<compile_context>
chip_gen: v7x
topology: tpu7x:2x2x1
jax: 0.10.0
libtpu: 0.0.40
codegen_flags: <defaults>
</compile_context>

<pallas_src>
import functools
import math

import jax
import jax.numpy as jnp
from jax.experimental import pallas as pl
from jax.experimental.pallas import tpu as pltpu


# ----------------------------------------------------------------------------
# Pallas kernels
# ----------------------------------------------------------------------------
def _batched_linear_kernel(x_ref, w_ref, b_ref, o_ref, *, apply_relu):
    # x_ref: (1, TM, K) bf16, w_ref: (1, K, N) bf16, b_ref: (1, 1, N) f32
    acc = jnp.dot(x_ref[0], w_ref[0], preferred_element_type=jnp.float32)
    acc = acc + b_ref[0]
    if apply_relu:
        acc = jnp.maximum(acc, 0.0)
    o_ref[0] = acc.astype(o_ref.dtype)


def _fused_head_kernel(flat_ref, w1_ref, b1_ref, wa_ref, ba_ref, o_ref):
    # flat_ref: (1, TB, K) bf16; w1_ref: (1, K, 512) bf16; b1_ref: (1, 1, 512) f32
    # wa_ref:   (1, 1, 512) bf16 row;  ba_ref: (1, 1, 1) f32
    h = jnp.dot(flat_ref[0], w1_ref[0], preferred_element_type=jnp.float32)
    h = jnp.maximum(h + b1_ref[0], 0.0)                       # (TB, 512) f32
    # A head: VPU multiply + lane (XLU) reduction instead of an N=1 MXU matmul;
    # the MXU would use 1/256 columns and still pay a full push/drain.
    a = jnp.sum(h * wa_ref[0].astype(jnp.float32), axis=-1, keepdims=True)
    o_ref[0] = (a + ba_ref[0]).astype(o_ref.dtype)


def _total_bytes(*arrs):
    return int(sum(a.size * jnp.dtype(a.dtype).itemsize for a in arrs))


# ----------------------------------------------------------------------------
# Wrappers
# ----------------------------------------------------------------------------
def pallas_batched_linear(x, w, b, *, relu, out_dtype=jnp.bfloat16,
                          share_x=False, tm_max=1024):
    """Head-batched fused GEMM: out[h] = act(x[h or 0] @ w[h] + b[h]).

    x: (Hx, M, K)  (Hx == 1 when share_x)   w: (H, K, N)   b: (H, 1, N)
    returns (H, M, N) in out_dtype.
    """
    Hx, M, K = x.shape
    H, K2, N = w.shape
    assert K == K2
    assert Hx == (1 if share_x else H)

    TM = M if M <= tm_max else tm_max          # tm_max divisible by 8 and 128
    n_m = pl.cdiv(M, TM)

    kernel = functools.partial(_batched_linear_kernel, apply_relu=relu)
    out_bytes = H * M * N * jnp.dtype(out_dtype).itemsize
    # NOTE: with share_x the cols really are streamed once per M tile now (head
    # axis innermost keeps the block resident), so counting x once is accurate.
    cost = pl.CostEstimate(flops=2 * H * M * K * N, transcendentals=0,
                           bytes_accessed=_total_bytes(x, w, b) + out_bytes)

    if share_x:
        # Grid (M tiles, heads): head axis innermost -> shared x block (0, m, 0)
        # is unchanged across the inner axis and is NOT re-DMA'd per head.
        grid = (n_m, H)
        x_spec = pl.BlockSpec((1, TM, K), lambda m, h: (0, m, 0))
        w_spec = pl.BlockSpec((1, K, N), lambda m, h: (h, 0, 0))
        b_spec = pl.BlockSpec((1, 1, N), lambda m, h: (h, 0, 0))
        o_spec = pl.BlockSpec((1, TM, N), lambda m, h: (h, m, 0))
    else:
        # Grid (heads, M tiles): per-head weight/bias blocks resident across M.
        grid = (H, n_m)
        x_spec = pl.BlockSpec((1, TM, K), lambda h, m: (h, m, 0))
        w_spec = pl.BlockSpec((1, K, N), lambda h, m: (h, 0, 0))
        b_spec = pl.BlockSpec((1, 1, N), lambda h, m: (h, 0, 0))
        o_spec = pl.BlockSpec((1, TM, N), lambda h, m: (h, m, 0))

    return pl.pallas_call(
        kernel,
        out_shape=jax.ShapeDtypeStruct((H, M, N), out_dtype),
        grid=grid,
        in_specs=[x_spec, w_spec, b_spec],
        out_specs=o_spec,
        compiler_params=pltpu.CompilerParams(
            dimension_semantics=("parallel", "parallel"),
            vmem_limit_bytes=32 * 1024 * 1024),
        cost_estimate=cost,
    )(x, w, b)


def pallas_fused_head(flat, wfc1, bfc1, wa_row, ba, *, tb_max=256):
    """Per-head fused fc1 + A: relu(flat @ Wfc1 + b1) . wa + ba -> (H, B, 1) f32.

    The batch axis is tiled (TB <= tb_max); Wfc1's block index is constant over
    the B axis so the 3.2 MB weight stays resident in VMEM across B tiles.
    """
    H, B, K = flat.shape
    _, _, Nh = wfc1.shape
    NA = 1

    TB = B if B <= tb_max else tb_max
    n_b = pl.cdiv(B, TB)

    cost = pl.CostEstimate(
        flops=2 * H * B * (K * Nh + Nh * NA), transcendentals=0,
        bytes_accessed=_total_bytes(flat, wfc1, bfc1, wa_row, ba) + H * B * NA * 4)

    return pl.pallas_call(
        _fused_head_kernel,
        out_shape=jax.ShapeDtypeStruct((H, B, NA), jnp.float32),
        grid=(H, n_b),
        in_specs=[
            pl.BlockSpec((1, TB, K), lambda h, b: (h, b, 0)),
            pl.BlockSpec((1, K, Nh), lambda h, b: (h, 0, 0)),   # resident over b
            pl.BlockSpec((1, 1, Nh), lambda h, b: (h, 0, 0)),
            pl.BlockSpec((1, 1, Nh), lambda h, b: (h, 0, 0)),   # wa as a row
            pl.BlockSpec((1, 1, NA), lambda h, b: (h, 0, 0)),
        ],
        out_specs=pl.BlockSpec((1, TB, NA), lambda h, b: (h, b, 0)),
        compiler_params=pltpu.CompilerParams(
            dimension_semantics=("parallel", "parallel"),
            vmem_limit_bytes=32 * 1024 * 1024),
        cost_estimate=cost,
    )(flat, wfc1, bfc1, wa_row, ba)


# ----------------------------------------------------------------------------
# im2col glue (plain JAX, NHWC): (N, H, W, C) -> (N*Ho*Wo, K*K*C), column order
# (kh, kw, c) -- matching the static weight layout produced below.
# TODO(synk): fold into the Pallas conv kernels (see header note).
# ----------------------------------------------------------------------------
def im2col_nhwc(x, k, stride, padding):
    if padding > 0:
        x = jnp.pad(x, ((0, 0), (padding, padding), (padding, padding), (0, 0)))
    N, Hh, Ww, C = x.shape
    Ho = (Hh - k) // stride + 1
    Wo = (Ww - k) // stride + 1
    patches = []
    for kh in range(k):
        for kw in range(k):
            patches.append(
                x[:, kh:kh + stride * (Ho - 1) + 1:stride,
                     kw:kw + stride * (Wo - 1) + 1:stride, :])
    cols = jnp.stack(patches, axis=3)              # (N, Ho, Wo, K*K, C)
    cols = cols.reshape(N * Ho * Wo, k * k * C)    # column order (kh, kw, c)
    return cols, Ho, Wo


# ----------------------------------------------------------------------------
# Parameters: init in PyTorch layout, then transform to the kernel layout
# (NHWC (kh,kw,c) GEMM weights, fc1 rows permuted to (h,w,c), /255 folded into
# w1, heads stacked, weights cast to bf16, biases kept f32, A weight as a row).
# ----------------------------------------------------------------------------
def init_action_network_params_torch(key):
    ks = jax.random.split(key, 10)

    def u(k, shape, bound):
        return jax.random.uniform(k, shape, jnp.float32, -bound, bound)

    p = {}
    b = 1.0 / math.sqrt(4 * 8 * 8)
    p["conv1_w"], p["conv1_b"] = u(ks[0], (32, 4, 8, 8), b), u(ks[1], (32,), b)
    b = 1.0 / math.sqrt(32 * 4 * 4)
    p["conv2_w"], p["conv2_b"] = u(ks[2], (64, 32, 4, 4), b), u(ks[3], (64,), b)
    b = 1.0 / math.sqrt(64 * 3 * 3)
    p["conv3_w"], p["conv3_b"] = u(ks[4], (64, 64, 3, 3), b), u(ks[5], (64,), b)
    b = 1.0 / math.sqrt(64 * 7 * 7)
    p["fc1_w"], p["fc1_b"] = u(ks[6], (512, 64 * 7 * 7), b), u(ks[7], (512,), b)
    b = 1.0 / math.sqrt(512)
    p["A_w"], p["A_b"] = u(ks[8], (1, 512), b), u(ks[9], (1,), b)
    return p


def prepare_stacked_params(torch_params_list, w_dtype=jnp.bfloat16):
    def conv_w(w):
        # (C_out, C_in, kh, kw) -> (kh*kw*C_in, C_out), rows ordered (kh, kw, c)
        co, ci, k, _ = w.shape
        return w.transpose(2, 3, 1, 0).reshape(k * k * ci, co)

    def fc1_w(w):
        # torch (512, 3136) with cols ordered (c, h, w) -> (3136, 512) rows (h, w, c)
        return w.reshape(512, 64, 7, 7).transpose(0, 2, 3, 1).reshape(512, 3136).T

    def stack_w(fn, name, scale=1.0):
        return jnp.stack([fn(p[name]) * scale for p in torch_params_list]).astype(w_dtype)

    def stack_b(name):
        return jnp.stack([p[name].reshape(1, -1) for p in torch_params_list]).astype(jnp.float32)

    params = {
        "w1": stack_w(conv_w, "conv1_w", scale=1.0 / 255.0),  # /255 folded in
        "b1": stack_b("conv1_b"),
        "w2": stack_w(conv_w, "conv2_w"),
        "b2": stack_b("conv2_b"),
        "w3": stack_w(conv_w, "conv3_w"),
        "b3": stack_b("conv3_b"),
        "wfc1": stack_w(fc1_w, "fc1_w"),
        "bfc1": stack_b("fc1_b"),
        # A weight kept as a (1, 512) row per head -> (H, 1, 512) for the VPU dot.
        "wA": stack_w(lambda w: w.reshape(1, 512), "A_w"),
        "bA": stack_b("A_b"),
    }
    return params


# ----------------------------------------------------------------------------
# Forward pass
# ----------------------------------------------------------------------------
def legged_qnetwork_forward(observation, params):
    """observation: (..., 4, 84, 84) raw -> (B, n_actions, 1) f32 (= torch.stack(dim=1))."""
    H = params["w1"].shape[0]

    x = observation.reshape(-1, 4, 84, 84).astype(jnp.float32)
    B = x.shape[0]
    # NOTE: bf16 cast before the first matmul is exact for integer pixels in
    # [0, 255]; ~0.4% rel. error otherwise (acceptable for RL inference).
    x = x.transpose(0, 2, 3, 1).astype(jnp.bfloat16)               # NHWC, bf16

    # conv1: 4->32, k=8, s=4, p=1  (cols shared across heads, /255 folded into w1)
    cols, Ho, Wo = im2col_nhwc(x, 8, 4, 1)                         # (B*400, 256)
    cols = cols.reshape(1, B * Ho * Wo, 8 * 8 * 4)
    h = pallas_batched_linear(cols, params["w1"], params["b1"],
                              relu=True, share_x=True)             # (H, B*400, 32)
    h = h.reshape(H * B, Ho, Wo, 32)

    # conv2: 32->64, k=4, s=2
    cols, Ho, Wo = im2col_nhwc(h, 4, 2, 0)                         # (H*B*81, 512)
    cols = cols.reshape(H, B * Ho * Wo, 4 * 4 * 32)
    h = pallas_batched_linear(cols, params["w2"], params["b2"], relu=True)
    h = h.reshape(H * B, Ho, Wo, 64)                               # (H*B, 9, 9, 64)

    # conv3: 64->64, k=3, s=1
    cols, Ho, Wo = im2col_nhwc(h, 3, 1, 0)                         # (H*B*49, 576)
    cols = cols.reshape(H, B * Ho * Wo, 3 * 3 * 64)
    h = pallas_batched_linear(cols, params["w3"], params["b3"], relu=True)
    # flatten in (h, w, c) order (the fc1 weight rows were permuted to match torch)
    flat = h.reshape(H, B, Ho * Wo * 64)                           # (H, B, 3136)

    # fused fc1 (3136->512, relu) + A head (512->1, VPU dot), B-tiled
    a = pallas_fused_head(flat, params["wfc1"], params["bfc1"],
                          params["wA"], params["bA"])              # (H, B, 1) f32
    return a.transpose(1, 0, 2)                                    # (B, n_actions, 1)


# ----------------------------------------------------------------------------
if __name__ == "__main__":
    key = jax.random.PRNGKey(0)
    k_x, k_p = jax.random.split(key)

    # The module's forward hard-codes 4x84x84 inputs (view(-1, 4, 84, 84)).
    batch = 2
    n_actions = 2
    x = jax.random.uniform(k_x, (batch, 4, 84, 84), jnp.float32, 0.0, 255.0)

    torch_layout_params = [init_action_network_params_torch(pk)
                           for pk in jax.random.split(k_p, n_actions)]
    params = prepare_stacked_params(torch_layout_params)

    fwd = jax.jit(legged_qnetwork_forward)
    out = fwd(x, params)
    jax.block_until_ready(out)

    assert out.shape == (batch, n_actions, 1), out.shape
    assert out.dtype == jnp.float32
    print("KERNEL_OK")
</pallas_src>

<mosaic_0001>
module attributes {stable_mosaic.version = 11 : i64} {
  func.func @_batched_linear_kernel(%arg0: i32, %arg1: i32, %arg2: memref<1x800x256xbf16, #tpu.memory_space<vmem>>, %arg3: memref<1x256x32xbf16, #tpu.memory_space<vmem>>, %arg4: memref<1x1x32xf32, #tpu.memory_space<vmem>>, %arg5: memref<1x800x32xbf16, #tpu.memory_space<vmem>>) attributes {dimension_semantics = [#tpu.dimension_semantics<parallel>, #tpu.dimension_semantics<parallel>], iteration_bounds = array<i64: 1, 2>, scalar_prefetch = 0 : i64, scratch_operands = 0 : i64, tpu.core_type = #tpu.core_type<tc>, window_params = [{transform_indices = @transform_0, window_bounds = array<i64: 1, 800, 256>}, {transform_indices = @transform_1, window_bounds = array<i64: 1, 256, 32>}, {transform_indices = @transform_2, window_bounds = array<i64: 1, 1, 32>}, {transform_indices = @transform_3, window_bounds = array<i64: 1, 800, 32>}]} {
    %c0 = arith.constant 0 : index
    %c0_0 = arith.constant 0 : index
    %c0_1 = arith.constant 0 : index
    %0 = vector.load %arg2[%c0, %c0_0, %c0_1] : memref<1x800x256xbf16, #tpu.memory_space<vmem>>, vector<1x800x256xbf16>
    %1 = vector.shape_cast %0 : vector<1x800x256xbf16> to vector<800x256xbf16>
    %c0_2 = arith.constant 0 : index
    %c0_3 = arith.constant 0 : index
    %c0_4 = arith.constant 0 : index
    %2 = vector.load %arg3[%c0_2, %c0_3, %c0_4] : memref<1x256x32xbf16, #tpu.memory_space<vmem>>, vector<1x256x32xbf16>
    %3 = vector.shape_cast %2 : vector<1x256x32xbf16> to vector<256x32xbf16>
    %cst = arith.constant dense<0.000000e+00> : vector<800x32xf32>
    %4 = tpu.matmul %1, %3, %cst {dimension_numbers = #tpu.dot_dimension_numbers<[1], [0], [0], [1], [0, 0, 1, 1], [], []>} : vector<800x256xbf16>, vector<256x32xbf16>, vector<800x32xf32> -> vector<800x32xf32>
    %c0_5 = arith.constant 0 : index
    %c0_6 = arith.constant 0 : index
    %c0_7 = arith.constant 0 : index
    %5 = vector.load %arg4[%c0_5, %c0_6, %c0_7] : memref<1x1x32xf32, #tpu.memory_space<vmem>>, vector<1x1x32xf32>
    %6 = vector.shape_cast %5 : vector<1x1x32xf32> to vector<1x32xf32>
    %7 = vector.broadcast %6 : vector<1x32xf32> to vector<800x32xf32>
    %8 = arith.addf %4, %7 : vector<800x32xf32>
    %cst_8 = arith.constant 0.000000e+00 : f32
    %9 = vector.broadcast %cst_8 : f32 to vector<800x32xf32>
    %10 = arith.maximumf %8, %9 : vector<800x32xf32>
    %11 = arith.truncf %10 : vector<800x32xf32> to vector<800x32xbf16>
    %c0_9 = arith.constant 0 : index
    %c0_10 = arith.constant 0 : index
    %c0_11 = arith.constant 0 : index
    %12 = vector.load %arg5[%c0_9, %c0_10, %c0_11] : memref<1x800x32xbf16, #tpu.memory_space<vmem>>, vector<1x800x32xbf16>
    %13 = vector.shape_cast %12 : vector<1x800x32xbf16> to vector<800x32xbf16>
    %14 = vector.shape_cast %11 : vector<800x32xbf16> to vector<1x800x32xbf16>
    tpu.vector_store %arg5[%c0_9, %c0_10, %c0_11], %14 {strides = array<i32>} : memref<1x800x32xbf16, #tpu.memory_space<vmem>>, vector<1x800x32xbf16>,
    return
  }
  func.func @transform_0(%arg0: i32, %arg1: i32) -> (i32, i32, i32) {
    %c0_i32 = arith.constant 0 : i32
    %c0_i32_0 = arith.constant 0 : i32
    %c0_i32_1 = arith.constant 0 : i32
    return %c0_i32, %arg0, %c0_i32_0 : i32, i32, i32
  }
  func.func @transform_1(%arg0: i32, %arg1: i32) -> (i32, i32, i32) {
    %c0_i32 = arith.constant 0 : i32
    %c0_i32_0 = arith.constant 0 : i32
    %c0_i32_1 = arith.constant 0 : i32
    return %arg1, %c0_i32, %c0_i32_0 : i32, i32, i32
  }
  func.func @transform_2(%arg0: i32, %arg1: i32) -> (i32, i32, i32) {
    %c0_i32 = arith.constant 0 : i32
    %c0_i32_0 = arith.constant 0 : i32
    %c0_i32_1 = arith.constant 0 : i32
    return %arg1, %c0_i32, %c0_i32_0 : i32, i32, i32
  }
  func.func @transform_3(%arg0: i32, %arg1: i32) -> (i32, i32, i32) {
    %c0_i32 = arith.constant 0 : i32
    %c0_i32_0 = arith.constant 0 : i32
    return %arg1, %arg0, %c0_i32 : i32, i32, i32
  }
}

module attributes {stable_mosaic.version = 11 : i64} {
  func.func @_batched_linear_kernel(%arg0: i32, %arg1: i32, %arg2: memref<1x162x512xbf16, #tpu.memory_space<vmem>>, %arg3: memref<1x512x64xbf16, #tpu.memory_space<vmem>>, %arg4: memref<1x1x64xf32, #tpu.memory_space<vmem>>, %arg5: memref<1x162x64xbf16, #tpu.memory_space<vmem>>) attributes {dimension_semantics = [#tpu.dimension_semantics<parallel>, #tpu.dimension_semantics<parallel>], iteration_bounds = array<i64: 2, 1>, scalar_prefetch = 0 : i64, scratch_operands = 0 : i64, tpu.core_type = #tpu.core_type<tc>, window_params = [{transform_indices = @transform_0, window_bounds = array<i64: 1, 162, 512>}, {transform_indices = @transform_1, window_bounds = array<i64: 1, 512, 64>}, {transform_indices = @transform_2, window_bounds = array<i64: 1, 1, 64>}, {transform_indices = @transform_3, window_bounds = array<i64: 1, 162, 64>}]} {
    %c0 = arith.constant 0 : index
    %c0_0 = arith.constant 0 : index
    %c0_1 = arith.constant 0 : index
    %0 = vector.load %arg2[%c0, %c0_0, %c0_1] : memref<1x162x512xbf16, #tpu.memory_space<vmem>>, vector<1x162x512xbf16>
    %1 = vector.shape_cast %0 : vector<1x162x512xbf16> to vector<162x512xbf16>
    %c0_2 = arith.constant 0 : index
    %c0_3 = arith.constant 0 : index
    %c0_4 = arith.constant 0 : index
    %2 = vector.load %arg3[%c0_2, %c0_3, %c0_4] : memref<1x512x64xbf16, #tpu.memory_space<vmem>>, vector<1x512x64xbf16>
    %3 = vector.shape_cast %2 : vector<1x512x64xbf16> to vector<512x64xbf16>
    %cst = arith.constant dense<0.000000e+00> : vector<162x64xf32>
    %4 = tpu.matmul %1, %3, %cst {dimension_numbers = #tpu.dot_dimension_numbers<[1], [0], [0], [1], [0, 0, 1, 1], [], []>} : vector<162x512xbf16>, vector<512x64xbf16>, vector<162x64xf32> -> vector<162x64xf32>
    %c0_5 = arith.constant 0 : index
    %c0_6 = arith.constant 0 : index
    %c0_7 = arith.constant 0 : index
    %5 = vector.load %arg4[%c0_5, %c0_6, %c0_7] : memref<1x1x64xf32, #tpu.memory_space<vmem>>, vector<1x1x64xf32>
    %6 = vector.shape_cast %5 : vector<1x1x64xf32> to vector<1x64xf32>
    %7 = vector.broadcast %6 : vector<1x64xf32> to vector<162x64xf32>
    %8 = arith.addf %4, %7 : vector<162x64xf32>
    %cst_8 = arith.constant 0.000000e+00 : f32
    %9 = vector.broadcast %cst_8 : f32 to vector<162x64xf32>
    %10 = arith.maximumf %8, %9 : vector<162x64xf32>
    %11 = arith.truncf %10 : vector<162x64xf32> to vector<162x64xbf16>
    %c0_9 = arith.constant 0 : index
    %c0_10 = arith.constant 0 : index
    %c0_11 = arith.constant 0 : index
    %12 = vector.load %arg5[%c0_9, %c0_10, %c0_11] : memref<1x162x64xbf16, #tpu.memory_space<vmem>>, vector<1x162x64xbf16>
    %13 = vector.shape_cast %12 : vector<1x162x64xbf16> to vector<162x64xbf16>
    %14 = vector.shape_cast %11 : vector<162x64xbf16> to vector<1x162x64xbf16>
    tpu.vector_store %arg5[%c0_9, %c0_10, %c0_11], %14 {strides = array<i32>} : memref<1x162x64xbf16, #tpu.memory_space<vmem>>, vector<1x162x64xbf16>,
    return
  }
  func.func @transform_0(%arg0: i32, %arg1: i32) -> (i32, i32, i32) {
    %c0_i32 = arith.constant 0 : i32
    %c0_i32_0 = arith.constant 0 : i32
    return %arg0, %arg1, %c0_i32 : i32, i32, i32
  }
  func.func @transform_1(%arg0: i32, %arg1: i32) -> (i32, i32, i32) {
    %c0_i32 = arith.constant 0 : i32
    %c0_i32_0 = arith.constant 0 : i32
    %c0_i32_1 = arith.constant 0 : i32
    return %arg0, %c0_i32, %c0_i32_0 : i32, i32, i32
  }
  func.func @transform_2(%arg0: i32, %arg1: i32) -> (i32, i32, i32) {
    %c0_i32 = arith.constant 0 : i32
    %c0_i32_0 = arith.constant 0 : i32
    %c0_i32_1 = arith.constant 0 : i32
    return %arg0, %c0_i32, %c0_i32_0 : i32, i32, i32
  }
  func.func @transform_3(%arg0: i32, %arg1: i32) -> (i32, i32, i32) {
    %c0_i32 = arith.constant 0 : i32
    %c0_i32_0 = arith.constant 0 : i32
    return %arg0, %arg1, %c0_i32 : i32, i32, i32
  }
}

module attributes {stable_mosaic.version = 11 : i64} {
  func.func @_batched_linear_kernel(%arg0: i32, %arg1: i32, %arg2: memref<1x98x576xbf16, #tpu.memory_space<vmem>>, %arg3: memref<1x576x64xbf16, #tpu.memory_space<vmem>>, %arg4: memref<1x1x64xf32, #tpu.memory_space<vmem>>, %arg5: memref<1x98x64xbf16, #tpu.memory_space<vmem>>) attributes {dimension_semantics = [#tpu.dimension_semantics<parallel>, #tpu.dimension_semantics<parallel>], iteration_bounds = array<i64: 2, 1>, scalar_prefetch = 0 : i64, scratch_operands = 0 : i64, tpu.core_type = #tpu.core_type<tc>, window_params = [{transform_indices = @transform_0, window_bounds = array<i64: 1, 98, 576>}, {transform_indices = @transform_1, window_bounds = array<i64: 1, 576, 64>}, {transform_indices = @transform_2, window_bounds = array<i64: 1, 1, 64>}, {transform_indices = @transform_3, window_bounds = array<i64: 1, 98, 64>}]} {
    %c0 = arith.constant 0 : index
    %c0_0 = arith.constant 0 : index
    %c0_1 = arith.constant 0 : index
    %0 = vector.load %arg2[%c0, %c0_0, %c0_1] : memref<1x98x576xbf16, #tpu.memory_space<vmem>>, vector<1x98x576xbf16>
    %1 = vector.shape_cast %0 : vector<1x98x576xbf16> to vector<98x576xbf16>
    %c0_2 = arith.constant 0 : index
    %c0_3 = arith.constant 0 : index
    %c0_4 = arith.constant 0 : index
    %2 = vector.load %arg3[%c0_2, %c0_3, %c0_4] : memref<1x576x64xbf16, #tpu.memory_space<vmem>>, vector<1x576x64xbf16>
    %3 = vector.shape_cast %2 : vector<1x576x64xbf16> to vector<576x64xbf16>
    %cst = arith.constant dense<0.000000e+00> : vector<98x64xf32>
    %4 = tpu.matmul %1, %3, %cst {dimension_numbers = #tpu.dot_dimension_numbers<[1], [0], [0], [1], [0, 0, 1, 1], [], []>} : vector<98x576xbf16>, vector<576x64xbf16>, vector<98x64xf32> -> vector<98x64xf32>
    %c0_5 = arith.constant 0 : index
    %c0_6 = arith.constant 0 : index
    %c0_7 = arith.constant 0 : index
    %5 = vector.load %arg4[%c0_5, %c0_6, %c0_7] : memref<1x1x64xf32, #tpu.memory_space<vmem>>, vector<1x1x64xf32>
    %6 = vector.shape_cast %5 : vector<1x1x64xf32> to vector<1x64xf32>
    %7 = vector.broadcast %6 : vector<1x64xf32> to vector<98x64xf32>
    %8 = arith.addf %4, %7 : vector<98x64xf32>
    %cst_8 = arith.constant 0.000000e+00 : f32
    %9 = vector.broadcast %cst_8 : f32 to vector<98x64xf32>
    %10 = arith.maximumf %8, %9 : vector<98x64xf32>
    %11 = arith.truncf %10 : vector<98x64xf32> to vector<98x64xbf16>
    %c0_9 = arith.constant 0 : index
    %c0_10 = arith.constant 0 : index
    %c0_11 = arith.constant 0 : index
    %12 = vector.load %arg5[%c0_9, %c0_10, %c0_11] : memref<1x98x64xbf16, #tpu.memory_space<vmem>>, vector<1x98x64xbf16>
    %13 = vector.shape_cast %12 : vector<1x98x64xbf16> to vector<98x64xbf16>
    %14 = vector.shape_cast %11 : vector<98x64xbf16> to vector<1x98x64xbf16>
    tpu.vector_store %arg5[%c0_9, %c0_10, %c0_11], %14 {strides = array<i32>} : memref<1x98x64xbf16, #tpu.memory_space<vmem>>, vector<1x98x64xbf16>,
    return
  }
  func.func @transform_0(%arg0: i32, %arg1: i32) -> (i32, i32, i32) {
    %c0_i32 = arith.constant 0 : i32
    %c0_i32_0 = arith.constant 0 : i32
    return %arg0, %arg1, %c0_i32 : i32, i32, i32
  }
  func.func @transform_1(%arg0: i32, %arg1: i32) -> (i32, i32, i32) {
    %c0_i32 = arith.constant 0 : i32
    %c0_i32_0 = arith.constant 0 : i32
    %c0_i32_1 = arith.constant 0 : i32
    return %arg0, %c0_i32, %c0_i32_0 : i32, i32, i32
  }
  func.func @transform_2(%arg0: i32, %arg1: i32) -> (i32, i32, i32) {
    %c0_i32 = arith.constant 0 : i32
    %c0_i32_0 = arith.constant 0 : i32
    %c0_i32_1 = arith.constant 0 : i32
    return %arg0, %c0_i32, %c0_i32_0 : i32, i32, i32
  }
  func.func @transform_3(%arg0: i32, %arg1: i32) -> (i32, i32, i32) {
    %c0_i32 = arith.constant 0 : i32
    %c0_i32_0 = arith.constant 0 : i32
    return %arg0, %arg1, %c0_i32 : i32, i32, i32
  }
}

module attributes {stable_mosaic.version = 11 : i64} {
  func.func @_fused_head_kernel(%arg0: i32, %arg1: i32, %arg2: memref<1x2x3136xbf16, #tpu.memory_space<vmem>>, %arg3: memref<1x3136x512xbf16, #tpu.memory_space<vmem>>, %arg4: memref<1x1x512xf32, #tpu.memory_space<vmem>>, %arg5: memref<1x1x512xbf16, #tpu.memory_space<vmem>>, %arg6: memref<1x1x1xf32, #tpu.memory_space<vmem>>, %arg7: memref<1x2x1xf32, #tpu.memory_space<vmem>>) attributes {dimension_semantics = [#tpu.dimension_semantics<parallel>, #tpu.dimension_semantics<parallel>], iteration_bounds = array<i64: 2, 1>, scalar_prefetch = 0 : i64, scratch_operands = 0 : i64, tpu.core_type = #tpu.core_type<tc>, window_params = [{transform_indices = @transform_0, window_bounds = array<i64: 1, 2, 3136>}, {transform_indices = @transform_1, window_bounds = array<i64: 1, 3136, 512>}, {transform_indices = @transform_2, window_bounds = array<i64: 1, 1, 512>}, {transform_indices = @transform_3, window_bounds = array<i64: 1, 1, 512>}, {transform_indices = @transform_4, window_bounds = array<i64: 1, 1, 1>}, {transform_indices = @transform_5, window_bounds = array<i64: 1, 2, 1>}]} {
    %c0 = arith.constant 0 : index
    %c0_0 = arith.constant 0 : index
    %c0_1 = arith.constant 0 : index
    %0 = vector.load %arg2[%c0, %c0_0, %c0_1] : memref<1x2x3136xbf16, #tpu.memory_space<vmem>>, vector<1x2x3136xbf16>
    %1 = vector.shape_cast %0 : vector<1x2x3136xbf16> to vector<2x3136xbf16>
    %c0_2 = arith.constant 0 : index
    %c0_3 = arith.constant 0 : index
    %c0_4 = arith.constant 0 : index
    %2 = vector.load %arg3[%c0_2, %c0_3, %c0_4] : memref<1x3136x512xbf16, #tpu.memory_space<vmem>>, vector<1x3136x512xbf16>
    %3 = vector.shape_cast %2 : vector<1x3136x512xbf16> to vector<3136x512xbf16>
    %cst = arith.constant dense<0.000000e+00> : vector<2x512xf32>
    %4 = tpu.matmul %1, %3, %cst {dimension_numbers = #tpu.dot_dimension_numbers<[1], [0], [0], [1], [0, 0, 1, 1], [], []>} : vector<2x3136xbf16>, vector<3136x512xbf16>, vector<2x512xf32> -> vector<2x512xf32>
    %c0_5 = arith.constant 0 : index
    %c0_6 = arith.constant 0 : index
    %c0_7 = arith.constant 0 : index
    %5 = vector.load %arg4[%c0_5, %c0_6, %c0_7] : memref<1x1x512xf32, #tpu.memory_space<vmem>>, vector<1x1x512xf32>
    %6 = vector.shape_cast %5 : vector<1x1x512xf32> to vector<1x512xf32>
    %7 = vector.broadcast %6 : vector<1x512xf32> to vector<2x512xf32>
    %8 = arith.addf %4, %7 : vector<2x512xf32>
    %cst_8 = arith.constant 0.000000e+00 : f32
    %9 = vector.broadcast %cst_8 : f32 to vector<2x512xf32>
    %10 = arith.maximumf %8, %9 : vector<2x512xf32>
    %c0_9 = arith.constant 0 : index
    %c0_10 = arith.constant 0 : index
    %c0_11 = arith.constant 0 : index
    %11 = vector.load %arg5[%c0_9, %c0_10, %c0_11] : memref<1x1x512xbf16, #tpu.memory_space<vmem>>, vector<1x1x512xbf16>
    %12 = vector.shape_cast %11 : vector<1x1x512xbf16> to vector<1x512xbf16>
    %13 = arith.extf %12 : vector<1x512xbf16> to vector<1x512xf32>
    %14 = vector.broadcast %13 : vector<1x512xf32> to vector<2x512xf32>
    %15 = arith.mulf %10, %14 : vector<2x512xf32>
    %cst_12 = arith.constant dense<0.000000e+00> : vector<2xf32>
    %16 = vector.multi_reduction <add>, %15, %cst_12 [1] : vector<2x512xf32> to vector<2xf32>
    %17 = vector.shape_cast %16 : vector<2xf32> to vector<2x1xf32>
    %c0_13 = arith.constant 0 : index
    %c0_14 = arith.constant 0 : index
    %c0_15 = arith.constant 0 : index
    %18 = vector.load %arg6[%c0_13, %c0_14, %c0_15] : memref<1x1x1xf32, #tpu.memory_space<vmem>>, vector<1x1x1xf32>
    %19 = vector.shape_cast %18 : vector<1x1x1xf32> to vector<1x1xf32>
    %20 = vector.broadcast %19 : vector<1x1xf32> to vector<2x1xf32>
    %21 = arith.addf %17, %20 : vector<2x1xf32>
    %c0_16 = arith.constant 0 : index
    %c0_17 = arith.constant 0 : index
    %c0_18 = arith.constant 0 : index
    %22 = vector.load %arg7[%c0_16, %c0_17, %c0_18] : memref<1x2x1xf32, #tpu.memory_space<vmem>>, vector<1x2x1xf32>
    %23 = vector.shape_cast %22 : vector<1x2x1xf32> to vector<2x1xf32>
    %24 = vector.shape_cast %21 : vector<2x1xf32> to vector<1x2x1xf32>
    tpu.vector_store %arg7[%c0_16, %c0_17, %c0_18], %24 {strides = array<i32>} : memref<1x2x1xf32, #tpu.memory_space<vmem>>, vector<1x2x1xf32>,
    return
  }
  func.func @transform_0(%arg0: i32, %arg1: i32) -> (i32, i32, i32) {
    %c0_i32 = arith.constant 0 : i32
    %c0_i32_0 = arith.constant 0 : i32
    return %arg0, %arg1, %c0_i32 : i32, i32, i32
  }
  func.func @transform_1(%arg0: i32, %arg1: i32) -> (i32, i32, i32) {
    %c0_i32 = arith.constant 0 : i32
    %c0_i32_0 = arith.constant 0 : i32
    %c0_i32_1 = arith.constant 0 : i32
    return %arg0, %c0_i32, %c0_i32_0 : i32, i32, i32
  }
  func.func @transform_2(%arg0: i32, %arg1: i32) -> (i32, i32, i32) {
    %c0_i32 = arith.constant 0 : i32
    %c0_i32_0 = arith.constant 0 : i32
    %c0_i32_1 = arith.constant 0 : i32
    return %arg0, %c0_i32, %c0_i32_0 : i32, i32, i32
  }
  func.func @transform_3(%arg0: i32, %arg1: i32) -> (i32, i32, i32) {
    %c0_i32 = arith.constant 0 : i32
    %c0_i32_0 = arith.constant 0 : i32
    %c0_i32_1 = arith.constant 0 : i32
    return %arg0, %c0_i32, %c0_i32_0 : i32, i32, i32
  }
  func.func @transform_4(%arg0: i32, %arg1: i32) -> (i32, i32, i32) {
    %c0_i32 = arith.constant 0 : i32
    %c0_i32_0 = arith.constant 0 : i32
    %c0_i32_1 = arith.constant 0 : i32
    return %arg0, %c0_i32, %c0_i32_0 : i32, i32, i32
  }
  func.func @transform_5(%arg0: i32, %arg1: i32) -> (i32, i32, i32) {
    %c0_i32 = arith.constant 0 : i32
    %c0_i32_0 = arith.constant 0 : i32
    return %arg0, %arg1, %c0_i32 : i32, i32, i32
  }
}

</mosaic_0001>

<llo_original>
// kernel: legged_qnetwork_forward.4
$region0: #{legged_qnetwork_forward.4}
  #allocation0 [shape = 'u32[]', space=smem, size = 0x4, offset = 0x4, fixed_abs, tag = 'smem constant byte address 0x4 - core index']
  #allocation1 [shape = 'u32[144,128]{1,0:T(1,128)}', space=vmem, size = 0x12000, scoped, tag = 'internal scratch']
  %s0 = inlined_call_operand.vmem [shape: bf16[1,800,256], index: 0, kind: input, shape index: {}]
  %s1 = inlined_call_operand.vmem [shape: bf16[2,256,32], index: 1, kind: input, shape index: {}]
  %s2 = inlined_call_operand.vmem [shape: f32[2,1,32], index: 2, kind: input, shape index: {}]
  %s3 = inlined_call_operand.vmem [shape: bf16[2,800,32], index: 3, kind: output, shape index: {}]
  %s4 = sld [smem:[#allocation0]]
  $region45: #{legged_qnetwork_forward.4} parent=0
    _
  %s6 = ssub.s32 1, %s4
  %s7 = scalar_select 0, %s6, %s4
  loop: start=0, step=1, limit=4
  $region2: #{legged_qnetwork_forward.4} parent=0 // loop_pre_header
    _
  $region3: #{legged_qnetwork_forward.4} parent=0 // loop_header
    %s9 = sphi 0, %s13
    %p10 = scmp.ge.s32.totalorder %s9, 4
    %s16 = sphi 0, %s28
    %s17 = sphi 0, %s24
    %s18 = sphi 0, %s16
    %s19 = sphi 0, %s17
    %s20 = sphi 0, %s18
    %s21 = sphi 0, %s19
    %s31 = sphi 0, %s33
    %s34 = sphi 0, %s31
    %s35 = sphi 0, %s34
    %s51 = sphi 0, %s35
    %s57 = sphi 0, %s59
    %s60 = sphi 0, %s57
    %s61 = sphi 0, %s60
    %s77 = sphi 0, %s61
    %s83 = sphi 0, %s85
    %s86 = sphi 0, %s83
    %s87 = sphi 0, %s86
    %s103 = sphi 0, %s87
    %s111 = sphi 0, %s113
    %s114 = sphi 0, %s111
    %s115 = sphi 0, %s114
    %s131 = sphi 0, %s115
  $region4: #{legged_qnetwork_forward.4} parent=0 // loop_header_branch
    %12 = sbr.rel (%p10) target = $region8
  $region5: #{legged_qnetwork_forward.4} parent=0 // loop_body
    %s14 = ssub.s32 %s9, 1
    %s15 = ssub.s32 %s9, 2
    %s22 = sadd.s32 1, %s17
    %p23 = scmp.ge.s32.totalorder %s22, 2
    %s24 = scalar_select %p23, 0, %s22
    %s25 = sadd.s32 1, %s16
    %s26 = scalar_select %p23, %s25, %s16
    %p27 = scmp.ge.s32.totalorder %s26, 1
    %s28 = scalar_select %p27, 0, %s26
    %s29 = ssub.s32 %s16, %s28
    %p30 = scmp.eq.s32.totalorder %s29, 0
    %s32 = sadd.s32 %s31, 1
    %s33 = scalar_select %p30, %s31, %s32
    %p36 = pneg %p30
    %p37 = scmp.eq.s32.totalorder %s9, 1
    %p38 = por %p36, %p37
    %p39 = scmp.ne.s32.totalorder %s31, %s34
    %p40 = scmp.eq.s32.totalorder %s9, 0
    %p41 = por %p39, %p40
    %p42 = scmp.ne.s32.totalorder %s31, %s34
    %p43 = scmp.eq.s32.totalorder %s14, 1
    %p44 = por %p42, %p43
    %p45 = scmp.ne.s32.totalorder %s34, %s35
    %p46 = scmp.eq.s32.totalorder %s14, 0
    %p47 = por %p45, %p46
    %p48 = scmp.ne.s32.totalorder %s34, %s35
    %p49 = scmp.eq.s32.totalorder %s15, 1
    %p50 = por %p48, %p49
    %p52 = scmp.ne.s32.totalorder %s35, %s51
    %p53 = scmp.eq.s32.totalorder %s15, 0
    %p54 = por %p52, %p53
    %s55 = ssub.s32 %s17, %s24
    %p56 = scmp.eq.s32.totalorder %s55, 0
    %s58 = sadd.s32 %s57, 1
    %s59 = scalar_select %p56, %s57, %s58
    %p62 = pneg %p56
    %p63 = scmp.eq.s32.totalorder %s9, 1
    %p64 = por %p62, %p63
    %p65 = scmp.ne.s32.totalorder %s57, %s60
    %p66 = scmp.eq.s32.totalorder %s9, 0
    %p67 = por %p65, %p66
    %p68 = scmp.ne.s32.totalorder %s57, %s60
    %p69 = scmp.eq.s32.totalorder %s14, 1
    %p70 = por %p68, %p69
    %p71 = scmp.ne.s32.totalorder %s60, %s61
    %p72 = scmp.eq.s32.totalorder %s14, 0
    %p73 = por %p71, %p72
    %p74 = scmp.ne.s32.totalorder %s60, %s61
    %p75 = scmp.eq.s32.totalorder %s15, 1
    %p76 = por %p74, %p75
    %p78 = scmp.ne.s32.totalorder %s61, %s77
    %p79 = scmp.eq.s32.totalorder %s15, 0
    %p80 = por %p78, %p79
    %s81 = ssub.s32 %s17, %s24
    %p82 = scmp.eq.s32.totalorder %s81, 0
    %s84 = sadd.s32 %s83, 1
    %s85 = scalar_select %p82, %s83, %s84
    %p88 = pneg %p82
    %p89 = scmp.eq.s32.totalorder %s9, 1
    %p90 = por %p88, %p89
    %p91 = scmp.ne.s32.totalorder %s83, %s86
    %p92 = scmp.eq.s32.totalorder %s9, 0
    %p93 = por %p91, %p92
    %p94 = scmp.ne.s32.totalorder %s83, %s86
    %p95 = scmp.eq.s32.totalorder %s14, 1
    %p96 = por %p94, %p95
    %p97 = scmp.ne.s32.totalorder %s86, %s87
    %p98 = scmp.eq.s32.totalorder %s14, 0
    %p99 = por %p97, %p98
    %p100 = scmp.ne.s32.totalorder %s86, %s87
    %p101 = scmp.eq.s32.totalorder %s15, 1
    %p102 = por %p100, %p101
    %p104 = scmp.ne.s32.totalorder %s87, %s103
    %p105 = scmp.eq.s32.totalorder %s15, 0
    %p106 = por %p104, %p105
    %s107 = ssub.s32 %s17, %s24
    %s108 = ssub.s32 %s16, %s28
    %s109 = sor.u32 %s107, %s108
    %p110 = scmp.eq.s32.totalorder %s109, 0
    %s112 = sadd.s32 %s111, 1
    %s113 = scalar_select %p110, %s111, %s112
    %p116 = pneg %p110
    %p117 = scmp.eq.s32.totalorder %s9, 1
    %p118 = por %p116, %p117
    %p119 = scmp.ne.s32.totalorder %s111, %s114
    %p120 = scmp.eq.s32.totalorder %s9, 0
    %p121 = por %p119, %p120
    %p122 = scmp.ne.s32.totalorder %s111, %s114
    %p123 = scmp.eq.s32.totalorder %s14, 1
    %p124 = por %p122, %p123
    %p125 = scmp.ne.s32.totalorder %s114, %s115
    %p126 = scmp.eq.s32.totalorder %s14, 0
    %p127 = por %p125, %p126
    %p128 = scmp.ne.s32.totalorder %s114, %s115
    %p129 = scmp.eq.s32.totalorder %s15, 1
    %p130 = por %p128, %p129
    %p132 = scmp.ne.s32.totalorder %s115, %s131
    %p133 = scmp.eq.s32.totalorder %s15, 0
    %p134 = por %p132, %p133
    %p135 = scmp.le.s32.totalorder 1, %s9
    %p136 = scmp.lt.s32.totalorder %s9, 3
    %p137 = pnand %p135, %p136
    %p138 = pneg %p137
    // Predicated region
    $region9: #{legged_qnetwork_forward.4} parent=5 // pred_check
      _
    $region10: #{legged_qnetwork_forward.4} parent=5 // pred_check_branch
      %140 = sbr.rel (%p137) target = $region12
    $region11: #{legged_qnetwork_forward.4} parent=5 // pred_region
      %s141 = ssub.s32 %s9, 1
      // Predicated region
      $region13: #{legged_qnetwork_forward.4} parent=11 // pred_check
        %p142 = pneg %p47
      $region14: #{legged_qnetwork_forward.4} parent=11 // pred_check_branch
        %144 = sbr.rel (%p142) target = $region16
      $region15: #{legged_qnetwork_forward.4} parent=11 // pred_region
        %s145 = smul.u32 100, %s18
        %p146 = scmp.lt.s32.totalorder %s145, 99
        %s147 = scalar_select %p146, %s145, 99
        %s148 = smul.addr %s147, 2
        %s149 = smul.addr %s148, 4
        %s150 = scalar_lea.vmem %s0, %s149
        %s151 = smul.u32 100, %s18
      $region16: #{legged_qnetwork_forward.4} parent=11 // pred_fallthru
        _
    $region12: #{legged_qnetwork_forward.4} parent=5 // pred_fallthru
      _
    %p152 = scmp.lt.s32.totalorder %s9, 2
    // Predicated region
    $region17: #{legged_qnetwork_forward.4} parent=5 // pred_check
      %p153 = pneg %p152
    $region18: #{legged_qnetwork_forward.4} parent=5 // pred_check_branch
      %155 = sbr.rel (%p153) target = $region20
    $region19: #{legged_qnetwork_forward.4} parent=5 // pred_region
      // Predicated region
      $region21: #{legged_qnetwork_forward.4} parent=19 // pred_check
        %p156 = pneg %p67
      $region22: #{legged_qnetwork_forward.4} parent=19 // pred_check_branch
        %158 = sbr.rel (%p156) target = $region24
      $region23: #{legged_qnetwork_forward.4} parent=19 // pred_region
        %p159 = scmp.lt.s32.totalorder %s17, 1
        %s160 = scalar_select %p159, %s17, 1
        %s161 = smul.addr %s160, 32
        %s162 = smul.addr %s161, 4
        %s163 = scalar_lea.vmem %s1, %s162
      $region24: #{legged_qnetwork_forward.4} parent=19 // pred_fallthru
        _
      // Predicated region
      $region25: #{legged_qnetwork_forward.4} parent=19 // pred_check
        %p164 = pneg %p93
      $region26: #{legged_qnetwork_forward.4} parent=19 // pred_check_branch
        %166 = sbr.rel (%p164) target = $region28
      $region27: #{legged_qnetwork_forward.4} parent=19 // pred_region
        %p167 = scmp.lt.s32.totalorder %s17, 1
        %s168 = scalar_select %p167, %s17, 1
        %s169 = scalar_lea.vmem %s2, %s168
      $region28: #{legged_qnetwork_forward.4} parent=19 // pred_fallthru
        _
    $region20: #{legged_qnetwork_forward.4} parent=5 // pred_fallthru
      _
    %p170 = scmp.le.s32.totalorder 1, %s9
    %p171 = scmp.lt.s32.totalorder %s9, 3
    %p172 = pnand %p170, %p171
    %p173 = pneg %p172
    // Predicated region
    $region29: #{legged_qnetwork_forward.4} parent=5 // pred_check
      _
    $region30: #{legged_qnetwork_forward.4} parent=5 // pred_check_branch
      %175 = sbr.rel (%p172) target = $region32
    $region31: #{legged_qnetwork_forward.4} parent=5 // pred_region
      %s176 = ssub.s32 %s9, 1
      %s177 = smul.u32 100, %s18
      %p178 = scmp.lt.s32.totalorder %s177, 99
      %s179 = scalar_select %p178, %s177, 99
      %s180 = smul.addr %s179, 2
      %s181 = smul.addr %s180, 4
      %s182 = scalar_lea.vmem %s0, %s181
      %p183 = pneg %p47
      %p184 = pneg %p44
      %p185 = scmp.lt.s32.totalorder %s19, 1
      %s186 = scalar_select %p185, %s19, 1
      %s187 = smul.addr %s186, 32
      %s188 = smul.addr %s187, 4
      %s189 = scalar_lea.vmem %s1, %s188
      %p190 = pneg %p73
      %p191 = pneg %p70
      %p192 = scmp.lt.s32.totalorder %s19, 1
      %s193 = scalar_select %p192, %s19, 1
      %s194 = scalar_lea.vmem %s2, %s193
      %p195 = pneg %p99
      %p196 = pneg %p96
      %p197 = pneg %p127
      %p198 = pneg %p124
      %s199 = smul.u32 100, %s18
      %p200 = scmp.lt.s32.totalorder %s19, 1
      %s201 = scalar_select %p200, %s19, 1
      %p202 = scmp.lt.s32.totalorder %s199, 99
      %s203 = scalar_select %p202, %s199, 99
      %s204 = smul.addr %s201, 100
      %s205 = sadd.s32 %s203, %s204
      %s206 = smul.addr %s205, 4
      %s207 = scalar_lea.vmem %s3, %s206
      %s208 = smul.u32 100, %s18
      %p209 = scmp.lt.s32.totalorder %s208, 99
      %s210 = scalar_select %p209, %s208, 99
      %s211 = smul.addr %s210, 2
      %s212 = smul.addr %s211, 4
      %s213 = scalar_lea.vmem %s0, %s212
      %s214 = smul.u32 100, %s18
      %p215 = scmp.lt.s32.totalorder %s19, 1
      %s216 = scalar_select %p215, %s19, 1
      %s217 = smul.addr %s216, 32
      %s218 = smul.addr %s217, 4
      %s219 = scalar_lea.vmem %s1, %s218
      %p220 = scmp.lt.s32.totalorder %s19, 1
      %s221 = scalar_select %p220, %s19, 1
      %s222 = scalar_lea.vmem %s2, %s221
      %s223 = smul.u32 100, %s18
      %p224 = scmp.lt.s32.totalorder %s19, 1
      %s225 = scalar_select %p224, %s19, 1
      %p226 = scmp.lt.s32.totalorder %s223, 99
      %s227 = scalar_select %p226, %s223, 99
      %s228 = smul.addr %s225, 100
      %s229 = sadd.s32 %s227, %s228
      %s230 = smul.addr %s229, 4
      %s231 = scalar_lea.vmem %s3, %s230
      %s232 = smul.u32 100, %s18
      %v234 = vld [vmem:[%s213] sm:$0xff]
      %v235 = vld [vmem:[%s213 + $0x8] sm:$0xff]
      %v236 = vld [vmem:[%s213 + $0x10] sm:$0xff]
      %v237 = vld [vmem:[%s213 + $0x18] sm:$0xff]
      %v238 = vld [vmem:[%s213 + $0x20] sm:$0xff]
      %v239 = vld [vmem:[%s213 + $0x28] sm:$0xff]
      %v240 = vld [vmem:[%s213 + $0x30] sm:$0xff]
      %v241 = vld [vmem:[%s213 + $0x38] sm:$0xff]
      %v242 = vld [vmem:[%s213 + $0x40] sm:$0xff]
      %v243 = vld [vmem:[%s213 + $0x48] sm:$0xff]
      %v244 = vld [vmem:[%s213 + $0x50] sm:$0xff]
      %v245 = vld [vmem:[%s213 + $0x58] sm:$0xff]
      %v246 = vld [vmem:[%s213 + $0x60] sm:$0xff]
      %v247 = vld [vmem:[%s213 + $0x68] sm:$0xff]
      %v248 = vld [vmem:[%s213 + $0x70] sm:$0xff]
      %v249 = vld [vmem:[%s213 + $0x78] sm:$0xff]
      %v250 = vld [vmem:[%s213 + $0x80] sm:$0xff]
      %v251 = vld [vmem:[%s213 + $0x88] sm:$0xff]
      %v252 = vld [vmem:[%s213 + $0x90] sm:$0xff]
      %v253 = vld [vmem:[%s213 + $0x98] sm:$0xff]
      %v254 = vld [vmem:[%s213 + $0xa0] sm:$0xff]
      %v255 = vld [vmem:[%s213 + $0xa8] sm:$0xff]
      %v256 = vld [vmem:[%s213 + $0xb0] sm:$0xff]
      %v257 = vld [vmem:[%s213 + $0xb8] sm:$0xff]
      %v258 = vld [vmem:[%s213 + $0xc0] sm:$0xff]
      %v259 = vld [vmem:[%s213 + $0xc8] sm:$0xff]
      %v260 = vld [vmem:[%s213 + $0xd0] sm:$0xff]
      %v261 = vld [vmem:[%s213 + $0xd8] sm:$0xff]
      %v262 = vld [vmem:[%s213 + $0xe0] sm:$0xff]
      %v263 = vld [vmem:[%s213 + $0xe8] sm:$0xff]
      %v264 = vld [vmem:[%s213 + $0xf0] sm:$0xff]
      %v265 = vld [vmem:[%s213 + $0xf8] sm:$0xff]
      %v266 = vld [vmem:[%s213 + $0x100] sm:$0xff]
      %v267 = vld [vmem:[%s213 + $0x108] sm:$0xff]
      %v268 = vld [vmem:[%s213 + $0x110] sm:$0xff]
      %v269 = vld [vmem:[%s213 + $0x118] sm:$0xff]
      %v270 = vld [vmem:[%s213 + $0x120] sm:$0xff]
      %v271 = vld [vmem:[%s213 + $0x128] sm:$0xff]
      %v272 = vld [vmem:[%s213 + $0x130] sm:$0xff]
      %v273 = vld [vmem:[%s213 + $0x138] sm:$0xff]
      %v274 = vld [vmem:[%s213 + $0x140] sm:$0xff]
      %v275 = vld [vmem:[%s213 + $0x148] sm:$0xff]
      %v276 = vld [vmem:[%s213 + $0x150] sm:$0xff]
      %v277 = vld [vmem:[%s213 + $0x158] sm:$0xff]
      %v278 = vld [vmem:[%s213 + $0x160] sm:$0xff]
      %v279 = vld [vmem:[%s213 + $0x168] sm:$0xff]
      %v280 = vld [vmem:[%s213 + $0x170] sm:$0xff]
      %v281 = vld [vmem:[%s213 + $0x178] sm:$0xff]
      %v282 = vld [vmem:[%s213 + $0x180] sm:$0xff]
      %v283 = vld [vmem:[%s213 + $0x188] sm:$0xff]
      %v284 = vld [vmem:[%s213 + $0x190] sm:$0xff]
      %v285 = vld [vmem:[%s213 + $0x198] sm:$0xff]
      %v286 = vld [vmem:[%s213 + $0x1a0] sm:$0xff]
      %v287 = vld [vmem:[%s213 + $0x1a8] sm:$0xff]
      %v288 = vld [vmem:[%s213 + $0x1b0] sm:$0xff]
      %v289 = vld [vmem:[%s213 + $0x1b8] sm:$0xff]
      %v290 = vld [vmem:[%s213 + $0x1c0] sm:$0xff]
      %v291 = vld [vmem:[%s213 + $0x1c8] sm:$0xff]
      %v292 = vld [vmem:[%s213 + $0x1d0] sm:$0xff]
      %v293 = vld [vmem:[%s213 + $0x1d8] sm:$0xff]
      %v294 = vld [vmem:[%s213 + $0x1e0] sm:$0xff]
      %v295 = vld [vmem:[%s213 + $0x1e8] sm:$0xff]
      %v296 = vld [vmem:[%s213 + $0x1f0] sm:$0xff]
      %v297 = vld [vmem:[%s213 + $0x1f8] sm:$0xff]
      %v298 = vld [vmem:[%s213 + $0x200] sm:$0xff]
      %v299 = vld [vmem:[%s213 + $0x208] sm:$0xff]
      %v300 = vld [vmem:[%s213 + $0x210] sm:$0xff]
      %v301 = vld [vmem:[%s213 + $0x218] sm:$0xff]
      %v302 = vld [vmem:[%s213 + $0x220] sm:$0xff]
      %v303 = vld [vmem:[%s213 + $0x228] sm:$0xff]
      %v304 = vld [vmem:[%s213 + $0x230] sm:$0xff]
      %v305 = vld [vmem:[%s213 + $0x238] sm:$0xff]
      %v306 = vld [vmem:[%s213 + $0x240] sm:$0xff]
      %v307 = vld [vmem:[%s213 + $0x248] sm:$0xff]
      %v308 = vld [vmem:[%s213 + $0x250] sm:$0xff]
      %v309 = vld [vmem:[%s213 + $0x258] sm:$0xff]
      %v310 = vld [vmem:[%s213 + $0x260] sm:$0xff]
      %v311 = vld [vmem:[%s213 + $0x268] sm:$0xff]
      %v312 = vld [vmem:[%s213 + $0x270] sm:$0xff]
      %v313 = vld [vmem:[%s213 + $0x278] sm:$0xff]
      %v314 = vld [vmem:[%s213 + $0x280] sm:$0xff]
      %v315 = vld [vmem:[%s213 + $0x288] sm:$0xff]
      %v316 = vld [vmem:[%s213 + $0x290] sm:$0xff]
      %v317 = vld [vmem:[%s213 + $0x298] sm:$0xff]
      %v318 = vld [vmem:[%s213 + $0x2a0] sm:$0xff]
      %v319 = vld [vmem:[%s213 + $0x2a8] sm:$0xff]
      %v320 = vld [vmem:[%s213 + $0x2b0] sm:$0xff]
      %v321 = vld [vmem:[%s213 + $0x2b8] sm:$0xff]
      %v322 = vld [vmem:[%s213 + $0x2c0] sm:$0xff]
      %v323 = vld [vmem:[%s213 + $0x2c8] sm:$0xff]
      %v324 = vld [vmem:[%s213 + $0x2d0] sm:$0xff]
      %v325 = vld [vmem:[%s213 + $0x2d8] sm:$0xff]
      %v326 = vld [vmem:[%s213 + $0x2e0] sm:$0xff]
      %v327 = vld [vmem:[%s213 + $0x2e8] sm:$0xff]
      %v328 = vld [vmem:[%s213 + $0x2f0] sm:$0xff]
      %v329 = vld [vmem:[%s213 + $0x2f8] sm:$0xff]
      %v330 = vld [vmem:[%s213 + $0x300] sm:$0xff]
      %v331 = vld [vmem:[%s213 + $0x308] sm:$0xff]
      %v332 = vld [vmem:[%s213 + $0x310] sm:$0xff]
      %v333 = vld [vmem:[%s213 + $0x318] sm:$0xff]
      %v334 = vld [vmem:[%s219] sm:$0xf]
      %v335 = vld [vmem:[%s219 + $0x4] sm:$0xf]
      %v336 = vld [vmem:[%s219 + $0x8] sm:$0xf]
      %v337 = vld [vmem:[%s219 + $0xc] sm:$0xf]
      %v338 = vld [vmem:[%s219 + $0x10] sm:$0xf]
      %v339 = vld [vmem:[%s219 + $0x14] sm:$0xf]
      %v340 = vld [vmem:[%s219 + $0x18] sm:$0xf]
      %v341 = vld [vmem:[%s219 + $0x1c] sm:$0xf]
      %v342 = vld [vmem:[%s219 + $0x20] sm:$0xf]
      %v343 = vld [vmem:[%s219 + $0x24] sm:$0xf]
      %v344 = vld [vmem:[%s219 + $0x28] sm:$0xf]
      %v345 = vld [vmem:[%s219 + $0x2c] sm:$0xf]
      %v346 = vld [vmem:[%s219 + $0x30] sm:$0xf]
      %v347 = vld [vmem:[%s219 + $0x34] sm:$0xf]
      %v348 = vld [vmem:[%s219 + $0x38] sm:$0xf]
      %v349 = vld [vmem:[%s219 + $0x3c] sm:$0xf]
      %v350 = vld [vmem:[%s219 + $0x40] sm:$0xf]
      %v351 = vld [vmem:[%s219 + $0x44] sm:$0xf]
      %v352 = vld [vmem:[%s219 + $0x48] sm:$0xf]
      %v353 = vld [vmem:[%s219 + $0x4c] sm:$0xf]
      %v354 = vld [vmem:[%s219 + $0x50] sm:$0xf]
      %v355 = vld [vmem:[%s219 + $0x54] sm:$0xf]
      %v356 = vld [vmem:[%s219 + $0x58] sm:$0xf]
      %v357 = vld [vmem:[%s219 + $0x5c] sm:$0xf]
      %v358 = vld [vmem:[%s219 + $0x60] sm:$0xf]
      %v359 = vld [vmem:[%s219 + $0x64] sm:$0xf]
      %v360 = vld [vmem:[%s219 + $0x68] sm:$0xf]
      %v361 = vld [vmem:[%s219 + $0x6c] sm:$0xf]
      %v362 = vld [vmem:[%s219 + $0x70] sm:$0xf]
      %v363 = vld [vmem:[%s219 + $0x74] sm:$0xf]
      %v364 = vld [vmem:[%s219 + $0x78] sm:$0xf]
      %v365 = vld [vmem:[%s219 + $0x7c] sm:$0xf]
      %v366 = vld [vmem:[%s222] sm:$0x1]
      %v368 = vlaneseq
      %v369 = vshrl.u32 %v368, 7
      %v370 = vsub.s32 0, %v369
      %v371 = vrot.slane %v366, %v370
      %v473 = vunpack.c.l.b16 %v234
      %v474 = vunpack.c.h.b16 %v234
      %v475 = vunpack.c.l.b16 %v235
      %v476 = vunpack.c.h.b16 %v235
      %v477 = vunpack.c.l.b16 %v236
      %v478 = vunpack.c.h.b16 %v236
      %v479 = vunpack.c.l.b16 %v237
      %v480 = vunpack.c.h.b16 %v237
      %v481 = vunpack.c.l.b16 %v238
      %v482 = vunpack.c.h.b16 %v238
      %v483 = vunpack.c.l.b16 %v239
      %v484 = vunpack.c.h.b16 %v239
      %v485 = vunpack.c.l.b16 %v240
      %v486 = vunpack.c.h.b16 %v240
      %v487 = vunpack.c.l.b16 %v241
      %v488 = vunpack.c.h.b16 %v241
      %v489 = vunpack.c.l.b16 %v242
      %v490 = vunpack.c.h.b16 %v242
      %v491 = vunpack.c.l.b16 %v243
      %v492 = vunpack.c.h.b16 %v243
      %v493 = vunpack.c.l.b16 %v244
      %v494 = vunpack.c.h.b16 %v244
      %v495 = vunpack.c.l.b16 %v245
      %v496 = vunpack.c.h.b16 %v245
      %v497 = vunpack.c.l.b16 %v246
      %v498 = vunpack.c.h.b16 %v246
      %v499 = vunpack.c.l.b16 %v247
      %v500 = vunpack.c.h.b16 %v247
      %v501 = vunpack.c.l.b16 %v248
      %v502 = vunpack.c.h.b16 %v248
      %v503 = vunpack.c.l.b16 %v249
      %v504 = vunpack.c.h.b16 %v249
      %v505 = vunpack.c.l.b16 %v250
      %v506 = vunpack.c.h.b16 %v250
      %v507 = vunpack.c.l.b16 %v251
      %v508 = vunpack.c.h.b16 %v251
      %v509 = vunpack.c.l.b16 %v252
      %v510 = vunpack.c.h.b16 %v252
      %v511 = vunpack.c.l.b16 %v253
      %v512 = vunpack.c.h.b16 %v253
      %v513 = vunpack.c.l.b16 %v254
      %v514 = vunpack.c.h.b16 %v254
      %v515 = vunpack.c.l.b16 %v255
      %v516 = vunpack.c.h.b16 %v255
      %v517 = vunpack.c.l.b16 %v256
      %v518 = vunpack.c.h.b16 %v256
      %v519 = vunpack.c.l.b16 %v257
      %v520 = vunpack.c.h.b16 %v257
      %v521 = vunpack.c.l.b16 %v258
      %v522 = vunpack.c.h.b16 %v258
      %v523 = vunpack.c.l.b16 %v259
      %v524 = vunpack.c.h.b16 %v259
      %v525 = vunpack.c.l.b16 %v260
      %v526 = vunpack.c.h.b16 %v260
      %v527 = vunpack.c.l.b16 %v261
      %v528 = vunpack.c.h.b16 %v261
      %v529 = vunpack.c.l.b16 %v262
      %v530 = vunpack.c.h.b16 %v262
      %v531 = vunpack.c.l.b16 %v263
      %v532 = vunpack.c.h.b16 %v263
      %v533 = vunpack.c.l.b16 %v264
      %v534 = vunpack.c.h.b16 %v264
      %v535 = vunpack.c.l.b16 %v265
      %v536 = vunpack.c.h.b16 %v265
      %v537 = vunpack.c.l.b16 %v266
      %v538 = vunpack.c.h.b16 %v266
      %v539 = vunpack.c.l.b16 %v267
      %v540 = vunpack.c.h.b16 %v267
      %v541 = vunpack.c.l.b16 %v268
      %v542 = vunpack.c.h.b16 %v268
      %v543 = vunpack.c.l.b16 %v269
      %v544 = vunpack.c.h.b16 %v269
      %v545 = vunpack.c.l.b16 %v270
      %v546 = vunpack.c.h.b16 %v270
      %v547 = vunpack.c.l.b16 %v271
      %v548 = vunpack.c.h.b16 %v271
      %v549 = vunpack.c.l.b16 %v272
      %v550 = vunpack.c.h.b16 %v272
      %v551 = vunpack.c.l.b16 %v273
      %v552 = vunpack.c.h.b16 %v273
      %v553 = vunpack.c.l.b16 %v274
      %v554 = vunpack.c.h.b16 %v274
      %v555 = vunpack.c.l.b16 %v275
      %v556 = vunpack.c.h.b16 %v275
      %v557 = vunpack.c.l.b16 %v276
      %v558 = vunpack.c.h.b16 %v276
      %v559 = vunpack.c.l.b16 %v277
      %v560 = vunpack.c.h.b16 %v277
      %v561 = vunpack.c.l.b16 %v278
      %v562 = vunpack.c.h.b16 %v278
      %v563 = vunpack.c.l.b16 %v279
      %v564 = vunpack.c.h.b16 %v279
      %v565 = vunpack.c.l.b16 %v280
      %v566 = vunpack.c.h.b16 %v280
      %v567 = vunpack.c.l.b16 %v281
      %v568 = vunpack.c.h.b16 %v281
      %v569 = vunpack.c.l.b16 %v282
      %v570 = vunpack.c.h.b16 %v282
      %v571 = vunpack.c.l.b16 %v283
      %v572 = vunpack.c.h.b16 %v283
      %v573 = vunpack.c.l.b16 %v284
      %v574 = vunpack.c.h.b16 %v284
      %v575 = vunpack.c.l.b16 %v285
      %v576 = vunpack.c.h.b16 %v285
      %v577 = vunpack.c.l.b16 %v286
      %v578 = vunpack.c.h.b16 %v286
      %v579 = vunpack.c.l.b16 %v287
      %v580 = vunpack.c.h.b16 %v287
      %v581 = vunpack.c.l.b16 %v288
      %v582 = vunpack.c.h.b16 %v288
      %v583 = vunpack.c.l.b16 %v289
      %v584 = vunpack.c.h.b16 %v289
      %v585 = vunpack.c.l.b16 %v290
      %v586 = vunpack.c.h.b16 %v290
      %v587 = vunpack.c.l.b16 %v291
      %v588 = vunpack.c.h.b16 %v291
      %v589 = vunpack.c.l.b16 %v292
      %v590 = vunpack.c.h.b16 %v292
      %v591 = vunpack.c.l.b16 %v293
      %v592 = vunpack.c.h.b16 %v293
      %v593 = vunpack.c.l.b16 %v294
      %v594 = vunpack.c.h.b16 %v294
      %v595 = vunpack.c.l.b16 %v295
      %v596 = vunpack.c.h.b16 %v295
      %v597 = vunpack.c.l.b16 %v296
      %v598 = vunpack.c.h.b16 %v296
      %v599 = vunpack.c.l.b16 %v297
      %v600 = vunpack.c.h.b16 %v297
      %v601 = vunpack.c.l.b16 %v298
      %v602 = vunpack.c.h.b16 %v298
      %v603 = vunpack.c.l.b16 %v299
      %v604 = vunpack.c.h.b16 %v299
      %v605 = vunpack.c.l.b16 %v300
      %v606 = vunpack.c.h.b16 %v300
      %v607 = vunpack.c.l.b16 %v301
      %v608 = vunpack.c.h.b16 %v301
      %v609 = vunpack.c.l.b16 %v302
      %v610 = vunpack.c.h.b16 %v302
      %v611 = vunpack.c.l.b16 %v303
      %v612 = vunpack.c.h.b16 %v303
      %v613 = vunpack.c.l.b16 %v304
      %v614 = vunpack.c.h.b16 %v304
      %v615 = vunpack.c.l.b16 %v305
      %v616 = vunpack.c.h.b16 %v305
      %v617 = vunpack.c.l.b16 %v306
      %v618 = vunpack.c.h.b16 %v306
      %v619 = vunpack.c.l.b16 %v307
      %v620 = vunpack.c.h.b16 %v307
      %v621 = vunpack.c.l.b16 %v308
      %v622 = vunpack.c.h.b16 %v308
      %v623 = vunpack.c.l.b16 %v309
      %v624 = vunpack.c.h.b16 %v309
      %v625 = vunpack.c.l.b16 %v310
      %v626 = vunpack.c.h.b16 %v310
      %v627 = vunpack.c.l.b16 %v311
      %v628 = vunpack.c.h.b16 %v311
      %v629 = vunpack.c.l.b16 %v312
      %v630 = vunpack.c.h.b16 %v312
      %v631 = vunpack.c.l.b16 %v313
      %v632 = vunpack.c.h.b16 %v313
      %v633 = vunpack.c.l.b16 %v314
      %v634 = vunpack.c.h.b16 %v314
      %v635 = vunpack.c.l.b16 %v315
      %v636 = vunpack.c.h.b16 %v315
      %v637 = vunpack.c.l.b16 %v316
      %v638 = vunpack.c.h.b16 %v316
      %v639 = vunpack.c.l.b16 %v317
      %v640 = vunpack.c.h.b16 %v317
      %v641 = vunpack.c.l.b16 %v318
      %v642 = vunpack.c.h.b16 %v318
      %v643 = vunpack.c.l.b16 %v319
      %v644 = vunpack.c.h.b16 %v319
      %v645 = vunpack.c.l.b16 %v320
      %v646 = vunpack.c.h.b16 %v320
      %v647 = vunpack.c.l.b16 %v321
      %v648 = vunpack.c.h.b16 %v321
      %v649 = vunpack.c.l.b16 %v322
      %v650 = vunpack.c.h.b16 %v322
      %v651 = vunpack.c.l.b16 %v323
      %v652 = vunpack.c.h.b16 %v323
      %v653 = vunpack.c.l.b16 %v324
      %v654 = vunpack.c.h.b16 %v324
      %v655 = vunpack.c.l.b16 %v325
      %v656 = vunpack.c.h.b16 %v325
      %v657 = vunpack.c.l.b16 %v326
      %v658 = vunpack.c.h.b16 %v326
      %v659 = vunpack.c.l.b16 %v327
      %v660 = vunpack.c.h.b16 %v327
      %v661 = vunpack.c.l.b16 %v328
      %v662 = vunpack.c.h.b16 %v328
      %v663 = vunpack.c.l.b16 %v329
      %v664 = vunpack.c.h.b16 %v329
      %v665 = vunpack.c.l.b16 %v330
      %v666 = vunpack.c.h.b16 %v330
      %v667 = vunpack.c.l.b16 %v331
      %v668 = vunpack.c.h.b16 %v331
      %v669 = vunpack.c.l.b16 %v332
      %v670 = vunpack.c.h.b16 %v332
      %v671 = vunpack.c.l.b16 %v333
      %v672 = vunpack.c.h.b16 %v333
      %v673 = vpack.c.b16 %v475, %v473
      %v674 = vpack.c.b16 %v476, %v474
      %v675 = vpack.c.b16 %v479, %v477
      %v676 = vpack.c.b16 %v480, %v478
      %v677 = vpack.c.b16 %v483, %v481
      %v678 = vpack.c.b16 %v484, %v482
      %v679 = vpack.c.b16 %v487, %v485
      %v680 = vpack.c.b16 %v488, %v486
      %v681 = vpack.c.b16 %v491, %v489
      %v682 = vpack.c.b16 %v492, %v490
      %v683 = vpack.c.b16 %v495, %v493
      %v684 = vpack.c.b16 %v496, %v494
      %v685 = vpack.c.b16 %v499, %v497
      %v686 = vpack.c.b16 %v500, %v498
      %v687 = vpack.c.b16 %v503, %v501
      %v688 = vpack.c.b16 %v504, %v502
      %v689 = vpack.c.b16 %v507, %v505
      %v690 = vpack.c.b16 %v508, %v506
      %v691 = vpack.c.b16 %v511, %v509
      %v692 = vpack.c.b16 %v512, %v510
      %v693 = vpack.c.b16 %v515, %v513
      %v694 = vpack.c.b16 %v516, %v514
      %v695 = vpack.c.b16 %v519, %v517
      %v696 = vpack.c.b16 %v520, %v518
      %v697 = vpack.c.b16 %v523, %v521
      %v698 = vpack.c.b16 %v524, %v522
      %v699 = vpack.c.b16 %v527, %v525
      %v700 = vpack.c.b16 %v528, %v526
      %v701 = vpack.c.b16 %v531, %v529
      %v702 = vpack.c.b16 %v532, %v530
      %v703 = vpack.c.b16 %v535, %v533
      %v704 = vpack.c.b16 %v536, %v534
      %v705 = vpack.c.b16 %v539, %v537
      %v706 = vpack.c.b16 %v540, %v538
      %v707 = vpack.c.b16 %v543, %v541
      %v708 = vpack.c.b16 %v544, %v542
      %v709 = vpack.c.b16 %v547, %v545
      %v710 = vpack.c.b16 %v548, %v546
      %v711 = vpack.c.b16 %v551, %v549
      %v712 = vpack.c.b16 %v552, %v550
      %v713 = vpack.c.b16 %v555, %v553
      %v714 = vpack.c.b16 %v556, %v554
      %v715 = vpack.c.b16 %v559, %v557
      %v716 = vpack.c.b16 %v560, %v558
      %v717 = vpack.c.b16 %v563, %v561
      %v718 = vpack.c.b16 %v564, %v562
      %v719 = vpack.c.b16 %v567, %v565
      %v720 = vpack.c.b16 %v568, %v566
      %v721 = vpack.c.b16 %v571, %v569
      %v722 = vpack.c.b16 %v572, %v570
      %v723 = vpack.c.b16 %v575, %v573
      %v724 = vpack.c.b16 %v576, %v574
      %v725 = vpack.c.b16 %v579, %v577
      %v726 = vpack.c.b16 %v580, %v578
      %v727 = vpack.c.b16 %v583, %v581
      %v728 = vpack.c.b16 %v584, %v582
      %v729 = vpack.c.b16 %v587, %v585
      %v730 = vpack.c.b16 %v588, %v586
      %v731 = vpack.c.b16 %v591, %v589
      %v732 = vpack.c.b16 %v592, %v590
      %v733 = vpack.c.b16 %v595, %v593
      %v734 = vpack.c.b16 %v596, %v594
      %v735 = vpack.c.b16 %v599, %v597
      %v736 = vpack.c.b16 %v600, %v598
      %v737 = vpack.c.b16 %v603, %v601
      %v738 = vpack.c.b16 %v604, %v602
      %v739 = vpack.c.b16 %v607, %v605
      %v740 = vpack.c.b16 %v608, %v606
      %v741 = vpack.c.b16 %v611, %v609
      %v742 = vpack.c.b16 %v612, %v610
      %v743 = vpack.c.b16 %v615, %v613
      %v744 = vpack.c.b16 %v616, %v614
      %v745 = vpack.c.b16 %v619, %v617
      %v746 = vpack.c.b16 %v620, %v618
      %v747 = vpack.c.b16 %v623, %v621
      %v748 = vpack.c.b16 %v624, %v622
      %v749 = vpack.c.b16 %v627, %v625
      %v750 = vpack.c.b16 %v628, %v626
      %v751 = vpack.c.b16 %v631, %v629
      %v752 = vpack.c.b16 %v632, %v630
      %v753 = vpack.c.b16 %v635, %v633
      %v754 = vpack.c.b16 %v636, %v634
      %v755 = vpack.c.b16 %v639, %v637
      %v756 = vpack.c.b16 %v640, %v638
      %v757 = vpack.c.b16 %v643, %v641
      %v758 = vpack.c.b16 %v644, %v642
      %v759 = vpack.c.b16 %v647, %v645
      %v760 = vpack.c.b16 %v648, %v646
      %v761 = vpack.c.b16 %v651, %v649
      %v762 = vpack.c.b16 %v652, %v650
      %v763 = vpack.c.b16 %v655, %v653
      %v764 = vpack.c.b16 %v656, %v654
      %v765 = vpack.c.b16 %v659, %v657
      %v766 = vpack.c.b16 %v660, %v658
      %v767 = vpack.c.b16 %v663, %v661
      %v768 = vpack.c.b16 %v664, %v662
      %v769 = vpack.c.b16 %v667, %v665
      %v770 = vpack.c.b16 %v668, %v666
      %v771 = vpack.c.b16 %v671, %v669
      %v772 = vpack.c.b16 %v672, %v670
      %v905 = vunpack.c.l.b16 %v334
      %v906 = vunpack.c.l.b16 %v335
      %v907 = vunpack.c.l.b16 %v336
      %v908 = vunpack.c.l.b16 %v337
      %v909 = vunpack.c.l.b16 %v338
      %v910 = vunpack.c.l.b16 %v339
      %v911 = vunpack.c.l.b16 %v340
      %v912 = vunpack.c.l.b16 %v341
      %v913 = vunpack.c.l.b16 %v342
      %v914 = vunpack.c.l.b16 %v343
      %v915 = vunpack.c.l.b16 %v344
      %v916 = vunpack.c.l.b16 %v345
      %v917 = vunpack.c.l.b16 %v346
      %v918 = vunpack.c.l.b16 %v347
      %v919 = vunpack.c.l.b16 %v348
      %v920 = vunpack.c.l.b16 %v349
      %v921 = vunpack.c.l.b16 %v350
      %v922 = vunpack.c.l.b16 %v351
      %v923 = vunpack.c.l.b16 %v352
      %v924 = vunpack.c.l.b16 %v353
      %v925 = vunpack.c.l.b16 %v354
      %v926 = vunpack.c.l.b16 %v355
      %v927 = vunpack.c.l.b16 %v356
      %v928 = vunpack.c.l.b16 %v357
      %v929 = vunpack.c.l.b16 %v358
      %v930 = vunpack.c.l.b16 %v359
      %v931 = vunpack.c.l.b16 %v360
      %v932 = vunpack.c.l.b16 %v361
      %v933 = vunpack.c.l.b16 %v362
      %v934 = vunpack.c.l.b16 %v363
      %v935 = vunpack.c.l.b16 %v364
      %v936 = vunpack.c.l.b16 %v365
      %v937 = vpack.c.b16 %v906, %v905
      %v938 = vpack.c.b16 %v908, %v907
      %v939 = vpack.c.b16 %v910, %v909
      %v940 = vpack.c.b16 %v912, %v911
      %v941 = vpack.c.b16 %v914, %v913
      %v942 = vpack.c.b16 %v916, %v915
      %v943 = vpack.c.b16 %v918, %v917
      %v944 = vpack.c.b16 %v920, %v919
      %v945 = vpack.c.b16 %v922, %v921
      %v946 = vpack.c.b16 %v924, %v923
      %v947 = vpack.c.b16 %v926, %v925
      %v948 = vpack.c.b16 %v928, %v927
      %v949 = vpack.c.b16 %v930, %v929
      %v950 = vpack.c.b16 %v932, %v931
      %v951 = vpack.c.b16 %v934, %v933
      %v952 = vpack.c.b16 %v936, %v935
      %969 = vmatprep.subr.bf16.mxu0 0
      %970 = vmatpush1.bf16.msra.mxu0 %v937
      %971 = vmatprep.subr.bf16.mxu0 0
      %972 = vmatpush1.bf16.msra.mxu0 %v938
      %973 = vmatprep.subr.bf16.mxu0 0
      %974 = vmatpush1.bf16.msra.mxu0 %v939
      %975 = vmatprep.subr.bf16.mxu0 0
      %976 = vmatpush1.bf16.msra.mxu0 %v940
      %977 = vmatprep.subr.bf16.mxu0 0
      %978 = vmatpush1.bf16.msra.mxu0 %v941
      %979 = vmatprep.subr.bf16.mxu0 0
      %980 = vmatpush1.bf16.msra.mxu0 %v942
      %981 = vmatprep.subr.bf16.mxu0 0
      %982 = vmatpush1.bf16.msra.mxu0 %v943
      %983 = vmatprep.subr.bf16.mxu0 0
      %984 = vmatpush1.bf16.msra.mxu0 %v944
      %985 = vmatprep.subr.bf16.mxu0 0
      %986 = vmatpush1.bf16.msra.mxu0 %v945
      %987 = vmatprep.subr.bf16.mxu0 0
      %988 = vmatpush1.bf16.msra.mxu0 %v946
      %989 = vmatprep.subr.bf16.mxu0 0
      %990 = vmatpush1.bf16.msra.mxu0 %v947
      %991 = vmatprep.subr.bf16.mxu0 0
      %992 = vmatpush1.bf16.msra.mxu0 %v948
      %993 = vmatprep.subr.bf16.mxu0 0
      %994 = vmatpush1.bf16.msra.mxu0 %v949
      %995 = vmatprep.subr.bf16.mxu0 0
      %996 = vmatpush1.bf16.msra.mxu0 %v950
      %997 = vmatprep.subr.bf16.mxu0 0
      %998 = vmatpush1.bf16.msra.mxu0 %v951
      %999 = vmatprep.subr.bf16.mxu0 0
      %1000 = vmatpush1.bf16.msra.mxu0 %v952
      %1001 = vmatprep.mubr.bf16.mxu0 %v674
      %1002 = vmatmul.mubr.bf16.gmra.mrb[0].mxu0 %v673
      %v1003 = vpop.f32.mrb[0].mxu0
      %v1004 = vadd.f32 %v371, %v1003
      %v1005 = vpop.f32.mrb[0].mxu0
      %v1006 = vpop.f32.mrb[0].mxu0
      %v1007 = vadd.f32 %v371, %v1006
      %v1008 = vpop.f32.mrb[0].mxu0
      %1009 = vmatprep.mubr.bf16.mxu0 %v676
      %1010 = vmatmul.mubr.bf16.gmra.mrb[0].mxu0 %v675
      %v1011 = vpop.f32.mrb[0].mxu0
      %v1012 = vadd.f32 %v371, %v1011
      %v1013 = vpop.f32.mrb[0].mxu0
      %v1014 = vpop.f32.mrb[0].mxu0
      %v1015 = vadd.f32 %v371, %v1014
      %v1016 = vpop.f32.mrb[0].mxu0
      %1017 = vmatprep.mubr.bf16.mxu0 %v678
      %1018 = vmatmul.mubr.bf16.gmra.mrb[0].mxu0 %v677
      %v1019 = vpop.f32.mrb[0].mxu0
      %v1020 = vadd.f32 %v371, %v1019
      %v1021 = vpop.f32.mrb[0].mxu0
      %v1022 = vpop.f32.mrb[0].mxu0
      %v1023 = vadd.f32 %v371, %v1022
      %v1024 = vpop.f32.mrb[0].mxu0
      %1025 = vmatprep.mubr.bf16.mxu0 %v680
      %1026 = vmatmul.mubr.bf16.gmra.mrb[0].mxu0 %v679
      %v1027 = vpop.f32.mrb[0].mxu0
      %v1028 = vadd.f32 %v371, %v1027
      %v1029 = vpop.f32.mrb[0].mxu0
      %v1030 = vpop.f32.mrb[0].mxu0
      %v1031 = vadd.f32 %v371, %v1030
      %v1032 = vpop.f32.mrb[0].mxu0
      %1033 = vmatprep.mubr.bf16.mxu0 %v682
      %1034 = vmatmul.mubr.bf16.gmra.mrb[0].mxu0 %v681
      %v1035 = vpop.f32.mrb[0].mxu0
      %v1036 = vadd.f32 %v371, %v1035
      %v1037 = vpop.f32.mrb[0].mxu0
      %v1038 = vpop.f32.mrb[0].mxu0
      %v1039 = vadd.f32 %v371, %v1038
      %v1040 = vpop.f32.mrb[0].mxu0
      %1041 = vmatprep.mubr.bf16.mxu0 %v684
      %1042 = vmatmul.mubr.bf16.gmra.mrb[0].mxu0 %v683
      %v1043 = vpop.f32.mrb[0].mxu0
      %v1044 = vadd.f32 %v371, %v1043
      %v1045 = vpop.f32.mrb[0].mxu0
      %v1046 = vpop.f32.mrb[0].mxu0
      %v1047 = vadd.f32 %v371, %v1046
      %v1048 = vpop.f32.mrb[0].mxu0
      %1049 = vmatprep.mubr.bf16.mxu0 %v686
      %1050 = vmatmul.mubr.bf16.gmra.mrb[0].mxu0 %v685
      %v1051 = vpop.f32.mrb[0].mxu0
      %v1052 = vadd.f32 %v371, %v1051
      %v1053 = vpop.f32.mrb[0].mxu0
      %v1054 = vpop.f32.mrb[0].mxu0
      %v1055 = vadd.f32 %v371, %v1054
      %v1056 = vpop.f32.mrb[0].mxu0
      %1057 = vmatprep.mubr.bf16.mxu0 %v688
      %1058 = vmatmul.mubr.bf16.gmra.mrb[0].mxu0 %v687
      %v1059 = vpop.f32.mrb[0].mxu0
      %v1060 = vadd.f32 %v371, %v1059
      %v1061 = vpop.f32.mrb[0].mxu0
      %v1062 = vpop.f32.mrb[0].mxu0
      %v1063 = vadd.f32 %v371, %v1062
      %v1064 = vpop.f32.mrb[0].mxu0
      %1065 = vmatprep.mubr.bf16.mxu0 %v690
      %1066 = vmatmul.mubr.bf16.gmra.mrb[0].mxu0 %v689
      %v1067 = vpop.f32.mrb[0].mxu0
      %v1068 = vadd.f32 %v371, %v1067
      %v1069 = vpop.f32.mrb[0].mxu0
      %v1070 = vpop.f32.mrb[0].mxu0
      %v1071 = vadd.f32 %v371, %v1070
      %v1072 = vpop.f32.mrb[0].mxu0
      %1073 = vmatprep.mubr.bf16.mxu0 %v692
      %1074 = vmatmul.mubr.bf16.gmra.mrb[0].mxu0 %v691
      %v1075 = vpop.f32.mrb[0].mxu0
      %v1076 = vadd.f32 %v371, %v1075
      %v1077 = vpop.f32.mrb[0].mxu0
      %v1078 = vpop.f32.mrb[0].mxu0
      %v1079 = vadd.f32 %v371, %v1078
      %v1080 = vpop.f32.mrb[0].mxu0
      %1081 = vmatprep.mubr.bf16.mxu0 %v694
      %1082 = vmatmul.mubr.bf16.gmra.mrb[0].mxu0 %v693
      %v1083 = vpop.f32.mrb[0].mxu0
      %v1084 = vadd.f32 %v371, %v1083
      %v1085 = vpop.f32.mrb[0].mxu0
      %v1086 = vpop.f32.mrb[0].mxu0
      %v1087 = vadd.f32 %v371, %v1086
      %v1088 = vpop.f32.mrb[0].mxu0
      %1089 = vmatprep.mubr.bf16.mxu0 %v696
      %1090 = vmatmul.mubr.bf16.gmra.mrb[0].mxu0 %v695
      %v1091 = vpop.f32.mrb[0].mxu0
      %v1092 = vadd.f32 %v371, %v1091
      %v1093 = vpop.f32.mrb[0].mxu0
      %v1094 = vpop.f32.mrb[0].mxu0
      %v1095 = vadd.f32 %v371, %v1094
      %v1096 = vpop.f32.mrb[0].mxu0
      %1097 = vmatprep.mubr.bf16.mxu0 %v698
      %1098 = vmatmul.mubr.bf16.gmra.mrb[0].mxu0 %v697
      %v1099 = vpop.f32.mrb[0].mxu0
      %v1100 = vadd.f32 %v371, %v1099
      %v1101 = vpop.f32.mrb[0].mxu0
      %v1102 = vpop.f32.mrb[0].mxu0
      %v1103 = vadd.f32 %v371, %v1102
      %v1104 = vpop.f32.mrb[0].mxu0
      %1105 = vmatprep.mubr.bf16.mxu0 %v700
      %1106 = vmatmul.mubr.bf16.gmra.mrb[0].mxu0 %v699
      %v1107 = vpop.f32.mrb[0].mxu0
      %v1108 = vadd.f32 %v371, %v1107
      %v1109 = vpop.f32.mrb[0].mxu0
      %v1110 = vpop.f32.mrb[0].mxu0
      %v1111 = vadd.f32 %v371, %v1110
      %v1112 = vpop.f32.mrb[0].mxu0
      %1113 = vmatprep.mubr.bf16.mxu0 %v702
      %1114 = vmatmul.mubr.bf16.gmra.mrb[0].mxu0 %v701
      %v1115 = vpop.f32.mrb[0].mxu0
      %v1116 = vadd.f32 %v371, %v1115
      %v1117 = vpop.f32.mrb[0].mxu0
      %v1118 = vpop.f32.mrb[0].mxu0
      %v1119 = vadd.f32 %v371, %v1118
      %v1120 = vpop.f32.mrb[0].mxu0
      %1121 = vmatprep.mubr.bf16.mxu0 %v704
      %1122 = vmatmul.mubr.bf16.gmra.mrb[0].mxu0 %v703
      %v1123 = vpop.f32.mrb[0].mxu0
      %v1124 = vadd.f32 %v371, %v1123
      %v1125 = vpop.f32.mrb[0].mxu0
      %v1126 = vpop.f32.mrb[0].mxu0
      %v1127 = vadd.f32 %v371, %v1126
      %v1128 = vpop.f32.mrb[0].mxu0
      %1129 = vmatprep.mubr.bf16.mxu0 %v706
      %1130 = vmatmul.mubr.bf16.gmra.mrb[0].mxu0 %v705
      %v1131 = vpop.f32.mrb[0].mxu0
      %v1132 = vadd.f32 %v371, %v1131
      %v1133 = vpop.f32.mrb[0].mxu0
      %v1134 = vpop.f32.mrb[0].mxu0
      %v1135 = vadd.f32 %v371, %v1134
      %v1136 = vpop.f32.mrb[0].mxu0
      %1137 = vmatprep.mubr.bf16.mxu0 %v708
      %1138 = vmatmul.mubr.bf16.gmra.mrb[0].mxu0 %v707
      %v1139 = vpop.f32.mrb[0].mxu0
      %v1140 = vadd.f32 %v371, %v1139
      %v1141 = vpop.f32.mrb[0].mxu0
      %v1142 = vpop.f32.mrb[0].mxu0
      %v1143 = vadd.f32 %v371, %v1142
      %v1144 = vpop.f32.mrb[0].mxu0
      %1145 = vmatprep.mubr.bf16.mxu0 %v710
      %1146 = vmatmul.mubr.bf16.gmra.mrb[0].mxu0 %v709
      %v1147 = vpop.f32.mrb[0].mxu0
      %v1148 = vadd.f32 %v371, %v1147
      %v1149 = vpop.f32.mrb[0].mxu0
      %v1150 = vpop.f32.mrb[0].mxu0
      %v1151 = vadd.f32 %v371, %v1150
      %v1152 = vpop.f32.mrb[0].mxu0
      %1153 = vmatprep.mubr.bf16.mxu0 %v712
      %1154 = vmatmul.mubr.bf16.gmra.mrb[0].mxu0 %v711
      %v1155 = vpop.f32.mrb[0].mxu0
      %v1156 = vadd.f32 %v371, %v1155
      %v1157 = vpop.f32.mrb[0].mxu0
      %v1158 = vpop.f32.mrb[0].mxu0
      %v1159 = vadd.f32 %v371, %v1158
      %v1160 = vpop.f32.mrb[0].mxu0
      %1161 = vmatprep.mubr.bf16.mxu0 %v714
      %1162 = vmatmul.mubr.bf16.gmra.mrb[0].mxu0 %v713
      %v1163 = vpop.f32.mrb[0].mxu0
      %v1164 = vadd.f32 %v371, %v1163
      %v1165 = vpop.f32.mrb[0].mxu0
      %v1166 = vpop.f32.mrb[0].mxu0
      %v1167 = vadd.f32 %v371, %v1166
      %v1168 = vpop.f32.mrb[0].mxu0
      %1169 = vmatprep.mubr.bf16.mxu0 %v716
      %1170 = vmatmul.mubr.bf16.gmra.mrb[0].mxu0 %v715
      %v1171 = vpop.f32.mrb[0].mxu0
      %v1172 = vadd.f32 %v371, %v1171
      %v1173 = vpop.f32.mrb[0].mxu0
      %v1174 = vpop.f32.mrb[0].mxu0
      %v1175 = vadd.f32 %v371, %v1174
      %v1176 = vpop.f32.mrb[0].mxu0
      %1177 = vmatprep.mubr.bf16.mxu0 %v718
      %1178 = vmatmul.mubr.bf16.gmra.mrb[0].mxu0 %v717
      %v1179 = vpop.f32.mrb[0].mxu0
      %v1180 = vadd.f32 %v371, %v1179
      %v1181 = vpop.f32.mrb[0].mxu0
      %v1182 = vpop.f32.mrb[0].mxu0
      %v1183 = vadd.f32 %v371, %v1182
      %v1184 = vpop.f32.mrb[0].mxu0
      %1185 = vmatprep.mubr.bf16.mxu0 %v720
      %1186 = vmatmul.mubr.bf16.gmra.mrb[0].mxu0 %v719
      %v1187 = vpop.f32.mrb[0].mxu0
      %v1188 = vadd.f32 %v371, %v1187
      %v1189 = vpop.f32.mrb[0].mxu0
      %v1190 = vpop.f32.mrb[0].mxu0
      %v1191 = vadd.f32 %v371, %v1190
      %v1192 = vpop.f32.mrb[0].mxu0
      %1193 = vmatprep.mubr.bf16.mxu0 %v722
      %1194 = vmatmul.mubr.bf16.gmra.mrb[0].mxu0 %v721
      %v1195 = vpop.f32.mrb[0].mxu0
      %v1196 = vadd.f32 %v371, %v1195
      %v1197 = vpop.f32.mrb[0].mxu0
      %v1198 = vpop.f32.mrb[0].mxu0
      %v1199 = vadd.f32 %v371, %v1198
      %v1200 = vpop.f32.mrb[0].mxu0
      %1201 = vmatprep.mubr.bf16.mxu0 %v724
      %1202 = vmatmul.mubr.bf16.gmra.mrb[0].mxu0 %v723
      %v1203 = vpop.f32.mrb[0].mxu0
      %v1204 = vadd.f32 %v371, %v1203
      %v1205 = vpop.f32.mrb[0].mxu0
      %v1206 = vpop.f32.mrb[0].mxu0
      %v1207 = vadd.f32 %v371, %v1206
      %v1208 = vpop.f32.mrb[0].mxu0
      %1209 = vmatprep.mubr.bf16.mxu0 %v726
      %1210 = vmatmul.mubr.bf16.gmra.mrb[0].mxu0 %v725
      %v1211 = vpop.f32.mrb[0].mxu0
      %v1212 = vadd.f32 %v371, %v1211
      %v1213 = vpop.f32.mrb[0].mxu0
      %v1214 = vpop.f32.mrb[0].mxu0
      %v1215 = vadd.f32 %v371, %v1214
      %v1216 = vpop.f32.mrb[0].mxu0
      %1217 = vmatprep.mubr.bf16.mxu0 %v728
      %1218 = vmatmul.mubr.bf16.gmra.mrb[0].mxu0 %v727
      %v1219 = vpop.f32.mrb[0].mxu0
      %v1220 = vadd.f32 %v371, %v1219
      %v1221 = vpop.f32.mrb[0].mxu0
      %v1222 = vpop.f32.mrb[0].mxu0
      %v1223 = vadd.f32 %v371, %v1222
      %v1224 = vpop.f32.mrb[0].mxu0
      %1225 = vmatprep.mubr.bf16.mxu0 %v730
      %1226 = vmatmul.mubr.bf16.gmra.mrb[0].mxu0 %v729
      %v1227 = vpop.f32.mrb[0].mxu0
      %v1228 = vadd.f32 %v371, %v1227
      %v1229 = vpop.f32.mrb[0].mxu0
      %v1230 = vpop.f32.mrb[0].mxu0
      %v1231 = vadd.f32 %v371, %v1230
      %v1232 = vpop.f32.mrb[0].mxu0
      %1233 = vmatprep.mubr.bf16.mxu0 %v732
      %1234 = vmatmul.mubr.bf16.gmra.mrb[0].mxu0 %v731
      %v1235 = vpop.f32.mrb[0].mxu0
      %v1236 = vadd.f32 %v371, %v1235
      %v1237 = vpop.f32.mrb[0].mxu0
      %v1238 = vpop.f32.mrb[0].mxu0
      %v1239 = vadd.f32 %v371, %v1238
      %v1240 = vpop.f32.mrb[0].mxu0
      %1241 = vmatprep.mubr.bf16.mxu0 %v734
      %1242 = vmatmul.mubr.bf16.gmra.mrb[0].mxu0 %v733
      %v1243 = vpop.f32.mrb[0].mxu0
      %v1244 = vadd.f32 %v371, %v1243
      %v1245 = vpop.f32.mrb[0].mxu0
      %v1246 = vpop.f32.mrb[0].mxu0
      %v1247 = vadd.f32 %v371, %v1246
      %v1248 = vpop.f32.mrb[0].mxu0
      %1249 = vmatprep.mubr.bf16.mxu0 %v736
      %1250 = vmatmul.mubr.bf16.gmra.mrb[0].mxu0 %v735
      %v1251 = vpop.f32.mrb[0].mxu0
      %v1252 = vadd.f32 %v371, %v1251
      %v1253 = vpop.f32.mrb[0].mxu0
      %v1254 = vpop.f32.mrb[0].mxu0
      %v1255 = vadd.f32 %v371, %v1254
      %v1256 = vpop.f32.mrb[0].mxu0
      %1257 = vmatprep.mubr.bf16.mxu0 %v738
      %1258 = vmatmul.mubr.bf16.gmra.mrb[0].mxu0 %v737
      %v1259 = vpop.f32.mrb[0].mxu0
      %v1260 = vadd.f32 %v371, %v1259
      %v1261 = vpop.f32.mrb[0].mxu0
      %v1262 = vpop.f32.mrb[0].mxu0
      %v1263 = vadd.f32 %v371, %v1262
      %v1264 = vpop.f32.mrb[0].mxu0
      %1265 = vmatprep.mubr.bf16.mxu0 %v740
      %1266 = vmatmul.mubr.bf16.gmra.mrb[0].mxu0 %v739
      %v1267 = vpop.f32.mrb[0].mxu0
      %v1268 = vadd.f32 %v371, %v1267
      %v1269 = vpop.f32.mrb[0].mxu0
      %v1270 = vpop.f32.mrb[0].mxu0
      %v1271 = vadd.f32 %v371, %v1270
      %v1272 = vpop.f32.mrb[0].mxu0
      %1273 = vmatprep.mubr.bf16.mxu0 %v742
      %1274 = vmatmul.mubr.bf16.gmra.mrb[0].mxu0 %v741
      %v1275 = vpop.f32.mrb[0].mxu0
      %v1276 = vadd.f32 %v371, %v1275
      %v1277 = vpop.f32.mrb[0].mxu0
      %v1278 = vpop.f32.mrb[0].mxu0
      %v1279 = vadd.f32 %v371, %v1278
      %v1280 = vpop.f32.mrb[0].mxu0
      %1281 = vmatprep.mubr.bf16.mxu0 %v744
      %1282 = vmatmul.mubr.bf16.gmra.mrb[0].mxu0 %v743
      %v1283 = vpop.f32.mrb[0].mxu0
      %v1284 = vadd.f32 %v371, %v1283
      %v1285 = vpop.f32.mrb[0].mxu0
      %v1286 = vpop.f32.mrb[0].mxu0
      %v1287 = vadd.f32 %v371, %v1286
      %v1288 = vpop.f32.mrb[0].mxu0
      %1289 = vmatprep.mubr.bf16.mxu0 %v746
      %1290 = vmatmul.mubr.bf16.gmra.mrb[0].mxu0 %v745
      %v1291 = vpop.f32.mrb[0].mxu0
      %v1292 = vadd.f32 %v371, %v1291
      %v1293 = vpop.f32.mrb[0].mxu0
      %v1294 = vpop.f32.mrb[0].mxu0
      %v1295 = vadd.f32 %v371, %v1294
      %v1296 = vpop.f32.mrb[0].mxu0
      %1297 = vmatprep.mubr.bf16.mxu0 %v748
      %1298 = vmatmul.mubr.bf16.gmra.mrb[0].mxu0 %v747
      %v1299 = vpop.f32.mrb[0].mxu0
      %v1300 = vadd.f32 %v371, %v1299
      %v1301 = vpop.f32.mrb[0].mxu0
      %v1302 = vpop.f32.mrb[0].mxu0
      %v1303 = vadd.f32 %v371, %v1302
      %v1304 = vpop.f32.mrb[0].mxu0
      %1305 = vmatprep.mubr.bf16.mxu0 %v750
      %1306 = vmatmul.mubr.bf16.gmra.mrb[0].mxu0 %v749
      %v1307 = vpop.f32.mrb[0].mxu0
      %v1308 = vadd.f32 %v371, %v1307
      %v1309 = vpop.f32.mrb[0].mxu0
      %v1310 = vpop.f32.mrb[0].mxu0
      %v1311 = vadd.f32 %v371, %v1310
      %v1312 = vpop.f32.mrb[0].mxu0
      %1313 = vmatprep.mubr.bf16.mxu0 %v752
      %1314 = vmatmul.mubr.bf16.gmra.mrb[0].mxu0 %v751
      %v1315 = vpop.f32.mrb[0].mxu0
      %v1316 = vadd.f32 %v371, %v1315
      %v1317 = vpop.f32.mrb[0].mxu0
      %v1318 = vpop.f32.mrb[0].mxu0
      %v1319 = vadd.f32 %v371, %v1318
      %v1320 = vpop.f32.mrb[0].mxu0
      %1321 = vmatprep.mubr.bf16.mxu0 %v754
      %1322 = vmatmul.mubr.bf16.gmra.mrb[0].mxu0 %v753
      %v1323 = vpop.f32.mrb[0].mxu0
      %v1324 = vadd.f32 %v371, %v1323
      %v1325 = vpop.f32.mrb[0].mxu0
      %v1326 = vpop.f32.mrb[0].mxu0
      %v1327 = vadd.f32 %v371, %v1326
      %v1328 = vpop.f32.mrb[0].mxu0
      %1329 = vmatprep.mubr.bf16.mxu0 %v756
      %1330 = vmatmul.mubr.bf16.gmra.mrb[0].mxu0 %v755
      %v1331 = vpop.f32.mrb[0].mxu0
      %v1332 = vadd.f32 %v371, %v1331
      %v1333 = vpop.f32.mrb[0].mxu0
      %v1334 = vpop.f32.mrb[0].mxu0
      %v1335 = vadd.f32 %v371, %v1334
      %v1336 = vpop.f32.mrb[0].mxu0
      %1337 = vmatprep.mubr.bf16.mxu0 %v758
      %1338 = vmatmul.mubr.bf16.gmra.mrb[0].mxu0 %v757
      %v1339 = vpop.f32.mrb[0].mxu0
      %v1340 = vadd.f32 %v371, %v1339
      %v1341 = vpop.f32.mrb[0].mxu0
      %v1342 = vpop.f32.mrb[0].mxu0
      %v1343 = vadd.f32 %v371, %v1342
      %v1344 = vpop.f32.mrb[0].mxu0
      %1345 = vmatprep.mubr.bf16.mxu0 %v760
      %1346 = vmatmul.mubr.bf16.gmra.mrb[0].mxu0 %v759
      %v1347 = vpop.f32.mrb[0].mxu0
      %v1348 = vadd.f32 %v371, %v1347
      %v1349 = vpop.f32.mrb[0].mxu0
      %v1350 = vpop.f32.mrb[0].mxu0
      %v1351 = vadd.f32 %v371, %v1350
      %v1352 = vpop.f32.mrb[0].mxu0
      %1353 = vmatprep.mubr.bf16.mxu0 %v762
      %1354 = vmatmul.mubr.bf16.gmra.mrb[0].mxu0 %v761
      %v1355 = vpop.f32.mrb[0].mxu0
      %v1356 = vadd.f32 %v371, %v1355
      %v1357 = vpop.f32.mrb[0].mxu0
      %v1358 = vpop.f32.mrb[0].mxu0
      %v1359 = vadd.f32 %v371, %v1358
      %v1360 = vpop.f32.mrb[0].mxu0
      %1361 = vmatprep.mubr.bf16.mxu0 %v764
      %1362 = vmatmul.mubr.bf16.gmra.mrb[0].mxu0 %v763
      %v1363 = vpop.f32.mrb[0].mxu0
      %v1364 = vadd.f32 %v371, %v1363
      %v1365 = vpop.f32.mrb[0].mxu0
      %v1366 = vpop.f32.mrb[0].mxu0
      %v1367 = vadd.f32 %v371, %v1366
      %v1368 = vpop.f32.mrb[0].mxu0
      %1369 = vmatprep.mubr.bf16.mxu0 %v766
      %1370 = vmatmul.mubr.bf16.gmra.mrb[0].mxu0 %v765
      %v1371 = vpop.f32.mrb[0].mxu0
      %v1372 = vadd.f32 %v371, %v1371
      %v1373 = vpop.f32.mrb[0].mxu0
      %v1374 = vpop.f32.mrb[0].mxu0
      %v1375 = vadd.f32 %v371, %v1374
      %v1376 = vpop.f32.mrb[0].mxu0
      %1377 = vmatprep.mubr.bf16.mxu0 %v768
      %1378 = vmatmul.mubr.bf16.gmra.mrb[0].mxu0 %v767
      %v1379 = vpop.f32.mrb[0].mxu0
      %v1380 = vadd.f32 %v371, %v1379
      %v1381 = vpop.f32.mrb[0].mxu0
      %v1382 = vpop.f32.mrb[0].mxu0
      %v1383 = vadd.f32 %v371, %v1382
      %v1384 = vpop.f32.mrb[0].mxu0
      %1385 = vmatprep.mubr.bf16.mxu0 %v770
      %1386 = vmatmul.mubr.bf16.gmra.mrb[0].mxu0 %v769
      %v1387 = vpop.f32.mrb[0].mxu0
      %v1388 = vadd.f32 %v371, %v1387
      %v1389 = vpop.f32.mrb[0].mxu0
      %v1390 = vpop.f32.mrb[0].mxu0
      %v1391 = vadd.f32 %v371, %v1390
      %v1392 = vpop.f32.mrb[0].mxu0
      %1393 = vmatprep.mubr.bf16.mxu0 %v772
      %1394 = vmatmul.mubr.bf16.gmra.mrb[0].mxu0 %v771
      %v1395 = vpop.f32.mrb[0].mxu0
      %v1396 = vadd.f32 %v371, %v1395
      %v1397 = vpop.f32.mrb[0].mxu0
      %v1398 = vpop.f32.mrb[0].mxu0
      %v1399 = vadd.f32 %v371, %v1398
      %v1400 = vpop.f32.mrb[0].mxu0
      %1401 = vdwg.mxu0
      %v1402 = vmax.f32 %v1004, 0.0
      %v1403 = vmax.f32 %v1007, 0.0
      %v1404 = vmax.f32 %v1012, 0.0
      %v1405 = vmax.f32 %v1015, 0.0
      %v1406 = vmax.f32 %v1020, 0.0
      %v1407 = vmax.f32 %v1023, 0.0
      %v1408 = vmax.f32 %v1028, 0.0
      %v1409 = vmax.f32 %v1031, 0.0
      %v1410 = vmax.f32 %v1036, 0.0
      %v1411 = vmax.f32 %v1039, 0.0
      %v1412 = vmax.f32 %v1044, 0.0
      %v1413 = vmax.f32 %v1047, 0.0
      %v1414 = vmax.f32 %v1052, 0.0
      %v1415 = vmax.f32 %v1055, 0.0
      %v1416 = vmax.f32 %v1060, 0.0
      %v1417 = vmax.f32 %v1063, 0.0
      %v1418 = vmax.f32 %v1068, 0.0
      %v1419 = vmax.f32 %v1071, 0.0
      %v1420 = vmax.f32 %v1076, 0.0
      %v1421 = vmax.f32 %v1079, 0.0
      %v1422 = vmax.f32 %v1084, 0.0
      %v1423 = vmax.f32 %v1087, 0.0
      %v1424 = vmax.f32 %v1092, 0.0
      %v1425 = vmax.f32 %v1095, 0.0
      %v1426 = vmax.f32 %v1100, 0.0
      %v1427 = vmax.f32 %v1103, 0.0
      %v1428 = vmax.f32 %v1108, 0.0
      %v1429 = vmax.f32 %v1111, 0.0
      %v1430 = vmax.f32 %v1116, 0.0
      %v1431 = vmax.f32 %v1119, 0.0
      %v1432 = vmax.f32 %v1124, 0.0
      %v1433 = vmax.f32 %v1127, 0.0
      %v1434 = vmax.f32 %v1132, 0.0
      %v1435 = vmax.f32 %v1135, 0.0
      %v1436 = vmax.f32 %v1140, 0.0
      %v1437 = vmax.f32 %v1143, 0.0
      %v1438 = vmax.f32 %v1148, 0.0
      %v1439 = vmax.f32 %v1151, 0.0
      %v1440 = vmax.f32 %v1156, 0.0
      %v1441 = vmax.f32 %v1159, 0.0
      %v1442 = vmax.f32 %v1164, 0.0
      %v1443 = vmax.f32 %v1167, 0.0
      %v1444 = vmax.f32 %v1172, 0.0
      %v1445 = vmax.f32 %v1175, 0.0
      %v1446 = vmax.f32 %v1180, 0.0
      %v1447 = vmax.f32 %v1183, 0.0
      %v1448 = vmax.f32 %v1188, 0.0
      %v1449 = vmax.f32 %v1191, 0.0
      %v1450 = vmax.f32 %v1196, 0.0
      %v1451 = vmax.f32 %v1199, 0.0
      %v1452 = vmax.f32 %v1204, 0.0
      %v1453 = vmax.f32 %v1207, 0.0
      %v1454 = vmax.f32 %v1212, 0.0
      %v1455 = vmax.f32 %v1215, 0.0
      %v1456 = vmax.f32 %v1220, 0.0
      %v1457 = vmax.f32 %v1223, 0.0
      %v1458 = vmax.f32 %v1228, 0.0
      %v1459 = vmax.f32 %v1231, 0.0
      %v1460 = vmax.f32 %v1236, 0.0
      %v1461 = vmax.f32 %v1239, 0.0
      %v1462 = vmax.f32 %v1244, 0.0
      %v1463 = vmax.f32 %v1247, 0.0
      %v1464 = vmax.f32 %v1252, 0.0
      %v1465 = vmax.f32 %v1255, 0.0
      %v1466 = vmax.f32 %v1260, 0.0
      %v1467 = vmax.f32 %v1263, 0.0
      %v1468 = vmax.f32 %v1268, 0.0
      %v1469 = vmax.f32 %v1271, 0.0
      %v1470 = vmax.f32 %v1276, 0.0
      %v1471 = vmax.f32 %v1279, 0.0
      %v1472 = vmax.f32 %v1284, 0.0
      %v1473 = vmax.f32 %v1287, 0.0
      %v1474 = vmax.f32 %v1292, 0.0
      %v1475 = vmax.f32 %v1295, 0.0
      %v1476 = vmax.f32 %v1300, 0.0
      %v1477 = vmax.f32 %v1303, 0.0
      %v1478 = vmax.f32 %v1308, 0.0
      %v1479 = vmax.f32 %v1311, 0.0
      %v1480 = vmax.f32 %v1316, 0.0
      %v1481 = vmax.f32 %v1319, 0.0
      %v1482 = vmax.f32 %v1324, 0.0
      %v1483 = vmax.f32 %v1327, 0.0
      %v1484 = vmax.f32 %v1332, 0.0
      %v1485 = vmax.f32 %v1335, 0.0
      %v1486 = vmax.f32 %v1340, 0.0
      %v1487 = vmax.f32 %v1343, 0.0
      %v1488 = vmax.f32 %v1348, 0.0
      %v1489 = vmax.f32 %v1351, 0.0
      %v1490 = vmax.f32 %v1356, 0.0
      %v1491 = vmax.f32 %v1359, 0.0
      %v1492 = vmax.f32 %v1364, 0.0
      %v1493 = vmax.f32 %v1367, 0.0
      %v1494 = vmax.f32 %v1372, 0.0
      %v1495 = vmax.f32 %v1375, 0.0
      %v1496 = vmax.f32 %v1380, 0.0
      %v1497 = vmax.f32 %v1383, 0.0
      %v1498 = vmax.f32 %v1388, 0.0
      %v1499 = vmax.f32 %v1391, 0.0
      %v1500 = vmax.f32 %v1396, 0.0
      %v1501 = vmax.f32 %v1399, 0.0
      %v1502 = vpack.c.bf16 %v1403, %v1402
      %v1503 = vpack.c.bf16 %v1405, %v1404
      %v1504 = vpack.c.bf16 %v1407, %v1406
      %v1505 = vpack.c.bf16 %v1409, %v1408
      %v1506 = vpack.c.bf16 %v1411, %v1410
      %v1507 = vpack.c.bf16 %v1413, %v1412
      %v1508 = vpack.c.bf16 %v1415, %v1414
      %v1509 = vpack.c.bf16 %v1417, %v1416
      %v1510 = vpack.c.bf16 %v1419, %v1418
      %v1511 = vpack.c.bf16 %v1421, %v1420
      %v1512 = vpack.c.bf16 %v1423, %v1422
      %v1513 = vpack.c.bf16 %v1425, %v1424
      %v1514 = vpack.c.bf16 %v1427, %v1426
      %v1515 = vpack.c.bf16 %v1429, %v1428
      %v1516 = vpack.c.bf16 %v1431, %v1430
      %v1517 = vpack.c.bf16 %v1433, %v1432
      %v1518 = vpack.c.bf16 %v1435, %v1434
      %v1519 = vpack.c.bf16 %v1437, %v1436
      %v1520 = vpack.c.bf16 %v1439, %v1438
      %v1521 = vpack.c.bf16 %v1441, %v1440
      %v1522 = vpack.c.bf16 %v1443, %v1442
      %v1523 = vpack.c.bf16 %v1445, %v1444
      %v1524 = vpack.c.bf16 %v1447, %v1446
      %v1525 = vpack.c.bf16 %v1449, %v1448
      %v1526 = vpack.c.bf16 %v1451, %v1450
      %v1527 = vpack.c.bf16 %v1453, %v1452
      %v1528 = vpack.c.bf16 %v1455, %v1454
      %v1529 = vpack.c.bf16 %v1457, %v1456
      %v1530 = vpack.c.bf16 %v1459, %v1458
      %v1531 = vpack.c.bf16 %v1461, %v1460
      %v1532 = vpack.c.bf16 %v1463, %v1462
      %v1533 = vpack.c.bf16 %v1465, %v1464
      %v1534 = vpack.c.bf16 %v1467, %v1466
      %v1535 = vpack.c.bf16 %v1469, %v1468
      %v1536 = vpack.c.bf16 %v1471, %v1470
      %v1537 = vpack.c.bf16 %v1473, %v1472
      %v1538 = vpack.c.bf16 %v1475, %v1474
      %v1539 = vpack.c.bf16 %v1477, %v1476
      %v1540 = vpack.c.bf16 %v1479, %v1478
      %v1541 = vpack.c.bf16 %v1481, %v1480
      %v1542 = vpack.c.bf16 %v1483, %v1482
      %v1543 = vpack.c.bf16 %v1485, %v1484
      %v1544 = vpack.c.bf16 %v1487, %v1486
      %v1545 = vpack.c.bf16 %v1489, %v1488
      %v1546 = vpack.c.bf16 %v1491, %v1490
      %v1547 = vpack.c.bf16 %v1493, %v1492
      %v1548 = vpack.c.bf16 %v1495, %v1494
      %v1549 = vpack.c.bf16 %v1497, %v1496
      %v1550 = vpack.c.bf16 %v1499, %v1498
      %v1551 = vpack.c.bf16 %v1501, %v1500
      %v1602 = vunpack.c.l.b16 %v1502
      %v1603 = vunpack.c.h.b16 %v1502
      %v1604 = vunpack.c.l.b16 %v1503
      %v1605 = vunpack.c.h.b16 %v1503
      %v1606 = vunpack.c.l.b16 %v1504
      %v1607 = vunpack.c.h.b16 %v1504
      %v1608 = vunpack.c.l.b16 %v1505
      %v1609 = vunpack.c.h.b16 %v1505
      %v1610 = vunpack.c.l.b16 %v1506
      %v1611 = vunpack.c.h.b16 %v1506
      %v1612 = vunpack.c.l.b16 %v1507
      %v1613 = vunpack.c.h.b16 %v1507
      %v1614 = vunpack.c.l.b16 %v1508
      %v1615 = vunpack.c.h.b16 %v1508
      %v1616 = vunpack.c.l.b16 %v1509
      %v1617 = vunpack.c.h.b16 %v1509
      %v1618 = vunpack.c.l.b16 %v1510
      %v1619 = vunpack.c.h.b16 %v1510
      %v1620 = vunpack.c.l.b16 %v1511
      %v1621 = vunpack.c.h.b16 %v1511
      %v1622 = vunpack.c.l.b16 %v1512
      %v1623 = vunpack.c.h.b16 %v1512
      %v1624 = vunpack.c.l.b16 %v1513
      %v1625 = vunpack.c.h.b16 %v1513
      %v1626 = vunpack.c.l.b16 %v1514
      %v1627 = vunpack.c.h.b16 %v1514
      %v1628 = vunpack.c.l.b16 %v1515
      %v1629 = vunpack.c.h.b16 %v1515
      %v1630 = vunpack.c.l.b16 %v1516
      %v1631 = vunpack.c.h.b16 %v1516
      %v1632 = vunpack.c.l.b16 %v1517
      %v1633 = vunpack.c.h.b16 %v1517
      %v1634 = vunpack.c.l.b16 %v1518
      %v1635 = vunpack.c.h.b16 %v1518
      %v1636 = vunpack.c.l.b16 %v1519
      %v1637 = vunpack.c.h.b16 %v1519
      %v1638 = vunpack.c.l.b16 %v1520
      %v1639 = vunpack.c.h.b16 %v1520
      %v1640 = vunpack.c.l.b16 %v1521
      %v1641 = vunpack.c.h.b16 %v1521
      %v1642 = vunpack.c.l.b16 %v1522
      %v1643 = vunpack.c.h.b16 %v1522
      %v1644 = vunpack.c.l.b16 %v1523
      %v1645 = vunpack.c.h.b16 %v1523
      %v1646 = vunpack.c.l.b16 %v1524
      %v1647 = vunpack.c.h.b16 %v1524
      %v1648 = vunpack.c.l.b16 %v1525
      %v1649 = vunpack.c.h.b16 %v1525
      %v1650 = vunpack.c.l.b16 %v1526
      %v1651 = vunpack.c.h.b16 %v1526
      %v1652 = vunpack.c.l.b16 %v1527
      %v1653 = vunpack.c.h.b16 %v1527
      %v1654 = vunpack.c.l.b16 %v1528
      %v1655 = vunpack.c.h.b16 %v1528
      %v1656 = vunpack.c.l.b16 %v1529
      %v1657 = vunpack.c.h.b16 %v1529
      %v1658 = vunpack.c.l.b16 %v1530
      %v1659 = vunpack.c.h.b16 %v1530
      %v1660 = vunpack.c.l.b16 %v1531
      %v1661 = vunpack.c.h.b16 %v1531
      %v1662 = vunpack.c.l.b16 %v1532
      %v1663 = vunpack.c.h.b16 %v1532
      %v1664 = vunpack.c.l.b16 %v1533
      %v1665 = vunpack.c.h.b16 %v1533
      %v1666 = vunpack.c.l.b16 %v1534
      %v1667 = vunpack.c.h.b16 %v1534
      %v1668 = vunpack.c.l.b16 %v1535
      %v1669 = vunpack.c.h.b16 %v1535
      %v1670 = vunpack.c.l.b16 %v1536
      %v1671 = vunpack.c.h.b16 %v1536
      %v1672 = vunpack.c.l.b16 %v1537
      %v1673 = vunpack.c.h.b16 %v1537
      %v1674 = vunpack.c.l.b16 %v1538
      %v1675 = vunpack.c.h.b16 %v1538
      %v1676 = vunpack.c.l.b16 %v1539
      %v1677 = vunpack.c.h.b16 %v1539
      %v1678 = vunpack.c.l.b16 %v1540
      %v1679 = vunpack.c.h.b16 %v1540
      %v1680 = vunpack.c.l.b16 %v1541
      %v1681 = vunpack.c.h.b16 %v1541
      %v1682 = vunpack.c.l.b16 %v1542
      %v1683 = vunpack.c.h.b16 %v1542
      %v1684 = vunpack.c.l.b16 %v1543
      %v1685 = vunpack.c.h.b16 %v1543
      %v1686 = vunpack.c.l.b16 %v1544
      %v1687 = vunpack.c.h.b16 %v1544
      %v1688 = vunpack.c.l.b16 %v1545
      %v1689 = vunpack.c.h.b16 %v1545
      %v1690 = vunpack.c.l.b16 %v1546
      %v1691 = vunpack.c.h.b16 %v1546
      %v1692 = vunpack.c.l.b16 %v1547
      %v1693 = vunpack.c.h.b16 %v1547
      %v1694 = vunpack.c.l.b16 %v1548
      %v1695 = vunpack.c.h.b16 %v1548
      %v1696 = vunpack.c.l.b16 %v1549
      %v1697 = vunpack.c.h.b16 %v1549
      %v1698 = vunpack.c.l.b16 %v1550
      %v1699 = vunpack.c.h.b16 %v1550
      %v1700 = vunpack.c.l.b16 %v1551
      %v1701 = vunpack.c.h.b16 %v1551
      %v1702 = vpack.c.b16 %v1602, %v1602
      %v1703 = vpack.c.b16 %v1603, %v1603
      %v1704 = vpack.c.b16 %v1604, %v1604
      %v1705 = vpack.c.b16 %v1605, %v1605
      %v1706 = vpack.c.b16 %v1606, %v1606
      %v1707 = vpack.c.b16 %v1607, %v1607
      %v1708 = vpack.c.b16 %v1608, %v1608
      %v1709 = vpack.c.b16 %v1609, %v1609
      %v1710 = vpack.c.b16 %v1610, %v1610
      %v1711 = vpack.c.b16 %v1611, %v1611
      %v1712 = vpack.c.b16 %v1612, %v1612
      %v1713 = vpack.c.b16 %v1613, %v1613
      %v1714 = vpack.c.b16 %v1614, %v1614
      %v1715 = vpack.c.b16 %v1615, %v1615
      %v1716 = vpack.c.b16 %v1616, %v1616
      %v1717 = vpack.c.b16 %v1617, %v1617
      %v1718 = vpack.c.b16 %v1618, %v1618
      %v1719 = vpack.c.b16 %v1619, %v1619
      %v1720 = vpack.c.b16 %v1620, %v1620
      %v1721 = vpack.c.b16 %v1621, %v1621
      %v1722 = vpack.c.b16 %v1622, %v1622
      %v1723 = vpack.c.b16 %v1623, %v1623
      %v1724 = vpack.c.b16 %v1624, %v1624
      %v1725 = vpack.c.b16 %v1625, %v1625
      %v1726 = vpack.c.b16 %v1626, %v1626
      %v1727 = vpack.c.b16 %v1627, %v1627
      %v1728 = vpack.c.b16 %v1628, %v1628
      %v1729 = vpack.c.b16 %v1629, %v1629
      %v1730 = vpack.c.b16 %v1630, %v1630
      %v1731 = vpack.c.b16 %v1631, %v1631
      %v1732 = vpack.c.b16 %v1632, %v1632
      %v1733 = vpack.c.b16 %v1633, %v1633
      %v1734 = vpack.c.b16 %v1634, %v1634
      %v1735 = vpack.c.b16 %v1635, %v1635
      %v1736 = vpack.c.b16 %v1636, %v1636
      %v1737 = vpack.c.b16 %v1637, %v1637
      %v1738 = vpack.c.b16 %v1638, %v1638
      %v1739 = vpack.c.b16 %v1639, %v1639
      %v1740 = vpack.c.b16 %v1640, %v1640
      %v1741 = vpack.c.b16 %v1641, %v1641
      %v1742 = vpack.c.b16 %v1642, %v1642
      %v1743 = vpack.c.b16 %v1643, %v1643
      %v1744 = vpack.c.b16 %v1644, %v1644
      %v1745 = vpack.c.b16 %v1645, %v1645
      %v1746 = vpack.c.b16 %v1646, %v1646
      %v1747 = vpack.c.b16 %v1647, %v1647
      %v1748 = vpack.c.b16 %v1648, %v1648
      %v1749 = vpack.c.b16 %v1649, %v1649
      %v1750 = vpack.c.b16 %v1650, %v1650
      %v1751 = vpack.c.b16 %v1651, %v1651
      %v1752 = vpack.c.b16 %v1652, %v1652
      %v1753 = vpack.c.b16 %v1653, %v1653
      %v1754 = vpack.c.b16 %v1654, %v1654
      %v1755 = vpack.c.b16 %v1655, %v1655
      %v1756 = vpack.c.b16 %v1656, %v1656
      %v1757 = vpack.c.b16 %v1657, %v1657
      %v1758 = vpack.c.b16 %v1658, %v1658
      %v1759 = vpack.c.b16 %v1659, %v1659
      %v1760 = vpack.c.b16 %v1660, %v1660
      %v1761 = vpack.c.b16 %v1661, %v1661
      %v1762 = vpack.c.b16 %v1662, %v1662
      %v1763 = vpack.c.b16 %v1663, %v1663
      %v1764 = vpack.c.b16 %v1664, %v1664
      %v1765 = vpack.c.b16 %v1665, %v1665
      %v1766 = vpack.c.b16 %v1666, %v1666
      %v1767 = vpack.c.b16 %v1667, %v1667
      %v1768 = vpack.c.b16 %v1668, %v1668
      %v1769 = vpack.c.b16 %v1669, %v1669
      %v1770 = vpack.c.b16 %v1670, %v1670
      %v1771 = vpack.c.b16 %v1671, %v1671
      %v1772 = vpack.c.b16 %v1672, %v1672
      %v1773 = vpack.c.b16 %v1673, %v1673
      %v1774 = vpack.c.b16 %v1674, %v1674
      %v1775 = vpack.c.b16 %v1675, %v1675
      %v1776 = vpack.c.b16 %v1676, %v1676
      %v1777 = vpack.c.b16 %v1677, %v1677
      %v1778 = vpack.c.b16 %v1678, %v1678
      %v1779 = vpack.c.b16 %v1679, %v1679
      %v1780 = vpack.c.b16 %v1680, %v1680
      %v1781 = vpack.c.b16 %v1681, %v1681
      %v1782 = vpack.c.b16 %v1682, %v1682
      %v1783 = vpack.c.b16 %v1683, %v1683
      %v1784 = vpack.c.b16 %v1684, %v1684
      %v1785 = vpack.c.b16 %v1685, %v1685
      %v1786 = vpack.c.b16 %v1686, %v1686
      %v1787 = vpack.c.b16 %v1687, %v1687
      %v1788 = vpack.c.b16 %v1688, %v1688
      %v1789 = vpack.c.b16 %v1689, %v1689
      %v1790 = vpack.c.b16 %v1690, %v1690
      %v1791 = vpack.c.b16 %v1691, %v1691
      %v1792 = vpack.c.b16 %v1692, %v1692
      %v1793 = vpack.c.b16 %v1693, %v1693
      %v1794 = vpack.c.b16 %v1694, %v1694
      %v1795 = vpack.c.b16 %v1695, %v1695
      %v1796 = vpack.c.b16 %v1696, %v1696
      %v1797 = vpack.c.b16 %v1697, %v1697
      %v1798 = vpack.c.b16 %v1698, %v1698
      %v1799 = vpack.c.b16 %v1699, %v1699
      %v1800 = vpack.c.b16 %v1700, %v1700
      %v1801 = vpack.c.b16 %v1701, %v1701
      %vm1902 = vcmask 257024
      %1903 = vst.msk [vmem:[%s231] sm:$0xf] %vm1902, %v1702
      %1904 = vst.msk [vmem:[%s231 + $0x4] sm:$0xf] %vm1902, %v1703
      %1905 = vst.msk [vmem:[%s231 + $0x8] sm:$0xf] %vm1902, %v1704
      %1906 = vst.msk [vmem:[%s231 + $0xc] sm:$0xf] %vm1902, %v1705
      %1907 = vst.msk [vmem:[%s231 + $0x10] sm:$0xf] %vm1902, %v1706
      %1908 = vst.msk [vmem:[%s231 + $0x14] sm:$0xf] %vm1902, %v1707
      %1909 = vst.msk [vmem:[%s231 + $0x18] sm:$0xf] %vm1902, %v1708
      %1910 = vst.msk [vmem:[%s231 + $0x1c] sm:$0xf] %vm1902, %v1709
      %1911 = vst.msk [vmem:[%s231 + $0x20] sm:$0xf] %vm1902, %v1710
      %1912 = vst.msk [vmem:[%s231 + $0x24] sm:$0xf] %vm1902, %v1711
      %1913 = vst.msk [vmem:[%s231 + $0x28] sm:$0xf] %vm1902, %v1712
      %1914 = vst.msk [vmem:[%s231 + $0x2c] sm:$0xf] %vm1902, %v1713
      %1915 = vst.msk [vmem:[%s231 + $0x30] sm:$0xf] %vm1902, %v1714
      %1916 = vst.msk [vmem:[%s231 + $0x34] sm:$0xf] %vm1902, %v1715
      %1917 = vst.msk [vmem:[%s231 + $0x38] sm:$0xf] %vm1902, %v1716
      %1918 = vst.msk [vmem:[%s231 + $0x3c] sm:$0xf] %vm1902, %v1717
      %1919 = vst.msk [vmem:[%s231 + $0x40] sm:$0xf] %vm1902, %v1718
      %1920 = vst.msk [vmem:[%s231 + $0x44] sm:$0xf] %vm1902, %v1719
      %1921 = vst.msk [vmem:[%s231 + $0x48] sm:$0xf] %vm1902, %v1720
      %1922 = vst.msk [vmem:[%s231 + $0x4c] sm:$0xf] %vm1902, %v1721
      %1923 = vst.msk [vmem:[%s231 + $0x50] sm:$0xf] %vm1902, %v1722
      %1924 = vst.msk [vmem:[%s231 + $0x54] sm:$0xf] %vm1902, %v1723
      %1925 = vst.msk [vmem:[%s231 + $0x58] sm:$0xf] %vm1902, %v1724
      %1926 = vst.msk [vmem:[%s231 + $0x5c] sm:$0xf] %vm1902, %v1725
      %1927 = vst.msk [vmem:[%s231 + $0x60] sm:$0xf] %vm1902, %v1726
      %1928 = vst.msk [vmem:[%s231 + $0x64] sm:$0xf] %vm1902, %v1727
      %1929 = vst.msk [vmem:[%s231 + $0x68] sm:$0xf] %vm1902, %v1728
      %1930 = vst.msk [vmem:[%s231 + $0x6c] sm:$0xf] %vm1902, %v1729
      %1931 = vst.msk [vmem:[%s231 + $0x70] sm:$0xf] %vm1902, %v1730
      %1932 = vst.msk [vmem:[%s231 + $0x74] sm:$0xf] %vm1902, %v1731
      %1933 = vst.msk [vmem:[%s231 + $0x78] sm:$0xf] %vm1902, %v1732
      %1934 = vst.msk [vmem:[%s231 + $0x7c] sm:$0xf] %vm1902, %v1733
      %1935 = vst.msk [vmem:[%s231 + $0x80] sm:$0xf] %vm1902, %v1734
      %1936 = vst.msk [vmem:[%s231 + $0x84] sm:$0xf] %vm1902, %v1735
      %1937 = vst.msk [vmem:[%s231 + $0x88] sm:$0xf] %vm1902, %v1736
      %1938 = vst.msk [vmem:[%s231 + $0x8c] sm:$0xf] %vm1902, %v1737
      %1939 = vst.msk [vmem:[%s231 + $0x90] sm:$0xf] %vm1902, %v1738
      %1940 = vst.msk [vmem:[%s231 + $0x94] sm:$0xf] %vm1902, %v1739
      %1941 = vst.msk [vmem:[%s231 + $0x98] sm:$0xf] %vm1902, %v1740
      %1942 = vst.msk [vmem:[%s231 + $0x9c] sm:$0xf] %vm1902, %v1741
      %1943 = vst.msk [vmem:[%s231 + $0xa0] sm:$0xf] %vm1902, %v1742
      %1944 = vst.msk [vmem:[%s231 + $0xa4] sm:$0xf] %vm1902, %v1743
      %1945 = vst.msk [vmem:[%s231 + $0xa8] sm:$0xf] %vm1902, %v1744
      %1946 = vst.msk [vmem:[%s231 + $0xac] sm:$0xf] %vm1902, %v1745
      %1947 = vst.msk [vmem:[%s231 + $0xb0] sm:$0xf] %vm1902, %v1746
      %1948 = vst.msk [vmem:[%s231 + $0xb4] sm:$0xf] %vm1902, %v1747
      %1949 = vst.msk [vmem:[%s231 + $0xb8] sm:$0xf] %vm1902, %v1748
      %1950 = vst.msk [vmem:[%s231 + $0xbc] sm:$0xf] %vm1902, %v1749
      %1951 = vst.msk [vmem:[%s231 + $0xc0] sm:$0xf] %vm1902, %v1750
      %1952 = vst.msk [vmem:[%s231 + $0xc4] sm:$0xf] %vm1902, %v1751
      %1953 = vst.msk [vmem:[%s231 + $0xc8] sm:$0xf] %vm1902, %v1752
      %1954 = vst.msk [vmem:[%s231 + $0xcc] sm:$0xf] %vm1902, %v1753
      %1955 = vst.msk [vmem:[%s231 + $0xd0] sm:$0xf] %vm1902, %v1754
      %1956 = vst.msk [vmem:[%s231 + $0xd4] sm:$0xf] %vm1902, %v1755
      %1957 = vst.msk [vmem:[%s231 + $0xd8] sm:$0xf] %vm1902, %v1756
      %1958 = vst.msk [vmem:[%s231 + $0xdc] sm:$0xf] %vm1902, %v1757
      %1959 = vst.msk [vmem:[%s231 + $0xe0] sm:$0xf] %vm1902, %v1758
      %1960 = vst.msk [vmem:[%s231 + $0xe4] sm:$0xf] %vm1902, %v1759
      %1961 = vst.msk [vmem:[%s231 + $0xe8] sm:$0xf] %vm1902, %v1760
      %1962 = vst.msk [vmem:[%s231 + $0xec] sm:$0xf] %vm1902, %v1761
      %1963 = vst.msk [vmem:[%s231 + $0xf0] sm:$0xf] %vm1902, %v1762
      %1964 = vst.msk [vmem:[%s231 + $0xf4] sm:$0xf] %vm1902, %v1763
      %1965 = vst.msk [vmem:[%s231 + $0xf8] sm:$0xf] %vm1902, %v1764
      %1966 = vst.msk [vmem:[%s231 + $0xfc] sm:$0xf] %vm1902, %v1765
      %1967 = vst.msk [vmem:[%s231 + $0x100] sm:$0xf] %vm1902, %v1766
      %1968 = vst.msk [vmem:[%s231 + $0x104] sm:$0xf] %vm1902, %v1767
      %1969 = vst.msk [vmem:[%s231 + $0x108] sm:$0xf] %vm1902, %v1768
      %1970 = vst.msk [vmem:[%s231 + $0x10c] sm:$0xf] %vm1902, %v1769
      %1971 = vst.msk [vmem:[%s231 + $0x110] sm:$0xf] %vm1902, %v1770
      %1972 = vst.msk [vmem:[%s231 + $0x114] sm:$0xf] %vm1902, %v1771
      %1973 = vst.msk [vmem:[%s231 + $0x118] sm:$0xf] %vm1902, %v1772
      %1974 = vst.msk [vmem:[%s231 + $0x11c] sm:$0xf] %vm1902, %v1773
      %1975 = vst.msk [vmem:[%s231 + $0x120] sm:$0xf] %vm1902, %v1774
      %1976 = vst.msk [vmem:[%s231 + $0x124] sm:$0xf] %vm1902, %v1775
      %1977 = vst.msk [vmem:[%s231 + $0x128] sm:$0xf] %vm1902, %v1776
      %1978 = vst.msk [vmem:[%s231 + $0x12c] sm:$0xf] %vm1902, %v1777
      %1979 = vst.msk [vmem:[%s231 + $0x130] sm:$0xf] %vm1902, %v1778
      %1980 = vst.msk [vmem:[%s231 + $0x134] sm:$0xf] %vm1902, %v1779
      %1981 = vst.msk [vmem:[%s231 + $0x138] sm:$0xf] %vm1902, %v1780
      %1982 = vst.msk [vmem:[%s231 + $0x13c] sm:$0xf] %vm1902, %v1781
      %1983 = vst.msk [vmem:[%s231 + $0x140] sm:$0xf] %vm1902, %v1782
      %1984 = vst.msk [vmem:[%s231 + $0x144] sm:$0xf] %vm1902, %v1783
      %1985 = vst.msk [vmem:[%s231 + $0x148] sm:$0xf] %vm1902, %v1784
      %1986 = vst.msk [vmem:[%s231 + $0x14c] sm:$0xf] %vm1902, %v1785
      %1987 = vst.msk [vmem:[%s231 + $0x150] sm:$0xf] %vm1902, %v1786
      %1988 = vst.msk [vmem:[%s231 + $0x154] sm:$0xf] %vm1902, %v1787
      %1989 = vst.msk [vmem:[%s231 + $0x158] sm:$0xf] %vm1902, %v1788
      %1990 = vst.msk [vmem:[%s231 + $0x15c] sm:$0xf] %vm1902, %v1789
      %1991 = vst.msk [vmem:[%s231 + $0x160] sm:$0xf] %vm1902, %v1790
      %1992 = vst.msk [vmem:[%s231 + $0x164] sm:$0xf] %vm1902, %v1791
      %1993 = vst.msk [vmem:[%s231 + $0x168] sm:$0xf] %vm1902, %v1792
      %1994 = vst.msk [vmem:[%s231 + $0x16c] sm:$0xf] %vm1902, %v1793
      %1995 = vst.msk [vmem:[%s231 + $0x170] sm:$0xf] %vm1902, %v1794
      %1996 = vst.msk [vmem:[%s231 + $0x174] sm:$0xf] %vm1902, %v1795
      %1997 = vst.msk [vmem:[%s231 + $0x178] sm:$0xf] %vm1902, %v1796
      %1998 = vst.msk [vmem:[%s231 + $0x17c] sm:$0xf] %vm1902, %v1797
      %1999 = vst.msk [vmem:[%s231 + $0x180] sm:$0xf] %vm1902, %v1798
      %2000 = vst.msk [vmem:[%s231 + $0x184] sm:$0xf] %vm1902, %v1799
      %2001 = vst.msk [vmem:[%s231 + $0x188] sm:$0xf] %vm1902, %v1800
      %2002 = vst.msk [vmem:[%s231 + $0x18c] sm:$0xf] %vm1902, %v1801
      %s2003 = smul.u32 100, %s18
      %p2004 = scmp.lt.s32.totalorder %s19, 1
      %s2005 = scalar_select %p2004, %s19, 1
      %p2006 = scmp.lt.s32.totalorder %s2003, 99
      %s2007 = scalar_select %p2006, %s2003, 99
      %s2008 = smul.addr %s2005, 100
      %s2009 = sadd.s32 %s2007, %s2008
      %s2010 = smul.addr %s2009, 4
      %s2011 = scalar_lea.vmem %s3, %s2010
      // Predicated region
      $region33: #{legged_qnetwork_forward.4} parent=31 // pred_check
        %p2012 = pneg %p124
      $region34: #{legged_qnetwork_forward.4} parent=31 // pred_check_branch
        %2014 = sbr.rel (%p2012) target = $region36
      $region35: #{legged_qnetwork_forward.4} parent=31 // pred_region
        %s2015 = smul.u32 100, %s18
      $region36: #{legged_qnetwork_forward.4} parent=31 // pred_fallthru
        _
    $region32: #{legged_qnetwork_forward.4} parent=5 // pred_fallthru
      _
    %p2016 = scmp.le.s32.totalorder 2, %s9
    // Predicated region
    $region37: #{legged_qnetwork_forward.4} parent=5 // pred_check
      %p2017 = pneg %p2016
    $region38: #{legged_qnetwork_forward.4} parent=5 // pred_check_branch
      %2019 = sbr.rel (%p2017) target = $region40
    $region39: #{legged_qnetwork_forward.4} parent=5 // pred_region
      %s2020 = ssub.s32 %s9, 2
      // Predicated region
      $region41: #{legged_qnetwork_forward.4} parent=39 // pred_check
        %p2021 = pneg %p130
      $region42: #{legged_qnetwork_forward.4} parent=39 // pred_check_branch
        %2023 = sbr.rel (%p2021) target = $region44
      $region43: #{legged_qnetwork_forward.4} parent=39 // pred_region
        %s2024 = smul.u32 100, %s20
        %p2025 = scmp.lt.s32.totalorder %s21, 1
        %s2026 = scalar_select %p2025, %s21, 1
        %p2027 = scmp.lt.s32.totalorder %s2024, 99
        %s2028 = scalar_select %p2027, %s2024, 99
        %s2029 = smul.addr %s2026, 100
        %s2030 = sadd.s32 %s2028, %s2029
        %s2031 = smul.addr %s2030, 4
        %s2032 = scalar_lea.vmem %s3, %s2031
      $region44: #{legged_qnetwork_forward.4} parent=39 // pred_fallthru
        _
    $region40: #{legged_qnetwork_forward.4} parent=5 // pred_fallthru
      _
  $region6: #{legged_qnetwork_forward.4} parent=0 // loop_footer
    %s13 = sadd.s32 1, %s9
  $region7: #{legged_qnetwork_forward.4} parent=0 // loop_footer_branch
    %8 = sbr.rel target = $region3
  $region8: #{legged_qnetwork_forward.4} parent=0 // loop_exit
    _

// kernel: legged_qnetwork_forward.5
$region0: #{legged_qnetwork_forward.5}
  #allocation0 [shape = 'u32[]', space=smem, size = 0x4, offset = 0x4, fixed_abs, tag = 'smem constant byte address 0x4 - core index']
  #allocation1 [shape = 'u32[144,128]{1,0:T(1,128)}', space=vmem, size = 0x12000, scoped, tag = 'internal scratch']
  %s0 = inlined_call_operand.vmem [shape: bf16[2,162,512], index: 0, kind: input, shape index: {}]
  %s1 = inlined_call_operand.vmem [shape: bf16[2,512,64], index: 1, kind: input, shape index: {}]
  %s2 = inlined_call_operand.vmem [shape: f32[2,1,64], index: 2, kind: input, shape index: {}]
  %s3 = inlined_call_operand.vmem [shape: bf16[2,162,64], index: 3, kind: output, shape index: {}]
  %s4 = sld [smem:[#allocation0]]
  $region45: #{legged_qnetwork_forward.5} parent=0
    _
  %s6 = ssub.s32 1, %s4
  %s7 = scalar_select 0, %s6, %s4
  loop: start=0, step=1, limit=4
  $region2: #{legged_qnetwork_forward.5} parent=0 // loop_pre_header
    _
  $region3: #{legged_qnetwork_forward.5} parent=0 // loop_header
    %s9 = sphi 0, %s13
    %p10 = scmp.ge.s32.totalorder %s9, 4
    %s16 = sphi 0, %s28
    %s17 = sphi 0, %s24
    %s18 = sphi 0, %s16
    %s19 = sphi 0, %s17
    %s20 = sphi 0, %s18
    %s21 = sphi 0, %s19
    %s33 = sphi 0, %s35
    %s36 = sphi 0, %s33
    %s37 = sphi 0, %s36
    %s53 = sphi 0, %s37
    %s59 = sphi 0, %s61
    %s62 = sphi 0, %s59
    %s63 = sphi 0, %s62
    %s79 = sphi 0, %s63
    %s85 = sphi 0, %s87
    %s88 = sphi 0, %s85
    %s89 = sphi 0, %s88
    %s105 = sphi 0, %s89
    %s113 = sphi 0, %s115
    %s116 = sphi 0, %s113
    %s117 = sphi 0, %s116
    %s133 = sphi 0, %s117
  $region4: #{legged_qnetwork_forward.5} parent=0 // loop_header_branch
    %12 = sbr.rel (%p10) target = $region8
  $region5: #{legged_qnetwork_forward.5} parent=0 // loop_body
    %s14 = ssub.s32 %s9, 1
    %s15 = ssub.s32 %s9, 2
    %s22 = sadd.s32 1, %s17
    %p23 = scmp.ge.s32.totalorder %s22, 1
    %s24 = scalar_select %p23, 0, %s22
    %s25 = sadd.s32 1, %s16
    %s26 = scalar_select %p23, %s25, %s16
    %p27 = scmp.ge.s32.totalorder %s26, 2
    %s28 = scalar_select %p27, 0, %s26
    %s29 = ssub.s32 %s16, %s28
    %s30 = ssub.s32 %s17, %s24
    %s31 = sor.u32 %s29, %s30
    %p32 = scmp.eq.s32.totalorder %s31, 0
    %s34 = sadd.s32 %s33, 1
    %s35 = scalar_select %p32, %s33, %s34
    %p38 = pneg %p32
    %p39 = scmp.eq.s32.totalorder %s9, 1
    %p40 = por %p38, %p39
    %p41 = scmp.ne.s32.totalorder %s33, %s36
    %p42 = scmp.eq.s32.totalorder %s9, 0
    %p43 = por %p41, %p42
    %p44 = scmp.ne.s32.totalorder %s33, %s36
    %p45 = scmp.eq.s32.totalorder %s14, 1
    %p46 = por %p44, %p45
    %p47 = scmp.ne.s32.totalorder %s36, %s37
    %p48 = scmp.eq.s32.totalorder %s14, 0
    %p49 = por %p47, %p48
    %p50 = scmp.ne.s32.totalorder %s36, %s37
    %p51 = scmp.eq.s32.totalorder %s15, 1
    %p52 = por %p50, %p51
    %p54 = scmp.ne.s32.totalorder %s37, %s53
    %p55 = scmp.eq.s32.totalorder %s15, 0
    %p56 = por %p54, %p55
    %s57 = ssub.s32 %s16, %s28
    %p58 = scmp.eq.s32.totalorder %s57, 0
    %s60 = sadd.s32 %s59, 1
    %s61 = scalar_select %p58, %s59, %s60
    %p64 = pneg %p58
    %p65 = scmp.eq.s32.totalorder %s9, 1
    %p66 = por %p64, %p65
    %p67 = scmp.ne.s32.totalorder %s59, %s62
    %p68 = scmp.eq.s32.totalorder %s9, 0
    %p69 = por %p67, %p68
    %p70 = scmp.ne.s32.totalorder %s59, %s62
    %p71 = scmp.eq.s32.totalorder %s14, 1
    %p72 = por %p70, %p71
    %p73 = scmp.ne.s32.totalorder %s62, %s63
    %p74 = scmp.eq.s32.totalorder %s14, 0
    %p75 = por %p73, %p74
    %p76 = scmp.ne.s32.totalorder %s62, %s63
    %p77 = scmp.eq.s32.totalorder %s15, 1
    %p78 = por %p76, %p77
    %p80 = scmp.ne.s32.totalorder %s63, %s79
    %p81 = scmp.eq.s32.totalorder %s15, 0
    %p82 = por %p80, %p81
    %s83 = ssub.s32 %s16, %s28
    %p84 = scmp.eq.s32.totalorder %s83, 0
    %s86 = sadd.s32 %s85, 1
    %s87 = scalar_select %p84, %s85, %s86
    %p90 = pneg %p84
    %p91 = scmp.eq.s32.totalorder %s9, 1
    %p92 = por %p90, %p91
    %p93 = scmp.ne.s32.totalorder %s85, %s88
    %p94 = scmp.eq.s32.totalorder %s9, 0
    %p95 = por %p93, %p94
    %p96 = scmp.ne.s32.totalorder %s85, %s88
    %p97 = scmp.eq.s32.totalorder %s14, 1
    %p98 = por %p96, %p97
    %p99 = scmp.ne.s32.totalorder %s88, %s89
    %p100 = scmp.eq.s32.totalorder %s14, 0
    %p101 = por %p99, %p100
    %p102 = scmp.ne.s32.totalorder %s88, %s89
    %p103 = scmp.eq.s32.totalorder %s15, 1
    %p104 = por %p102, %p103
    %p106 = scmp.ne.s32.totalorder %s89, %s105
    %p107 = scmp.eq.s32.totalorder %s15, 0
    %p108 = por %p106, %p107
    %s109 = ssub.s32 %s16, %s28
    %s110 = ssub.s32 %s17, %s24
    %s111 = sor.u32 %s109, %s110
    %p112 = scmp.eq.s32.totalorder %s111, 0
    %s114 = sadd.s32 %s113, 1
    %s115 = scalar_select %p112, %s113, %s114
    %p118 = pneg %p112
    %p119 = scmp.eq.s32.totalorder %s9, 1
    %p120 = por %p118, %p119
    %p121 = scmp.ne.s32.totalorder %s113, %s116
    %p122 = scmp.eq.s32.totalorder %s9, 0
    %p123 = por %p121, %p122
    %p124 = scmp.ne.s32.totalorder %s113, %s116
    %p125 = scmp.eq.s32.totalorder %s14, 1
    %p126 = por %p124, %p125
    %p127 = scmp.ne.s32.totalorder %s116, %s117
    %p128 = scmp.eq.s32.totalorder %s14, 0
    %p129 = por %p127, %p128
    %p130 = scmp.ne.s32.totalorder %s116, %s117
    %p131 = scmp.eq.s32.totalorder %s15, 1
    %p132 = por %p130, %p131
    %p134 = scmp.ne.s32.totalorder %s117, %s133
    %p135 = scmp.eq.s32.totalorder %s15, 0
    %p136 = por %p134, %p135
    %p137 = scmp.le.s32.totalorder 1, %s9
    %p138 = scmp.lt.s32.totalorder %s9, 3
    %p139 = pnand %p137, %p138
    %p140 = pneg %p139
    // Predicated region
    $region9: #{legged_qnetwork_forward.5} parent=5 // pred_check
      _
    $region10: #{legged_qnetwork_forward.5} parent=5 // pred_check_branch
      %142 = sbr.rel (%p139) target = $region12
    $region11: #{legged_qnetwork_forward.5} parent=5 // pred_region
      %s143 = ssub.s32 %s9, 1
    $region12: #{legged_qnetwork_forward.5} parent=5 // pred_fallthru
      _
    %p144 = scmp.lt.s32.totalorder %s9, 2
    // Predicated region
    $region13: #{legged_qnetwork_forward.5} parent=5 // pred_check
      %p145 = pneg %p144
    $region14: #{legged_qnetwork_forward.5} parent=5 // pred_check_branch
      %147 = sbr.rel (%p145) target = $region16
    $region15: #{legged_qnetwork_forward.5} parent=5 // pred_region
      // Predicated region
      $region17: #{legged_qnetwork_forward.5} parent=15 // pred_check
        %p148 = pneg %p43
      $region18: #{legged_qnetwork_forward.5} parent=15 // pred_check_branch
        %150 = sbr.rel (%p148) target = $region20
      $region19: #{legged_qnetwork_forward.5} parent=15 // pred_region
        %s151 = smul.u32 21, %s17
        %p152 = scmp.lt.s32.totalorder %s16, 1
        %s153 = scalar_select %p152, %s16, 1
        %p154 = scmp.lt.s32.totalorder %s151, 20
        %s155 = scalar_select %p154, %s151, 20
        %s156 = smul.addr %s155, 4
        %s157 = smul.addr %s153, 84
        %s158 = sadd.s32 %s156, %s157
        %s159 = smul.addr %s158, 4
        %s160 = scalar_lea.vmem %s0, %s159
        %s161 = smul.u32 21, %s17
      $region20: #{legged_qnetwork_forward.5} parent=15 // pred_fallthru
        _
      // Predicated region
      $region21: #{legged_qnetwork_forward.5} parent=15 // pred_check
        %p162 = pneg %p69
      $region22: #{legged_qnetwork_forward.5} parent=15 // pred_check_branch
        %164 = sbr.rel (%p162) target = $region24
      $region23: #{legged_qnetwork_forward.5} parent=15 // pred_region
        %p165 = scmp.lt.s32.totalorder %s16, 1
        %s166 = scalar_select %p165, %s16, 1
        %s167 = smul.addr %s166, 64
        %s168 = smul.addr %s167, 4
        %s169 = scalar_lea.vmem %s1, %s168
      $region24: #{legged_qnetwork_forward.5} parent=15 // pred_fallthru
        _
      // Predicated region
      $region25: #{legged_qnetwork_forward.5} parent=15 // pred_check
        %p170 = pneg %p95
      $region26: #{legged_qnetwork_forward.5} parent=15 // pred_check_branch
        %172 = sbr.rel (%p170) target = $region28
      $region27: #{legged_qnetwork_forward.5} parent=15 // pred_region
        %p173 = scmp.lt.s32.totalorder %s16, 1
        %s174 = scalar_select %p173, %s16, 1
        %s175 = scalar_lea.vmem %s2, %s174
      $region28: #{legged_qnetwork_forward.5} parent=15 // pred_fallthru
        _
    $region16: #{legged_qnetwork_forward.5} parent=5 // pred_fallthru
      _
    %p176 = scmp.le.s32.totalorder 1, %s9
    %p177 = scmp.lt.s32.totalorder %s9, 3
    %p178 = pnand %p176, %p177
    %p179 = pneg %p178
    // Predicated region
    $region29: #{legged_qnetwork_forward.5} parent=5 // pred_check
      _
    $region30: #{legged_qnetwork_forward.5} parent=5 // pred_check_branch
      %181 = sbr.rel (%p178) target = $region32
    $region31: #{legged_qnetwork_forward.5} parent=5 // pred_region
      %s182 = ssub.s32 %s9, 1
      %s183 = smul.u32 21, %s19
      %p184 = scmp.lt.s32.totalorder %s18, 1
      %s185 = scalar_select %p184, %s18, 1
      %p186 = scmp.lt.s32.totalorder %s183, 20
      %s187 = scalar_select %p186, %s183, 20
      %s188 = smul.addr %s187, 4
      %s189 = smul.addr %s185, 84
      %s190 = sadd.s32 %s188, %s189
      %s191 = smul.addr %s190, 4
      %s192 = scalar_lea.vmem %s0, %s191
      %p193 = pneg %p49
      %p194 = pneg %p46
      %p195 = scmp.lt.s32.totalorder %s18, 1
      %s196 = scalar_select %p195, %s18, 1
      %s197 = smul.addr %s196, 64
      %s198 = smul.addr %s197, 4
      %s199 = scalar_lea.vmem %s1, %s198
      %p200 = pneg %p75
      %p201 = pneg %p72
      %p202 = scmp.lt.s32.totalorder %s18, 1
      %s203 = scalar_select %p202, %s18, 1
      %s204 = scalar_lea.vmem %s2, %s203
      %p205 = pneg %p101
      %p206 = pneg %p98
      %p207 = pneg %p129
      %p208 = pneg %p126
      %s209 = smul.u32 21, %s19
      %p210 = scmp.lt.s32.totalorder %s18, 1
      %s211 = scalar_select %p210, %s18, 1
      %p212 = scmp.lt.s32.totalorder %s209, 20
      %s213 = scalar_select %p212, %s209, 20
      %s214 = smul.addr %s211, 21
      %s215 = sadd.s32 %s213, %s214
      %s216 = smul.addr %s215, 4
      %s217 = scalar_lea.vmem %s3, %s216
      %s218 = smul.u32 21, %s19
      %p219 = scmp.lt.s32.totalorder %s18, 1
      %s220 = scalar_select %p219, %s18, 1
      %p221 = scmp.lt.s32.totalorder %s218, 20
      %s222 = scalar_select %p221, %s218, 20
      %s223 = smul.addr %s222, 4
      %s224 = smul.addr %s220, 84
      %s225 = sadd.s32 %s223, %s224
      %s226 = smul.addr %s225, 4
      %s227 = scalar_lea.vmem %s0, %s226
      %s228 = smul.u32 21, %s19
      %p229 = scmp.lt.s32.totalorder %s18, 1
      %s230 = scalar_select %p229, %s18, 1
      %s231 = smul.addr %s230, 64
      %s232 = smul.addr %s231, 4
      %s233 = scalar_lea.vmem %s1, %s232
      %p234 = scmp.lt.s32.totalorder %s18, 1
      %s235 = scalar_select %p234, %s18, 1
      %s236 = scalar_lea.vmem %s2, %s235
      %s237 = smul.u32 21, %s19
      %p238 = scmp.lt.s32.totalorder %s18, 1
      %s239 = scalar_select %p238, %s18, 1
      %p240 = scmp.lt.s32.totalorder %s237, 20
      %s241 = scalar_select %p240, %s237, 20
      %s242 = smul.addr %s239, 21
      %s243 = sadd.s32 %s241, %s242
      %s244 = smul.addr %s243, 4
      %s245 = scalar_lea.vmem %s3, %s244
      %s246 = smul.u32 21, %s19
      %v248 = vld [vmem:[%s227] sm:$0xff]
      %v249 = vld [vmem:[%s227 + $0x8] sm:$0xff]
      %v250 = vld [vmem:[%s227 + $0x10] sm:$0xff]
      %v251 = vld [vmem:[%s227 + $0x18] sm:$0xff]
      %v252 = vld [vmem:[%s227 + $0x20] sm:$0xff]
      %v253 = vld [vmem:[%s227 + $0x28] sm:$0xff]
      %v254 = vld [vmem:[%s227 + $0x30] sm:$0xff]
      %v255 = vld [vmem:[%s227 + $0x38] sm:$0xff]
      %v256 = vld [vmem:[%s227 + $0x40] sm:$0xff]
      %v257 = vld [vmem:[%s227 + $0x48] sm:$0xff]
      %v258 = vld [vmem:[%s227 + $0x50] sm:$0xff]
      %v259 = vld [vmem:[%s227 + $0x58] sm:$0xff]
      %v260 = vld [vmem:[%s227 + $0x60] sm:$0xff]
      %v261 = vld [vmem:[%s227 + $0x68] sm:$0xff]
      %v262 = vld [vmem:[%s227 + $0x70] sm:$0xff]
      %v263 = vld [vmem:[%s227 + $0x78] sm:$0xff]
      %v264 = vld [vmem:[%s227 + $0x80] sm:$0xff]
      %v265 = vld [vmem:[%s227 + $0x88] sm:$0xff]
      %v266 = vld [vmem:[%s227 + $0x90] sm:$0xff]
      %v267 = vld [vmem:[%s227 + $0x98] sm:$0xff]
      %v268 = vld [vmem:[%s227 + $0xa0] sm:$0xff]
      %v269 = vld [vmem:[%s227 + $0xa8] sm:$0xff]
      %v270 = vld [vmem:[%s227 + $0xb0] sm:$0xff]
      %v271 = vld [vmem:[%s227 + $0xb8] sm:$0xff]
      %v272 = vld [vmem:[%s227 + $0xc0] sm:$0xff]
      %v273 = vld [vmem:[%s227 + $0xc8] sm:$0xff]
      %v274 = vld [vmem:[%s227 + $0xd0] sm:$0xff]
      %v275 = vld [vmem:[%s227 + $0xd8] sm:$0xff]
      %v276 = vld [vmem:[%s227 + $0xe0] sm:$0xff]
      %v277 = vld [vmem:[%s227 + $0xe8] sm:$0xff]
      %v278 = vld [vmem:[%s227 + $0xf0] sm:$0xff]
      %v279 = vld [vmem:[%s227 + $0xf8] sm:$0xff]
      %v280 = vld [vmem:[%s227 + $0x100] sm:$0xff]
      %v281 = vld [vmem:[%s227 + $0x108] sm:$0xff]
      %v282 = vld [vmem:[%s227 + $0x110] sm:$0xff]
      %v283 = vld [vmem:[%s227 + $0x118] sm:$0xff]
      %v284 = vld [vmem:[%s227 + $0x120] sm:$0xff]
      %v285 = vld [vmem:[%s227 + $0x128] sm:$0xff]
      %v286 = vld [vmem:[%s227 + $0x130] sm:$0xff]
      %v287 = vld [vmem:[%s227 + $0x138] sm:$0xff]
      %v288 = vld [vmem:[%s227 + $0x140] sm:$0x11]
      %v289 = vld [vmem:[%s227 + $0x148] sm:$0x11]
      %v290 = vld [vmem:[%s233] sm:$0xf]
      %v291 = vld [vmem:[%s233 + $0x4] sm:$0xf]
      %v292 = vld [vmem:[%s233 + $0x8] sm:$0xf]
      %v293 = vld [vmem:[%s233 + $0xc] sm:$0xf]
      %v294 = vld [vmem:[%s233 + $0x10] sm:$0xf]
      %v295 = vld [vmem:[%s233 + $0x14] sm:$0xf]
      %v296 = vld [vmem:[%s233 + $0x18] sm:$0xf]
      %v297 = vld [vmem:[%s233 + $0x1c] sm:$0xf]
      %v298 = vld [vmem:[%s233 + $0x20] sm:$0xf]
      %v299 = vld [vmem:[%s233 + $0x24] sm:$0xf]
      %v300 = vld [vmem:[%s233 + $0x28] sm:$0xf]
      %v301 = vld [vmem:[%s233 + $0x2c] sm:$0xf]
      %v302 = vld [vmem:[%s233 + $0x30] sm:$0xf]
      %v303 = vld [vmem:[%s233 + $0x34] sm:$0xf]
      %v304 = vld [vmem:[%s233 + $0x38] sm:$0xf]
      %v305 = vld [vmem:[%s233 + $0x3c] sm:$0xf]
      %v306 = vld [vmem:[%s233 + $0x40] sm:$0xf]
      %v307 = vld [vmem:[%s233 + $0x44] sm:$0xf]
      %v308 = vld [vmem:[%s233 + $0x48] sm:$0xf]
      %v309 = vld [vmem:[%s233 + $0x4c] sm:$0xf]
      %v310 = vld [vmem:[%s233 + $0x50] sm:$0xf]
      %v311 = vld [vmem:[%s233 + $0x54] sm:$0xf]
      %v312 = vld [vmem:[%s233 + $0x58] sm:$0xf]
      %v313 = vld [vmem:[%s233 + $0x5c] sm:$0xf]
      %v314 = vld [vmem:[%s233 + $0x60] sm:$0xf]
      %v315 = vld [vmem:[%s233 + $0x64] sm:$0xf]
      %v316 = vld [vmem:[%s233 + $0x68] sm:$0xf]
      %v317 = vld [vmem:[%s233 + $0x6c] sm:$0xf]
      %v318 = vld [vmem:[%s233 + $0x70] sm:$0xf]
      %v319 = vld [vmem:[%s233 + $0x74] sm:$0xf]
      %v320 = vld [vmem:[%s233 + $0x78] sm:$0xf]
      %v321 = vld [vmem:[%s233 + $0x7c] sm:$0xf]
      %v322 = vld [vmem:[%s233 + $0x80] sm:$0xf]
      %v323 = vld [vmem:[%s233 + $0x84] sm:$0xf]
      %v324 = vld [vmem:[%s233 + $0x88] sm:$0xf]
      %v325 = vld [vmem:[%s233 + $0x8c] sm:$0xf]
      %v326 = vld [vmem:[%s233 + $0x90] sm:$0xf]
      %v327 = vld [vmem:[%s233 + $0x94] sm:$0xf]
      %v328 = vld [vmem:[%s233 + $0x98] sm:$0xf]
      %v329 = vld [vmem:[%s233 + $0x9c] sm:$0xf]
      %v330 = vld [vmem:[%s233 + $0xa0] sm:$0xf]
      %v331 = vld [vmem:[%s233 + $0xa4] sm:$0xf]
      %v332 = vld [vmem:[%s233 + $0xa8] sm:$0xf]
      %v333 = vld [vmem:[%s233 + $0xac] sm:$0xf]
      %v334 = vld [vmem:[%s233 + $0xb0] sm:$0xf]
      %v335 = vld [vmem:[%s233 + $0xb4] sm:$0xf]
      %v336 = vld [vmem:[%s233 + $0xb8] sm:$0xf]
      %v337 = vld [vmem:[%s233 + $0xbc] sm:$0xf]
      %v338 = vld [vmem:[%s233 + $0xc0] sm:$0xf]
      %v339 = vld [vmem:[%s233 + $0xc4] sm:$0xf]
      %v340 = vld [vmem:[%s233 + $0xc8] sm:$0xf]
      %v341 = vld [vmem:[%s233 + $0xcc] sm:$0xf]
      %v342 = vld [vmem:[%s233 + $0xd0] sm:$0xf]
      %v343 = vld [vmem:[%s233 + $0xd4] sm:$0xf]
      %v344 = vld [vmem:[%s233 + $0xd8] sm:$0xf]
      %v345 = vld [vmem:[%s233 + $0xdc] sm:$0xf]
      %v346 = vld [vmem:[%s233 + $0xe0] sm:$0xf]
      %v347 = vld [vmem:[%s233 + $0xe4] sm:$0xf]
      %v348 = vld [vmem:[%s233 + $0xe8] sm:$0xf]
      %v349 = vld [vmem:[%s233 + $0xec] sm:$0xf]
      %v350 = vld [vmem:[%s233 + $0xf0] sm:$0xf]
      %v351 = vld [vmem:[%s233 + $0xf4] sm:$0xf]
      %v352 = vld [vmem:[%s233 + $0xf8] sm:$0xf]
      %v353 = vld [vmem:[%s233 + $0xfc] sm:$0xf]
      %v354 = vld [vmem:[%s236] sm:$0x1]
      %v356 = vlaneseq
      %v357 = vshrl.u32 %v356, 7
      %v358 = vsub.s32 0, %v357
      %v359 = vrot.slane %v354, %v358
      %v403 = vunpack.c.l.b16 %v248
      %v404 = vunpack.c.h.b16 %v248
      %v405 = vunpack.c.l.b16 %v249
      %v406 = vunpack.c.h.b16 %v249
      %v407 = vunpack.c.l.b16 %v250
      %v408 = vunpack.c.h.b16 %v250
      %v409 = vunpack.c.l.b16 %v251
      %v410 = vunpack.c.h.b16 %v251
      %v411 = vunpack.c.l.b16 %v252
      %v412 = vunpack.c.h.b16 %v252
      %v413 = vunpack.c.l.b16 %v253
      %v414 = vunpack.c.h.b16 %v253
      %v415 = vunpack.c.l.b16 %v254
      %v416 = vunpack.c.h.b16 %v254
      %v417 = vunpack.c.l.b16 %v255
      %v418 = vunpack.c.h.b16 %v255
      %v419 = vunpack.c.l.b16 %v256
      %v420 = vunpack.c.h.b16 %v256
      %v421 = vunpack.c.l.b16 %v257
      %v422 = vunpack.c.h.b16 %v257
      %v423 = vunpack.c.l.b16 %v258
      %v424 = vunpack.c.h.b16 %v258
      %v425 = vunpack.c.l.b16 %v259
      %v426 = vunpack.c.h.b16 %v259
      %v427 = vunpack.c.l.b16 %v260
      %v428 = vunpack.c.h.b16 %v260
      %v429 = vunpack.c.l.b16 %v261
      %v430 = vunpack.c.h.b16 %v261
      %v431 = vunpack.c.l.b16 %v262
      %v432 = vunpack.c.h.b16 %v262
      %v433 = vunpack.c.l.b16 %v263
      %v434 = vunpack.c.h.b16 %v263
      %v435 = vunpack.c.l.b16 %v264
      %v436 = vunpack.c.h.b16 %v264
      %v437 = vunpack.c.l.b16 %v265
      %v438 = vunpack.c.h.b16 %v265
      %v439 = vunpack.c.l.b16 %v266
      %v440 = vunpack.c.h.b16 %v266
      %v441 = vunpack.c.l.b16 %v267
      %v442 = vunpack.c.h.b16 %v267
      %v443 = vunpack.c.l.b16 %v268
      %v444 = vunpack.c.h.b16 %v268
      %v445 = vunpack.c.l.b16 %v269
      %v446 = vunpack.c.h.b16 %v269
      %v447 = vunpack.c.l.b16 %v270
      %v448 = vunpack.c.h.b16 %v270
      %v449 = vunpack.c.l.b16 %v271
      %v450 = vunpack.c.h.b16 %v271
      %v451 = vunpack.c.l.b16 %v272
      %v452 = vunpack.c.h.b16 %v272
      %v453 = vunpack.c.l.b16 %v273
      %v454 = vunpack.c.h.b16 %v273
      %v455 = vunpack.c.l.b16 %v274
      %v456 = vunpack.c.h.b16 %v274
      %v457 = vunpack.c.l.b16 %v275
      %v458 = vunpack.c.h.b16 %v275
      %v459 = vunpack.c.l.b16 %v276
      %v460 = vunpack.c.h.b16 %v276
      %v461 = vunpack.c.l.b16 %v277
      %v462 = vunpack.c.h.b16 %v277
      %v463 = vunpack.c.l.b16 %v278
      %v464 = vunpack.c.h.b16 %v278
      %v465 = vunpack.c.l.b16 %v279
      %v466 = vunpack.c.h.b16 %v279
      %v467 = vunpack.c.l.b16 %v280
      %v468 = vunpack.c.h.b16 %v280
      %v469 = vunpack.c.l.b16 %v281
      %v470 = vunpack.c.h.b16 %v281
      %v471 = vunpack.c.l.b16 %v282
      %v472 = vunpack.c.h.b16 %v282
      %v473 = vunpack.c.l.b16 %v283
      %v474 = vunpack.c.h.b16 %v283
      %v475 = vunpack.c.l.b16 %v284
      %v476 = vunpack.c.h.b16 %v284
      %v477 = vunpack.c.l.b16 %v285
      %v478 = vunpack.c.h.b16 %v285
      %v479 = vunpack.c.l.b16 %v286
      %v480 = vunpack.c.h.b16 %v286
      %v481 = vunpack.c.l.b16 %v287
      %v482 = vunpack.c.h.b16 %v287
      %v483 = vunpack.c.l.b16 %v288
      %v484 = vunpack.c.h.b16 %v288
      %v485 = vunpack.c.l.b16 %v289
      %v486 = vunpack.c.h.b16 %v289
      %v487 = vpack.c.b16 %v407, %v403
      %v488 = vpack.c.b16 %v408, %v404
      %v489 = vpack.c.b16 %v409, %v405
      %v490 = vpack.c.b16 %v410, %v406
      %v491 = vpack.c.b16 %v415, %v411
      %v492 = vpack.c.b16 %v416, %v412
      %v493 = vpack.c.b16 %v417, %v413
      %v494 = vpack.c.b16 %v418, %v414
      %v495 = vpack.c.b16 %v423, %v419
      %v496 = vpack.c.b16 %v424, %v420
      %v497 = vpack.c.b16 %v425, %v421
      %v498 = vpack.c.b16 %v426, %v422
      %v499 = vpack.c.b16 %v431, %v427
      %v500 = vpack.c.b16 %v432, %v428
      %v501 = vpack.c.b16 %v433, %v429
      %v502 = vpack.c.b16 %v434, %v430
      %v503 = vpack.c.b16 %v439, %v435
      %v504 = vpack.c.b16 %v440, %v436
      %v505 = vpack.c.b16 %v441, %v437
      %v506 = vpack.c.b16 %v442, %v438
      %v507 = vpack.c.b16 %v447, %v443
      %v508 = vpack.c.b16 %v448, %v444
      %v509 = vpack.c.b16 %v449, %v445
      %v510 = vpack.c.b16 %v450, %v446
      %v511 = vpack.c.b16 %v455, %v451
      %v512 = vpack.c.b16 %v456, %v452
      %v513 = vpack.c.b16 %v457, %v453
      %v514 = vpack.c.b16 %v458, %v454
      %v515 = vpack.c.b16 %v463, %v459
      %v516 = vpack.c.b16 %v464, %v460
      %v517 = vpack.c.b16 %v465, %v461
      %v518 = vpack.c.b16 %v466, %v462
      %v519 = vpack.c.b16 %v471, %v467
      %v520 = vpack.c.b16 %v472, %v468
      %v521 = vpack.c.b16 %v473, %v469
      %v522 = vpack.c.b16 %v474, %v470
      %v523 = vpack.c.b16 %v479, %v475
      %v524 = vpack.c.b16 %v480, %v476
      %v525 = vpack.c.b16 %v481, %v477
      %v526 = vpack.c.b16 %v482, %v478
      %v527 = vpack.c.b16 %v483, %v483
      %v528 = vpack.c.b16 %v484, %v484
      %v529 = vpack.c.b16 %v485, %v485
      %v530 = vpack.c.b16 %v486, %v486
      %v639 = vunpack.c.l.b16 %v290
      %v640 = vunpack.c.l.b16 %v291
      %v641 = vunpack.c.l.b16 %v292
      %v642 = vunpack.c.l.b16 %v293
      %v643 = vunpack.c.l.b16 %v294
      %v644 = vunpack.c.l.b16 %v295
      %v645 = vunpack.c.l.b16 %v296
      %v646 = vunpack.c.l.b16 %v297
      %v647 = vunpack.c.l.b16 %v298
      %v648 = vunpack.c.l.b16 %v299
      %v649 = vunpack.c.l.b16 %v300
      %v650 = vunpack.c.l.b16 %v301
      %v651 = vunpack.c.l.b16 %v302
      %v652 = vunpack.c.l.b16 %v303
      %v653 = vunpack.c.l.b16 %v304
      %v654 = vunpack.c.l.b16 %v305
      %v655 = vunpack.c.l.b16 %v306
      %v656 = vunpack.c.l.b16 %v307
      %v657 = vunpack.c.l.b16 %v308
      %v658 = vunpack.c.l.b16 %v309
      %v659 = vunpack.c.l.b16 %v310
      %v660 = vunpack.c.l.b16 %v311
      %v661 = vunpack.c.l.b16 %v312
      %v662 = vunpack.c.l.b16 %v313
      %v663 = vunpack.c.l.b16 %v314
      %v664 = vunpack.c.l.b16 %v315
      %v665 = vunpack.c.l.b16 %v316
      %v666 = vunpack.c.l.b16 %v317
      %v667 = vunpack.c.l.b16 %v318
      %v668 = vunpack.c.l.b16 %v319
      %v669 = vunpack.c.l.b16 %v320
      %v670 = vunpack.c.l.b16 %v321
      %v671 = vunpack.c.l.b16 %v322
      %v672 = vunpack.c.l.b16 %v323
      %v673 = vunpack.c.l.b16 %v324
      %v674 = vunpack.c.l.b16 %v325
      %v675 = vunpack.c.l.b16 %v326
      %v676 = vunpack.c.l.b16 %v327
      %v677 = vunpack.c.l.b16 %v328
      %v678 = vunpack.c.l.b16 %v329
      %v679 = vunpack.c.l.b16 %v330
      %v680 = vunpack.c.l.b16 %v331
      %v681 = vunpack.c.l.b16 %v332
      %v682 = vunpack.c.l.b16 %v333
      %v683 = vunpack.c.l.b16 %v334
      %v684 = vunpack.c.l.b16 %v335
      %v685 = vunpack.c.l.b16 %v336
      %v686 = vunpack.c.l.b16 %v337
      %v687 = vunpack.c.l.b16 %v338
      %v688 = vunpack.c.l.b16 %v339
      %v689 = vunpack.c.l.b16 %v340
      %v690 = vunpack.c.l.b16 %v341
      %v691 = vunpack.c.l.b16 %v342
      %v692 = vunpack.c.l.b16 %v343
      %v693 = vunpack.c.l.b16 %v344
      %v694 = vunpack.c.l.b16 %v345
      %v695 = vunpack.c.l.b16 %v346
      %v696 = vunpack.c.l.b16 %v347
      %v697 = vunpack.c.l.b16 %v348
      %v698 = vunpack.c.l.b16 %v349
      %v699 = vunpack.c.l.b16 %v350
      %v700 = vunpack.c.l.b16 %v351
      %v701 = vunpack.c.l.b16 %v352
      %v702 = vunpack.c.l.b16 %v353
      %v703 = vpack.c.b16 %v640, %v639
      %v704 = vpack.c.b16 %v642, %v641
      %v705 = vpack.c.b16 %v644, %v643
      %v706 = vpack.c.b16 %v646, %v645
      %v707 = vpack.c.b16 %v648, %v647
      %v708 = vpack.c.b16 %v650, %v649
      %v709 = vpack.c.b16 %v652, %v651
      %v710 = vpack.c.b16 %v654, %v653
      %v711 = vpack.c.b16 %v656, %v655
      %v712 = vpack.c.b16 %v658, %v657
      %v713 = vpack.c.b16 %v660, %v659
      %v714 = vpack.c.b16 %v662, %v661
      %v715 = vpack.c.b16 %v664, %v663
      %v716 = vpack.c.b16 %v666, %v665
      %v717 = vpack.c.b16 %v668, %v667
      %v718 = vpack.c.b16 %v670, %v669
      %v719 = vpack.c.b16 %v672, %v671
      %v720 = vpack.c.b16 %v674, %v673
      %v721 = vpack.c.b16 %v676, %v675
      %v722 = vpack.c.b16 %v678, %v677
      %v723 = vpack.c.b16 %v680, %v679
      %v724 = vpack.c.b16 %v682, %v681
      %v725 = vpack.c.b16 %v684, %v683
      %v726 = vpack.c.b16 %v686, %v685
      %v727 = vpack.c.b16 %v688, %v687
      %v728 = vpack.c.b16 %v690, %v689
      %v729 = vpack.c.b16 %v692, %v691
      %v730 = vpack.c.b16 %v694, %v693
      %v731 = vpack.c.b16 %v696, %v695
      %v732 = vpack.c.b16 %v698, %v697
      %v733 = vpack.c.b16 %v700, %v699
      %v734 = vpack.c.b16 %v702, %v701
      %767 = vmatprep.subr.bf16.mxu0 0
      %768 = vmatpush1.bf16.msra.mxu0 %v703
      %769 = vmatprep.subr.bf16.mxu0 0
      %770 = vmatpush1.bf16.msra.mxu0 %v704
      %771 = vmatprep.subr.bf16.mxu0 0
      %772 = vmatpush1.bf16.msra.mxu0 %v705
      %773 = vmatprep.subr.bf16.mxu0 0
      %774 = vmatpush1.bf16.msra.mxu0 %v706
      %775 = vmatprep.subr.bf16.mxu0 0
      %776 = vmatpush1.bf16.msra.mxu0 %v707
      %777 = vmatprep.subr.bf16.mxu0 0
      %778 = vmatpush1.bf16.msra.mxu0 %v708
      %779 = vmatprep.subr.bf16.mxu0 0
      %780 = vmatpush1.bf16.msra.mxu0 %v709
      %781 = vmatprep.subr.bf16.mxu0 0
      %782 = vmatpush1.bf16.msra.mxu0 %v710
      %783 = vmatprep.subr.bf16.mxu0 0
      %784 = vmatpush1.bf16.msra.mxu0 %v711
      %785 = vmatprep.subr.bf16.mxu0 0
      %786 = vmatpush1.bf16.msra.mxu0 %v712
      %787 = vmatprep.subr.bf16.mxu0 0
      %788 = vmatpush1.bf16.msra.mxu0 %v713
      %789 = vmatprep.subr.bf16.mxu0 0
      %790 = vmatpush1.bf16.msra.mxu0 %v714
      %791 = vmatprep.subr.bf16.mxu0 0
      %792 = vmatpush1.bf16.msra.mxu0 %v715
      %793 = vmatprep.subr.bf16.mxu0 0
      %794 = vmatpush1.bf16.msra.mxu0 %v716
      %795 = vmatprep.subr.bf16.mxu0 0
      %796 = vmatpush1.bf16.msra.mxu0 %v717
      %797 = vmatprep.subr.bf16.mxu0 0
      %798 = vmatpush1.bf16.msra.mxu0 %v718
      %799 = vmatprep.mubr.bf16.mxu0 %v488
      %800 = vmatmul.mubr.bf16.gmra.mrb[0].mxu0 %v487
      %v801 = vpop.f32.mrb[0].mxu0
      %v802 = vadd.f32 %v359, %v801
      %v803 = vpop.f32.mrb[0].mxu0
      %v804 = vpop.f32.mrb[0].mxu0
      %v805 = vadd.f32 %v359, %v804
      %v806 = vpop.f32.mrb[0].mxu0
      %807 = vmatprep.mubr.bf16.mxu0 %v492
      %808 = vmatmul.mubr.bf16.gmra.mrb[0].mxu0 %v491
      %v809 = vpop.f32.mrb[0].mxu0
      %v810 = vadd.f32 %v359, %v809
      %v811 = vpop.f32.mrb[0].mxu0
      %v812 = vpop.f32.mrb[0].mxu0
      %v813 = vadd.f32 %v359, %v812
      %v814 = vpop.f32.mrb[0].mxu0
      %815 = vmatprep.mubr.bf16.mxu0 %v496
      %816 = vmatmul.mubr.bf16.gmra.mrb[0].mxu0 %v495
      %v817 = vpop.f32.mrb[0].mxu0
      %v818 = vadd.f32 %v359, %v817
      %v819 = vpop.f32.mrb[0].mxu0
      %v820 = vpop.f32.mrb[0].mxu0
      %v821 = vadd.f32 %v359, %v820
      %v822 = vpop.f32.mrb[0].mxu0
      %823 = vmatprep.mubr.bf16.mxu0 %v500
      %824 = vmatmul.mubr.bf16.gmra.mrb[0].mxu0 %v499
      %v825 = vpop.f32.mrb[0].mxu0
      %v826 = vadd.f32 %v359, %v825
      %v827 = vpop.f32.mrb[0].mxu0
      %v828 = vpop.f32.mrb[0].mxu0
      %v829 = vadd.f32 %v359, %v828
      %v830 = vpop.f32.mrb[0].mxu0
      %831 = vmatprep.mubr.bf16.mxu0 %v504
      %832 = vmatmul.mubr.bf16.gmra.mrb[0].mxu0 %v503
      %v833 = vpop.f32.mrb[0].mxu0
      %v834 = vadd.f32 %v359, %v833
      %v835 = vpop.f32.mrb[0].mxu0
      %v836 = vpop.f32.mrb[0].mxu0
      %v837 = vadd.f32 %v359, %v836
      %v838 = vpop.f32.mrb[0].mxu0
      %839 = vmatprep.mubr.bf16.mxu0 %v508
      %840 = vmatmul.mubr.bf16.gmra.mrb[0].mxu0 %v507
      %v841 = vpop.f32.mrb[0].mxu0
      %v842 = vadd.f32 %v359, %v841
      %v843 = vpop.f32.mrb[0].mxu0
      %v844 = vpop.f32.mrb[0].mxu0
      %v845 = vadd.f32 %v359, %v844
      %v846 = vpop.f32.mrb[0].mxu0
      %847 = vmatprep.mubr.bf16.mxu0 %v512
      %848 = vmatmul.mubr.bf16.gmra.mrb[0].mxu0 %v511
      %v849 = vpop.f32.mrb[0].mxu0
      %v850 = vadd.f32 %v359, %v849
      %v851 = vpop.f32.mrb[0].mxu0
      %v852 = vpop.f32.mrb[0].mxu0
      %v853 = vadd.f32 %v359, %v852
      %v854 = vpop.f32.mrb[0].mxu0
      %855 = vmatprep.mubr.bf16.mxu0 %v516
      %856 = vmatmul.mubr.bf16.gmra.mrb[0].mxu0 %v515
      %v857 = vpop.f32.mrb[0].mxu0
      %v858 = vadd.f32 %v359, %v857
      %v859 = vpop.f32.mrb[0].mxu0
      %v860 = vpop.f32.mrb[0].mxu0
      %v861 = vadd.f32 %v359, %v860
      %v862 = vpop.f32.mrb[0].mxu0
      %863 = vmatprep.mubr.bf16.mxu0 %v520
      %864 = vmatmul.mubr.bf16.gmra.mrb[0].mxu0 %v519
      %v865 = vpop.f32.mrb[0].mxu0
      %v866 = vadd.f32 %v359, %v865
      %v867 = vpop.f32.mrb[0].mxu0
      %v868 = vpop.f32.mrb[0].mxu0
      %v869 = vadd.f32 %v359, %v868
      %v870 = vpop.f32.mrb[0].mxu0
      %871 = vmatprep.mubr.bf16.mxu0 %v524
      %872 = vmatmul.mubr.bf16.gmra.mrb[0].mxu0 %v523
      %v873 = vpop.f32.mrb[0].mxu0
      %v874 = vadd.f32 %v359, %v873
      %v875 = vpop.f32.mrb[0].mxu0
      %v876 = vpop.f32.mrb[0].mxu0
      %v877 = vadd.f32 %v359, %v876
      %v878 = vpop.f32.mrb[0].mxu0
      %879 = vmatprep.mubr.bf16.mxu0 %v528
      %880 = vmatmul.mubr.bf16.gmra.mrb[0].mxu0 %v527
      %v881 = vpop.f32.mrb[0].mxu0
      %v882 = vadd.f32 %v359, %v881
      %v883 = vpop.f32.mrb[0].mxu0
      %v884 = vpop.f32.mrb[0].mxu0
      %v885 = vpop.f32.mrb[0].mxu0
      %886 = vdwg.mxu0
      %887 = vmatprep.subr.bf16.mxu0 0
      %888 = vmatpush1.bf16.msra.mxu0 %v719
      %889 = vmatprep.subr.bf16.mxu0 0
      %890 = vmatpush1.bf16.msra.mxu0 %v720
      %891 = vmatprep.subr.bf16.mxu0 0
      %892 = vmatpush1.bf16.msra.mxu0 %v721
      %893 = vmatprep.subr.bf16.mxu0 0
      %894 = vmatpush1.bf16.msra.mxu0 %v722
      %895 = vmatprep.subr.bf16.mxu0 0
      %896 = vmatpush1.bf16.msra.mxu0 %v723
      %897 = vmatprep.subr.bf16.mxu0 0
      %898 = vmatpush1.bf16.msra.mxu0 %v724
      %899 = vmatprep.subr.bf16.mxu0 0
      %900 = vmatpush1.bf16.msra.mxu0 %v725
      %901 = vmatprep.subr.bf16.mxu0 0
      %902 = vmatpush1.bf16.msra.mxu0 %v726
      %903 = vmatprep.subr.bf16.mxu0 0
      %904 = vmatpush1.bf16.msra.mxu0 %v727
      %905 = vmatprep.subr.bf16.mxu0 0
      %906 = vmatpush1.bf16.msra.mxu0 %v728
      %907 = vmatprep.subr.bf16.mxu0 0
      %908 = vmatpush1.bf16.msra.mxu0 %v729
      %909 = vmatprep.subr.bf16.mxu0 0
      %910 = vmatpush1.bf16.msra.mxu0 %v730
      %911 = vmatprep.subr.bf16.mxu0 0
      %912 = vmatpush1.bf16.msra.mxu0 %v731
      %913 = vmatprep.subr.bf16.mxu0 0
      %914 = vmatpush1.bf16.msra.mxu0 %v732
      %915 = vmatprep.subr.bf16.mxu0 0
      %916 = vmatpush1.bf16.msra.mxu0 %v733
      %917 = vmatprep.subr.bf16.mxu0 0
      %918 = vmatpush1.bf16.msra.mxu0 %v734
      %919 = vmatprep.mubr.bf16.mxu0 %v490
      %920 = vmatmul.mubr.bf16.gmra.mrb[0].mxu0 %v489
      %v921 = vpop.f32.mrb[0].mxu0
      %v922 = vadd.f32 %v802, %v921
      %v923 = vpop.f32.mrb[0].mxu0
      %v924 = vpop.f32.mrb[0].mxu0
      %v925 = vadd.f32 %v805, %v924
      %v926 = vpop.f32.mrb[0].mxu0
      %927 = vmatprep.mubr.bf16.mxu0 %v494
      %928 = vmatmul.mubr.bf16.gmra.mrb[0].mxu0 %v493
      %v929 = vpop.f32.mrb[0].mxu0
      %v930 = vadd.f32 %v810, %v929
      %v931 = vpop.f32.mrb[0].mxu0
      %v932 = vpop.f32.mrb[0].mxu0
      %v933 = vadd.f32 %v813, %v932
      %v934 = vpop.f32.mrb[0].mxu0
      %935 = vmatprep.mubr.bf16.mxu0 %v498
      %936 = vmatmul.mubr.bf16.gmra.mrb[0].mxu0 %v497
      %v937 = vpop.f32.mrb[0].mxu0
      %v938 = vadd.f32 %v818, %v937
      %v939 = vpop.f32.mrb[0].mxu0
      %v940 = vpop.f32.mrb[0].mxu0
      %v941 = vadd.f32 %v821, %v940
      %v942 = vpop.f32.mrb[0].mxu0
      %943 = vmatprep.mubr.bf16.mxu0 %v502
      %944 = vmatmul.mubr.bf16.gmra.mrb[0].mxu0 %v501
      %v945 = vpop.f32.mrb[0].mxu0
      %v946 = vadd.f32 %v826, %v945
      %v947 = vpop.f32.mrb[0].mxu0
      %v948 = vpop.f32.mrb[0].mxu0
      %v949 = vadd.f32 %v829, %v948
      %v950 = vpop.f32.mrb[0].mxu0
      %951 = vmatprep.mubr.bf16.mxu0 %v506
      %952 = vmatmul.mubr.bf16.gmra.mrb[0].mxu0 %v505
      %v953 = vpop.f32.mrb[0].mxu0
      %v954 = vadd.f32 %v834, %v953
      %v955 = vpop.f32.mrb[0].mxu0
      %v956 = vpop.f32.mrb[0].mxu0
      %v957 = vadd.f32 %v837, %v956
      %v958 = vpop.f32.mrb[0].mxu0
      %959 = vmatprep.mubr.bf16.mxu0 %v510
      %960 = vmatmul.mubr.bf16.gmra.mrb[0].mxu0 %v509
      %v961 = vpop.f32.mrb[0].mxu0
      %v962 = vadd.f32 %v842, %v961
      %v963 = vpop.f32.mrb[0].mxu0
      %v964 = vpop.f32.mrb[0].mxu0
      %v965 = vadd.f32 %v845, %v964
      %v966 = vpop.f32.mrb[0].mxu0
      %967 = vmatprep.mubr.bf16.mxu0 %v514
      %968 = vmatmul.mubr.bf16.gmra.mrb[0].mxu0 %v513
      %v969 = vpop.f32.mrb[0].mxu0
      %v970 = vadd.f32 %v850, %v969
      %v971 = vpop.f32.mrb[0].mxu0
      %v972 = vpop.f32.mrb[0].mxu0
      %v973 = vadd.f32 %v853, %v972
      %v974 = vpop.f32.mrb[0].mxu0
      %975 = vmatprep.mubr.bf16.mxu0 %v518
      %976 = vmatmul.mubr.bf16.gmra.mrb[0].mxu0 %v517
      %v977 = vpop.f32.mrb[0].mxu0
      %v978 = vadd.f32 %v858, %v977
      %v979 = vpop.f32.mrb[0].mxu0
      %v980 = vpop.f32.mrb[0].mxu0
      %v981 = vadd.f32 %v861, %v980
      %v982 = vpop.f32.mrb[0].mxu0
      %983 = vmatprep.mubr.bf16.mxu0 %v522
      %984 = vmatmul.mubr.bf16.gmra.mrb[0].mxu0 %v521
      %v985 = vpop.f32.mrb[0].mxu0
      %v986 = vadd.f32 %v866, %v985
      %v987 = vpop.f32.mrb[0].mxu0
      %v988 = vpop.f32.mrb[0].mxu0
      %v989 = vadd.f32 %v869, %v988
      %v990 = vpop.f32.mrb[0].mxu0
      %991 = vmatprep.mubr.bf16.mxu0 %v526
      %992 = vmatmul.mubr.bf16.gmra.mrb[0].mxu0 %v525
      %v993 = vpop.f32.mrb[0].mxu0
      %v994 = vadd.f32 %v874, %v993
      %v995 = vpop.f32.mrb[0].mxu0
      %v996 = vpop.f32.mrb[0].mxu0
      %v997 = vadd.f32 %v877, %v996
      %v998 = vpop.f32.mrb[0].mxu0
      %999 = vmatprep.mubr.bf16.mxu0 %v530
      %1000 = vmatmul.mubr.bf16.gmra.mrb[0].mxu0 %v529
      %v1001 = vpop.f32.mrb[0].mxu0
      %v1002 = vadd.f32 %v882, %v1001
      %v1003 = vpop.f32.mrb[0].mxu0
      %v1004 = vpop.f32.mrb[0].mxu0
      %v1005 = vpop.f32.mrb[0].mxu0
      %1006 = vdwg.mxu0
      %v1007 = vmax.f32 %v922, 0.0
      %v1008 = vmax.f32 %v925, 0.0
      %v1009 = vmax.f32 %v930, 0.0
      %v1010 = vmax.f32 %v933, 0.0
      %v1011 = vmax.f32 %v938, 0.0
      %v1012 = vmax.f32 %v941, 0.0
      %v1013 = vmax.f32 %v946, 0.0
      %v1014 = vmax.f32 %v949, 0.0
      %v1015 = vmax.f32 %v954, 0.0
      %v1016 = vmax.f32 %v957, 0.0
      %v1017 = vmax.f32 %v962, 0.0
      %v1018 = vmax.f32 %v965, 0.0
      %v1019 = vmax.f32 %v970, 0.0
      %v1020 = vmax.f32 %v973, 0.0
      %v1021 = vmax.f32 %v978, 0.0
      %v1022 = vmax.f32 %v981, 0.0
      %v1023 = vmax.f32 %v986, 0.0
      %v1024 = vmax.f32 %v989, 0.0
      %v1025 = vmax.f32 %v994, 0.0
      %v1026 = vmax.f32 %v997, 0.0
      %v1027 = vmax.f32 %v1002, 0.0
      %v1028 = vpack.c.bf16 %v1008, %v1007
      %v1029 = vpack.c.bf16 %v1010, %v1009
      %v1030 = vpack.c.bf16 %v1012, %v1011
      %v1031 = vpack.c.bf16 %v1014, %v1013
      %v1032 = vpack.c.bf16 %v1016, %v1015
      %v1033 = vpack.c.bf16 %v1018, %v1017
      %v1034 = vpack.c.bf16 %v1020, %v1019
      %v1035 = vpack.c.bf16 %v1022, %v1021
      %v1036 = vpack.c.bf16 %v1024, %v1023
      %v1037 = vpack.c.bf16 %v1026, %v1025
      %v1038 = vpack.c.bf16 %v1027, %v1027
      %v1050 = vunpack.c.l.b16 %v1028
      %v1051 = vunpack.c.h.b16 %v1028
      %v1052 = vunpack.c.l.b16 %v1029
      %v1053 = vunpack.c.h.b16 %v1029
      %v1054 = vunpack.c.l.b16 %v1030
      %v1055 = vunpack.c.h.b16 %v1030
      %v1056 = vunpack.c.l.b16 %v1031
      %v1057 = vunpack.c.h.b16 %v1031
      %v1058 = vunpack.c.l.b16 %v1032
      %v1059 = vunpack.c.h.b16 %v1032
      %v1060 = vunpack.c.l.b16 %v1033
      %v1061 = vunpack.c.h.b16 %v1033
      %v1062 = vunpack.c.l.b16 %v1034
      %v1063 = vunpack.c.h.b16 %v1034
      %v1064 = vunpack.c.l.b16 %v1035
      %v1065 = vunpack.c.h.b16 %v1035
      %v1066 = vunpack.c.l.b16 %v1036
      %v1067 = vunpack.c.h.b16 %v1036
      %v1068 = vunpack.c.l.b16 %v1037
      %v1069 = vunpack.c.h.b16 %v1037
      %v1070 = vunpack.c.l.b16 %v1038
      %v1071 = vpack.c.b16 %v1050, %v1050
      %v1072 = vpack.c.b16 %v1051, %v1051
      %v1073 = vpack.c.b16 %v1052, %v1052
      %v1074 = vpack.c.b16 %v1053, %v1053
      %v1075 = vpack.c.b16 %v1054, %v1054
      %v1076 = vpack.c.b16 %v1055, %v1055
      %v1077 = vpack.c.b16 %v1056, %v1056
      %v1078 = vpack.c.b16 %v1057, %v1057
      %v1079 = vpack.c.b16 %v1058, %v1058
      %v1080 = vpack.c.b16 %v1059, %v1059
      %v1081 = vpack.c.b16 %v1060, %v1060
      %v1082 = vpack.c.b16 %v1061, %v1061
      %v1083 = vpack.c.b16 %v1062, %v1062
      %v1084 = vpack.c.b16 %v1063, %v1063
      %v1085 = vpack.c.b16 %v1064, %v1064
      %v1086 = vpack.c.b16 %v1065, %v1065
      %v1087 = vpack.c.b16 %v1066, %v1066
      %v1088 = vpack.c.b16 %v1067, %v1067
      %v1089 = vpack.c.b16 %v1068, %v1068
      %v1090 = vpack.c.b16 %v1069, %v1069
      %v1091 = vpack.c.b16 %v1070, %v1070
      %vm1113 = vcmask 519168
      %1114 = vst.msk [vmem:[%s245] sm:$0xf] %vm1113, %v1071
      %1115 = vst.msk [vmem:[%s245 + $0x4] sm:$0xf] %vm1113, %v1072
      %1116 = vst.msk [vmem:[%s245 + $0x8] sm:$0xf] %vm1113, %v1073
      %1117 = vst.msk [vmem:[%s245 + $0xc] sm:$0xf] %vm1113, %v1074
      %1118 = vst.msk [vmem:[%s245 + $0x10] sm:$0xf] %vm1113, %v1075
      %1119 = vst.msk [vmem:[%s245 + $0x14] sm:$0xf] %vm1113, %v1076
      %1120 = vst.msk [vmem:[%s245 + $0x18] sm:$0xf] %vm1113, %v1077
      %1121 = vst.msk [vmem:[%s245 + $0x1c] sm:$0xf] %vm1113, %v1078
      %1122 = vst.msk [vmem:[%s245 + $0x20] sm:$0xf] %vm1113, %v1079
      %1123 = vst.msk [vmem:[%s245 + $0x24] sm:$0xf] %vm1113, %v1080
      %1124 = vst.msk [vmem:[%s245 + $0x28] sm:$0xf] %vm1113, %v1081
      %1125 = vst.msk [vmem:[%s245 + $0x2c] sm:$0xf] %vm1113, %v1082
      %1126 = vst.msk [vmem:[%s245 + $0x30] sm:$0xf] %vm1113, %v1083
      %1127 = vst.msk [vmem:[%s245 + $0x34] sm:$0xf] %vm1113, %v1084
      %1128 = vst.msk [vmem:[%s245 + $0x38] sm:$0xf] %vm1113, %v1085
      %1129 = vst.msk [vmem:[%s245 + $0x3c] sm:$0xf] %vm1113, %v1086
      %1130 = vst.msk [vmem:[%s245 + $0x40] sm:$0xf] %vm1113, %v1087
      %1131 = vst.msk [vmem:[%s245 + $0x44] sm:$0xf] %vm1113, %v1088
      %1132 = vst.msk [vmem:[%s245 + $0x48] sm:$0xf] %vm1113, %v1089
      %1133 = vst.msk [vmem:[%s245 + $0x4c] sm:$0xf] %vm1113, %v1090
      %vm1134 = vcmask 516096
      %1135 = vst.msk [vmem:[%s245 + $0x50] sm:$0x1] %vm1134, %v1091
      %s1136 = smul.u32 21, %s19
      %p1137 = scmp.lt.s32.totalorder %s18, 1
      %s1138 = scalar_select %p1137, %s18, 1
      %p1139 = scmp.lt.s32.totalorder %s1136, 20
      %s1140 = scalar_select %p1139, %s1136, 20
      %s1141 = smul.addr %s1138, 21
      %s1142 = sadd.s32 %s1140, %s1141
      %s1143 = smul.addr %s1142, 4
      %s1144 = scalar_lea.vmem %s3, %s1143
      // Predicated region
      $region33: #{legged_qnetwork_forward.5} parent=31 // pred_check
        %p1145 = pneg %p126
      $region34: #{legged_qnetwork_forward.5} parent=31 // pred_check_branch
        %1147 = sbr.rel (%p1145) target = $region36
      $region35: #{legged_qnetwork_forward.5} parent=31 // pred_region
        %s1148 = smul.u32 21, %s19
      $region36: #{legged_qnetwork_forward.5} parent=31 // pred_fallthru
        _
    $region32: #{legged_qnetwork_forward.5} parent=5 // pred_fallthru
      _
    %p1149 = scmp.le.s32.totalorder 2, %s9
    // Predicated region
    $region37: #{legged_qnetwork_forward.5} parent=5 // pred_check
      %p1150 = pneg %p1149
    $region38: #{legged_qnetwork_forward.5} parent=5 // pred_check_branch
      %1152 = sbr.rel (%p1150) target = $region40
    $region39: #{legged_qnetwork_forward.5} parent=5 // pred_region
      %s1153 = ssub.s32 %s9, 2
      // Predicated region
      $region41: #{legged_qnetwork_forward.5} parent=39 // pred_check
        %p1154 = pneg %p132
      $region42: #{legged_qnetwork_forward.5} parent=39 // pred_check_branch
        %1156 = sbr.rel (%p1154) target = $region44
      $region43: #{legged_qnetwork_forward.5} parent=39 // pred_region
        %s1157 = smul.u32 21, %s21
        %p1158 = scmp.lt.s32.totalorder %s20, 1
        %s1159 = scalar_select %p1158, %s20, 1
        %p1160 = scmp.lt.s32.totalorder %s1157, 20
        %s1161 = scalar_select %p1160, %s1157, 20
        %s1162 = smul.addr %s1159, 21
        %s1163 = sadd.s32 %s1161, %s1162
        %s1164 = smul.addr %s1163, 4
        %s1165 = scalar_lea.vmem %s3, %s1164
      $region44: #{legged_qnetwork_forward.5} parent=39 // pred_fallthru
        _
    $region40: #{legged_qnetwork_forward.5} parent=5 // pred_fallthru
      _
  $region6: #{legged_qnetwork_forward.5} parent=0 // loop_footer
    %s13 = sadd.s32 1, %s9
  $region7: #{legged_qnetwork_forward.5} parent=0 // loop_footer_branch
    %8 = sbr.rel target = $region3
  $region8: #{legged_qnetwork_forward.5} parent=0 // loop_exit
    _

// kernel: legged_qnetwork_forward.6
$region0: #{legged_qnetwork_forward.6}
  #allocation0 [shape = 'u32[]', space=smem, size = 0x4, offset = 0x4, fixed_abs, tag = 'smem constant byte address 0x4 - core index']
  #allocation1 [shape = 'u32[144,128]{1,0:T(1,128)}', space=vmem, size = 0x12000, scoped, tag = 'internal scratch']
  %s0 = inlined_call_operand.vmem [shape: bf16[2,98,576], index: 0, kind: input, shape index: {}]
  %s1 = inlined_call_operand.vmem [shape: bf16[2,576,64], index: 1, kind: input, shape index: {}]
  %s2 = inlined_call_operand.vmem [shape: f32[2,1,64], index: 2, kind: input, shape index: {}]
  %s3 = inlined_call_operand.vmem [shape: bf16[2,98,64], index: 3, kind: output, shape index: {}]
  %s4 = sld [smem:[#allocation0]]
  $region45: #{legged_qnetwork_forward.6} parent=0
    _
  %s6 = ssub.s32 1, %s4
  %s7 = scalar_select 0, %s6, %s4
  loop: start=0, step=1, limit=4
  $region2: #{legged_qnetwork_forward.6} parent=0 // loop_pre_header
    _
  $region3: #{legged_qnetwork_forward.6} parent=0 // loop_header
    %s9 = sphi 0, %s13
    %p10 = scmp.ge.s32.totalorder %s9, 4
    %s16 = sphi 0, %s28
    %s17 = sphi 0, %s24
    %s18 = sphi 0, %s16
    %s19 = sphi 0, %s17
    %s20 = sphi 0, %s18
    %s21 = sphi 0, %s19
    %s33 = sphi 0, %s35
    %s36 = sphi 0, %s33
    %s37 = sphi 0, %s36
    %s53 = sphi 0, %s37
    %s59 = sphi 0, %s61
    %s62 = sphi 0, %s59
    %s63 = sphi 0, %s62
    %s79 = sphi 0, %s63
    %s85 = sphi 0, %s87
    %s88 = sphi 0, %s85
    %s89 = sphi 0, %s88
    %s105 = sphi 0, %s89
    %s113 = sphi 0, %s115
    %s116 = sphi 0, %s113
    %s117 = sphi 0, %s116
    %s133 = sphi 0, %s117
  $region4: #{legged_qnetwork_forward.6} parent=0 // loop_header_branch
    %12 = sbr.rel (%p10) target = $region8
  $region5: #{legged_qnetwork_forward.6} parent=0 // loop_body
    %s14 = ssub.s32 %s9, 1
    %s15 = ssub.s32 %s9, 2
    %s22 = sadd.s32 1, %s17
    %p23 = scmp.ge.s32.totalorder %s22, 1
    %s24 = scalar_select %p23, 0, %s22
    %s25 = sadd.s32 1, %s16
    %s26 = scalar_select %p23, %s25, %s16
    %p27 = scmp.ge.s32.totalorder %s26, 2
    %s28 = scalar_select %p27, 0, %s26
    %s29 = ssub.s32 %s16, %s28
    %s30 = ssub.s32 %s17, %s24
    %s31 = sor.u32 %s29, %s30
    %p32 = scmp.eq.s32.totalorder %s31, 0
    %s34 = sadd.s32 %s33, 1
    %s35 = scalar_select %p32, %s33, %s34
    %p38 = pneg %p32
    %p39 = scmp.eq.s32.totalorder %s9, 1
    %p40 = por %p38, %p39
    %p41 = scmp.ne.s32.totalorder %s33, %s36
    %p42 = scmp.eq.s32.totalorder %s9, 0
    %p43 = por %p41, %p42
    %p44 = scmp.ne.s32.totalorder %s33, %s36
    %p45 = scmp.eq.s32.totalorder %s14, 1
    %p46 = por %p44, %p45
    %p47 = scmp.ne.s32.totalorder %s36, %s37
    %p48 = scmp.eq.s32.totalorder %s14, 0
    %p49 = por %p47, %p48
    %p50 = scmp.ne.s32.totalorder %s36, %s37
    %p51 = scmp.eq.s32.totalorder %s15, 1
    %p52 = por %p50, %p51
    %p54 = scmp.ne.s32.totalorder %s37, %s53
    %p55 = scmp.eq.s32.totalorder %s15, 0
    %p56 = por %p54, %p55
    %s57 = ssub.s32 %s16, %s28
    %p58 = scmp.eq.s32.totalorder %s57, 0
    %s60 = sadd.s32 %s59, 1
    %s61 = scalar_select %p58, %s59, %s60
    %p64 = pneg %p58
    %p65 = scmp.eq.s32.totalorder %s9, 1
    %p66 = por %p64, %p65
    %p67 = scmp.ne.s32.totalorder %s59, %s62
    %p68 = scmp.eq.s32.totalorder %s9, 0
    %p69 = por %p67, %p68
    %p70 = scmp.ne.s32.totalorder %s59, %s62
    %p71 = scmp.eq.s32.totalorder %s14, 1
    %p72 = por %p70, %p71
    %p73 = scmp.ne.s32.totalorder %s62, %s63
    %p74 = scmp.eq.s32.totalorder %s14, 0
    %p75 = por %p73, %p74
    %p76 = scmp.ne.s32.totalorder %s62, %s63
    %p77 = scmp.eq.s32.totalorder %s15, 1
    %p78 = por %p76, %p77
    %p80 = scmp.ne.s32.totalorder %s63, %s79
    %p81 = scmp.eq.s32.totalorder %s15, 0
    %p82 = por %p80, %p81
    %s83 = ssub.s32 %s16, %s28
    %p84 = scmp.eq.s32.totalorder %s83, 0
    %s86 = sadd.s32 %s85, 1
    %s87 = scalar_select %p84, %s85, %s86
    %p90 = pneg %p84
    %p91 = scmp.eq.s32.totalorder %s9, 1
    %p92 = por %p90, %p91
    %p93 = scmp.ne.s32.totalorder %s85, %s88
    %p94 = scmp.eq.s32.totalorder %s9, 0
    %p95 = por %p93, %p94
    %p96 = scmp.ne.s32.totalorder %s85, %s88
    %p97 = scmp.eq.s32.totalorder %s14, 1
    %p98 = por %p96, %p97
    %p99 = scmp.ne.s32.totalorder %s88, %s89
    %p100 = scmp.eq.s32.totalorder %s14, 0
    %p101 = por %p99, %p100
    %p102 = scmp.ne.s32.totalorder %s88, %s89
    %p103 = scmp.eq.s32.totalorder %s15, 1
    %p104 = por %p102, %p103
    %p106 = scmp.ne.s32.totalorder %s89, %s105
    %p107 = scmp.eq.s32.totalorder %s15, 0
    %p108 = por %p106, %p107
    %s109 = ssub.s32 %s16, %s28
    %s110 = ssub.s32 %s17, %s24
    %s111 = sor.u32 %s109, %s110
    %p112 = scmp.eq.s32.totalorder %s111, 0
    %s114 = sadd.s32 %s113, 1
    %s115 = scalar_select %p112, %s113, %s114
    %p118 = pneg %p112
    %p119 = scmp.eq.s32.totalorder %s9, 1
    %p120 = por %p118, %p119
    %p121 = scmp.ne.s32.totalorder %s113, %s116
    %p122 = scmp.eq.s32.totalorder %s9, 0
    %p123 = por %p121, %p122
    %p124 = scmp.ne.s32.totalorder %s113, %s116
    %p125 = scmp.eq.s32.totalorder %s14, 1
    %p126 = por %p124, %p125
    %p127 = scmp.ne.s32.totalorder %s116, %s117
    %p128 = scmp.eq.s32.totalorder %s14, 0
    %p129 = por %p127, %p128
    %p130 = scmp.ne.s32.totalorder %s116, %s117
    %p131 = scmp.eq.s32.totalorder %s15, 1
    %p132 = por %p130, %p131
    %p134 = scmp.ne.s32.totalorder %s117, %s133
    %p135 = scmp.eq.s32.totalorder %s15, 0
    %p136 = por %p134, %p135
    %p137 = scmp.le.s32.totalorder 1, %s9
    %p138 = scmp.lt.s32.totalorder %s9, 3
    %p139 = pnand %p137, %p138
    %p140 = pneg %p139
    // Predicated region
    $region9: #{legged_qnetwork_forward.6} parent=5 // pred_check
      _
    $region10: #{legged_qnetwork_forward.6} parent=5 // pred_check_branch
      %142 = sbr.rel (%p139) target = $region12
    $region11: #{legged_qnetwork_forward.6} parent=5 // pred_region
      %s143 = ssub.s32 %s9, 1
    $region12: #{legged_qnetwork_forward.6} parent=5 // pred_fallthru
      _
    %p144 = scmp.lt.s32.totalorder %s9, 2
    // Predicated region
    $region13: #{legged_qnetwork_forward.6} parent=5 // pred_check
      %p145 = pneg %p144
    $region14: #{legged_qnetwork_forward.6} parent=5 // pred_check_branch
      %147 = sbr.rel (%p145) target = $region16
    $region15: #{legged_qnetwork_forward.6} parent=5 // pred_region
      // Predicated region
      $region17: #{legged_qnetwork_forward.6} parent=15 // pred_check
        %p148 = pneg %p43
      $region18: #{legged_qnetwork_forward.6} parent=15 // pred_check_branch
        %150 = sbr.rel (%p148) target = $region20
      $region19: #{legged_qnetwork_forward.6} parent=15 // pred_region
        %s151 = smul.u32 13, %s17
        %p152 = scmp.lt.s32.totalorder %s16, 1
        %s153 = scalar_select %p152, %s16, 1
        %p154 = scmp.lt.s32.totalorder %s151, 12
        %s155 = scalar_select %p154, %s151, 12
        %s156 = smul.addr %s155, 5
        %s157 = smul.addr %s153, 65
        %s158 = sadd.s32 %s156, %s157
        %s159 = smul.addr %s158, 4
        %s160 = scalar_lea.vmem %s0, %s159
        %s161 = smul.u32 13, %s17
      $region20: #{legged_qnetwork_forward.6} parent=15 // pred_fallthru
        _
      // Predicated region
      $region21: #{legged_qnetwork_forward.6} parent=15 // pred_check
        %p162 = pneg %p69
      $region22: #{legged_qnetwork_forward.6} parent=15 // pred_check_branch
        %164 = sbr.rel (%p162) target = $region24
      $region23: #{legged_qnetwork_forward.6} parent=15 // pred_region
        %p165 = scmp.lt.s32.totalorder %s16, 1
        %s166 = scalar_select %p165, %s16, 1
        %s167 = smul.addr %s166, 72
        %s168 = smul.addr %s167, 4
        %s169 = scalar_lea.vmem %s1, %s168
      $region24: #{legged_qnetwork_forward.6} parent=15 // pred_fallthru
        _
      // Predicated region
      $region25: #{legged_qnetwork_forward.6} parent=15 // pred_check
        %p170 = pneg %p95
      $region26: #{legged_qnetwork_forward.6} parent=15 // pred_check_branch
        %172 = sbr.rel (%p170) target = $region28
      $region27: #{legged_qnetwork_forward.6} parent=15 // pred_region
        %p173 = scmp.lt.s32.totalorder %s16, 1
        %s174 = scalar_select %p173, %s16, 1
        %s175 = scalar_lea.vmem %s2, %s174
      $region28: #{legged_qnetwork_forward.6} parent=15 // pred_fallthru
        _
    $region16: #{legged_qnetwork_forward.6} parent=5 // pred_fallthru
      _
    %p176 = scmp.le.s32.totalorder 1, %s9
    %p177 = scmp.lt.s32.totalorder %s9, 3
    %p178 = pnand %p176, %p177
    %p179 = pneg %p178
    // Predicated region
    $region29: #{legged_qnetwork_forward.6} parent=5 // pred_check
      _
    $region30: #{legged_qnetwork_forward.6} parent=5 // pred_check_branch
      %181 = sbr.rel (%p178) target = $region32
    $region31: #{legged_qnetwork_forward.6} parent=5 // pred_region
      %s182 = ssub.s32 %s9, 1
      %s183 = smul.u32 13, %s19
      %p184 = scmp.lt.s32.totalorder %s18, 1
      %s185 = scalar_select %p184, %s18, 1
      %p186 = scmp.lt.s32.totalorder %s183, 12
      %s187 = scalar_select %p186, %s183, 12
      %s188 = smul.addr %s187, 5
      %s189 = smul.addr %s185, 65
      %s190 = sadd.s32 %s188, %s189
      %s191 = smul.addr %s190, 4
      %s192 = scalar_lea.vmem %s0, %s191
      %p193 = pneg %p49
      %p194 = pneg %p46
      %p195 = scmp.lt.s32.totalorder %s18, 1
      %s196 = scalar_select %p195, %s18, 1
      %s197 = smul.addr %s196, 72
      %s198 = smul.addr %s197, 4
      %s199 = scalar_lea.vmem %s1, %s198
      %p200 = pneg %p75
      %p201 = pneg %p72
      %p202 = scmp.lt.s32.totalorder %s18, 1
      %s203 = scalar_select %p202, %s18, 1
      %s204 = scalar_lea.vmem %s2, %s203
      %p205 = pneg %p101
      %p206 = pneg %p98
      %p207 = pneg %p129
      %p208 = pneg %p126
      %s209 = smul.u32 13, %s19
      %p210 = scmp.lt.s32.totalorder %s18, 1
      %s211 = scalar_select %p210, %s18, 1
      %p212 = scmp.lt.s32.totalorder %s209, 12
      %s213 = scalar_select %p212, %s209, 12
      %s214 = smul.addr %s211, 13
      %s215 = sadd.s32 %s213, %s214
      %s216 = smul.addr %s215, 4
      %s217 = scalar_lea.vmem %s3, %s216
      %s218 = smul.u32 13, %s19
      %p219 = scmp.lt.s32.totalorder %s18, 1
      %s220 = scalar_select %p219, %s18, 1
      %p221 = scmp.lt.s32.totalorder %s218, 12
      %s222 = scalar_select %p221, %s218, 12
      %s223 = smul.addr %s222, 5
      %s224 = smul.addr %s220, 65
      %s225 = sadd.s32 %s223, %s224
      %s226 = smul.addr %s225, 4
      %s227 = scalar_lea.vmem %s0, %s226
      %s228 = smul.u32 13, %s19
      %p229 = scmp.lt.s32.totalorder %s18, 1
      %s230 = scalar_select %p229, %s18, 1
      %s231 = smul.addr %s230, 72
      %s232 = smul.addr %s231, 4
      %s233 = scalar_lea.vmem %s1, %s232
      %p234 = scmp.lt.s32.totalorder %s18, 1
      %s235 = scalar_select %p234, %s18, 1
      %s236 = scalar_lea.vmem %s2, %s235
      %s237 = smul.u32 13, %s19
      %p238 = scmp.lt.s32.totalorder %s18, 1
      %s239 = scalar_select %p238, %s18, 1
      %p240 = scmp.lt.s32.totalorder %s237, 12
      %s241 = scalar_select %p240, %s237, 12
      %s242 = smul.addr %s239, 13
      %s243 = sadd.s32 %s241, %s242
      %s244 = smul.addr %s243, 4
      %s245 = scalar_lea.vmem %s3, %s244
      %s246 = smul.u32 13, %s19
      %v248 = vld [vmem:[%s227] sm:$0xff]
      %v249 = vld [vmem:[%s227 + $0x8] sm:$0xff]
      %v250 = vld [vmem:[%s227 + $0x10] sm:$0xf]
      %v251 = vld [vmem:[%s227 + $0x14] sm:$0xff]
      %v252 = vld [vmem:[%s227 + $0x1c] sm:$0xff]
      %v253 = vld [vmem:[%s227 + $0x24] sm:$0xf]
      %v254 = vld [vmem:[%s227 + $0x28] sm:$0xff]
      %v255 = vld [vmem:[%s227 + $0x30] sm:$0xff]
      %v256 = vld [vmem:[%s227 + $0x38] sm:$0xf]
      %v257 = vld [vmem:[%s227 + $0x3c] sm:$0xff]
      %v258 = vld [vmem:[%s227 + $0x44] sm:$0xff]
      %v259 = vld [vmem:[%s227 + $0x4c] sm:$0xf]
      %v260 = vld [vmem:[%s227 + $0x50] sm:$0xff]
      %v261 = vld [vmem:[%s227 + $0x58] sm:$0xff]
      %v262 = vld [vmem:[%s227 + $0x60] sm:$0xf]
      %v263 = vld [vmem:[%s227 + $0x64] sm:$0xff]
      %v264 = vld [vmem:[%s227 + $0x6c] sm:$0xff]
      %v265 = vld [vmem:[%s227 + $0x74] sm:$0xf]
      %v266 = vld [vmem:[%s227 + $0x78] sm:$0xff]
      %v267 = vld [vmem:[%s227 + $0x80] sm:$0xff]
      %v268 = vld [vmem:[%s227 + $0x88] sm:$0xf]
      %v269 = vld [vmem:[%s227 + $0x8c] sm:$0xff]
      %v270 = vld [vmem:[%s227 + $0x94] sm:$0xff]
      %v271 = vld [vmem:[%s227 + $0x9c] sm:$0xf]
      %v272 = vld [vmem:[%s227 + $0xa0] sm:$0xff]
      %v273 = vld [vmem:[%s227 + $0xa8] sm:$0xff]
      %v274 = vld [vmem:[%s227 + $0xb0] sm:$0xf]
      %v275 = vld [vmem:[%s227 + $0xb4] sm:$0xff]
      %v276 = vld [vmem:[%s227 + $0xbc] sm:$0xff]
      %v277 = vld [vmem:[%s227 + $0xc4] sm:$0xf]
      %v278 = vld [vmem:[%s227 + $0xc8] sm:$0xff]
      %v279 = vld [vmem:[%s227 + $0xd0] sm:$0xff]
      %v280 = vld [vmem:[%s227 + $0xd8] sm:$0xf]
      %v281 = vld [vmem:[%s227 + $0xdc] sm:$0xff]
      %v282 = vld [vmem:[%s227 + $0xe4] sm:$0xff]
      %v283 = vld [vmem:[%s227 + $0xec] sm:$0xf]
      %v284 = vld [vmem:[%s227 + $0xf0] sm:$0x11]
      %v285 = vld [vmem:[%s227 + $0xf8] sm:$0x11]
      %v286 = vld [vmem:[%s227 + $0x100] sm:$0x1]
      %v287 = vld [vmem:[%s233] sm:$0xf]
      %v288 = vld [vmem:[%s233 + $0x4] sm:$0xf]
      %v289 = vld [vmem:[%s233 + $0x8] sm:$0xf]
      %v290 = vld [vmem:[%s233 + $0xc] sm:$0xf]
      %v291 = vld [vmem:[%s233 + $0x10] sm:$0xf]
      %v292 = vld [vmem:[%s233 + $0x14] sm:$0xf]
      %v293 = vld [vmem:[%s233 + $0x18] sm:$0xf]
      %v294 = vld [vmem:[%s233 + $0x1c] sm:$0xf]
      %v295 = vld [vmem:[%s233 + $0x20] sm:$0xf]
      %v296 = vld [vmem:[%s233 + $0x24] sm:$0xf]
      %v297 = vld [vmem:[%s233 + $0x28] sm:$0xf]
      %v298 = vld [vmem:[%s233 + $0x2c] sm:$0xf]
      %v299 = vld [vmem:[%s233 + $0x30] sm:$0xf]
      %v300 = vld [vmem:[%s233 + $0x34] sm:$0xf]
      %v301 = vld [vmem:[%s233 + $0x38] sm:$0xf]
      %v302 = vld [vmem:[%s233 + $0x3c] sm:$0xf]
      %v303 = vld [vmem:[%s233 + $0x40] sm:$0xf]
      %v304 = vld [vmem:[%s233 + $0x44] sm:$0xf]
      %v305 = vld [vmem:[%s233 + $0x48] sm:$0xf]
      %v306 = vld [vmem:[%s233 + $0x4c] sm:$0xf]
      %v307 = vld [vmem:[%s233 + $0x50] sm:$0xf]
      %v308 = vld [vmem:[%s233 + $0x54] sm:$0xf]
      %v309 = vld [vmem:[%s233 + $0x58] sm:$0xf]
      %v310 = vld [vmem:[%s233 + $0x5c] sm:$0xf]
      %v311 = vld [vmem:[%s233 + $0x60] sm:$0xf]
      %v312 = vld [vmem:[%s233 + $0x64] sm:$0xf]
      %v313 = vld [vmem:[%s233 + $0x68] sm:$0xf]
      %v314 = vld [vmem:[%s233 + $0x6c] sm:$0xf]
      %v315 = vld [vmem:[%s233 + $0x70] sm:$0xf]
      %v316 = vld [vmem:[%s233 + $0x74] sm:$0xf]
      %v317 = vld [vmem:[%s233 + $0x78] sm:$0xf]
      %v318 = vld [vmem:[%s233 + $0x7c] sm:$0xf]
      %v319 = vld [vmem:[%s233 + $0x80] sm:$0xf]
      %v320 = vld [vmem:[%s233 + $0x84] sm:$0xf]
      %v321 = vld [vmem:[%s233 + $0x88] sm:$0xf]
      %v322 = vld [vmem:[%s233 + $0x8c] sm:$0xf]
      %v323 = vld [vmem:[%s233 + $0x90] sm:$0xf]
      %v324 = vld [vmem:[%s233 + $0x94] sm:$0xf]
      %v325 = vld [vmem:[%s233 + $0x98] sm:$0xf]
      %v326 = vld [vmem:[%s233 + $0x9c] sm:$0xf]
      %v327 = vld [vmem:[%s233 + $0xa0] sm:$0xf]
      %v328 = vld [vmem:[%s233 + $0xa4] sm:$0xf]
      %v329 = vld [vmem:[%s233 + $0xa8] sm:$0xf]
      %v330 = vld [vmem:[%s233 + $0xac] sm:$0xf]
      %v331 = vld [vmem:[%s233 + $0xb0] sm:$0xf]
      %v332 = vld [vmem:[%s233 + $0xb4] sm:$0xf]
      %v333 = vld [vmem:[%s233 + $0xb8] sm:$0xf]
      %v334 = vld [vmem:[%s233 + $0xbc] sm:$0xf]
      %v335 = vld [vmem:[%s233 + $0xc0] sm:$0xf]
      %v336 = vld [vmem:[%s233 + $0xc4] sm:$0xf]
      %v337 = vld [vmem:[%s233 + $0xc8] sm:$0xf]
      %v338 = vld [vmem:[%s233 + $0xcc] sm:$0xf]
      %v339 = vld [vmem:[%s233 + $0xd0] sm:$0xf]
      %v340 = vld [vmem:[%s233 + $0xd4] sm:$0xf]
      %v341 = vld [vmem:[%s233 + $0xd8] sm:$0xf]
      %v342 = vld [vmem:[%s233 + $0xdc] sm:$0xf]
      %v343 = vld [vmem:[%s233 + $0xe0] sm:$0xf]
      %v344 = vld [vmem:[%s233 + $0xe4] sm:$0xf]
      %v345 = vld [vmem:[%s233 + $0xe8] sm:$0xf]
      %v346 = vld [vmem:[%s233 + $0xec] sm:$0xf]
      %v347 = vld [vmem:[%s233 + $0xf0] sm:$0xf]
      %v348 = vld [vmem:[%s233 + $0xf4] sm:$0xf]
      %v349 = vld [vmem:[%s233 + $0xf8] sm:$0xf]
      %v350 = vld [vmem:[%s233 + $0xfc] sm:$0xf]
      %v351 = vld [vmem:[%s233 + $0x100] sm:$0xf]
      %v352 = vld [vmem:[%s233 + $0x104] sm:$0xf]
      %v353 = vld [vmem:[%s233 + $0x108] sm:$0xf]
      %v354 = vld [vmem:[%s233 + $0x10c] sm:$0xf]
      %v355 = vld [vmem:[%s233 + $0x110] sm:$0xf]
      %v356 = vld [vmem:[%s233 + $0x114] sm:$0xf]
      %v357 = vld [vmem:[%s233 + $0x118] sm:$0xf]
      %v358 = vld [vmem:[%s233 + $0x11c] sm:$0xf]
      %v359 = vld [vmem:[%s236] sm:$0x1]
      %v361 = vlaneseq
      %v362 = vshrl.u32 %v361, 7
      %v363 = vsub.s32 0, %v362
      %v364 = vrot.slane %v359, %v363
      %v405 = vunpack.c.l.b16 %v248
      %v406 = vunpack.c.h.b16 %v248
      %v407 = vunpack.c.l.b16 %v249
      %v408 = vunpack.c.h.b16 %v249
      %v409 = vunpack.c.l.b16 %v250
      %v410 = vunpack.c.l.b16 %v251
      %v411 = vunpack.c.h.b16 %v251
      %v412 = vunpack.c.l.b16 %v252
      %v413 = vunpack.c.h.b16 %v252
      %v414 = vunpack.c.l.b16 %v253
      %v415 = vunpack.c.l.b16 %v254
      %v416 = vunpack.c.h.b16 %v254
      %v417 = vunpack.c.l.b16 %v255
      %v418 = vunpack.c.h.b16 %v255
      %v419 = vunpack.c.l.b16 %v256
      %v420 = vunpack.c.l.b16 %v257
      %v421 = vunpack.c.h.b16 %v257
      %v422 = vunpack.c.l.b16 %v258
      %v423 = vunpack.c.h.b16 %v258
      %v424 = vunpack.c.l.b16 %v259
      %v425 = vunpack.c.l.b16 %v260
      %v426 = vunpack.c.h.b16 %v260
      %v427 = vunpack.c.l.b16 %v261
      %v428 = vunpack.c.h.b16 %v261
      %v429 = vunpack.c.l.b16 %v262
      %v430 = vunpack.c.l.b16 %v263
      %v431 = vunpack.c.h.b16 %v263
      %v432 = vunpack.c.l.b16 %v264
      %v433 = vunpack.c.h.b16 %v264
      %v434 = vunpack.c.l.b16 %v265
      %v435 = vunpack.c.l.b16 %v266
      %v436 = vunpack.c.h.b16 %v266
      %v437 = vunpack.c.l.b16 %v267
      %v438 = vunpack.c.h.b16 %v267
      %v439 = vunpack.c.l.b16 %v268
      %v440 = vunpack.c.l.b16 %v269
      %v441 = vunpack.c.h.b16 %v269
      %v442 = vunpack.c.l.b16 %v270
      %v443 = vunpack.c.h.b16 %v270
      %v444 = vunpack.c.l.b16 %v271
      %v445 = vunpack.c.l.b16 %v272
      %v446 = vunpack.c.h.b16 %v272
      %v447 = vunpack.c.l.b16 %v273
      %v448 = vunpack.c.h.b16 %v273
      %v449 = vunpack.c.l.b16 %v274
      %v450 = vunpack.c.l.b16 %v275
      %v451 = vunpack.c.h.b16 %v275
      %v452 = vunpack.c.l.b16 %v276
      %v453 = vunpack.c.h.b16 %v276
      %v454 = vunpack.c.l.b16 %v277
      %v455 = vunpack.c.l.b16 %v278
      %v456 = vunpack.c.h.b16 %v278
      %v457 = vunpack.c.l.b16 %v279
      %v458 = vunpack.c.h.b16 %v279
      %v459 = vunpack.c.l.b16 %v280
      %v460 = vunpack.c.l.b16 %v281
      %v461 = vunpack.c.h.b16 %v281
      %v462 = vunpack.c.l.b16 %v282
      %v463 = vunpack.c.h.b16 %v282
      %v464 = vunpack.c.l.b16 %v283
      %v465 = vunpack.c.l.b16 %v284
      %v466 = vunpack.c.h.b16 %v284
      %v467 = vunpack.c.l.b16 %v285
      %v468 = vunpack.c.h.b16 %v285
      %v469 = vunpack.c.l.b16 %v286
      %v470 = vpack.c.b16 %v410, %v405
      %v471 = vpack.c.b16 %v411, %v406
      %v472 = vpack.c.b16 %v412, %v407
      %v473 = vpack.c.b16 %v413, %v408
      %v474 = vpack.c.b16 %v414, %v409
      %v475 = vpack.c.b16 %v420, %v415
      %v476 = vpack.c.b16 %v421, %v416
      %v477 = vpack.c.b16 %v422, %v417
      %v478 = vpack.c.b16 %v423, %v418
      %v479 = vpack.c.b16 %v424, %v419
      %v480 = vpack.c.b16 %v430, %v425
      %v481 = vpack.c.b16 %v431, %v426
      %v482 = vpack.c.b16 %v432, %v427
      %v483 = vpack.c.b16 %v433, %v428
      %v484 = vpack.c.b16 %v434, %v429
      %v485 = vpack.c.b16 %v440, %v435
      %v486 = vpack.c.b16 %v441, %v436
      %v487 = vpack.c.b16 %v442, %v437
      %v488 = vpack.c.b16 %v443, %v438
      %v489 = vpack.c.b16 %v444, %v439
      %v490 = vpack.c.b16 %v450, %v445
      %v491 = vpack.c.b16 %v451, %v446
      %v492 = vpack.c.b16 %v452, %v447
      %v493 = vpack.c.b16 %v453, %v448
      %v494 = vpack.c.b16 %v454, %v449
      %v495 = vpack.c.b16 %v460, %v455
      %v496 = vpack.c.b16 %v461, %v456
      %v497 = vpack.c.b16 %v462, %v457
      %v498 = vpack.c.b16 %v463, %v458
      %v499 = vpack.c.b16 %v464, %v459
      %v500 = vpack.c.b16 %v465, %v465
      %v501 = vpack.c.b16 %v466, %v466
      %v502 = vpack.c.b16 %v467, %v467
      %v503 = vpack.c.b16 %v468, %v468
      %v504 = vpack.c.b16 %v469, %v469
      %v605 = vunpack.c.l.b16 %v287
      %v606 = vunpack.c.l.b16 %v288
      %v607 = vunpack.c.l.b16 %v289
      %v608 = vunpack.c.l.b16 %v290
      %v609 = vunpack.c.l.b16 %v291
      %v610 = vunpack.c.l.b16 %v292
      %v611 = vunpack.c.l.b16 %v293
      %v612 = vunpack.c.l.b16 %v294
      %v613 = vunpack.c.l.b16 %v295
      %v614 = vunpack.c.l.b16 %v296
      %v615 = vunpack.c.l.b16 %v297
      %v616 = vunpack.c.l.b16 %v298
      %v617 = vunpack.c.l.b16 %v299
      %v618 = vunpack.c.l.b16 %v300
      %v619 = vunpack.c.l.b16 %v301
      %v620 = vunpack.c.l.b16 %v302
      %v621 = vunpack.c.l.b16 %v303
      %v622 = vunpack.c.l.b16 %v304
      %v623 = vunpack.c.l.b16 %v305
      %v624 = vunpack.c.l.b16 %v306
      %v625 = vunpack.c.l.b16 %v307
      %v626 = vunpack.c.l.b16 %v308
      %v627 = vunpack.c.l.b16 %v309
      %v628 = vunpack.c.l.b16 %v310
      %v629 = vunpack.c.l.b16 %v311
      %v630 = vunpack.c.l.b16 %v312
      %v631 = vunpack.c.l.b16 %v313
      %v632 = vunpack.c.l.b16 %v314
      %v633 = vunpack.c.l.b16 %v315
      %v634 = vunpack.c.l.b16 %v316
      %v635 = vunpack.c.l.b16 %v317
      %v636 = vunpack.c.l.b16 %v318
      %v637 = vunpack.c.l.b16 %v319
      %v638 = vunpack.c.l.b16 %v320
      %v639 = vunpack.c.l.b16 %v321
      %v640 = vunpack.c.l.b16 %v322
      %v641 = vunpack.c.l.b16 %v323
      %v642 = vunpack.c.l.b16 %v324
      %v643 = vunpack.c.l.b16 %v325
      %v644 = vunpack.c.l.b16 %v326
      %v645 = vunpack.c.l.b16 %v327
      %v646 = vunpack.c.l.b16 %v328
      %v647 = vunpack.c.l.b16 %v329
      %v648 = vunpack.c.l.b16 %v330
      %v649 = vunpack.c.l.b16 %v331
      %v650 = vunpack.c.l.b16 %v332
      %v651 = vunpack.c.l.b16 %v333
      %v652 = vunpack.c.l.b16 %v334
      %v653 = vunpack.c.l.b16 %v335
      %v654 = vunpack.c.l.b16 %v336
      %v655 = vunpack.c.l.b16 %v337
      %v656 = vunpack.c.l.b16 %v338
      %v657 = vunpack.c.l.b16 %v339
      %v658 = vunpack.c.l.b16 %v340
      %v659 = vunpack.c.l.b16 %v341
      %v660 = vunpack.c.l.b16 %v342
      %v661 = vunpack.c.l.b16 %v343
      %v662 = vunpack.c.l.b16 %v344
      %v663 = vunpack.c.l.b16 %v345
      %v664 = vunpack.c.l.b16 %v346
      %v665 = vunpack.c.l.b16 %v347
      %v666 = vunpack.c.l.b16 %v348
      %v667 = vunpack.c.l.b16 %v349
      %v668 = vunpack.c.l.b16 %v350
      %v669 = vunpack.c.l.b16 %v351
      %v670 = vunpack.c.l.b16 %v352
      %v671 = vunpack.c.l.b16 %v353
      %v672 = vunpack.c.l.b16 %v354
      %v673 = vunpack.c.l.b16 %v355
      %v674 = vunpack.c.l.b16 %v356
      %v675 = vunpack.c.l.b16 %v357
      %v676 = vunpack.c.l.b16 %v358
      %v677 = vpack.c.b16 %v606, %v605
      %v678 = vpack.c.b16 %v608, %v607
      %v679 = vpack.c.b16 %v610, %v609
      %v680 = vpack.c.b16 %v612, %v611
      %v681 = vpack.c.b16 %v614, %v613
      %v682 = vpack.c.b16 %v616, %v615
      %v683 = vpack.c.b16 %v618, %v617
      %v684 = vpack.c.b16 %v620, %v619
      %v685 = vpack.c.b16 %v622, %v621
      %v686 = vpack.c.b16 %v624, %v623
      %v687 = vpack.c.b16 %v626, %v625
      %v688 = vpack.c.b16 %v628, %v627
      %v689 = vpack.c.b16 %v630, %v629
      %v690 = vpack.c.b16 %v632, %v631
      %v691 = vpack.c.b16 %v634, %v633
      %v692 = vpack.c.b16 %v636, %v635
      %v693 = vpack.c.b16 %v638, %v637
      %v694 = vpack.c.b16 %v640, %v639
      %v695 = vpack.c.b16 %v642, %v641
      %v696 = vpack.c.b16 %v644, %v643
      %v697 = vpack.c.b16 %v646, %v645
      %v698 = vpack.c.b16 %v648, %v647
      %v699 = vpack.c.b16 %v650, %v649
      %v700 = vpack.c.b16 %v652, %v651
      %v701 = vpack.c.b16 %v654, %v653
      %v702 = vpack.c.b16 %v656, %v655
      %v703 = vpack.c.b16 %v658, %v657
      %v704 = vpack.c.b16 %v660, %v659
      %v705 = vpack.c.b16 %v662, %v661
      %v706 = vpack.c.b16 %v664, %v663
      %v707 = vpack.c.b16 %v666, %v665
      %v708 = vpack.c.b16 %v668, %v667
      %v709 = vpack.c.b16 %v670, %v669
      %v710 = vpack.c.b16 %v672, %v671
      %v711 = vpack.c.b16 %v674, %v673
      %v712 = vpack.c.b16 %v676, %v675
      %vm749 = vcmask 523264
      %v751 = vsel %vm749, %v474, 0
      %v754 = vsel %vm749, %v479, 0
      %v757 = vsel %vm749, %v484, 0
      %v760 = vsel %vm749, %v489, 0
      %v763 = vsel %vm749, %v494, 0
      %v766 = vsel %vm749, %v499, 0
      %v769 = vsel %vm749, %v504, 0
      %771 = vmatprep.subr.bf16.mxu0 0
      %772 = vmatpush1.bf16.msra.mxu0 %v677
      %773 = vmatprep.subr.bf16.mxu0 0
      %774 = vmatpush1.bf16.msra.mxu0 %v678
      %775 = vmatprep.subr.bf16.mxu0 0
      %776 = vmatpush1.bf16.msra.mxu0 %v679
      %777 = vmatprep.subr.bf16.mxu0 0
      %778 = vmatpush1.bf16.msra.mxu0 %v680
      %779 = vmatprep.subr.bf16.mxu0 0
      %780 = vmatpush1.bf16.msra.mxu0 %v681
      %781 = vmatprep.subr.bf16.mxu0 0
      %782 = vmatpush1.bf16.msra.mxu0 %v682
      %783 = vmatprep.subr.bf16.mxu0 0
      %784 = vmatpush1.bf16.msra.mxu0 %v683
      %785 = vmatprep.subr.bf16.mxu0 0
      %786 = vmatpush1.bf16.msra.mxu0 %v684
      %787 = vmatprep.subr.bf16.mxu0 0
      %788 = vmatpush1.bf16.msra.mxu0 %v685
      %789 = vmatprep.subr.bf16.mxu0 0
      %790 = vmatpush1.bf16.msra.mxu0 %v686
      %791 = vmatprep.subr.bf16.mxu0 0
      %792 = vmatpush1.bf16.msra.mxu0 %v687
      %793 = vmatprep.subr.bf16.mxu0 0
      %794 = vmatpush1.bf16.msra.mxu0 %v688
      %795 = vmatprep.subr.bf16.mxu0 0
      %796 = vmatpush1.bf16.msra.mxu0 %v689
      %797 = vmatprep.subr.bf16.mxu0 0
      %798 = vmatpush1.bf16.msra.mxu0 %v690
      %799 = vmatprep.subr.bf16.mxu0 0
      %800 = vmatpush1.bf16.msra.mxu0 %v691
      %801 = vmatprep.subr.bf16.mxu0 0
      %802 = vmatpush1.bf16.msra.mxu0 %v692
      %803 = vmatprep.mubr.bf16.mxu0 %v471
      %804 = vmatmul.mubr.bf16.gmra.mrb[0].mxu0 %v470
      %v805 = vpop.f32.mrb[0].mxu0
      %v806 = vadd.f32 %v364, %v805
      %v807 = vpop.f32.mrb[0].mxu0
      %v808 = vpop.f32.mrb[0].mxu0
      %v809 = vadd.f32 %v364, %v808
      %v810 = vpop.f32.mrb[0].mxu0
      %811 = vmatprep.mubr.bf16.mxu0 %v476
      %812 = vmatmul.mubr.bf16.gmra.mrb[0].mxu0 %v475
      %v813 = vpop.f32.mrb[0].mxu0
      %v814 = vadd.f32 %v364, %v813
      %v815 = vpop.f32.mrb[0].mxu0
      %v816 = vpop.f32.mrb[0].mxu0
      %v817 = vadd.f32 %v364, %v816
      %v818 = vpop.f32.mrb[0].mxu0
      %819 = vmatprep.mubr.bf16.mxu0 %v481
      %820 = vmatmul.mubr.bf16.gmra.mrb[0].mxu0 %v480
      %v821 = vpop.f32.mrb[0].mxu0
      %v822 = vadd.f32 %v364, %v821
      %v823 = vpop.f32.mrb[0].mxu0
      %v824 = vpop.f32.mrb[0].mxu0
      %v825 = vadd.f32 %v364, %v824
      %v826 = vpop.f32.mrb[0].mxu0
      %827 = vmatprep.mubr.bf16.mxu0 %v486
      %828 = vmatmul.mubr.bf16.gmra.mrb[0].mxu0 %v485
      %v829 = vpop.f32.mrb[0].mxu0
      %v830 = vadd.f32 %v364, %v829
      %v831 = vpop.f32.mrb[0].mxu0
      %v832 = vpop.f32.mrb[0].mxu0
      %v833 = vadd.f32 %v364, %v832
      %v834 = vpop.f32.mrb[0].mxu0
      %835 = vmatprep.mubr.bf16.mxu0 %v491
      %836 = vmatmul.mubr.bf16.gmra.mrb[0].mxu0 %v490
      %v837 = vpop.f32.mrb[0].mxu0
      %v838 = vadd.f32 %v364, %v837
      %v839 = vpop.f32.mrb[0].mxu0
      %v840 = vpop.f32.mrb[0].mxu0
      %v841 = vadd.f32 %v364, %v840
      %v842 = vpop.f32.mrb[0].mxu0
      %843 = vmatprep.mubr.bf16.mxu0 %v496
      %844 = vmatmul.mubr.bf16.gmra.mrb[0].mxu0 %v495
      %v845 = vpop.f32.mrb[0].mxu0
      %v846 = vadd.f32 %v364, %v845
      %v847 = vpop.f32.mrb[0].mxu0
      %v848 = vpop.f32.mrb[0].mxu0
      %v849 = vadd.f32 %v364, %v848
      %v850 = vpop.f32.mrb[0].mxu0
      %851 = vmatprep.mubr.bf16.mxu0 %v501
      %852 = vmatmul.mubr.bf16.gmra.mrb[0].mxu0 %v500
      %v853 = vpop.f32.mrb[0].mxu0
      %v854 = vadd.f32 %v364, %v853
      %v855 = vpop.f32.mrb[0].mxu0
      %v856 = vpop.f32.mrb[0].mxu0
      %v857 = vpop.f32.mrb[0].mxu0
      %858 = vdwg.mxu0
      %859 = vmatprep.subr.bf16.mxu0 0
      %860 = vmatpush1.bf16.msra.mxu0 %v693
      %861 = vmatprep.subr.bf16.mxu0 0
      %862 = vmatpush1.bf16.msra.mxu0 %v694
      %863 = vmatprep.subr.bf16.mxu0 0
      %864 = vmatpush1.bf16.msra.mxu0 %v695
      %865 = vmatprep.subr.bf16.mxu0 0
      %866 = vmatpush1.bf16.msra.mxu0 %v696
      %867 = vmatprep.subr.bf16.mxu0 0
      %868 = vmatpush1.bf16.msra.mxu0 %v697
      %869 = vmatprep.subr.bf16.mxu0 0
      %870 = vmatpush1.bf16.msra.mxu0 %v698
      %871 = vmatprep.subr.bf16.mxu0 0
      %872 = vmatpush1.bf16.msra.mxu0 %v699
      %873 = vmatprep.subr.bf16.mxu0 0
      %874 = vmatpush1.bf16.msra.mxu0 %v700
      %875 = vmatprep.subr.bf16.mxu0 0
      %876 = vmatpush1.bf16.msra.mxu0 %v701
      %877 = vmatprep.subr.bf16.mxu0 0
      %878 = vmatpush1.bf16.msra.mxu0 %v702
      %879 = vmatprep.subr.bf16.mxu0 0
      %880 = vmatpush1.bf16.msra.mxu0 %v703
      %881 = vmatprep.subr.bf16.mxu0 0
      %882 = vmatpush1.bf16.msra.mxu0 %v704
      %883 = vmatprep.subr.bf16.mxu0 0
      %884 = vmatpush1.bf16.msra.mxu0 %v705
      %885 = vmatprep.subr.bf16.mxu0 0
      %886 = vmatpush1.bf16.msra.mxu0 %v706
      %887 = vmatprep.subr.bf16.mxu0 0
      %888 = vmatpush1.bf16.msra.mxu0 %v707
      %889 = vmatprep.subr.bf16.mxu0 0
      %890 = vmatpush1.bf16.msra.mxu0 %v708
      %891 = vmatprep.mubr.bf16.mxu0 %v473
      %892 = vmatmul.mubr.bf16.gmra.mrb[0].mxu0 %v472
      %v893 = vpop.f32.mrb[0].mxu0
      %v894 = vadd.f32 %v806, %v893
      %v895 = vpop.f32.mrb[0].mxu0
      %v896 = vpop.f32.mrb[0].mxu0
      %v897 = vadd.f32 %v809, %v896
      %v898 = vpop.f32.mrb[0].mxu0
      %899 = vmatprep.mubr.bf16.mxu0 %v478
      %900 = vmatmul.mubr.bf16.gmra.mrb[0].mxu0 %v477
      %v901 = vpop.f32.mrb[0].mxu0
      %v902 = vadd.f32 %v814, %v901
      %v903 = vpop.f32.mrb[0].mxu0
      %v904 = vpop.f32.mrb[0].mxu0
      %v905 = vadd.f32 %v817, %v904
      %v906 = vpop.f32.mrb[0].mxu0
      %907 = vmatprep.mubr.bf16.mxu0 %v483
      %908 = vmatmul.mubr.bf16.gmra.mrb[0].mxu0 %v482
      %v909 = vpop.f32.mrb[0].mxu0
      %v910 = vadd.f32 %v822, %v909
      %v911 = vpop.f32.mrb[0].mxu0
      %v912 = vpop.f32.mrb[0].mxu0
      %v913 = vadd.f32 %v825, %v912
      %v914 = vpop.f32.mrb[0].mxu0
      %915 = vmatprep.mubr.bf16.mxu0 %v488
      %916 = vmatmul.mubr.bf16.gmra.mrb[0].mxu0 %v487
      %v917 = vpop.f32.mrb[0].mxu0
      %v918 = vadd.f32 %v830, %v917
      %v919 = vpop.f32.mrb[0].mxu0
      %v920 = vpop.f32.mrb[0].mxu0
      %v921 = vadd.f32 %v833, %v920
      %v922 = vpop.f32.mrb[0].mxu0
      %923 = vmatprep.mubr.bf16.mxu0 %v493
      %924 = vmatmul.mubr.bf16.gmra.mrb[0].mxu0 %v492
      %v925 = vpop.f32.mrb[0].mxu0
      %v926 = vadd.f32 %v838, %v925
      %v927 = vpop.f32.mrb[0].mxu0
      %v928 = vpop.f32.mrb[0].mxu0
      %v929 = vadd.f32 %v841, %v928
      %v930 = vpop.f32.mrb[0].mxu0
      %931 = vmatprep.mubr.bf16.mxu0 %v498
      %932 = vmatmul.mubr.bf16.gmra.mrb[0].mxu0 %v497
      %v933 = vpop.f32.mrb[0].mxu0
      %v934 = vadd.f32 %v846, %v933
      %v935 = vpop.f32.mrb[0].mxu0
      %v936 = vpop.f32.mrb[0].mxu0
      %v937 = vadd.f32 %v849, %v936
      %v938 = vpop.f32.mrb[0].mxu0
      %939 = vmatprep.mubr.bf16.mxu0 %v503
      %940 = vmatmul.mubr.bf16.gmra.mrb[0].mxu0 %v502
      %v941 = vpop.f32.mrb[0].mxu0
      %v942 = vadd.f32 %v854, %v941
      %v943 = vpop.f32.mrb[0].mxu0
      %v944 = vpop.f32.mrb[0].mxu0
      %v945 = vpop.f32.mrb[0].mxu0
      %946 = vdwg.mxu0
      %947 = vmatprep.subr.bf16.mxu0 0
      %948 = vmatpush1.bf16.msra.mxu0 %v709
      %949 = vmatprep.subr.bf16.mxu0 0
      %950 = vmatpush1.bf16.msra.mxu0 %v710
      %951 = vmatprep.subr.bf16.mxu0 0
      %952 = vmatpush1.bf16.msra.mxu0 %v711
      %953 = vmatprep.subr.bf16.mxu0 0
      %954 = vmatpush1.bf16.msra.mxu0 %v712
      %955 = vmatprep.subr.bf16.mxu0 0
      %956 = vmatpush1.bf16.msra.mxu0 0
      %957 = vmatprep.subr.bf16.mxu0 0
      %958 = vmatpush1.bf16.msra.mxu0 0
      %959 = vmatprep.subr.bf16.mxu0 0
      %960 = vmatpush1.bf16.msra.mxu0 0
      %961 = vmatprep.subr.bf16.mxu0 0
      %962 = vmatpush1.bf16.msra.mxu0 0
      %963 = vmatprep.subr.bf16.mxu0 0
      %964 = vmatpush1.bf16.msra.mxu0 0
      %965 = vmatprep.subr.bf16.mxu0 0
      %966 = vmatpush1.bf16.msra.mxu0 0
      %967 = vmatprep.subr.bf16.mxu0 0
      %968 = vmatpush1.bf16.msra.mxu0 0
      %969 = vmatprep.subr.bf16.mxu0 0
      %970 = vmatpush1.bf16.msra.mxu0 0
      %971 = vmatprep.subr.bf16.mxu0 0
      %972 = vmatpush1.bf16.msra.mxu0 0
      %973 = vmatprep.subr.bf16.mxu0 0
      %974 = vmatpush1.bf16.msra.mxu0 0
      %975 = vmatprep.subr.bf16.mxu0 0
      %976 = vmatpush1.bf16.msra.mxu0 0
      %977 = vmatprep.subr.bf16.mxu0 0
      %978 = vmatpush1.bf16.msra.mxu0 0
      %979 = vmatprep.mubr.bf16.mxu0 0
      %980 = vmatmul.mubr.bf16.gmra.mrb[0].mxu0 %v751
      %v981 = vpop.f32.mrb[0].mxu0
      %v982 = vadd.f32 %v894, %v981
      %v983 = vpop.f32.mrb[0].mxu0
      %v984 = vpop.f32.mrb[0].mxu0
      %v985 = vadd.f32 %v897, %v984
      %v986 = vpop.f32.mrb[0].mxu0
      %987 = vmatprep.mubr.bf16.mxu0 0
      %988 = vmatmul.mubr.bf16.gmra.mrb[0].mxu0 %v754
      %v989 = vpop.f32.mrb[0].mxu0
      %v990 = vadd.f32 %v902, %v989
      %v991 = vpop.f32.mrb[0].mxu0
      %v992 = vpop.f32.mrb[0].mxu0
      %v993 = vadd.f32 %v905, %v992
      %v994 = vpop.f32.mrb[0].mxu0
      %995 = vmatprep.mubr.bf16.mxu0 0
      %996 = vmatmul.mubr.bf16.gmra.mrb[0].mxu0 %v757
      %v997 = vpop.f32.mrb[0].mxu0
      %v998 = vadd.f32 %v910, %v997
      %v999 = vpop.f32.mrb[0].mxu0
      %v1000 = vpop.f32.mrb[0].mxu0
      %v1001 = vadd.f32 %v913, %v1000
      %v1002 = vpop.f32.mrb[0].mxu0
      %1003 = vmatprep.mubr.bf16.mxu0 0
      %1004 = vmatmul.mubr.bf16.gmra.mrb[0].mxu0 %v760
      %v1005 = vpop.f32.mrb[0].mxu0
      %v1006 = vadd.f32 %v918, %v1005
      %v1007 = vpop.f32.mrb[0].mxu0
      %v1008 = vpop.f32.mrb[0].mxu0
      %v1009 = vadd.f32 %v921, %v1008
      %v1010 = vpop.f32.mrb[0].mxu0
      %1011 = vmatprep.mubr.bf16.mxu0 0
      %1012 = vmatmul.mubr.bf16.gmra.mrb[0].mxu0 %v763
      %v1013 = vpop.f32.mrb[0].mxu0
      %v1014 = vadd.f32 %v926, %v1013
      %v1015 = vpop.f32.mrb[0].mxu0
      %v1016 = vpop.f32.mrb[0].mxu0
      %v1017 = vadd.f32 %v929, %v1016
      %v1018 = vpop.f32.mrb[0].mxu0
      %1019 = vmatprep.mubr.bf16.mxu0 0
      %1020 = vmatmul.mubr.bf16.gmra.mrb[0].mxu0 %v766
      %v1021 = vpop.f32.mrb[0].mxu0
      %v1022 = vadd.f32 %v934, %v1021
      %v1023 = vpop.f32.mrb[0].mxu0
      %v1024 = vpop.f32.mrb[0].mxu0
      %v1025 = vadd.f32 %v937, %v1024
      %v1026 = vpop.f32.mrb[0].mxu0
      %1027 = vmatprep.mubr.bf16.mxu0 0
      %1028 = vmatmul.mubr.bf16.gmra.mrb[0].mxu0 %v769
      %v1029 = vpop.f32.mrb[0].mxu0
      %v1030 = vadd.f32 %v942, %v1029
      %v1031 = vpop.f32.mrb[0].mxu0
      %v1032 = vpop.f32.mrb[0].mxu0
      %v1033 = vpop.f32.mrb[0].mxu0
      %1034 = vdwg.mxu0
      %v1035 = vmax.f32 %v982, 0.0
      %v1036 = vmax.f32 %v985, 0.0
      %v1037 = vmax.f32 %v990, 0.0
      %v1038 = vmax.f32 %v993, 0.0
      %v1039 = vmax.f32 %v998, 0.0
      %v1040 = vmax.f32 %v1001, 0.0
      %v1041 = vmax.f32 %v1006, 0.0
      %v1042 = vmax.f32 %v1009, 0.0
      %v1043 = vmax.f32 %v1014, 0.0
      %v1044 = vmax.f32 %v1017, 0.0
      %v1045 = vmax.f32 %v1022, 0.0
      %v1046 = vmax.f32 %v1025, 0.0
      %v1047 = vmax.f32 %v1030, 0.0
      %v1048 = vpack.c.bf16 %v1036, %v1035
      %v1049 = vpack.c.bf16 %v1038, %v1037
      %v1050 = vpack.c.bf16 %v1040, %v1039
      %v1051 = vpack.c.bf16 %v1042, %v1041
      %v1052 = vpack.c.bf16 %v1044, %v1043
      %v1053 = vpack.c.bf16 %v1046, %v1045
      %v1054 = vpack.c.bf16 %v1047, %v1047
      %v1062 = vunpack.c.l.b16 %v1048
      %v1063 = vunpack.c.h.b16 %v1048
      %v1064 = vunpack.c.l.b16 %v1049
      %v1065 = vunpack.c.h.b16 %v1049
      %v1066 = vunpack.c.l.b16 %v1050
      %v1067 = vunpack.c.h.b16 %v1050
      %v1068 = vunpack.c.l.b16 %v1051
      %v1069 = vunpack.c.h.b16 %v1051
      %v1070 = vunpack.c.l.b16 %v1052
      %v1071 = vunpack.c.h.b16 %v1052
      %v1072 = vunpack.c.l.b16 %v1053
      %v1073 = vunpack.c.h.b16 %v1053
      %v1074 = vunpack.c.l.b16 %v1054
      %v1075 = vpack.c.b16 %v1062, %v1062
      %v1076 = vpack.c.b16 %v1063, %v1063
      %v1077 = vpack.c.b16 %v1064, %v1064
      %v1078 = vpack.c.b16 %v1065, %v1065
      %v1079 = vpack.c.b16 %v1066, %v1066
      %v1080 = vpack.c.b16 %v1067, %v1067
      %v1081 = vpack.c.b16 %v1068, %v1068
      %v1082 = vpack.c.b16 %v1069, %v1069
      %v1083 = vpack.c.b16 %v1070, %v1070
      %v1084 = vpack.c.b16 %v1071, %v1071
      %v1085 = vpack.c.b16 %v1072, %v1072
      %v1086 = vpack.c.b16 %v1073, %v1073
      %v1087 = vpack.c.b16 %v1074, %v1074
      %vm1101 = vcmask 519168
      %1102 = vst.msk [vmem:[%s245] sm:$0xf] %vm1101, %v1075
      %1103 = vst.msk [vmem:[%s245 + $0x4] sm:$0xf] %vm1101, %v1076
      %1104 = vst.msk [vmem:[%s245 + $0x8] sm:$0xf] %vm1101, %v1077
      %1105 = vst.msk [vmem:[%s245 + $0xc] sm:$0xf] %vm1101, %v1078
      %1106 = vst.msk [vmem:[%s245 + $0x10] sm:$0xf] %vm1101, %v1079
      %1107 = vst.msk [vmem:[%s245 + $0x14] sm:$0xf] %vm1101, %v1080
      %1108 = vst.msk [vmem:[%s245 + $0x18] sm:$0xf] %vm1101, %v1081
      %1109 = vst.msk [vmem:[%s245 + $0x1c] sm:$0xf] %vm1101, %v1082
      %1110 = vst.msk [vmem:[%s245 + $0x20] sm:$0xf] %vm1101, %v1083
      %1111 = vst.msk [vmem:[%s245 + $0x24] sm:$0xf] %vm1101, %v1084
      %1112 = vst.msk [vmem:[%s245 + $0x28] sm:$0xf] %vm1101, %v1085
      %1113 = vst.msk [vmem:[%s245 + $0x2c] sm:$0xf] %vm1101, %v1086
      %vm1114 = vcmask 516096
      %1115 = vst.msk [vmem:[%s245 + $0x30] sm:$0x1] %vm1114, %v1087
      %s1116 = smul.u32 13, %s19
      %p1117 = scmp.lt.s32.totalorder %s18, 1
      %s1118 = scalar_select %p1117, %s18, 1
      %p1119 = scmp.lt.s32.totalorder %s1116, 12
      %s1120 = scalar_select %p1119, %s1116, 12
      %s1121 = smul.addr %s1118, 13
      %s1122 = sadd.s32 %s1120, %s1121
      %s1123 = smul.addr %s1122, 4
      %s1124 = scalar_lea.vmem %s3, %s1123
      // Predicated region
      $region33: #{legged_qnetwork_forward.6} parent=31 // pred_check
        %p1125 = pneg %p126
      $region34: #{legged_qnetwork_forward.6} parent=31 // pred_check_branch
        %1127 = sbr.rel (%p1125) target = $region36
      $region35: #{legged_qnetwork_forward.6} parent=31 // pred_region
        %s1128 = smul.u32 13, %s19
      $region36: #{legged_qnetwork_forward.6} parent=31 // pred_fallthru
        _
    $region32: #{legged_qnetwork_forward.6} parent=5 // pred_fallthru
      _
    %p1129 = scmp.le.s32.totalorder 2, %s9
    // Predicated region
    $region37: #{legged_qnetwork_forward.6} parent=5 // pred_check
      %p1130 = pneg %p1129
    $region38: #{legged_qnetwork_forward.6} parent=5 // pred_check_branch
      %1132 = sbr.rel (%p1130) target = $region40
    $region39: #{legged_qnetwork_forward.6} parent=5 // pred_region
      %s1133 = ssub.s32 %s9, 2
      // Predicated region
      $region41: #{legged_qnetwork_forward.6} parent=39 // pred_check
        %p1134 = pneg %p132
      $region42: #{legged_qnetwork_forward.6} parent=39 // pred_check_branch
        %1136 = sbr.rel (%p1134) target = $region44
      $region43: #{legged_qnetwork_forward.6} parent=39 // pred_region
        %s1137 = smul.u32 13, %s21
        %p1138 = scmp.lt.s32.totalorder %s20, 1
        %s1139 = scalar_select %p1138, %s20, 1
        %p1140 = scmp.lt.s32.totalorder %s1137, 12
        %s1141 = scalar_select %p1140, %s1137, 12
        %s1142 = smul.addr %s1139, 13
        %s1143 = sadd.s32 %s1141, %s1142
        %s1144 = smul.addr %s1143, 4
        %s1145 = scalar_lea.vmem %s3, %s1144
      $region44: #{legged_qnetwork_forward.6} parent=39 // pred_fallthru
        _
    $region40: #{legged_qnetwork_forward.6} parent=5 // pred_fallthru
      _
  $region6: #{legged_qnetwork_forward.6} parent=0 // loop_footer
    %s13 = sadd.s32 1, %s9
  $region7: #{legged_qnetwork_forward.6} parent=0 // loop_footer_branch
    %8 = sbr.rel target = $region3
  $region8: #{legged_qnetwork_forward.6} parent=0 // loop_exit
    _

// kernel: legged_qnetwork_forward.7
$region0: #{legged_qnetwork_forward.7}
  #allocation0 [shape = 'u32[]', space=smem, size = 0x4, offset = 0x4, fixed_abs, tag = 'smem constant byte address 0x4 - core index']
  #allocation1 [shape = 'u32[144,128]{1,0:T(1,128)}', space=vmem, size = 0x12000, scoped, tag = 'internal scratch']
  %s0 = inlined_call_operand.vmem [shape: bf16[2,2,3136], index: 0, kind: input, shape index: {}]
  %s1 = inlined_call_operand.vmem [shape: bf16[2,3136,512], index: 1, kind: input, shape index: {}]
  %s2 = inlined_call_operand.vmem [shape: f32[2,1,512], index: 2, kind: input, shape index: {}]
  %s3 = inlined_call_operand.vmem [shape: bf16[2,1,512], index: 3, kind: input, shape index: {}]
  %s4 = inlined_call_operand.vmem [shape: f32[2,1,1], index: 4, kind: input, shape index: {}]
  %s5 = inlined_call_operand.vmem [shape: f32[2,2,1], index: 5, kind: output, shape index: {}]
  %s6 = sld [smem:[#allocation0]]
  $region53: #{legged_qnetwork_forward.7} parent=0
    _
  %s8 = ssub.s32 1, %s6
  %s9 = scalar_select 0, %s8, %s6
  loop: start=0, step=1, limit=4
  $region2: #{legged_qnetwork_forward.7} parent=0 // loop_pre_header
    _
  $region3: #{legged_qnetwork_forward.7} parent=0 // loop_header
    %s11 = sphi 0, %s15
    %p12 = scmp.ge.s32.totalorder %s11, 4
    %s18 = sphi 0, %s30
    %s19 = sphi 0, %s26
    %s20 = sphi 0, %s18
    %s21 = sphi 0, %s19
    %s22 = sphi 0, %s20
    %s23 = sphi 0, %s21
    %s35 = sphi 0, %s37
    %s38 = sphi 0, %s35
    %s39 = sphi 0, %s38
    %s55 = sphi 0, %s39
    %s61 = sphi 0, %s63
    %s64 = sphi 0, %s61
    %s65 = sphi 0, %s64
    %s81 = sphi 0, %s65
    %s87 = sphi 0, %s89
    %s90 = sphi 0, %s87
    %s91 = sphi 0, %s90
    %s107 = sphi 0, %s91
    %s113 = sphi 0, %s115
    %s116 = sphi 0, %s113
    %s117 = sphi 0, %s116
    %s133 = sphi 0, %s117
    %s139 = sphi 0, %s141
    %s142 = sphi 0, %s139
    %s143 = sphi 0, %s142
    %s159 = sphi 0, %s143
    %s167 = sphi 0, %s169
    %s170 = sphi 0, %s167
    %s171 = sphi 0, %s170
    %s187 = sphi 0, %s171
  $region4: #{legged_qnetwork_forward.7} parent=0 // loop_header_branch
    %14 = sbr.rel (%p12) target = $region8
  $region5: #{legged_qnetwork_forward.7} parent=0 // loop_body
    %s16 = ssub.s32 %s11, 1
    %s17 = ssub.s32 %s11, 2
    %s24 = sadd.s32 1, %s19
    %p25 = scmp.ge.s32.totalorder %s24, 1
    %s26 = scalar_select %p25, 0, %s24
    %s27 = sadd.s32 1, %s18
    %s28 = scalar_select %p25, %s27, %s18
    %p29 = scmp.ge.s32.totalorder %s28, 2
    %s30 = scalar_select %p29, 0, %s28
    %s31 = ssub.s32 %s18, %s30
    %s32 = ssub.s32 %s19, %s26
    %s33 = sor.u32 %s31, %s32
    %p34 = scmp.eq.s32.totalorder %s33, 0
    %s36 = sadd.s32 %s35, 1
    %s37 = scalar_select %p34, %s35, %s36
    %p40 = pneg %p34
    %p41 = scmp.eq.s32.totalorder %s11, 1
    %p42 = por %p40, %p41
    %p43 = scmp.ne.s32.totalorder %s35, %s38
    %p44 = scmp.eq.s32.totalorder %s11, 0
    %p45 = por %p43, %p44
    %p46 = scmp.ne.s32.totalorder %s35, %s38
    %p47 = scmp.eq.s32.totalorder %s16, 1
    %p48 = por %p46, %p47
    %p49 = scmp.ne.s32.totalorder %s38, %s39
    %p50 = scmp.eq.s32.totalorder %s16, 0
    %p51 = por %p49, %p50
    %p52 = scmp.ne.s32.totalorder %s38, %s39
    %p53 = scmp.eq.s32.totalorder %s17, 1
    %p54 = por %p52, %p53
    %p56 = scmp.ne.s32.totalorder %s39, %s55
    %p57 = scmp.eq.s32.totalorder %s17, 0
    %p58 = por %p56, %p57
    %s59 = ssub.s32 %s18, %s30
    %p60 = scmp.eq.s32.totalorder %s59, 0
    %s62 = sadd.s32 %s61, 1
    %s63 = scalar_select %p60, %s61, %s62
    %p66 = pneg %p60
    %p67 = scmp.eq.s32.totalorder %s11, 1
    %p68 = por %p66, %p67
    %p69 = scmp.ne.s32.totalorder %s61, %s64
    %p70 = scmp.eq.s32.totalorder %s11, 0
    %p71 = por %p69, %p70
    %p72 = scmp.ne.s32.totalorder %s61, %s64
    %p73 = scmp.eq.s32.totalorder %s16, 1
    %p74 = por %p72, %p73
    %p75 = scmp.ne.s32.totalorder %s64, %s65
    %p76 = scmp.eq.s32.totalorder %s16, 0
    %p77 = por %p75, %p76
    %p78 = scmp.ne.s32.totalorder %s64, %s65
    %p79 = scmp.eq.s32.totalorder %s17, 1
    %p80 = por %p78, %p79
    %p82 = scmp.ne.s32.totalorder %s65, %s81
    %p83 = scmp.eq.s32.totalorder %s17, 0
    %p84 = por %p82, %p83
    %s85 = ssub.s32 %s18, %s30
    %p86 = scmp.eq.s32.totalorder %s85, 0
    %s88 = sadd.s32 %s87, 1
    %s89 = scalar_select %p86, %s87, %s88
    %p92 = pneg %p86
    %p93 = scmp.eq.s32.totalorder %s11, 1
    %p94 = por %p92, %p93
    %p95 = scmp.ne.s32.totalorder %s87, %s90
    %p96 = scmp.eq.s32.totalorder %s11, 0
    %p97 = por %p95, %p96
    %p98 = scmp.ne.s32.totalorder %s87, %s90
    %p99 = scmp.eq.s32.totalorder %s16, 1
    %p100 = por %p98, %p99
    %p101 = scmp.ne.s32.totalorder %s90, %s91
    %p102 = scmp.eq.s32.totalorder %s16, 0
    %p103 = por %p101, %p102
    %p104 = scmp.ne.s32.totalorder %s90, %s91
    %p105 = scmp.eq.s32.totalorder %s17, 1
    %p106 = por %p104, %p105
    %p108 = scmp.ne.s32.totalorder %s91, %s107
    %p109 = scmp.eq.s32.totalorder %s17, 0
    %p110 = por %p108, %p109
    %s111 = ssub.s32 %s18, %s30
    %p112 = scmp.eq.s32.totalorder %s111, 0
    %s114 = sadd.s32 %s113, 1
    %s115 = scalar_select %p112, %s113, %s114
    %p118 = pneg %p112
    %p119 = scmp.eq.s32.totalorder %s11, 1
    %p120 = por %p118, %p119
    %p121 = scmp.ne.s32.totalorder %s113, %s116
    %p122 = scmp.eq.s32.totalorder %s11, 0
    %p123 = por %p121, %p122
    %p124 = scmp.ne.s32.totalorder %s113, %s116
    %p125 = scmp.eq.s32.totalorder %s16, 1
    %p126 = por %p124, %p125
    %p127 = scmp.ne.s32.totalorder %s116, %s117
    %p128 = scmp.eq.s32.totalorder %s16, 0
    %p129 = por %p127, %p128
    %p130 = scmp.ne.s32.totalorder %s116, %s117
    %p131 = scmp.eq.s32.totalorder %s17, 1
    %p132 = por %p130, %p131
    %p134 = scmp.ne.s32.totalorder %s117, %s133
    %p135 = scmp.eq.s32.totalorder %s17, 0
    %p136 = por %p134, %p135
    %s137 = ssub.s32 %s18, %s30
    %p138 = scmp.eq.s32.totalorder %s137, 0
    %s140 = sadd.s32 %s139, 1
    %s141 = scalar_select %p138, %s139, %s140
    %p144 = pneg %p138
    %p145 = scmp.eq.s32.totalorder %s11, 1
    %p146 = por %p144, %p145
    %p147 = scmp.ne.s32.totalorder %s139, %s142
    %p148 = scmp.eq.s32.totalorder %s11, 0
    %p149 = por %p147, %p148
    %p150 = scmp.ne.s32.totalorder %s139, %s142
    %p151 = scmp.eq.s32.totalorder %s16, 1
    %p152 = por %p150, %p151
    %p153 = scmp.ne.s32.totalorder %s142, %s143
    %p154 = scmp.eq.s32.totalorder %s16, 0
    %p155 = por %p153, %p154
    %p156 = scmp.ne.s32.totalorder %s142, %s143
    %p157 = scmp.eq.s32.totalorder %s17, 1
    %p158 = por %p156, %p157
    %p160 = scmp.ne.s32.totalorder %s143, %s159
    %p161 = scmp.eq.s32.totalorder %s17, 0
    %p162 = por %p160, %p161
    %s163 = ssub.s32 %s18, %s30
    %s164 = ssub.s32 %s19, %s26
    %s165 = sor.u32 %s163, %s164
    %p166 = scmp.eq.s32.totalorder %s165, 0
    %s168 = sadd.s32 %s167, 1
    %s169 = scalar_select %p166, %s167, %s168
    %p172 = pneg %p166
    %p173 = scmp.eq.s32.totalorder %s11, 1
    %p174 = por %p172, %p173
    %p175 = scmp.ne.s32.totalorder %s167, %s170
    %p176 = scmp.eq.s32.totalorder %s11, 0
    %p177 = por %p175, %p176
    %p178 = scmp.ne.s32.totalorder %s167, %s170
    %p179 = scmp.eq.s32.totalorder %s16, 1
    %p180 = por %p178, %p179
    %p181 = scmp.ne.s32.totalorder %s170, %s171
    %p182 = scmp.eq.s32.totalorder %s16, 0
    %p183 = por %p181, %p182
    %p184 = scmp.ne.s32.totalorder %s170, %s171
    %p185 = scmp.eq.s32.totalorder %s17, 1
    %p186 = por %p184, %p185
    %p188 = scmp.ne.s32.totalorder %s171, %s187
    %p189 = scmp.eq.s32.totalorder %s17, 0
    %p190 = por %p188, %p189
    %p191 = scmp.le.s32.totalorder 1, %s11
    %p192 = scmp.lt.s32.totalorder %s11, 3
    %p193 = pnand %p191, %p192
    %p194 = pneg %p193
    // Predicated region
    $region9: #{legged_qnetwork_forward.7} parent=5 // pred_check
      _
    $region10: #{legged_qnetwork_forward.7} parent=5 // pred_check_branch
      %196 = sbr.rel (%p193) target = $region12
    $region11: #{legged_qnetwork_forward.7} parent=5 // pred_region
      %s197 = ssub.s32 %s11, 1
    $region12: #{legged_qnetwork_forward.7} parent=5 // pred_fallthru
      _
    %p198 = scmp.lt.s32.totalorder %s11, 2
    // Predicated region
    $region13: #{legged_qnetwork_forward.7} parent=5 // pred_check
      %p199 = pneg %p198
    $region14: #{legged_qnetwork_forward.7} parent=5 // pred_check_branch
      %201 = sbr.rel (%p199) target = $region16
    $region15: #{legged_qnetwork_forward.7} parent=5 // pred_region
      // Predicated region
      $region17: #{legged_qnetwork_forward.7} parent=15 // pred_check
        %p202 = pneg %p45
      $region18: #{legged_qnetwork_forward.7} parent=15 // pred_check_branch
        %204 = sbr.rel (%p202) target = $region20
      $region19: #{legged_qnetwork_forward.7} parent=15 // pred_region
        %p205 = scmp.lt.s32.totalorder %s18, 1
        %s206 = scalar_select %p205, %s18, 1
        %p207 = scmp.lt.s32.totalorder %s19, 0
        %s208 = scalar_select %p207, %s19, 0
        %s209 = smul.addr %s208, 25
        %s210 = smul.addr %s206, 25
        %s211 = sadd.s32 %s209, %s210
        %s212 = scalar_lea.vmem %s0, %s211
      $region20: #{legged_qnetwork_forward.7} parent=15 // pred_fallthru
        _
      // Predicated region
      $region21: #{legged_qnetwork_forward.7} parent=15 // pred_check
        %p213 = pneg %p71
      $region22: #{legged_qnetwork_forward.7} parent=15 // pred_check_branch
        %215 = sbr.rel (%p213) target = $region24
      $region23: #{legged_qnetwork_forward.7} parent=15 // pred_region
        %p216 = scmp.lt.s32.totalorder %s18, 1
        %s217 = scalar_select %p216, %s18, 1
        %s218 = smul.addr %s217, 1568
        %s219 = smul.addr %s218, 4
        %s220 = scalar_lea.vmem %s1, %s219
      $region24: #{legged_qnetwork_forward.7} parent=15 // pred_fallthru
        _
      // Predicated region
      $region25: #{legged_qnetwork_forward.7} parent=15 // pred_check
        %p221 = pneg %p97
      $region26: #{legged_qnetwork_forward.7} parent=15 // pred_check_branch
        %223 = sbr.rel (%p221) target = $region28
      $region27: #{legged_qnetwork_forward.7} parent=15 // pred_region
        %p224 = scmp.lt.s32.totalorder %s18, 1
        %s225 = scalar_select %p224, %s18, 1
        %s226 = smul.addr %s225, 4
        %s227 = scalar_lea.vmem %s2, %s226
      $region28: #{legged_qnetwork_forward.7} parent=15 // pred_fallthru
        _
      // Predicated region
      $region29: #{legged_qnetwork_forward.7} parent=15 // pred_check
        %p228 = pneg %p123
      $region30: #{legged_qnetwork_forward.7} parent=15 // pred_check_branch
        %230 = sbr.rel (%p228) target = $region32
      $region31: #{legged_qnetwork_forward.7} parent=15 // pred_region
        %p231 = scmp.lt.s32.totalorder %s18, 1
        %s232 = scalar_select %p231, %s18, 1
        %s233 = smul.addr %s232, 4
        %s234 = scalar_lea.vmem %s3, %s233
      $region32: #{legged_qnetwork_forward.7} parent=15 // pred_fallthru
        _
      // Predicated region
      $region33: #{legged_qnetwork_forward.7} parent=15 // pred_check
        %p235 = pneg %p149
      $region34: #{legged_qnetwork_forward.7} parent=15 // pred_check_branch
        %237 = sbr.rel (%p235) target = $region36
      $region35: #{legged_qnetwork_forward.7} parent=15 // pred_region
        %p238 = scmp.lt.s32.totalorder %s18, 1
        %s239 = scalar_select %p238, %s18, 1
        %s240 = scalar_lea.vmem %s4, %s239
      $region36: #{legged_qnetwork_forward.7} parent=15 // pred_fallthru
        _
    $region16: #{legged_qnetwork_forward.7} parent=5 // pred_fallthru
      _
    %p241 = scmp.le.s32.totalorder 1, %s11
    %p242 = scmp.lt.s32.totalorder %s11, 3
    %p243 = pnand %p241, %p242
    %p244 = pneg %p243
    // Predicated region
    $region37: #{legged_qnetwork_forward.7} parent=5 // pred_check
      _
    $region38: #{legged_qnetwork_forward.7} parent=5 // pred_check_branch
      %246 = sbr.rel (%p243) target = $region40
    $region39: #{legged_qnetwork_forward.7} parent=5 // pred_region
      %s247 = ssub.s32 %s11, 1
      %p248 = scmp.lt.s32.totalorder %s20, 1
      %s249 = scalar_select %p248, %s20, 1
      %p250 = scmp.lt.s32.totalorder %s21, 0
      %s251 = scalar_select %p250, %s21, 0
      %s252 = smul.addr %s251, 25
      %s253 = smul.addr %s249, 25
      %s254 = sadd.s32 %s252, %s253
      %s255 = scalar_lea.vmem %s0, %s254
      %p256 = pneg %p51
      %p257 = pneg %p48
      %p258 = scmp.lt.s32.totalorder %s20, 1
      %s259 = scalar_select %p258, %s20, 1
      %s260 = smul.addr %s259, 1568
      %s261 = smul.addr %s260, 4
      %s262 = scalar_lea.vmem %s1, %s261
      %p263 = pneg %p77
      %p264 = pneg %p74
      %p265 = scmp.lt.s32.totalorder %s20, 1
      %s266 = scalar_select %p265, %s20, 1
      %s267 = smul.addr %s266, 4
      %s268 = scalar_lea.vmem %s2, %s267
      %p269 = pneg %p103
      %p270 = pneg %p100
      %p271 = scmp.lt.s32.totalorder %s20, 1
      %s272 = scalar_select %p271, %s20, 1
      %s273 = smul.addr %s272, 4
      %s274 = scalar_lea.vmem %s3, %s273
      %p275 = pneg %p129
      %p276 = pneg %p126
      %p277 = scmp.lt.s32.totalorder %s20, 1
      %s278 = scalar_select %p277, %s20, 1
      %s279 = scalar_lea.vmem %s4, %s278
      %p280 = pneg %p155
      %p281 = pneg %p152
      %p282 = pneg %p183
      %p283 = pneg %p180
      %p284 = scmp.lt.s32.totalorder %s20, 1
      %s285 = scalar_select %p284, %s20, 1
      %p286 = scmp.lt.s32.totalorder %s21, 0
      %s287 = scalar_select %p286, %s21, 0
      %s288 = sadd.s32 %s287, %s285
      %s289 = smul.addr %s288, 2
      %s290 = scalar_lea.vmem %s5, %s289
      %p291 = scmp.lt.s32.totalorder %s20, 1
      %s292 = scalar_select %p291, %s20, 1
      %p293 = scmp.lt.s32.totalorder %s21, 0
      %s294 = scalar_select %p293, %s21, 0
      %s295 = smul.addr %s294, 25
      %s296 = smul.addr %s292, 25
      %s297 = sadd.s32 %s295, %s296
      %s298 = scalar_lea.vmem %s0, %s297
      %p299 = scmp.lt.s32.totalorder %s20, 1
      %s300 = scalar_select %p299, %s20, 1
      %s301 = smul.addr %s300, 1568
      %s302 = smul.addr %s301, 4
      %s303 = scalar_lea.vmem %s1, %s302
      %p304 = scmp.lt.s32.totalorder %s20, 1
      %s305 = scalar_select %p304, %s20, 1
      %s306 = smul.addr %s305, 4
      %s307 = scalar_lea.vmem %s2, %s306
      %p308 = scmp.lt.s32.totalorder %s20, 1
      %s309 = scalar_select %p308, %s20, 1
      %s310 = smul.addr %s309, 4
      %s311 = scalar_lea.vmem %s3, %s310
      %p312 = scmp.lt.s32.totalorder %s20, 1
      %s313 = scalar_select %p312, %s20, 1
      %s314 = scalar_lea.vmem %s4, %s313
      %p315 = scmp.lt.s32.totalorder %s20, 1
      %s316 = scalar_select %p315, %s20, 1
      %p317 = scmp.lt.s32.totalorder %s21, 0
      %s318 = scalar_select %p317, %s21, 0
      %s319 = sadd.s32 %s318, %s316
      %s320 = smul.addr %s319, 2
      %s321 = scalar_lea.vmem %s5, %s320
      %v323 = vld [vmem:[%s298] sm:$0xff]
      %v324 = vld [vmem:[%s298 + $0x8] sm:$0xff]
      %v325 = vld [vmem:[%s298 + $0x10] sm:$0xff]
      %v326 = vld [vmem:[%s298 + $0x18] sm:$0x1]
      %v327 = vld [vmem:[%s303] sm:$0xff]
      %v328 = vld [vmem:[%s303 + $0x8] sm:$0xff]
      %v329 = vld [vmem:[%s303 + $0x10] sm:$0xff]
      %v330 = vld [vmem:[%s303 + $0x18] sm:$0xff]
      %v331 = vld [vmem:[%s303 + $0x20] sm:$0xff]
      %v332 = vld [vmem:[%s303 + $0x28] sm:$0xff]
      %v333 = vld [vmem:[%s303 + $0x30] sm:$0xff]
      %v334 = vld [vmem:[%s303 + $0x38] sm:$0xff]
      %v335 = vld [vmem:[%s303 + $0x40] sm:$0xff]
      %v336 = vld [vmem:[%s303 + $0x48] sm:$0xff]
      %v337 = vld [vmem:[%s303 + $0x50] sm:$0xff]
      %v338 = vld [vmem:[%s303 + $0x58] sm:$0xff]
      %v339 = vld [vmem:[%s303 + $0x60] sm:$0xff]
      %v340 = vld [vmem:[%s303 + $0x68] sm:$0xff]
      %v341 = vld [vmem:[%s303 + $0x70] sm:$0xff]
      %v342 = vld [vmem:[%s303 + $0x78] sm:$0xff]
      %v343 = vld [vmem:[%s303 + $0x80] sm:$0xff]
      %v344 = vld [vmem:[%s303 + $0x88] sm:$0xff]
      %v345 = vld [vmem:[%s303 + $0x90] sm:$0xff]
      %v346 = vld [vmem:[%s303 + $0x98] sm:$0xff]
      %v347 = vld [vmem:[%s303 + $0xa0] sm:$0xff]
      %v348 = vld [vmem:[%s303 + $0xa8] sm:$0xff]
      %v349 = vld [vmem:[%s303 + $0xb0] sm:$0xff]
      %v350 = vld [vmem:[%s303 + $0xb8] sm:$0xff]
      %v351 = vld [vmem:[%s303 + $0xc0] sm:$0xff]
      %v352 = vld [vmem:[%s303 + $0xc8] sm:$0xff]
      %v353 = vld [vmem:[%s303 + $0xd0] sm:$0xff]
      %v354 = vld [vmem:[%s303 + $0xd8] sm:$0xff]
      %v355 = vld [vmem:[%s303 + $0xe0] sm:$0xff]
      %v356 = vld [vmem:[%s303 + $0xe8] sm:$0xff]
      %v357 = vld [vmem:[%s303 + $0xf0] sm:$0xff]
      %v358 = vld [vmem:[%s303 + $0xf8] sm:$0xff]
      %v359 = vld [vmem:[%s303 + $0x100] sm:$0xff]
      %v360 = vld [vmem:[%s303 + $0x108] sm:$0xff]
      %v361 = vld [vmem:[%s303 + $0x110] sm:$0xff]
      %v362 = vld [vmem:[%s303 + $0x118] sm:$0xff]
      %v363 = vld [vmem:[%s303 + $0x120] sm:$0xff]
      %v364 = vld [vmem:[%s303 + $0x128] sm:$0xff]
      %v365 = vld [vmem:[%s303 + $0x130] sm:$0xff]
      %v366 = vld [vmem:[%s303 + $0x138] sm:$0xff]
      %v367 = vld [vmem:[%s303 + $0x140] sm:$0xff]
      %v368 = vld [vmem:[%s303 + $0x148] sm:$0xff]
      %v369 = vld [vmem:[%s303 + $0x150] sm:$0xff]
      %v370 = vld [vmem:[%s303 + $0x158] sm:$0xff]
      %v371 = vld [vmem:[%s303 + $0x160] sm:$0xff]
      %v372 = vld [vmem:[%s303 + $0x168] sm:$0xff]
      %v373 = vld [vmem:[%s303 + $0x170] sm:$0xff]
      %v374 = vld [vmem:[%s303 + $0x178] sm:$0xff]
      %v375 = vld [vmem:[%s303 + $0x180] sm:$0xff]
      %v376 = vld [vmem:[%s303 + $0x188] sm:$0xff]
      %v377 = vld [vmem:[%s303 + $0x190] sm:$0xff]
      %v378 = vld [vmem:[%s303 + $0x198] sm:$0xff]
      %v379 = vld [vmem:[%s303 + $0x1a0] sm:$0xff]
      %v380 = vld [vmem:[%s303 + $0x1a8] sm:$0xff]
      %v381 = vld [vmem:[%s303 + $0x1b0] sm:$0xff]
      %v382 = vld [vmem:[%s303 + $0x1b8] sm:$0xff]
      %v383 = vld [vmem:[%s303 + $0x1c0] sm:$0xff]
      %v384 = vld [vmem:[%s303 + $0x1c8] sm:$0xff]
      %v385 = vld [vmem:[%s303 + $0x1d0] sm:$0xff]
      %v386 = vld [vmem:[%s303 + $0x1d8] sm:$0xff]
      %v387 = vld [vmem:[%s303 + $0x1e0] sm:$0xff]
      %v388 = vld [vmem:[%s303 + $0x1e8] sm:$0xff]
      %v389 = vld [vmem:[%s303 + $0x1f0] sm:$0xff]
      %v390 = vld [vmem:[%s303 + $0x1f8] sm:$0xff]
      %v391 = vld [vmem:[%s303 + $0x200] sm:$0xff]
      %v392 = vld [vmem:[%s303 + $0x208] sm:$0xff]
      %v393 = vld [vmem:[%s303 + $0x210] sm:$0xff]
      %v394 = vld [vmem:[%s303 + $0x218] sm:$0xff]
      %v395 = vld [vmem:[%s303 + $0x220] sm:$0xff]
      %v396 = vld [vmem:[%s303 + $0x228] sm:$0xff]
      %v397 = vld [vmem:[%s303 + $0x230] sm:$0xff]
      %v398 = vld [vmem:[%s303 + $0x238] sm:$0xff]
      %v399 = vld [vmem:[%s303 + $0x240] sm:$0xff]
      %v400 = vld [vmem:[%s303 + $0x248] sm:$0xff]
      %v401 = vld [vmem:[%s303 + $0x250] sm:$0xff]
      %v402 = vld [vmem:[%s303 + $0x258] sm:$0xff]
      %v403 = vld [vmem:[%s303 + $0x260] sm:$0xff]
      %v404 = vld [vmem:[%s303 + $0x268] sm:$0xff]
      %v405 = vld [vmem:[%s303 + $0x270] sm:$0xff]
      %v406 = vld [vmem:[%s303 + $0x278] sm:$0xff]
      %v407 = vld [vmem:[%s303 + $0x280] sm:$0xff]
      %v408 = vld [vmem:[%s303 + $0x288] sm:$0xff]
      %v409 = vld [vmem:[%s303 + $0x290] sm:$0xff]
      %v410 = vld [vmem:[%s303 + $0x298] sm:$0xff]
      %v411 = vld [vmem:[%s303 + $0x2a0] sm:$0xff]
      %v412 = vld [vmem:[%s303 + $0x2a8] sm:$0xff]
      %v413 = vld [vmem:[%s303 + $0x2b0] sm:$0xff]
      %v414 = vld [vmem:[%s303 + $0x2b8] sm:$0xff]
      %v415 = vld [vmem:[%s303 + $0x2c0] sm:$0xff]
      %v416 = vld [vmem:[%s303 + $0x2c8] sm:$0xff]
      %v417 = vld [vmem:[%s303 + $0x2d0] sm:$0xff]
      %v418 = vld [vmem:[%s303 + $0x2d8] sm:$0xff]
      %v419 = vld [vmem:[%s303 + $0x2e0] sm:$0xff]
      %v420 = vld [vmem:[%s303 + $0x2e8] sm:$0xff]
      %v421 = vld [vmem:[%s303 + $0x2f0] sm:$0xff]
      %v422 = vld [vmem:[%s303 + $0x2f8] sm:$0xff]
      %v423 = vld [vmem:[%s303 + $0x300] sm:$0xff]
      %v424 = vld [vmem:[%s303 + $0x308] sm:$0xff]
      %v425 = vld [vmem:[%s303 + $0x310] sm:$0xff]
      %v426 = vld [vmem:[%s303 + $0x318] sm:$0xff]
      %v427 = vld [vmem:[%s303 + $0x320] sm:$0xff]
      %v428 = vld [vmem:[%s303 + $0x328] sm:$0xff]
      %v429 = vld [vmem:[%s303 + $0x330] sm:$0xff]
      %v430 = vld [vmem:[%s303 + $0x338] sm:$0xff]
      %v431 = vld [vmem:[%s303 + $0x340] sm:$0xff]
      %v432 = vld [vmem:[%s303 + $0x348] sm:$0xff]
      %v433 = vld [vmem:[%s303 + $0x350] sm:$0xff]
      %v434 = vld [vmem:[%s303 + $0x358] sm:$0xff]
      %v435 = vld [vmem:[%s303 + $0x360] sm:$0xff]
      %v436 = vld [vmem:[%s303 + $0x368] sm:$0xff]
      %v437 = vld [vmem:[%s303 + $0x370] sm:$0xff]
      %v438 = vld [vmem:[%s303 + $0x378] sm:$0xff]
      %v439 = vld [vmem:[%s303 + $0x380] sm:$0xff]
      %v440 = vld [vmem:[%s303 + $0x388] sm:$0xff]
      %v441 = vld [vmem:[%s303 + $0x390] sm:$0xff]
      %v442 = vld [vmem:[%s303 + $0x398] sm:$0xff]
      %v443 = vld [vmem:[%s303 + $0x3a0] sm:$0xff]
      %v444 = vld [vmem:[%s303 + $0x3a8] sm:$0xff]
      %v445 = vld [vmem:[%s303 + $0x3b0] sm:$0xff]
      %v446 = vld [vmem:[%s303 + $0x3b8] sm:$0xff]
      %v447 = vld [vmem:[%s303 + $0x3c0] sm:$0xff]
      %v448 = vld [vmem:[%s303 + $0x3c8] sm:$0xff]
      %v449 = vld [vmem:[%s303 + $0x3d0] sm:$0xff]
      %v450 = vld [vmem:[%s303 + $0x3d8] sm:$0xff]
      %v451 = vld [vmem:[%s303 + $0x3e0] sm:$0xff]
      %v452 = vld [vmem:[%s303 + $0x3e8] sm:$0xff]
      %v453 = vld [vmem:[%s303 + $0x3f0] sm:$0xff]
      %v454 = vld [vmem:[%s303 + $0x3f8] sm:$0xff]
      %v455 = vld [vmem:[%s303 + $0x400] sm:$0xff]
      %v456 = vld [vmem:[%s303 + $0x408] sm:$0xff]
      %v457 = vld [vmem:[%s303 + $0x410] sm:$0xff]
      %v458 = vld [vmem:[%s303 + $0x418] sm:$0xff]
      %v459 = vld [vmem:[%s303 + $0x420] sm:$0xff]
      %v460 = vld [vmem:[%s303 + $0x428] sm:$0xff]
      %v461 = vld [vmem:[%s303 + $0x430] sm:$0xff]
      %v462 = vld [vmem:[%s303 + $0x438] sm:$0xff]
      %v463 = vld [vmem:[%s303 + $0x440] sm:$0xff]
      %v464 = vld [vmem:[%s303 + $0x448] sm:$0xff]
      %v465 = vld [vmem:[%s303 + $0x450] sm:$0xff]
      %v466 = vld [vmem:[%s303 + $0x458] sm:$0xff]
      %v467 = vld [vmem:[%s303 + $0x460] sm:$0xff]
      %v468 = vld [vmem:[%s303 + $0x468] sm:$0xff]
      %v469 = vld [vmem:[%s303 + $0x470] sm:$0xff]
      %v470 = vld [vmem:[%s303 + $0x478] sm:$0xff]
      %v471 = vld [vmem:[%s303 + $0x480] sm:$0xff]
      %v472 = vld [vmem:[%s303 + $0x488] sm:$0xff]
      %v473 = vld [vmem:[%s303 + $0x490] sm:$0xff]
      %v474 = vld [vmem:[%s303 + $0x498] sm:$0xff]
      %v475 = vld [vmem:[%s303 + $0x4a0] sm:$0xff]
      %v476 = vld [vmem:[%s303 + $0x4a8] sm:$0xff]
      %v477 = vld [vmem:[%s303 + $0x4b0] sm:$0xff]
      %v478 = vld [vmem:[%s303 + $0x4b8] sm:$0xff]
      %v479 = vld [vmem:[%s303 + $0x4c0] sm:$0xff]
      %v480 = vld [vmem:[%s303 + $0x4c8] sm:$0xff]
      %v481 = vld [vmem:[%s303 + $0x4d0] sm:$0xff]
      %v482 = vld [vmem:[%s303 + $0x4d8] sm:$0xff]
      %v483 = vld [vmem:[%s303 + $0x4e0] sm:$0xff]
      %v484 = vld [vmem:[%s303 + $0x4e8] sm:$0xff]
      %v485 = vld [vmem:[%s303 + $0x4f0] sm:$0xff]
      %v486 = vld [vmem:[%s303 + $0x4f8] sm:$0xff]
      %v487 = vld [vmem:[%s303 + $0x500] sm:$0xff]
      %v488 = vld [vmem:[%s303 + $0x508] sm:$0xff]
      %v489 = vld [vmem:[%s303 + $0x510] sm:$0xff]
      %v490 = vld [vmem:[%s303 + $0x518] sm:$0xff]
      %v491 = vld [vmem:[%s303 + $0x520] sm:$0xff]
      %v492 = vld [vmem:[%s303 + $0x528] sm:$0xff]
      %v493 = vld [vmem:[%s303 + $0x530] sm:$0xff]
      %v494 = vld [vmem:[%s303 + $0x538] sm:$0xff]
      %v495 = vld [vmem:[%s303 + $0x540] sm:$0xff]
      %v496 = vld [vmem:[%s303 + $0x548] sm:$0xff]
      %v497 = vld [vmem:[%s303 + $0x550] sm:$0xff]
      %v498 = vld [vmem:[%s303 + $0x558] sm:$0xff]
      %v499 = vld [vmem:[%s303 + $0x560] sm:$0xff]
      %v500 = vld [vmem:[%s303 + $0x568] sm:$0xff]
      %v501 = vld [vmem:[%s303 + $0x570] sm:$0xff]
      %v502 = vld [vmem:[%s303 + $0x578] sm:$0xff]
      %v503 = vld [vmem:[%s303 + $0x580] sm:$0xff]
      %v504 = vld [vmem:[%s303 + $0x588] sm:$0xff]
      %v505 = vld [vmem:[%s303 + $0x590] sm:$0xff]
      %v506 = vld [vmem:[%s303 + $0x598] sm:$0xff]
      %v507 = vld [vmem:[%s303 + $0x5a0] sm:$0xff]
      %v508 = vld [vmem:[%s303 + $0x5a8] sm:$0xff]
      %v509 = vld [vmem:[%s303 + $0x5b0] sm:$0xff]
      %v510 = vld [vmem:[%s303 + $0x5b8] sm:$0xff]
      %v511 = vld [vmem:[%s303 + $0x5c0] sm:$0xff]
      %v512 = vld [vmem:[%s303 + $0x5c8] sm:$0xff]
      %v513 = vld [vmem:[%s303 + $0x5d0] sm:$0xff]
      %v514 = vld [vmem:[%s303 + $0x5d8] sm:$0xff]
      %v515 = vld [vmem:[%s303 + $0x5e0] sm:$0xff]
      %v516 = vld [vmem:[%s303 + $0x5e8] sm:$0xff]
      %v517 = vld [vmem:[%s303 + $0x5f0] sm:$0xff]
      %v518 = vld [vmem:[%s303 + $0x5f8] sm:$0xff]
      %v519 = vld [vmem:[%s303 + $0x600] sm:$0xff]
      %v520 = vld [vmem:[%s303 + $0x608] sm:$0xff]
      %v521 = vld [vmem:[%s303 + $0x610] sm:$0xff]
      %v522 = vld [vmem:[%s303 + $0x618] sm:$0xff]
      %v523 = vld [vmem:[%s303 + $0x620] sm:$0xff]
      %v524 = vld [vmem:[%s303 + $0x628] sm:$0xff]
      %v525 = vld [vmem:[%s303 + $0x630] sm:$0xff]
      %v526 = vld [vmem:[%s303 + $0x638] sm:$0xff]
      %v527 = vld [vmem:[%s303 + $0x640] sm:$0xff]
      %v528 = vld [vmem:[%s303 + $0x648] sm:$0xff]
      %v529 = vld [vmem:[%s303 + $0x650] sm:$0xff]
      %v530 = vld [vmem:[%s303 + $0x658] sm:$0xff]
      %v531 = vld [vmem:[%s303 + $0x660] sm:$0xff]
      %v532 = vld [vmem:[%s303 + $0x668] sm:$0xff]
      %v533 = vld [vmem:[%s303 + $0x670] sm:$0xff]
      %v534 = vld [vmem:[%s303 + $0x678] sm:$0xff]
      %v535 = vld [vmem:[%s303 + $0x680] sm:$0xff]
      %v536 = vld [vmem:[%s303 + $0x688] sm:$0xff]
      %v537 = vld [vmem:[%s303 + $0x690] sm:$0xff]
      %v538 = vld [vmem:[%s303 + $0x698] sm:$0xff]
      %v539 = vld [vmem:[%s303 + $0x6a0] sm:$0xff]
      %v540 = vld [vmem:[%s303 + $0x6a8] sm:$0xff]
      %v541 = vld [vmem:[%s303 + $0x6b0] sm:$0xff]
      %v542 = vld [vmem:[%s303 + $0x6b8] sm:$0xff]
      %v543 = vld [vmem:[%s303 + $0x6c0] sm:$0xff]
      %v544 = vld [vmem:[%s303 + $0x6c8] sm:$0xff]
      %v545 = vld [vmem:[%s303 + $0x6d0] sm:$0xff]
      %v546 = vld [vmem:[%s303 + $0x6d8] sm:$0xff]
      %v547 = vld [vmem:[%s303 + $0x6e0] sm:$0xff]
      %v548 = vld [vmem:[%s303 + $0x6e8] sm:$0xff]
      %v549 = vld [vmem:[%s303 + $0x6f0] sm:$0xff]
      %v550 = vld [vmem:[%s303 + $0x6f8] sm:$0xff]
      %v551 = vld [vmem:[%s303 + $0x700] sm:$0xff]
      %v552 = vld [vmem:[%s303 + $0x708] sm:$0xff]
      %v553 = vld [vmem:[%s303 + $0x710] sm:$0xff]
      %v554 = vld [vmem:[%s303 + $0x718] sm:$0xff]
      %v555 = vld [vmem:[%s303 + $0x720] sm:$0xff]
      %v556 = vld [vmem:[%s303 + $0x728] sm:$0xff]
      %v557 = vld [vmem:[%s303 + $0x730] sm:$0xff]
      %v558 = vld [vmem:[%s303 + $0x738] sm:$0xff]
      %v559 = vld [vmem:[%s303 + $0x740] sm:$0xff]
      %v560 = vld [vmem:[%s303 + $0x748] sm:$0xff]
      %v561 = vld [vmem:[%s303 + $0x750] sm:$0xff]
      %v562 = vld [vmem:[%s303 + $0x758] sm:$0xff]
      %v563 = vld [vmem:[%s303 + $0x760] sm:$0xff]
      %v564 = vld [vmem:[%s303 + $0x768] sm:$0xff]
      %v565 = vld [vmem:[%s303 + $0x770] sm:$0xff]
      %v566 = vld [vmem:[%s303 + $0x778] sm:$0xff]
      %v567 = vld [vmem:[%s303 + $0x780] sm:$0xff]
      %v568 = vld [vmem:[%s303 + $0x788] sm:$0xff]
      %v569 = vld [vmem:[%s303 + $0x790] sm:$0xff]
      %v570 = vld [vmem:[%s303 + $0x798] sm:$0xff]
      %v571 = vld [vmem:[%s303 + $0x7a0] sm:$0xff]
      %v572 = vld [vmem:[%s303 + $0x7a8] sm:$0xff]
      %v573 = vld [vmem:[%s303 + $0x7b0] sm:$0xff]
      %v574 = vld [vmem:[%s303 + $0x7b8] sm:$0xff]
      %v575 = vld [vmem:[%s303 + $0x7c0] sm:$0xff]
      %v576 = vld [vmem:[%s303 + $0x7c8] sm:$0xff]
      %v577 = vld [vmem:[%s303 + $0x7d0] sm:$0xff]
      %v578 = vld [vmem:[%s303 + $0x7d8] sm:$0xff]
      %v579 = vld [vmem:[%s303 + $0x7e0] sm:$0xff]
      %v580 = vld [vmem:[%s303 + $0x7e8] sm:$0xff]
      %v581 = vld [vmem:[%s303 + $0x7f0] sm:$0xff]
      %v582 = vld [vmem:[%s303 + $0x7f8] sm:$0xff]
      %v583 = vld [vmem:[%s303 + $0x800] sm:$0xff]
      %v584 = vld [vmem:[%s303 + $0x808] sm:$0xff]
      %v585 = vld [vmem:[%s303 + $0x810] sm:$0xff]
      %v586 = vld [vmem:[%s303 + $0x818] sm:$0xff]
      %v587 = vld [vmem:[%s303 + $0x820] sm:$0xff]
      %v588 = vld [vmem:[%s303 + $0x828] sm:$0xff]
      %v589 = vld [vmem:[%s303 + $0x830] sm:$0xff]
      %v590 = vld [vmem:[%s303 + $0x838] sm:$0xff]
      %v591 = vld [vmem:[%s303 + $0x840] sm:$0xff]
      %v592 = vld [vmem:[%s303 + $0x848] sm:$0xff]
      %v593 = vld [vmem:[%s303 + $0x850] sm:$0xff]
      %v594 = vld [vmem:[%s303 + $0x858] sm:$0xff]
      %v595 = vld [vmem:[%s303 + $0x860] sm:$0xff]
      %v596 = vld [vmem:[%s303 + $0x868] sm:$0xff]
      %v597 = vld [vmem:[%s303 + $0x870] sm:$0xff]
      %v598 = vld [vmem:[%s303 + $0x878] sm:$0xff]
      %v599 = vld [vmem:[%s303 + $0x880] sm:$0xff]
      %v600 = vld [vmem:[%s303 + $0x888] sm:$0xff]
      %v601 = vld [vmem:[%s303 + $0x890] sm:$0xff]
      %v602 = vld [vmem:[%s303 + $0x898] sm:$0xff]
      %v603 = vld [vmem:[%s303 + $0x8a0] sm:$0xff]
      %v604 = vld [vmem:[%s303 + $0x8a8] sm:$0xff]
      %v605 = vld [vmem:[%s303 + $0x8b0] sm:$0xff]
      %v606 = vld [vmem:[%s303 + $0x8b8] sm:$0xff]
      %v607 = vld [vmem:[%s303 + $0x8c0] sm:$0xff]
      %v608 = vld [vmem:[%s303 + $0x8c8] sm:$0xff]
      %v609 = vld [vmem:[%s303 + $0x8d0] sm:$0xff]
      %v610 = vld [vmem:[%s303 + $0x8d8] sm:$0xff]
      %v611 = vld [vmem:[%s303 + $0x8e0] sm:$0xff]
      %v612 = vld [vmem:[%s303 + $0x8e8] sm:$0xff]
      %v613 = vld [vmem:[%s303 + $0x8f0] sm:$0xff]
      %v614 = vld [vmem:[%s303 + $0x8f8] sm:$0xff]
      %v615 = vld [vmem:[%s303 + $0x900] sm:$0xff]
      %v616 = vld [vmem:[%s303 + $0x908] sm:$0xff]
      %v617 = vld [vmem:[%s303 + $0x910] sm:$0xff]
      %v618 = vld [vmem:[%s303 + $0x918] sm:$0xff]
      %v619 = vld [vmem:[%s303 + $0x920] sm:$0xff]
      %v620 = vld [vmem:[%s303 + $0x928] sm:$0xff]
      %v621 = vld [vmem:[%s303 + $0x930] sm:$0xff]
      %v622 = vld [vmem:[%s303 + $0x938] sm:$0xff]
      %v623 = vld [vmem:[%s303 + $0x940] sm:$0xff]
      %v624 = vld [vmem:[%s303 + $0x948] sm:$0xff]
      %v625 = vld [vmem:[%s303 + $0x950] sm:$0xff]
      %v626 = vld [vmem:[%s303 + $0x958] sm:$0xff]
      %v627 = vld [vmem:[%s303 + $0x960] sm:$0xff]
      %v628 = vld [vmem:[%s303 + $0x968] sm:$0xff]
      %v629 = vld [vmem:[%s303 + $0x970] sm:$0xff]
      %v630 = vld [vmem:[%s303 + $0x978] sm:$0xff]
      %v631 = vld [vmem:[%s303 + $0x980] sm:$0xff]
      %v632 = vld [vmem:[%s303 + $0x988] sm:$0xff]
      %v633 = vld [vmem:[%s303 + $0x990] sm:$0xff]
      %v634 = vld [vmem:[%s303 + $0x998] sm:$0xff]
      %v635 = vld [vmem:[%s303 + $0x9a0] sm:$0xff]
      %v636 = vld [vmem:[%s303 + $0x9a8] sm:$0xff]
      %v637 = vld [vmem:[%s303 + $0x9b0] sm:$0xff]
      %v638 = vld [vmem:[%s303 + $0x9b8] sm:$0xff]
      %v639 = vld [vmem:[%s303 + $0x9c0] sm:$0xff]
      %v640 = vld [vmem:[%s303 + $0x9c8] sm:$0xff]
      %v641 = vld [vmem:[%s303 + $0x9d0] sm:$0xff]
      %v642 = vld [vmem:[%s303 + $0x9d8] sm:$0xff]
      %v643 = vld [vmem:[%s303 + $0x9e0] sm:$0xff]
      %v644 = vld [vmem:[%s303 + $0x9e8] sm:$0xff]
      %v645 = vld [vmem:[%s303 + $0x9f0] sm:$0xff]
      %v646 = vld [vmem:[%s303 + $0x9f8] sm:$0xff]
      %v647 = vld [vmem:[%s303 + $0xa00] sm:$0xff]
      %v648 = vld [vmem:[%s303 + $0xa08] sm:$0xff]
      %v649 = vld [vmem:[%s303 + $0xa10] sm:$0xff]
      %v650 = vld [vmem:[%s303 + $0xa18] sm:$0xff]
      %v651 = vld [vmem:[%s303 + $0xa20] sm:$0xff]
      %v652 = vld [vmem:[%s303 + $0xa28] sm:$0xff]
      %v653 = vld [vmem:[%s303 + $0xa30] sm:$0xff]
      %v654 = vld [vmem:[%s303 + $0xa38] sm:$0xff]
      %v655 = vld [vmem:[%s303 + $0xa40] sm:$0xff]
      %v656 = vld [vmem:[%s303 + $0xa48] sm:$0xff]
      %v657 = vld [vmem:[%s303 + $0xa50] sm:$0xff]
      %v658 = vld [vmem:[%s303 + $0xa58] sm:$0xff]
      %v659 = vld [vmem:[%s303 + $0xa60] sm:$0xff]
      %v660 = vld [vmem:[%s303 + $0xa68] sm:$0xff]
      %v661 = vld [vmem:[%s303 + $0xa70] sm:$0xff]
      %v662 = vld [vmem:[%s303 + $0xa78] sm:$0xff]
      %v663 = vld [vmem:[%s303 + $0xa80] sm:$0xff]
      %v664 = vld [vmem:[%s303 + $0xa88] sm:$0xff]
      %v665 = vld [vmem:[%s303 + $0xa90] sm:$0xff]
      %v666 = vld [vmem:[%s303 + $0xa98] sm:$0xff]
      %v667 = vld [vmem:[%s303 + $0xaa0] sm:$0xff]
      %v668 = vld [vmem:[%s303 + $0xaa8] sm:$0xff]
      %v669 = vld [vmem:[%s303 + $0xab0] sm:$0xff]
      %v670 = vld [vmem:[%s303 + $0xab8] sm:$0xff]
      %v671 = vld [vmem:[%s303 + $0xac0] sm:$0xff]
      %v672 = vld [vmem:[%s303 + $0xac8] sm:$0xff]
      %v673 = vld [vmem:[%s303 + $0xad0] sm:$0xff]
      %v674 = vld [vmem:[%s303 + $0xad8] sm:$0xff]
      %v675 = vld [vmem:[%s303 + $0xae0] sm:$0xff]
      %v676 = vld [vmem:[%s303 + $0xae8] sm:$0xff]
      %v677 = vld [vmem:[%s303 + $0xaf0] sm:$0xff]
      %v678 = vld [vmem:[%s303 + $0xaf8] sm:$0xff]
      %v679 = vld [vmem:[%s303 + $0xb00] sm:$0xff]
      %v680 = vld [vmem:[%s303 + $0xb08] sm:$0xff]
      %v681 = vld [vmem:[%s303 + $0xb10] sm:$0xff]
      %v682 = vld [vmem:[%s303 + $0xb18] sm:$0xff]
      %v683 = vld [vmem:[%s303 + $0xb20] sm:$0xff]
      %v684 = vld [vmem:[%s303 + $0xb28] sm:$0xff]
      %v685 = vld [vmem:[%s303 + $0xb30] sm:$0xff]
      %v686 = vld [vmem:[%s303 + $0xb38] sm:$0xff]
      %v687 = vld [vmem:[%s303 + $0xb40] sm:$0xff]
      %v688 = vld [vmem:[%s303 + $0xb48] sm:$0xff]
      %v689 = vld [vmem:[%s303 + $0xb50] sm:$0xff]
      %v690 = vld [vmem:[%s303 + $0xb58] sm:$0xff]
      %v691 = vld [vmem:[%s303 + $0xb60] sm:$0xff]
      %v692 = vld [vmem:[%s303 + $0xb68] sm:$0xff]
      %v693 = vld [vmem:[%s303 + $0xb70] sm:$0xff]
      %v694 = vld [vmem:[%s303 + $0xb78] sm:$0xff]
      %v695 = vld [vmem:[%s303 + $0xb80] sm:$0xff]
      %v696 = vld [vmem:[%s303 + $0xb88] sm:$0xff]
      %v697 = vld [vmem:[%s303 + $0xb90] sm:$0xff]
      %v698 = vld [vmem:[%s303 + $0xb98] sm:$0xff]
      %v699 = vld [vmem:[%s303 + $0xba0] sm:$0xff]
      %v700 = vld [vmem:[%s303 + $0xba8] sm:$0xff]
      %v701 = vld [vmem:[%s303 + $0xbb0] sm:$0xff]
      %v702 = vld [vmem:[%s303 + $0xbb8] sm:$0xff]
      %v703 = vld [vmem:[%s303 + $0xbc0] sm:$0xff]
      %v704 = vld [vmem:[%s303 + $0xbc8] sm:$0xff]
      %v705 = vld [vmem:[%s303 + $0xbd0] sm:$0xff]
      %v706 = vld [vmem:[%s303 + $0xbd8] sm:$0xff]
      %v707 = vld [vmem:[%s303 + $0xbe0] sm:$0xff]
      %v708 = vld [vmem:[%s303 + $0xbe8] sm:$0xff]
      %v709 = vld [vmem:[%s303 + $0xbf0] sm:$0xff]
      %v710 = vld [vmem:[%s303 + $0xbf8] sm:$0xff]
      %v711 = vld [vmem:[%s303 + $0xc00] sm:$0xff]
      %v712 = vld [vmem:[%s303 + $0xc08] sm:$0xff]
      %v713 = vld [vmem:[%s303 + $0xc10] sm:$0xff]
      %v714 = vld [vmem:[%s303 + $0xc18] sm:$0xff]
      %v715 = vld [vmem:[%s303 + $0xc20] sm:$0xff]
      %v716 = vld [vmem:[%s303 + $0xc28] sm:$0xff]
      %v717 = vld [vmem:[%s303 + $0xc30] sm:$0xff]
      %v718 = vld [vmem:[%s303 + $0xc38] sm:$0xff]
      %v719 = vld [vmem:[%s303 + $0xc40] sm:$0xff]
      %v720 = vld [vmem:[%s303 + $0xc48] sm:$0xff]
      %v721 = vld [vmem:[%s303 + $0xc50] sm:$0xff]
      %v722 = vld [vmem:[%s303 + $0xc58] sm:$0xff]
      %v723 = vld [vmem:[%s303 + $0xc60] sm:$0xff]
      %v724 = vld [vmem:[%s303 + $0xc68] sm:$0xff]
      %v725 = vld [vmem:[%s303 + $0xc70] sm:$0xff]
      %v726 = vld [vmem:[%s303 + $0xc78] sm:$0xff]
      %v727 = vld [vmem:[%s303 + $0xc80] sm:$0xff]
      %v728 = vld [vmem:[%s303 + $0xc88] sm:$0xff]
      %v729 = vld [vmem:[%s303 + $0xc90] sm:$0xff]
      %v730 = vld [vmem:[%s303 + $0xc98] sm:$0xff]
      %v731 = vld [vmem:[%s303 + $0xca0] sm:$0xff]
      %v732 = vld [vmem:[%s303 + $0xca8] sm:$0xff]
      %v733 = vld [vmem:[%s303 + $0xcb0] sm:$0xff]
      %v734 = vld [vmem:[%s303 + $0xcb8] sm:$0xff]
      %v735 = vld [vmem:[%s303 + $0xcc0] sm:$0xff]
      %v736 = vld [vmem:[%s303 + $0xcc8] sm:$0xff]
      %v737 = vld [vmem:[%s303 + $0xcd0] sm:$0xff]
      %v738 = vld [vmem:[%s303 + $0xcd8] sm:$0xff]
      %v739 = vld [vmem:[%s303 + $0xce0] sm:$0xff]
      %v740 = vld [vmem:[%s303 + $0xce8] sm:$0xff]
      %v741 = vld [vmem:[%s303 + $0xcf0] sm:$0xff]
      %v742 = vld [vmem:[%s303 + $0xcf8] sm:$0xff]
      %v743 = vld [vmem:[%s303 + $0xd00] sm:$0xff]
      %v744 = vld [vmem:[%s303 + $0xd08] sm:$0xff]
      %v745 = vld [vmem:[%s303 + $0xd10] sm:$0xff]
      %v746 = vld [vmem:[%s303 + $0xd18] sm:$0xff]
      %v747 = vld [vmem:[%s303 + $0xd20] sm:$0xff]
      %v748 = vld [vmem:[%s303 + $0xd28] sm:$0xff]
      %v749 = vld [vmem:[%s303 + $0xd30] sm:$0xff]
      %v750 = vld [vmem:[%s303 + $0xd38] sm:$0xff]
      %v751 = vld [vmem:[%s303 + $0xd40] sm:$0xff]
      %v752 = vld [vmem:[%s303 + $0xd48] sm:$0xff]
      %v753 = vld [vmem:[%s303 + $0xd50] sm:$0xff]
      %v754 = vld [vmem:[%s303 + $0xd58] sm:$0xff]
      %v755 = vld [vmem:[%s303 + $0xd60] sm:$0xff]
      %v756 = vld [vmem:[%s303 + $0xd68] sm:$0xff]
      %v757 = vld [vmem:[%s303 + $0xd70] sm:$0xff]
      %v758 = vld [vmem:[%s303 + $0xd78] sm:$0xff]
      %v759 = vld [vmem:[%s303 + $0xd80] sm:$0xff]
      %v760 = vld [vmem:[%s303 + $0xd88] sm:$0xff]
      %v761 = vld [vmem:[%s303 + $0xd90] sm:$0xff]
      %v762 = vld [vmem:[%s303 + $0xd98] sm:$0xff]
      %v763 = vld [vmem:[%s303 + $0xda0] sm:$0xff]
      %v764 = vld [vmem:[%s303 + $0xda8] sm:$0xff]
      %v765 = vld [vmem:[%s303 + $0xdb0] sm:$0xff]
      %v766 = vld [vmem:[%s303 + $0xdb8] sm:$0xff]
      %v767 = vld [vmem:[%s303 + $0xdc0] sm:$0xff]
      %v768 = vld [vmem:[%s303 + $0xdc8] sm:$0xff]
      %v769 = vld [vmem:[%s303 + $0xdd0] sm:$0xff]
      %v770 = vld [vmem:[%s303 + $0xdd8] sm:$0xff]
      %v771 = vld [vmem:[%s303 + $0xde0] sm:$0xff]
      %v772 = vld [vmem:[%s303 + $0xde8] sm:$0xff]
      %v773 = vld [vmem:[%s303 + $0xdf0] sm:$0xff]
      %v774 = vld [vmem:[%s303 + $0xdf8] sm:$0xff]
      %v775 = vld [vmem:[%s303 + $0xe00] sm:$0xff]
      %v776 = vld [vmem:[%s303 + $0xe08] sm:$0xff]
      %v777 = vld [vmem:[%s303 + $0xe10] sm:$0xff]
      %v778 = vld [vmem:[%s303 + $0xe18] sm:$0xff]
      %v779 = vld [vmem:[%s303 + $0xe20] sm:$0xff]
      %v780 = vld [vmem:[%s303 + $0xe28] sm:$0xff]
      %v781 = vld [vmem:[%s303 + $0xe30] sm:$0xff]
      %v782 = vld [vmem:[%s303 + $0xe38] sm:$0xff]
      %v783 = vld [vmem:[%s303 + $0xe40] sm:$0xff]
      %v784 = vld [vmem:[%s303 + $0xe48] sm:$0xff]
      %v785 = vld [vmem:[%s303 + $0xe50] sm:$0xff]
      %v786 = vld [vmem:[%s303 + $0xe58] sm:$0xff]
      %v787 = vld [vmem:[%s303 + $0xe60] sm:$0xff]
      %v788 = vld [vmem:[%s303 + $0xe68] sm:$0xff]
      %v789 = vld [vmem:[%s303 + $0xe70] sm:$0xff]
      %v790 = vld [vmem:[%s303 + $0xe78] sm:$0xff]
      %v791 = vld [vmem:[%s303 + $0xe80] sm:$0xff]
      %v792 = vld [vmem:[%s303 + $0xe88] sm:$0xff]
      %v793 = vld [vmem:[%s303 + $0xe90] sm:$0xff]
      %v794 = vld [vmem:[%s303 + $0xe98] sm:$0xff]
      %v795 = vld [vmem:[%s303 + $0xea0] sm:$0xff]
      %v796 = vld [vmem:[%s303 + $0xea8] sm:$0xff]
      %v797 = vld [vmem:[%s303 + $0xeb0] sm:$0xff]
      %v798 = vld [vmem:[%s303 + $0xeb8] sm:$0xff]
      %v799 = vld [vmem:[%s303 + $0xec0] sm:$0xff]
      %v800 = vld [vmem:[%s303 + $0xec8] sm:$0xff]
      %v801 = vld [vmem:[%s303 + $0xed0] sm:$0xff]
      %v802 = vld [vmem:[%s303 + $0xed8] sm:$0xff]
      %v803 = vld [vmem:[%s303 + $0xee0] sm:$0xff]
      %v804 = vld [vmem:[%s303 + $0xee8] sm:$0xff]
      %v805 = vld [vmem:[%s303 + $0xef0] sm:$0xff]
      %v806 = vld [vmem:[%s303 + $0xef8] sm:$0xff]
      %v807 = vld [vmem:[%s303 + $0xf00] sm:$0xff]
      %v808 = vld [vmem:[%s303 + $0xf08] sm:$0xff]
      %v809 = vld [vmem:[%s303 + $0xf10] sm:$0xff]
      %v810 = vld [vmem:[%s303 + $0xf18] sm:$0xff]
      %v811 = vld [vmem:[%s303 + $0xf20] sm:$0xff]
      %v812 = vld [vmem:[%s303 + $0xf28] sm:$0xff]
      %v813 = vld [vmem:[%s303 + $0xf30] sm:$0xff]
      %v814 = vld [vmem:[%s303 + $0xf38] sm:$0xff]
      %v815 = vld [vmem:[%s303 + $0xf40] sm:$0xff]
      %v816 = vld [vmem:[%s303 + $0xf48] sm:$0xff]
      %v817 = vld [vmem:[%s303 + $0xf50] sm:$0xff]
      %v818 = vld [vmem:[%s303 + $0xf58] sm:$0xff]
      %v819 = vld [vmem:[%s303 + $0xf60] sm:$0xff]
      %v820 = vld [vmem:[%s303 + $0xf68] sm:$0xff]
      %v821 = vld [vmem:[%s303 + $0xf70] sm:$0xff]
      %v822 = vld [vmem:[%s303 + $0xf78] sm:$0xff]
      %v823 = vld [vmem:[%s303 + $0xf80] sm:$0xff]
      %v824 = vld [vmem:[%s303 + $0xf88] sm:$0xff]
      %v825 = vld [vmem:[%s303 + $0xf90] sm:$0xff]
      %v826 = vld [vmem:[%s303 + $0xf98] sm:$0xff]
      %v827 = vld [vmem:[%s303 + $0xfa0] sm:$0xff]
      %v828 = vld [vmem:[%s303 + $0xfa8] sm:$0xff]
      %v829 = vld [vmem:[%s303 + $0xfb0] sm:$0xff]
      %v830 = vld [vmem:[%s303 + $0xfb8] sm:$0xff]
      %v831 = vld [vmem:[%s303 + $0xfc0] sm:$0xff]
      %v832 = vld [vmem:[%s303 + $0xfc8] sm:$0xff]
      %v833 = vld [vmem:[%s303 + $0xfd0] sm:$0xff]
      %v834 = vld [vmem:[%s303 + $0xfd8] sm:$0xff]
      %v835 = vld [vmem:[%s303 + $0xfe0] sm:$0xff]
      %v836 = vld [vmem:[%s303 + $0xfe8] sm:$0xff]
      %v837 = vld [vmem:[%s303 + $0xff0] sm:$0xff]
      %v838 = vld [vmem:[%s303 + $0xff8] sm:$0xff]
      %v839 = vld [vmem:[%s303 + $0x1000] sm:$0xff]
      %v840 = vld [vmem:[%s303 + $0x1008] sm:$0xff]
      %v841 = vld [vmem:[%s303 + $0x1010] sm:$0xff]
      %v842 = vld [vmem:[%s303 + $0x1018] sm:$0xff]
      %v843 = vld [vmem:[%s303 + $0x1020] sm:$0xff]
      %v844 = vld [vmem:[%s303 + $0x1028] sm:$0xff]
      %v845 = vld [vmem:[%s303 + $0x1030] sm:$0xff]
      %v846 = vld [vmem:[%s303 + $0x1038] sm:$0xff]
      %v847 = vld [vmem:[%s303 + $0x1040] sm:$0xff]
      %v848 = vld [vmem:[%s303 + $0x1048] sm:$0xff]
      %v849 = vld [vmem:[%s303 + $0x1050] sm:$0xff]
      %v850 = vld [vmem:[%s303 + $0x1058] sm:$0xff]
      %v851 = vld [vmem:[%s303 + $0x1060] sm:$0xff]
      %v852 = vld [vmem:[%s303 + $0x1068] sm:$0xff]
      %v853 = vld [vmem:[%s303 + $0x1070] sm:$0xff]
      %v854 = vld [vmem:[%s303 + $0x1078] sm:$0xff]
      %v855 = vld [vmem:[%s303 + $0x1080] sm:$0xff]
      %v856 = vld [vmem:[%s303 + $0x1088] sm:$0xff]
      %v857 = vld [vmem:[%s303 + $0x1090] sm:$0xff]
      %v858 = vld [vmem:[%s303 + $0x1098] sm:$0xff]
      %v859 = vld [vmem:[%s303 + $0x10a0] sm:$0xff]
      %v860 = vld [vmem:[%s303 + $0x10a8] sm:$0xff]
      %v861 = vld [vmem:[%s303 + $0x10b0] sm:$0xff]
      %v862 = vld [vmem:[%s303 + $0x10b8] sm:$0xff]
      %v863 = vld [vmem:[%s303 + $0x10c0] sm:$0xff]
      %v864 = vld [vmem:[%s303 + $0x10c8] sm:$0xff]
      %v865 = vld [vmem:[%s303 + $0x10d0] sm:$0xff]
      %v866 = vld [vmem:[%s303 + $0x10d8] sm:$0xff]
      %v867 = vld [vmem:[%s303 + $0x10e0] sm:$0xff]
      %v868 = vld [vmem:[%s303 + $0x10e8] sm:$0xff]
      %v869 = vld [vmem:[%s303 + $0x10f0] sm:$0xff]
      %v870 = vld [vmem:[%s303 + $0x10f8] sm:$0xff]
      %v871 = vld [vmem:[%s303 + $0x1100] sm:$0xff]
      %v872 = vld [vmem:[%s303 + $0x1108] sm:$0xff]
      %v873 = vld [vmem:[%s303 + $0x1110] sm:$0xff]
      %v874 = vld [vmem:[%s303 + $0x1118] sm:$0xff]
      %v875 = vld [vmem:[%s303 + $0x1120] sm:$0xff]
      %v876 = vld [vmem:[%s303 + $0x1128] sm:$0xff]
      %v877 = vld [vmem:[%s303 + $0x1130] sm:$0xff]
      %v878 = vld [vmem:[%s303 + $0x1138] sm:$0xff]
      %v879 = vld [vmem:[%s303 + $0x1140] sm:$0xff]
      %v880 = vld [vmem:[%s303 + $0x1148] sm:$0xff]
      %v881 = vld [vmem:[%s303 + $0x1150] sm:$0xff]
      %v882 = vld [vmem:[%s303 + $0x1158] sm:$0xff]
      %v883 = vld [vmem:[%s303 + $0x1160] sm:$0xff]
      %v884 = vld [vmem:[%s303 + $0x1168] sm:$0xff]
      %v885 = vld [vmem:[%s303 + $0x1170] sm:$0xff]
      %v886 = vld [vmem:[%s303 + $0x1178] sm:$0xff]
      %v887 = vld [vmem:[%s303 + $0x1180] sm:$0xff]
      %v888 = vld [vmem:[%s303 + $0x1188] sm:$0xff]
      %v889 = vld [vmem:[%s303 + $0x1190] sm:$0xff]
      %v890 = vld [vmem:[%s303 + $0x1198] sm:$0xff]
      %v891 = vld [vmem:[%s303 + $0x11a0] sm:$0xff]
      %v892 = vld [vmem:[%s303 + $0x11a8] sm:$0xff]
      %v893 = vld [vmem:[%s303 + $0x11b0] sm:$0xff]
      %v894 = vld [vmem:[%s303 + $0x11b8] sm:$0xff]
      %v895 = vld [vmem:[%s303 + $0x11c0] sm:$0xff]
      %v896 = vld [vmem:[%s303 + $0x11c8] sm:$0xff]
      %v897 = vld [vmem:[%s303 + $0x11d0] sm:$0xff]
      %v898 = vld [vmem:[%s303 + $0x11d8] sm:$0xff]
      %v899 = vld [vmem:[%s303 + $0x11e0] sm:$0xff]
      %v900 = vld [vmem:[%s303 + $0x11e8] sm:$0xff]
      %v901 = vld [vmem:[%s303 + $0x11f0] sm:$0xff]
      %v902 = vld [vmem:[%s303 + $0x11f8] sm:$0xff]
      %v903 = vld [vmem:[%s303 + $0x1200] sm:$0xff]
      %v904 = vld [vmem:[%s303 + $0x1208] sm:$0xff]
      %v905 = vld [vmem:[%s303 + $0x1210] sm:$0xff]
      %v906 = vld [vmem:[%s303 + $0x1218] sm:$0xff]
      %v907 = vld [vmem:[%s303 + $0x1220] sm:$0xff]
      %v908 = vld [vmem:[%s303 + $0x1228] sm:$0xff]
      %v909 = vld [vmem:[%s303 + $0x1230] sm:$0xff]
      %v910 = vld [vmem:[%s303 + $0x1238] sm:$0xff]
      %v911 = vld [vmem:[%s303 + $0x1240] sm:$0xff]
      %v912 = vld [vmem:[%s303 + $0x1248] sm:$0xff]
      %v913 = vld [vmem:[%s303 + $0x1250] sm:$0xff]
      %v914 = vld [vmem:[%s303 + $0x1258] sm:$0xff]
      %v915 = vld [vmem:[%s303 + $0x1260] sm:$0xff]
      %v916 = vld [vmem:[%s303 + $0x1268] sm:$0xff]
      %v917 = vld [vmem:[%s303 + $0x1270] sm:$0xff]
      %v918 = vld [vmem:[%s303 + $0x1278] sm:$0xff]
      %v919 = vld [vmem:[%s303 + $0x1280] sm:$0xff]
      %v920 = vld [vmem:[%s303 + $0x1288] sm:$0xff]
      %v921 = vld [vmem:[%s303 + $0x1290] sm:$0xff]
      %v922 = vld [vmem:[%s303 + $0x1298] sm:$0xff]
      %v923 = vld [vmem:[%s303 + $0x12a0] sm:$0xff]
      %v924 = vld [vmem:[%s303 + $0x12a8] sm:$0xff]
      %v925 = vld [vmem:[%s303 + $0x12b0] sm:$0xff]
      %v926 = vld [vmem:[%s303 + $0x12b8] sm:$0xff]
      %v927 = vld [vmem:[%s303 + $0x12c0] sm:$0xff]
      %v928 = vld [vmem:[%s303 + $0x12c8] sm:$0xff]
      %v929 = vld [vmem:[%s303 + $0x12d0] sm:$0xff]
      %v930 = vld [vmem:[%s303 + $0x12d8] sm:$0xff]
      %v931 = vld [vmem:[%s303 + $0x12e0] sm:$0xff]
      %v932 = vld [vmem:[%s303 + $0x12e8] sm:$0xff]
      %v933 = vld [vmem:[%s303 + $0x12f0] sm:$0xff]
      %v934 = vld [vmem:[%s303 + $0x12f8] sm:$0xff]
      %v935 = vld [vmem:[%s303 + $0x1300] sm:$0xff]
      %v936 = vld [vmem:[%s303 + $0x1308] sm:$0xff]
      %v937 = vld [vmem:[%s303 + $0x1310] sm:$0xff]
      %v938 = vld [vmem:[%s303 + $0x1318] sm:$0xff]
      %v939 = vld [vmem:[%s303 + $0x1320] sm:$0xff]
      %v940 = vld [vmem:[%s303 + $0x1328] sm:$0xff]
      %v941 = vld [vmem:[%s303 + $0x1330] sm:$0xff]
      %v942 = vld [vmem:[%s303 + $0x1338] sm:$0xff]
      %v943 = vld [vmem:[%s303 + $0x1340] sm:$0xff]
      %v944 = vld [vmem:[%s303 + $0x1348] sm:$0xff]
      %v945 = vld [vmem:[%s303 + $0x1350] sm:$0xff]
      %v946 = vld [vmem:[%s303 + $0x1358] sm:$0xff]
      %v947 = vld [vmem:[%s303 + $0x1360] sm:$0xff]
      %v948 = vld [vmem:[%s303 + $0x1368] sm:$0xff]
      %v949 = vld [vmem:[%s303 + $0x1370] sm:$0xff]
      %v950 = vld [vmem:[%s303 + $0x1378] sm:$0xff]
      %v951 = vld [vmem:[%s303 + $0x1380] sm:$0xff]
      %v952 = vld [vmem:[%s303 + $0x1388] sm:$0xff]
      %v953 = vld [vmem:[%s303 + $0x1390] sm:$0xff]
      %v954 = vld [vmem:[%s303 + $0x1398] sm:$0xff]
      %v955 = vld [vmem:[%s303 + $0x13a0] sm:$0xff]
      %v956 = vld [vmem:[%s303 + $0x13a8] sm:$0xff]
      %v957 = vld [vmem:[%s303 + $0x13b0] sm:$0xff]
      %v958 = vld [vmem:[%s303 + $0x13b8] sm:$0xff]
      %v959 = vld [vmem:[%s303 + $0x13c0] sm:$0xff]
      %v960 = vld [vmem:[%s303 + $0x13c8] sm:$0xff]
      %v961 = vld [vmem:[%s303 + $0x13d0] sm:$0xff]
      %v962 = vld [vmem:[%s303 + $0x13d8] sm:$0xff]
      %v963 = vld [vmem:[%s303 + $0x13e0] sm:$0xff]
      %v964 = vld [vmem:[%s303 + $0x13e8] sm:$0xff]
      %v965 = vld [vmem:[%s303 + $0x13f0] sm:$0xff]
      %v966 = vld [vmem:[%s303 + $0x13f8] sm:$0xff]
      %v967 = vld [vmem:[%s303 + $0x1400] sm:$0xff]
      %v968 = vld [vmem:[%s303 + $0x1408] sm:$0xff]
      %v969 = vld [vmem:[%s303 + $0x1410] sm:$0xff]
      %v970 = vld [vmem:[%s303 + $0x1418] sm:$0xff]
      %v971 = vld [vmem:[%s303 + $0x1420] sm:$0xff]
      %v972 = vld [vmem:[%s303 + $0x1428] sm:$0xff]
      %v973 = vld [vmem:[%s303 + $0x1430] sm:$0xff]
      %v974 = vld [vmem:[%s303 + $0x1438] sm:$0xff]
      %v975 = vld [vmem:[%s303 + $0x1440] sm:$0xff]
      %v976 = vld [vmem:[%s303 + $0x1448] sm:$0xff]
      %v977 = vld [vmem:[%s303 + $0x1450] sm:$0xff]
      %v978 = vld [vmem:[%s303 + $0x1458] sm:$0xff]
      %v979 = vld [vmem:[%s303 + $0x1460] sm:$0xff]
      %v980 = vld [vmem:[%s303 + $0x1468] sm:$0xff]
      %v981 = vld [vmem:[%s303 + $0x1470] sm:$0xff]
      %v982 = vld [vmem:[%s303 + $0x1478] sm:$0xff]
      %v983 = vld [vmem:[%s303 + $0x1480] sm:$0xff]
      %v984 = vld [vmem:[%s303 + $0x1488] sm:$0xff]
      %v985 = vld [vmem:[%s303 + $0x1490] sm:$0xff]
      %v986 = vld [vmem:[%s303 + $0x1498] sm:$0xff]
      %v987 = vld [vmem:[%s303 + $0x14a0] sm:$0xff]
      %v988 = vld [vmem:[%s303 + $0x14a8] sm:$0xff]
      %v989 = vld [vmem:[%s303 + $0x14b0] sm:$0xff]
      %v990 = vld [vmem:[%s303 + $0x14b8] sm:$0xff]
      %v991 = vld [vmem:[%s303 + $0x14c0] sm:$0xff]
      %v992 = vld [vmem:[%s303 + $0x14c8] sm:$0xff]
      %v993 = vld [vmem:[%s303 + $0x14d0] sm:$0xff]
      %v994 = vld [vmem:[%s303 + $0x14d8] sm:$0xff]
      %v995 = vld [vmem:[%s303 + $0x14e0] sm:$0xff]
      %v996 = vld [vmem:[%s303 + $0x14e8] sm:$0xff]
      %v997 = vld [vmem:[%s303 + $0x14f0] sm:$0xff]
      %v998 = vld [vmem:[%s303 + $0x14f8] sm:$0xff]
      %v999 = vld [vmem:[%s303 + $0x1500] sm:$0xff]
      %v1000 = vld [vmem:[%s303 + $0x1508] sm:$0xff]
      %v1001 = vld [vmem:[%s303 + $0x1510] sm:$0xff]
      %v1002 = vld [vmem:[%s303 + $0x1518] sm:$0xff]
      %v1003 = vld [vmem:[%s303 + $0x1520] sm:$0xff]
      %v1004 = vld [vmem:[%s303 + $0x1528] sm:$0xff]
      %v1005 = vld [vmem:[%s303 + $0x1530] sm:$0xff]
      %v1006 = vld [vmem:[%s303 + $0x1538] sm:$0xff]
      %v1007 = vld [vmem:[%s303 + $0x1540] sm:$0xff]
      %v1008 = vld [vmem:[%s303 + $0x1548] sm:$0xff]
      %v1009 = vld [vmem:[%s303 + $0x1550] sm:$0xff]
      %v1010 = vld [vmem:[%s303 + $0x1558] sm:$0xff]
      %v1011 = vld [vmem:[%s303 + $0x1560] sm:$0xff]
      %v1012 = vld [vmem:[%s303 + $0x1568] sm:$0xff]
      %v1013 = vld [vmem:[%s303 + $0x1570] sm:$0xff]
      %v1014 = vld [vmem:[%s303 + $0x1578] sm:$0xff]
      %v1015 = vld [vmem:[%s303 + $0x1580] sm:$0xff]
      %v1016 = vld [vmem:[%s303 + $0x1588] sm:$0xff]
      %v1017 = vld [vmem:[%s303 + $0x1590] sm:$0xff]
      %v1018 = vld [vmem:[%s303 + $0x1598] sm:$0xff]
      %v1019 = vld [vmem:[%s303 + $0x15a0] sm:$0xff]
      %v1020 = vld [vmem:[%s303 + $0x15a8] sm:$0xff]
      %v1021 = vld [vmem:[%s303 + $0x15b0] sm:$0xff]
      %v1022 = vld [vmem:[%s303 + $0x15b8] sm:$0xff]
      %v1023 = vld [vmem:[%s303 + $0x15c0] sm:$0xff]
      %v1024 = vld [vmem:[%s303 + $0x15c8] sm:$0xff]
      %v1025 = vld [vmem:[%s303 + $0x15d0] sm:$0xff]
      %v1026 = vld [vmem:[%s303 + $0x15d8] sm:$0xff]
      %v1027 = vld [vmem:[%s303 + $0x15e0] sm:$0xff]
      %v1028 = vld [vmem:[%s303 + $0x15e8] sm:$0xff]
      %v1029 = vld [vmem:[%s303 + $0x15f0] sm:$0xff]
      %v1030 = vld [vmem:[%s303 + $0x15f8] sm:$0xff]
      %v1031 = vld [vmem:[%s303 + $0x1600] sm:$0xff]
      %v1032 = vld [vmem:[%s303 + $0x1608] sm:$0xff]
      %v1033 = vld [vmem:[%s303 + $0x1610] sm:$0xff]
      %v1034 = vld [vmem:[%s303 + $0x1618] sm:$0xff]
      %v1035 = vld [vmem:[%s303 + $0x1620] sm:$0xff]
      %v1036 = vld [vmem:[%s303 + $0x1628] sm:$0xff]
      %v1037 = vld [vmem:[%s303 + $0x1630] sm:$0xff]
      %v1038 = vld [vmem:[%s303 + $0x1638] sm:$0xff]
      %v1039 = vld [vmem:[%s303 + $0x1640] sm:$0xff]
      %v1040 = vld [vmem:[%s303 + $0x1648] sm:$0xff]
      %v1041 = vld [vmem:[%s303 + $0x1650] sm:$0xff]
      %v1042 = vld [vmem:[%s303 + $0x1658] sm:$0xff]
      %v1043 = vld [vmem:[%s303 + $0x1660] sm:$0xff]
      %v1044 = vld [vmem:[%s303 + $0x1668] sm:$0xff]
      %v1045 = vld [vmem:[%s303 + $0x1670] sm:$0xff]
      %v1046 = vld [vmem:[%s303 + $0x1678] sm:$0xff]
      %v1047 = vld [vmem:[%s303 + $0x1680] sm:$0xff]
      %v1048 = vld [vmem:[%s303 + $0x1688] sm:$0xff]
      %v1049 = vld [vmem:[%s303 + $0x1690] sm:$0xff]
      %v1050 = vld [vmem:[%s303 + $0x1698] sm:$0xff]
      %v1051 = vld [vmem:[%s303 + $0x16a0] sm:$0xff]
      %v1052 = vld [vmem:[%s303 + $0x16a8] sm:$0xff]
      %v1053 = vld [vmem:[%s303 + $0x16b0] sm:$0xff]
      %v1054 = vld [vmem:[%s303 + $0x16b8] sm:$0xff]
      %v1055 = vld [vmem:[%s303 + $0x16c0] sm:$0xff]
      %v1056 = vld [vmem:[%s303 + $0x16c8] sm:$0xff]
      %v1057 = vld [vmem:[%s303 + $0x16d0] sm:$0xff]
      %v1058 = vld [vmem:[%s303 + $0x16d8] sm:$0xff]
      %v1059 = vld [vmem:[%s303 + $0x16e0] sm:$0xff]
      %v1060 = vld [vmem:[%s303 + $0x16e8] sm:$0xff]
      %v1061 = vld [vmem:[%s303 + $0x16f0] sm:$0xff]
      %v1062 = vld [vmem:[%s303 + $0x16f8] sm:$0xff]
      %v1063 = vld [vmem:[%s303 + $0x1700] sm:$0xff]
      %v1064 = vld [vmem:[%s303 + $0x1708] sm:$0xff]
      %v1065 = vld [vmem:[%s303 + $0x1710] sm:$0xff]
      %v1066 = vld [vmem:[%s303 + $0x1718] sm:$0xff]
      %v1067 = vld [vmem:[%s303 + $0x1720] sm:$0xff]
      %v1068 = vld [vmem:[%s303 + $0x1728] sm:$0xff]
      %v1069 = vld [vmem:[%s303 + $0x1730] sm:$0xff]
      %v1070 = vld [vmem:[%s303 + $0x1738] sm:$0xff]
      %v1071 = vld [vmem:[%s303 + $0x1740] sm:$0xff]
      %v1072 = vld [vmem:[%s303 + $0x1748] sm:$0xff]
      %v1073 = vld [vmem:[%s303 + $0x1750] sm:$0xff]
      %v1074 = vld [vmem:[%s303 + $0x1758] sm:$0xff]
      %v1075 = vld [vmem:[%s303 + $0x1760] sm:$0xff]
      %v1076 = vld [vmem:[%s303 + $0x1768] sm:$0xff]
      %v1077 = vld [vmem:[%s303 + $0x1770] sm:$0xff]
      %v1078 = vld [vmem:[%s303 + $0x1778] sm:$0xff]
      %v1079 = vld [vmem:[%s303 + $0x1780] sm:$0xff]
      %v1080 = vld [vmem:[%s303 + $0x1788] sm:$0xff]
      %v1081 = vld [vmem:[%s303 + $0x1790] sm:$0xff]
      %v1082 = vld [vmem:[%s303 + $0x1798] sm:$0xff]
      %v1083 = vld [vmem:[%s303 + $0x17a0] sm:$0xff]
      %v1084 = vld [vmem:[%s303 + $0x17a8] sm:$0xff]
      %v1085 = vld [vmem:[%s303 + $0x17b0] sm:$0xff]
      %v1086 = vld [vmem:[%s303 + $0x17b8] sm:$0xff]
      %v1087 = vld [vmem:[%s303 + $0x17c0] sm:$0xff]
      %v1088 = vld [vmem:[%s303 + $0x17c8] sm:$0xff]
      %v1089 = vld [vmem:[%s303 + $0x17d0] sm:$0xff]
      %v1090 = vld [vmem:[%s303 + $0x17d8] sm:$0xff]
      %v1091 = vld [vmem:[%s303 + $0x17e0] sm:$0xff]
      %v1092 = vld [vmem:[%s303 + $0x17e8] sm:$0xff]
      %v1093 = vld [vmem:[%s303 + $0x17f0] sm:$0xff]
      %v1094 = vld [vmem:[%s303 + $0x17f8] sm:$0xff]
      %v1095 = vld [vmem:[%s303 + $0x1800] sm:$0xff]
      %v1096 = vld [vmem:[%s303 + $0x1808] sm:$0xff]
      %v1097 = vld [vmem:[%s303 + $0x1810] sm:$0xff]
      %v1098 = vld [vmem:[%s303 + $0x1818] sm:$0xff]
      %v1099 = vld [vmem:[%s303 + $0x1820] sm:$0xff]
      %v1100 = vld [vmem:[%s303 + $0x1828] sm:$0xff]
      %v1101 = vld [vmem:[%s303 + $0x1830] sm:$0xff]
      %v1102 = vld [vmem:[%s303 + $0x1838] sm:$0xff]
      %v1103 = vld [vmem:[%s303 + $0x1840] sm:$0xff]
      %v1104 = vld [vmem:[%s303 + $0x1848] sm:$0xff]
      %v1105 = vld [vmem:[%s303 + $0x1850] sm:$0xff]
      %v1106 = vld [vmem:[%s303 + $0x1858] sm:$0xff]
      %v1107 = vld [vmem:[%s303 + $0x1860] sm:$0xff]
      %v1108 = vld [vmem:[%s303 + $0x1868] sm:$0xff]
      %v1109 = vld [vmem:[%s303 + $0x1870] sm:$0xff]
      %v1110 = vld [vmem:[%s303 + $0x1878] sm:$0xff]
      %v1111 = vld [vmem:[%s307] sm:$0xf]
      %v1113 = vlaneseq
      %v1114 = vshrl.u32 %v1113, 7
      %v1115 = vsub.s32 0, %v1114
      %v1116 = vrot.slane %v1111, %v1115
      %v1117 = vlaneseq
      %v1118 = vshrl.u32 %v1117, 7
      %v1119 = vsub.s32 1, %v1118
      %v1120 = vrot.slane %v1111, %v1119
      %v1121 = vlaneseq
      %v1122 = vshrl.u32 %v1121, 7
      %v1123 = vsub.s32 2, %v1122
      %v1124 = vrot.slane %v1111, %v1123
      %v1125 = vlaneseq
      %v1126 = vshrl.u32 %v1125, 7
      %v1127 = vsub.s32 3, %v1126
      %v1128 = vrot.slane %v1111, %v1127
      %v1137 = vcombine.high %v323, %v323
      %v1139 = vunpack.c.l.s4 1966171168
      %v1140 = vunpack.c.0.s8 %v1139
      %v1141 = vlaneseq
      %v1142 = vshrl.u32 %v1141, 7
      %v1143 = vsub.s32 %v1140, %v1142
      %v1144 = vrot.slane %v323, %v1143
      %v1146 = vunpack.c.l.s4 1966171168
      %v1147 = vunpack.c.0.s8 %v1146
      %v1148 = vlaneseq
      %v1149 = vshrl.u32 %v1148, 7
      %v1150 = vsub.s32 %v1147, %v1149
      %v1151 = vrot.slane %v1137, %v1150
      %v1152 = vcombine.high %v1144, %v1144
      %v1153 = vcombine.high %v1151, %v1151
      %v1155 = vunpack.c.l.s4 1966171168
      %v1156 = vunpack.c.0.s8 %v1155
      %v1157 = vlaneseq
      %v1158 = vshrl.u32 %v1157, 7
      %v1159 = vsub.s32 %v1156, %v1158
      %v1160 = vrot.slane %v1144, %v1159
      %v1162 = vunpack.c.l.s4 1966171168
      %v1163 = vunpack.c.0.s8 %v1162
      %v1164 = vlaneseq
      %v1165 = vshrl.u32 %v1164, 7
      %v1166 = vsub.s32 %v1163, %v1165
      %v1167 = vrot.slane %v1151, %v1166
      %v1169 = vunpack.c.l.s4 1966171168
      %v1170 = vunpack.c.0.s8 %v1169
      %v1171 = vlaneseq
      %v1172 = vshrl.u32 %v1171, 7
      %v1173 = vsub.s32 %v1170, %v1172
      %v1174 = vrot.slane %v1152, %v1173
      %v1176 = vunpack.c.l.s4 1966171168
      %v1177 = vunpack.c.0.s8 %v1176
      %v1178 = vlaneseq
      %v1179 = vshrl.u32 %v1178, 7
      %v1180 = vsub.s32 %v1177, %v1179
      %v1181 = vrot.slane %v1153, %v1180
      %v1182 = vcombine.high %v1160, %v1160
      %v1183 = vcombine.high %v1167, %v1167
      %v1184 = vcombine.high %v1174, %v1174
      %v1185 = vcombine.high %v1181, %v1181
      %v1186 = vcombine.high %v324, %v324
      %v1188 = vunpack.c.l.s4 1966171168
      %v1189 = vunpack.c.0.s8 %v1188
      %v1190 = vlaneseq
      %v1191 = vshrl.u32 %v1190, 7
      %v1192 = vsub.s32 %v1189, %v1191
      %v1193 = vrot.slane %v324, %v1192
      %v1195 = vunpack.c.l.s4 1966171168
      %v1196 = vunpack.c.0.s8 %v1195
      %v1197 = vlaneseq
      %v1198 = vshrl.u32 %v1197, 7
      %v1199 = vsub.s32 %v1196, %v1198
      %v1200 = vrot.slane %v1186, %v1199
      %v1201 = vcombine.high %v1193, %v1193
      %v1202 = vcombine.high %v1200, %v1200
      %v1204 = vunpack.c.l.s4 1966171168
      %v1205 = vunpack.c.0.s8 %v1204
      %v1206 = vlaneseq
      %v1207 = vshrl.u32 %v1206, 7
      %v1208 = vsub.s32 %v1205, %v1207
      %v1209 = vrot.slane %v1193, %v1208
      %v1211 = vunpack.c.l.s4 1966171168
      %v1212 = vunpack.c.0.s8 %v1211
      %v1213 = vlaneseq
      %v1214 = vshrl.u32 %v1213, 7
      %v1215 = vsub.s32 %v1212, %v1214
      %v1216 = vrot.slane %v1200, %v1215
      %v1218 = vunpack.c.l.s4 1966171168
      %v1219 = vunpack.c.0.s8 %v1218
      %v1220 = vlaneseq
      %v1221 = vshrl.u32 %v1220, 7
      %v1222 = vsub.s32 %v1219, %v1221
      %v1223 = vrot.slane %v1201, %v1222
      %v1225 = vunpack.c.l.s4 1966171168
      %v1226 = vunpack.c.0.s8 %v1225
      %v1227 = vlaneseq
      %v1228 = vshrl.u32 %v1227, 7
      %v1229 = vsub.s32 %v1226, %v1228
      %v1230 = vrot.slane %v1202, %v1229
      %v1231 = vcombine.high %v1209, %v1209
      %v1232 = vcombine.high %v1216, %v1216
      %v1233 = vcombine.high %v1223, %v1223
      %v1234 = vcombine.high %v1230, %v1230
      %v1235 = vcombine.high %v325, %v325
      %v1237 = vunpack.c.l.s4 1966171168
      %v1238 = vunpack.c.0.s8 %v1237
      %v1239 = vlaneseq
      %v1240 = vshrl.u32 %v1239, 7
      %v1241 = vsub.s32 %v1238, %v1240
      %v1242 = vrot.slane %v325, %v1241
      %v1244 = vunpack.c.l.s4 1966171168
      %v1245 = vunpack.c.0.s8 %v1244
      %v1246 = vlaneseq
      %v1247 = vshrl.u32 %v1246, 7
      %v1248 = vsub.s32 %v1245, %v1247
      %v1249 = vrot.slane %v1235, %v1248
      %v1250 = vcombine.high %v1242, %v1242
      %v1251 = vcombine.high %v1249, %v1249
      %v1253 = vunpack.c.l.s4 1966171168
      %v1254 = vunpack.c.0.s8 %v1253
      %v1255 = vlaneseq
      %v1256 = vshrl.u32 %v1255, 7
      %v1257 = vsub.s32 %v1254, %v1256
      %v1258 = vrot.slane %v1242, %v1257
      %v1260 = vunpack.c.l.s4 1966171168
      %v1261 = vunpack.c.0.s8 %v1260
      %v1262 = vlaneseq
      %v1263 = vshrl.u32 %v1262, 7
      %v1264 = vsub.s32 %v1261, %v1263
      %v1265 = vrot.slane %v1249, %v1264
      %v1267 = vunpack.c.l.s4 1966171168
      %v1268 = vunpack.c.0.s8 %v1267
      %v1269 = vlaneseq
      %v1270 = vshrl.u32 %v1269, 7
      %v1271 = vsub.s32 %v1268, %v1270
      %v1272 = vrot.slane %v1250, %v1271
      %v1274 = vunpack.c.l.s4 1966171168
      %v1275 = vunpack.c.0.s8 %v1274
      %v1276 = vlaneseq
      %v1277 = vshrl.u32 %v1276, 7
      %v1278 = vsub.s32 %v1275, %v1277
      %v1279 = vrot.slane %v1251, %v1278
      %v1280 = vcombine.high %v1258, %v1258
      %v1281 = vcombine.high %v1265, %v1265
      %v1282 = vcombine.high %v1272, %v1272
      %v1283 = vcombine.high %v1279, %v1279
      %v1285 = vunpack.c.l.s4 1966171168
      %v1286 = vunpack.c.0.s8 %v1285
      %v1287 = vlaneseq
      %v1288 = vshrl.u32 %v1287, 7
      %v1289 = vsub.s32 %v1286, %v1288
      %v1290 = vrot.slane %v326, %v1289
      %v1292 = vunpack.c.l.s4 1966171168
      %v1293 = vunpack.c.0.s8 %v1292
      %v1294 = vlaneseq
      %v1295 = vshrl.u32 %v1294, 7
      %v1296 = vsub.s32 %v1293, %v1295
      %v1297 = vrot.slane %v1290, %v1296
      %v2106 = vunpack.c.l.b16 %v327
      %v2107 = vunpack.c.h.b16 %v327
      %v2108 = vunpack.c.l.b16 %v328
      %v2109 = vunpack.c.h.b16 %v328
      %v2110 = vunpack.c.l.b16 %v329
      %v2111 = vunpack.c.h.b16 %v329
      %v2112 = vunpack.c.l.b16 %v330
      %v2113 = vunpack.c.h.b16 %v330
      %v2114 = vunpack.c.l.b16 %v331
      %v2115 = vunpack.c.h.b16 %v331
      %v2116 = vunpack.c.l.b16 %v332
      %v2117 = vunpack.c.h.b16 %v332
      %v2118 = vunpack.c.l.b16 %v333
      %v2119 = vunpack.c.h.b16 %v333
      %v2120 = vunpack.c.l.b16 %v334
      %v2121 = vunpack.c.h.b16 %v334
      %v2122 = vunpack.c.l.b16 %v335
      %v2123 = vunpack.c.h.b16 %v335
      %v2124 = vunpack.c.l.b16 %v336
      %v2125 = vunpack.c.h.b16 %v336
      %v2126 = vunpack.c.l.b16 %v337
      %v2127 = vunpack.c.h.b16 %v337
      %v2128 = vunpack.c.l.b16 %v338
      %v2129 = vunpack.c.h.b16 %v338
      %v2130 = vunpack.c.l.b16 %v339
      %v2131 = vunpack.c.h.b16 %v339
      %v2132 = vunpack.c.l.b16 %v340
      %v2133 = vunpack.c.h.b16 %v340
      %v2134 = vunpack.c.l.b16 %v341
      %v2135 = vunpack.c.h.b16 %v341
      %v2136 = vunpack.c.l.b16 %v342
      %v2137 = vunpack.c.h.b16 %v342
      %v2138 = vunpack.c.l.b16 %v343
      %v2139 = vunpack.c.h.b16 %v343
      %v2140 = vunpack.c.l.b16 %v344
      %v2141 = vunpack.c.h.b16 %v344
      %v2142 = vunpack.c.l.b16 %v345
      %v2143 = vunpack.c.h.b16 %v345
      %v2144 = vunpack.c.l.b16 %v346
      %v2145 = vunpack.c.h.b16 %v346
      %v2146 = vunpack.c.l.b16 %v347
      %v2147 = vunpack.c.h.b16 %v347
      %v2148 = vunpack.c.l.b16 %v348
      %v2149 = vunpack.c.h.b16 %v348
      %v2150 = vunpack.c.l.b16 %v349
      %v2151 = vunpack.c.h.b16 %v349
      %v2152 = vunpack.c.l.b16 %v350
      %v2153 = vunpack.c.h.b16 %v350
      %v2154 = vunpack.c.l.b16 %v351
      %v2155 = vunpack.c.h.b16 %v351
      %v2156 = vunpack.c.l.b16 %v352
      %v2157 = vunpack.c.h.b16 %v352
      %v2158 = vunpack.c.l.b16 %v353
      %v2159 = vunpack.c.h.b16 %v353
      %v2160 = vunpack.c.l.b16 %v354
      %v2161 = vunpack.c.h.b16 %v354
      %v2162 = vunpack.c.l.b16 %v355
      %v2163 = vunpack.c.h.b16 %v355
      %v2164 = vunpack.c.l.b16 %v356
      %v2165 = vunpack.c.h.b16 %v356
      %v2166 = vunpack.c.l.b16 %v357
      %v2167 = vunpack.c.h.b16 %v357
      %v2168 = vunpack.c.l.b16 %v358
      %v2169 = vunpack.c.h.b16 %v358
      %v2170 = vunpack.c.l.b16 %v359
      %v2171 = vunpack.c.h.b16 %v359
      %v2172 = vunpack.c.l.b16 %v360
      %v2173 = vunpack.c.h.b16 %v360
      %v2174 = vunpack.c.l.b16 %v361
      %v2175 = vunpack.c.h.b16 %v361
      %v2176 = vunpack.c.l.b16 %v362
      %v2177 = vunpack.c.h.b16 %v362
      %v2178 = vunpack.c.l.b16 %v363
      %v2179 = vunpack.c.h.b16 %v363
      %v2180 = vunpack.c.l.b16 %v364
      %v2181 = vunpack.c.h.b16 %v364
      %v2182 = vunpack.c.l.b16 %v365
      %v2183 = vunpack.c.h.b16 %v365
      %v2184 = vunpack.c.l.b16 %v366
      %v2185 = vunpack.c.h.b16 %v366
      %v2186 = vunpack.c.l.b16 %v367
      %v2187 = vunpack.c.h.b16 %v367
      %v2188 = vunpack.c.l.b16 %v368
      %v2189 = vunpack.c.h.b16 %v368
      %v2190 = vunpack.c.l.b16 %v369
      %v2191 = vunpack.c.h.b16 %v369
      %v2192 = vunpack.c.l.b16 %v370
      %v2193 = vunpack.c.h.b16 %v370
      %v2194 = vunpack.c.l.b16 %v371
      %v2195 = vunpack.c.h.b16 %v371
      %v2196 = vunpack.c.l.b16 %v372
      %v2197 = vunpack.c.h.b16 %v372
      %v2198 = vunpack.c.l.b16 %v373
      %v2199 = vunpack.c.h.b16 %v373
      %v2200 = vunpack.c.l.b16 %v374
      %v2201 = vunpack.c.h.b16 %v374
      %v2202 = vunpack.c.l.b16 %v375
      %v2203 = vunpack.c.h.b16 %v375
      %v2204 = vunpack.c.l.b16 %v376
      %v2205 = vunpack.c.h.b16 %v376
      %v2206 = vunpack.c.l.b16 %v377
      %v2207 = vunpack.c.h.b16 %v377
      %v2208 = vunpack.c.l.b16 %v378
      %v2209 = vunpack.c.h.b16 %v378
      %v2210 = vunpack.c.l.b16 %v379
      %v2211 = vunpack.c.h.b16 %v379
      %v2212 = vunpack.c.l.b16 %v380
      %v2213 = vunpack.c.h.b16 %v380
      %v2214 = vunpack.c.l.b16 %v381
      %v2215 = vunpack.c.h.b16 %v381
      %v2216 = vunpack.c.l.b16 %v382
      %v2217 = vunpack.c.h.b16 %v382
      %v2218 = vunpack.c.l.b16 %v383
      %v2219 = vunpack.c.h.b16 %v383
      %v2220 = vunpack.c.l.b16 %v384
      %v2221 = vunpack.c.h.b16 %v384
      %v2222 = vunpack.c.l.b16 %v385
      %v2223 = vunpack.c.h.b16 %v385
      %v2224 = vunpack.c.l.b16 %v386
      %v2225 = vunpack.c.h.b16 %v386
      %v2226 = vunpack.c.l.b16 %v387
      %v2227 = vunpack.c.h.b16 %v387
      %v2228 = vunpack.c.l.b16 %v388
      %v2229 = vunpack.c.h.b16 %v388
      %v2230 = vunpack.c.l.b16 %v389
      %v2231 = vunpack.c.h.b16 %v389
      %v2232 = vunpack.c.l.b16 %v390
      %v2233 = vunpack.c.h.b16 %v390
      %v2234 = vunpack.c.l.b16 %v391
      %v2235 = vunpack.c.h.b16 %v391
      %v2236 = vunpack.c.l.b16 %v392
      %v2237 = vunpack.c.h.b16 %v392
      %v2238 = vunpack.c.l.b16 %v393
      %v2239 = vunpack.c.h.b16 %v393
      %v2240 = vunpack.c.l.b16 %v394
      %v2241 = vunpack.c.h.b16 %v394
      %v2242 = vunpack.c.l.b16 %v395
      %v2243 = vunpack.c.h.b16 %v395
      %v2244 = vunpack.c.l.b16 %v396
      %v2245 = vunpack.c.h.b16 %v396
      %v2246 = vunpack.c.l.b16 %v397
      %v2247 = vunpack.c.h.b16 %v397
      %v2248 = vunpack.c.l.b16 %v398
      %v2249 = vunpack.c.h.b16 %v398
      %v2250 = vunpack.c.l.b16 %v399
      %v2251 = vunpack.c.h.b16 %v399
      %v2252 = vunpack.c.l.b16 %v400
      %v2253 = vunpack.c.h.b16 %v400
      %v2254 = vunpack.c.l.b16 %v401
      %v2255 = vunpack.c.h.b16 %v401
      %v2256 = vunpack.c.l.b16 %v402
      %v2257 = vunpack.c.h.b16 %v402
      %v2258 = vunpack.c.l.b16 %v403
      %v2259 = vunpack.c.h.b16 %v403
      %v2260 = vunpack.c.l.b16 %v404
      %v2261 = vunpack.c.h.b16 %v404
      %v2262 = vunpack.c.l.b16 %v405
      %v2263 = vunpack.c.h.b16 %v405
      %v2264 = vunpack.c.l.b16 %v406
      %v2265 = vunpack.c.h.b16 %v406
      %v2266 = vunpack.c.l.b16 %v407
      %v2267 = vunpack.c.h.b16 %v407
      %v2268 = vunpack.c.l.b16 %v408
      %v2269 = vunpack.c.h.b16 %v408
      %v2270 = vunpack.c.l.b16 %v409
      %v2271 = vunpack.c.h.b16 %v409
      %v2272 = vunpack.c.l.b16 %v410
      %v2273 = vunpack.c.h.b16 %v410
      %v2274 = vunpack.c.l.b16 %v411
      %v2275 = vunpack.c.h.b16 %v411
      %v2276 = vunpack.c.l.b16 %v412
      %v2277 = vunpack.c.h.b16 %v412
      %v2278 = vunpack.c.l.b16 %v413
      %v2279 = vunpack.c.h.b16 %v413
      %v2280 = vunpack.c.l.b16 %v414
      %v2281 = vunpack.c.h.b16 %v414
      %v2282 = vunpack.c.l.b16 %v415
      %v2283 = vunpack.c.h.b16 %v415
      %v2284 = vunpack.c.l.b16 %v416
      %v2285 = vunpack.c.h.b16 %v416
      %v2286 = vunpack.c.l.b16 %v417
      %v2287 = vunpack.c.h.b16 %v417
      %v2288 = vunpack.c.l.b16 %v418
      %v2289 = vunpack.c.h.b16 %v418
      %v2290 = vunpack.c.l.b16 %v419
      %v2291 = vunpack.c.h.b16 %v419
      %v2292 = vunpack.c.l.b16 %v420
      %v2293 = vunpack.c.h.b16 %v420
      %v2294 = vunpack.c.l.b16 %v421
      %v2295 = vunpack.c.h.b16 %v421
      %v2296 = vunpack.c.l.b16 %v422
      %v2297 = vunpack.c.h.b16 %v422
      %v2298 = vunpack.c.l.b16 %v423
      %v2299 = vunpack.c.h.b16 %v423
      %v2300 = vunpack.c.l.b16 %v424
      %v2301 = vunpack.c.h.b16 %v424
      %v2302 = vunpack.c.l.b16 %v425
      %v2303 = vunpack.c.h.b16 %v425
      %v2304 = vunpack.c.l.b16 %v426
      %v2305 = vunpack.c.h.b16 %v426
      %v2306 = vunpack.c.l.b16 %v427
      %v2307 = vunpack.c.h.b16 %v427
      %v2308 = vunpack.c.l.b16 %v428
      %v2309 = vunpack.c.h.b16 %v428
      %v2310 = vunpack.c.l.b16 %v429
      %v2311 = vunpack.c.h.b16 %v429
      %v2312 = vunpack.c.l.b16 %v430
      %v2313 = vunpack.c.h.b16 %v430
      %v2314 = vunpack.c.l.b16 %v431
      %v2315 = vunpack.c.h.b16 %v431
      %v2316 = vunpack.c.l.b16 %v432
      %v2317 = vunpack.c.h.b16 %v432
      %v2318 = vunpack.c.l.b16 %v433
      %v2319 = vunpack.c.h.b16 %v433
      %v2320 = vunpack.c.l.b16 %v434
      %v2321 = vunpack.c.h.b16 %v434
      %v2322 = vunpack.c.l.b16 %v435
      %v2323 = vunpack.c.h.b16 %v435
      %v2324 = vunpack.c.l.b16 %v436
      %v2325 = vunpack.c.h.b16 %v436
      %v2326 = vunpack.c.l.b16 %v437
      %v2327 = vunpack.c.h.b16 %v437
      %v2328 = vunpack.c.l.b16 %v438
      %v2329 = vunpack.c.h.b16 %v438
      %v2330 = vunpack.c.l.b16 %v439
      %v2331 = vunpack.c.h.b16 %v439
      %v2332 = vunpack.c.l.b16 %v440
      %v2333 = vunpack.c.h.b16 %v440
      %v2334 = vunpack.c.l.b16 %v441
      %v2335 = vunpack.c.h.b16 %v441
      %v2336 = vunpack.c.l.b16 %v442
      %v2337 = vunpack.c.h.b16 %v442
      %v2338 = vunpack.c.l.b16 %v443
      %v2339 = vunpack.c.h.b16 %v443
      %v2340 = vunpack.c.l.b16 %v444
      %v2341 = vunpack.c.h.b16 %v444
      %v2342 = vunpack.c.l.b16 %v445
      %v2343 = vunpack.c.h.b16 %v445
      %v2344 = vunpack.c.l.b16 %v446
      %v2345 = vunpack.c.h.b16 %v446
      %v2346 = vunpack.c.l.b16 %v447
      %v2347 = vunpack.c.h.b16 %v447
      %v2348 = vunpack.c.l.b16 %v448
      %v2349 = vunpack.c.h.b16 %v448
      %v2350 = vunpack.c.l.b16 %v449
      %v2351 = vunpack.c.h.b16 %v449
      %v2352 = vunpack.c.l.b16 %v450
      %v2353 = vunpack.c.h.b16 %v450
      %v2354 = vunpack.c.l.b16 %v451
      %v2355 = vunpack.c.h.b16 %v451
      %v2356 = vunpack.c.l.b16 %v452
      %v2357 = vunpack.c.h.b16 %v452
      %v2358 = vunpack.c.l.b16 %v453
      %v2359 = vunpack.c.h.b16 %v453
      %v2360 = vunpack.c.l.b16 %v454
      %v2361 = vunpack.c.h.b16 %v454
      %v2362 = vunpack.c.l.b16 %v455
      %v2363 = vunpack.c.h.b16 %v455
      %v2364 = vunpack.c.l.b16 %v456
      %v2365 = vunpack.c.h.b16 %v456
      %v2366 = vunpack.c.l.b16 %v457
      %v2367 = vunpack.c.h.b16 %v457
      %v2368 = vunpack.c.l.b16 %v458
      %v2369 = vunpack.c.h.b16 %v458
      %v2370 = vunpack.c.l.b16 %v459
      %v2371 = vunpack.c.h.b16 %v459
      %v2372 = vunpack.c.l.b16 %v460
      %v2373 = vunpack.c.h.b16 %v460
      %v2374 = vunpack.c.l.b16 %v461
      %v2375 = vunpack.c.h.b16 %v461
      %v2376 = vunpack.c.l.b16 %v462
      %v2377 = vunpack.c.h.b16 %v462
      %v2378 = vunpack.c.l.b16 %v463
      %v2379 = vunpack.c.h.b16 %v463
      %v2380 = vunpack.c.l.b16 %v464
      %v2381 = vunpack.c.h.b16 %v464
      %v2382 = vunpack.c.l.b16 %v465
      %v2383 = vunpack.c.h.b16 %v465
      %v2384 = vunpack.c.l.b16 %v466
      %v2385 = vunpack.c.h.b16 %v466
      %v2386 = vunpack.c.l.b16 %v467
      %v2387 = vunpack.c.h.b16 %v467
      %v2388 = vunpack.c.l.b16 %v468
      %v2389 = vunpack.c.h.b16 %v468
      %v2390 = vunpack.c.l.b16 %v469
      %v2391 = vunpack.c.h.b16 %v469
      %v2392 = vunpack.c.l.b16 %v470
      %v2393 = vunpack.c.h.b16 %v470
      %v2394 = vunpack.c.l.b16 %v471
      %v2395 = vunpack.c.h.b16 %v471
      %v2396 = vunpack.c.l.b16 %v472
      %v2397 = vunpack.c.h.b16 %v472
      %v2398 = vunpack.c.l.b16 %v473
      %v2399 = vunpack.c.h.b16 %v473
      %v2400 = vunpack.c.l.b16 %v474
      %v2401 = vunpack.c.h.b16 %v474
      %v2402 = vunpack.c.l.b16 %v475
      %v2403 = vunpack.c.h.b16 %v475
      %v2404 = vunpack.c.l.b16 %v476
      %v2405 = vunpack.c.h.b16 %v476
      %v2406 = vunpack.c.l.b16 %v477
      %v2407 = vunpack.c.h.b16 %v477
      %v2408 = vunpack.c.l.b16 %v478
      %v2409 = vunpack.c.h.b16 %v478
      %v2410 = vunpack.c.l.b16 %v479
      %v2411 = vunpack.c.h.b16 %v479
      %v2412 = vunpack.c.l.b16 %v480
      %v2413 = vunpack.c.h.b16 %v480
      %v2414 = vunpack.c.l.b16 %v481
      %v2415 = vunpack.c.h.b16 %v481
      %v2416 = vunpack.c.l.b16 %v482
      %v2417 = vunpack.c.h.b16 %v482
      %v2418 = vunpack.c.l.b16 %v483
      %v2419 = vunpack.c.h.b16 %v483
      %v2420 = vunpack.c.l.b16 %v484
      %v2421 = vunpack.c.h.b16 %v484
      %v2422 = vunpack.c.l.b16 %v485
      %v2423 = vunpack.c.h.b16 %v485
      %v2424 = vunpack.c.l.b16 %v486
      %v2425 = vunpack.c.h.b16 %v486
      %v2426 = vunpack.c.l.b16 %v487
      %v2427 = vunpack.c.h.b16 %v487
      %v2428 = vunpack.c.l.b16 %v488
      %v2429 = vunpack.c.h.b16 %v488
      %v2430 = vunpack.c.l.b16 %v489
      %v2431 = vunpack.c.h.b16 %v489
      %v2432 = vunpack.c.l.b16 %v490
      %v2433 = vunpack.c.h.b16 %v490
      %v2434 = vunpack.c.l.b16 %v491
      %v2435 = vunpack.c.h.b16 %v491
      %v2436 = vunpack.c.l.b16 %v492
      %v2437 = vunpack.c.h.b16 %v492
      %v2438 = vunpack.c.l.b16 %v493
      %v2439 = vunpack.c.h.b16 %v493
      %v2440 = vunpack.c.l.b16 %v494
      %v2441 = vunpack.c.h.b16 %v494
      %v2442 = vunpack.c.l.b16 %v495
      %v2443 = vunpack.c.h.b16 %v495
      %v2444 = vunpack.c.l.b16 %v496
      %v2445 = vunpack.c.h.b16 %v496
      %v2446 = vunpack.c.l.b16 %v497
      %v2447 = vunpack.c.h.b16 %v497
      %v2448 = vunpack.c.l.b16 %v498
      %v2449 = vunpack.c.h.b16 %v498
      %v2450 = vunpack.c.l.b16 %v499
      %v2451 = vunpack.c.h.b16 %v499
      %v2452 = vunpack.c.l.b16 %v500
      %v2453 = vunpack.c.h.b16 %v500
      %v2454 = vunpack.c.l.b16 %v501
      %v2455 = vunpack.c.h.b16 %v501
      %v2456 = vunpack.c.l.b16 %v502
      %v2457 = vunpack.c.h.b16 %v502
      %v2458 = vunpack.c.l.b16 %v503
      %v2459 = vunpack.c.h.b16 %v503
      %v2460 = vunpack.c.l.b16 %v504
      %v2461 = vunpack.c.h.b16 %v504
      %v2462 = vunpack.c.l.b16 %v505
      %v2463 = vunpack.c.h.b16 %v505
      %v2464 = vunpack.c.l.b16 %v506
      %v2465 = vunpack.c.h.b16 %v506
      %v2466 = vunpack.c.l.b16 %v507
      %v2467 = vunpack.c.h.b16 %v507
      %v2468 = vunpack.c.l.b16 %v508
      %v2469 = vunpack.c.h.b16 %v508
      %v2470 = vunpack.c.l.b16 %v509
      %v2471 = vunpack.c.h.b16 %v509
      %v2472 = vunpack.c.l.b16 %v510
      %v2473 = vunpack.c.h.b16 %v510
      %v2474 = vunpack.c.l.b16 %v511
      %v2475 = vunpack.c.h.b16 %v511
      %v2476 = vunpack.c.l.b16 %v512
      %v2477 = vunpack.c.h.b16 %v512
      %v2478 = vunpack.c.l.b16 %v513
      %v2479 = vunpack.c.h.b16 %v513
      %v2480 = vunpack.c.l.b16 %v514
      %v2481 = vunpack.c.h.b16 %v514
      %v2482 = vunpack.c.l.b16 %v515
      %v2483 = vunpack.c.h.b16 %v515
      %v2484 = vunpack.c.l.b16 %v516
      %v2485 = vunpack.c.h.b16 %v516
      %v2486 = vunpack.c.l.b16 %v517
      %v2487 = vunpack.c.h.b16 %v517
      %v2488 = vunpack.c.l.b16 %v518
      %v2489 = vunpack.c.h.b16 %v518
      %v2490 = vunpack.c.l.b16 %v519
      %v2491 = vunpack.c.h.b16 %v519
      %v2492 = vunpack.c.l.b16 %v520
      %v2493 = vunpack.c.h.b16 %v520
      %v2494 = vunpack.c.l.b16 %v521
      %v2495 = vunpack.c.h.b16 %v521
      %v2496 = vunpack.c.l.b16 %v522
      %v2497 = vunpack.c.h.b16 %v522
      %v2498 = vunpack.c.l.b16 %v523
      %v2499 = vunpack.c.h.b16 %v523
      %v2500 = vunpack.c.l.b16 %v524
      %v2501 = vunpack.c.h.b16 %v524
      %v2502 = vunpack.c.l.b16 %v525
      %v2503 = vunpack.c.h.b16 %v525
      %v2504 = vunpack.c.l.b16 %v526
      %v2505 = vunpack.c.h.b16 %v526
      %v2506 = vunpack.c.l.b16 %v527
      %v2507 = vunpack.c.h.b16 %v527
      %v2508 = vunpack.c.l.b16 %v528
      %v2509 = vunpack.c.h.b16 %v528
      %v2510 = vunpack.c.l.b16 %v529
      %v2511 = vunpack.c.h.b16 %v529
      %v2512 = vunpack.c.l.b16 %v530
      %v2513 = vunpack.c.h.b16 %v530
      %v2514 = vunpack.c.l.b16 %v531
      %v2515 = vunpack.c.h.b16 %v531
      %v2516 = vunpack.c.l.b16 %v532
      %v2517 = vunpack.c.h.b16 %v532
      %v2518 = vunpack.c.l.b16 %v533
      %v2519 = vunpack.c.h.b16 %v533
      %v2520 = vunpack.c.l.b16 %v534
      %v2521 = vunpack.c.h.b16 %v534
      %v2522 = vunpack.c.l.b16 %v535
      %v2523 = vunpack.c.h.b16 %v535
      %v2524 = vunpack.c.l.b16 %v536
      %v2525 = vunpack.c.h.b16 %v536
      %v2526 = vunpack.c.l.b16 %v537
      %v2527 = vunpack.c.h.b16 %v537
      %v2528 = vunpack.c.l.b16 %v538
      %v2529 = vunpack.c.h.b16 %v538
      %v2530 = vunpack.c.l.b16 %v539
      %v2531 = vunpack.c.h.b16 %v539
      %v2532 = vunpack.c.l.b16 %v540
      %v2533 = vunpack.c.h.b16 %v540
      %v2534 = vunpack.c.l.b16 %v541
      %v2535 = vunpack.c.h.b16 %v541
      %v2536 = vunpack.c.l.b16 %v542
      %v2537 = vunpack.c.h.b16 %v542
      %v2538 = vunpack.c.l.b16 %v543
      %v2539 = vunpack.c.h.b16 %v543
      %v2540 = vunpack.c.l.b16 %v544
      %v2541 = vunpack.c.h.b16 %v544
      %v2542 = vunpack.c.l.b16 %v545
      %v2543 = vunpack.c.h.b16 %v545
      %v2544 = vunpack.c.l.b16 %v546
      %v2545 = vunpack.c.h.b16 %v546
      %v2546 = vunpack.c.l.b16 %v547
      %v2547 = vunpack.c.h.b16 %v547
      %v2548 = vunpack.c.l.b16 %v548
      %v2549 = vunpack.c.h.b16 %v548
      %v2550 = vunpack.c.l.b16 %v549
      %v2551 = vunpack.c.h.b16 %v549
      %v2552 = vunpack.c.l.b16 %v550
      %v2553 = vunpack.c.h.b16 %v550
      %v2554 = vunpack.c.l.b16 %v551
      %v2555 = vunpack.c.h.b16 %v551
      %v2556 = vunpack.c.l.b16 %v552
      %v2557 = vunpack.c.h.b16 %v552
      %v2558 = vunpack.c.l.b16 %v553
      %v2559 = vunpack.c.h.b16 %v553
      %v2560 = vunpack.c.l.b16 %v554
      %v2561 = vunpack.c.h.b16 %v554
      %v2562 = vunpack.c.l.b16 %v555
      %v2563 = vunpack.c.h.b16 %v555
      %v2564 = vunpack.c.l.b16 %v556
      %v2565 = vunpack.c.h.b16 %v556
      %v2566 = vunpack.c.l.b16 %v557
      %v2567 = vunpack.c.h.b16 %v557
      %v2568 = vunpack.c.l.b16 %v558
      %v2569 = vunpack.c.h.b16 %v558
      %v2570 = vunpack.c.l.b16 %v559
      %v2571 = vunpack.c.h.b16 %v559
      %v2572 = vunpack.c.l.b16 %v560
      %v2573 = vunpack.c.h.b16 %v560
      %v2574 = vunpack.c.l.b16 %v561
      %v2575 = vunpack.c.h.b16 %v561
      %v2576 = vunpack.c.l.b16 %v562
      %v2577 = vunpack.c.h.b16 %v562
      %v2578 = vunpack.c.l.b16 %v563
      %v2579 = vunpack.c.h.b16 %v563
      %v2580 = vunpack.c.l.b16 %v564
      %v2581 = vunpack.c.h.b16 %v564
      %v2582 = vunpack.c.l.b16 %v565
      %v2583 = vunpack.c.h.b16 %v565
      %v2584 = vunpack.c.l.b16 %v566
      %v2585 = vunpack.c.h.b16 %v566
      %v2586 = vunpack.c.l.b16 %v567
      %v2587 = vunpack.c.h.b16 %v567
      %v2588 = vunpack.c.l.b16 %v568
      %v2589 = vunpack.c.h.b16 %v568
      %v2590 = vunpack.c.l.b16 %v569
      %v2591 = vunpack.c.h.b16 %v569
      %v2592 = vunpack.c.l.b16 %v570
      %v2593 = vunpack.c.h.b16 %v570
      %v2594 = vunpack.c.l.b16 %v571
      %v2595 = vunpack.c.h.b16 %v571
      %v2596 = vunpack.c.l.b16 %v572
      %v2597 = vunpack.c.h.b16 %v572
      %v2598 = vunpack.c.l.b16 %v573
      %v2599 = vunpack.c.h.b16 %v573
      %v2600 = vunpack.c.l.b16 %v574
      %v2601 = vunpack.c.h.b16 %v574
      %v2602 = vunpack.c.l.b16 %v575
      %v2603 = vunpack.c.h.b16 %v575
      %v2604 = vunpack.c.l.b16 %v576
      %v2605 = vunpack.c.h.b16 %v576
      %v2606 = vunpack.c.l.b16 %v577
      %v2607 = vunpack.c.h.b16 %v577
      %v2608 = vunpack.c.l.b16 %v578
      %v2609 = vunpack.c.h.b16 %v578
      %v2610 = vunpack.c.l.b16 %v579
      %v2611 = vunpack.c.h.b16 %v579
      %v2612 = vunpack.c.l.b16 %v580
      %v2613 = vunpack.c.h.b16 %v580
      %v2614 = vunpack.c.l.b16 %v581
      %v2615 = vunpack.c.h.b16 %v581
      %v2616 = vunpack.c.l.b16 %v582
      %v2617 = vunpack.c.h.b16 %v582
      %v2618 = vunpack.c.l.b16 %v583
      %v2619 = vunpack.c.h.b16 %v583
      %v2620 = vunpack.c.l.b16 %v584
      %v2621 = vunpack.c.h.b16 %v584
      %v2622 = vunpack.c.l.b16 %v585
      %v2623 = vunpack.c.h.b16 %v585
      %v2624 = vunpack.c.l.b16 %v586
      %v2625 = vunpack.c.h.b16 %v586
      %v2626 = vunpack.c.l.b16 %v587
      %v2627 = vunpack.c.h.b16 %v587
      %v2628 = vunpack.c.l.b16 %v588
      %v2629 = vunpack.c.h.b16 %v588
      %v2630 = vunpack.c.l.b16 %v589
      %v2631 = vunpack.c.h.b16 %v589
      %v2632 = vunpack.c.l.b16 %v590
      %v2633 = vunpack.c.h.b16 %v590
      %v2634 = vunpack.c.l.b16 %v591
      %v2635 = vunpack.c.h.b16 %v591
      %v2636 = vunpack.c.l.b16 %v592
      %v2637 = vunpack.c.h.b16 %v592
      %v2638 = vunpack.c.l.b16 %v593
      %v2639 = vunpack.c.h.b16 %v593
      %v2640 = vunpack.c.l.b16 %v594
      %v2641 = vunpack.c.h.b16 %v594
      %v2642 = vunpack.c.l.b16 %v595
      %v2643 = vunpack.c.h.b16 %v595
      %v2644 = vunpack.c.l.b16 %v596
      %v2645 = vunpack.c.h.b16 %v596
      %v2646 = vunpack.c.l.b16 %v597
      %v2647 = vunpack.c.h.b16 %v597
      %v2648 = vunpack.c.l.b16 %v598
      %v2649 = vunpack.c.h.b16 %v598
      %v2650 = vunpack.c.l.b16 %v599
      %v2651 = vunpack.c.h.b16 %v599
      %v2652 = vunpack.c.l.b16 %v600
      %v2653 = vunpack.c.h.b16 %v600
      %v2654 = vunpack.c.l.b16 %v601
      %v2655 = vunpack.c.h.b16 %v601
      %v2656 = vunpack.c.l.b16 %v602
      %v2657 = vunpack.c.h.b16 %v602
      %v2658 = vunpack.c.l.b16 %v603
      %v2659 = vunpack.c.h.b16 %v603
      %v2660 = vunpack.c.l.b16 %v604
      %v2661 = vunpack.c.h.b16 %v604
      %v2662 = vunpack.c.l.b16 %v605
      %v2663 = vunpack.c.h.b16 %v605
      %v2664 = vunpack.c.l.b16 %v606
      %v2665 = vunpack.c.h.b16 %v606
      %v2666 = vunpack.c.l.b16 %v607
      %v2667 = vunpack.c.h.b16 %v607
      %v2668 = vunpack.c.l.b16 %v608
      %v2669 = vunpack.c.h.b16 %v608
      %v2670 = vunpack.c.l.b16 %v609
      %v2671 = vunpack.c.h.b16 %v609
      %v2672 = vunpack.c.l.b16 %v610
      %v2673 = vunpack.c.h.b16 %v610
      %v2674 = vunpack.c.l.b16 %v611
      %v2675 = vunpack.c.h.b16 %v611
      %v2676 = vunpack.c.l.b16 %v612
      %v2677 = vunpack.c.h.b16 %v612
      %v2678 = vunpack.c.l.b16 %v613
      %v2679 = vunpack.c.h.b16 %v613
      %v2680 = vunpack.c.l.b16 %v614
      %v2681 = vunpack.c.h.b16 %v614
      %v2682 = vunpack.c.l.b16 %v615
      %v2683 = vunpack.c.h.b16 %v615
      %v2684 = vunpack.c.l.b16 %v616
      %v2685 = vunpack.c.h.b16 %v616
      %v2686 = vunpack.c.l.b16 %v617
      %v2687 = vunpack.c.h.b16 %v617
      %v2688 = vunpack.c.l.b16 %v618
      %v2689 = vunpack.c.h.b16 %v618
      %v2690 = vunpack.c.l.b16 %v619
      %v2691 = vunpack.c.h.b16 %v619
      %v2692 = vunpack.c.l.b16 %v620
      %v2693 = vunpack.c.h.b16 %v620
      %v2694 = vunpack.c.l.b16 %v621
      %v2695 = vunpack.c.h.b16 %v621
      %v2696 = vunpack.c.l.b16 %v622
      %v2697 = vunpack.c.h.b16 %v622
      %v2698 = vunpack.c.l.b16 %v623
      %v2699 = vunpack.c.h.b16 %v623
      %v2700 = vunpack.c.l.b16 %v624
      %v2701 = vunpack.c.h.b16 %v624
      %v2702 = vunpack.c.l.b16 %v625
      %v2703 = vunpack.c.h.b16 %v625
      %v2704 = vunpack.c.l.b16 %v626
      %v2705 = vunpack.c.h.b16 %v626
      %v2706 = vunpack.c.l.b16 %v627
      %v2707 = vunpack.c.h.b16 %v627
      %v2708 = vunpack.c.l.b16 %v628
      %v2709 = vunpack.c.h.b16 %v628
      %v2710 = vunpack.c.l.b16 %v629
      %v2711 = vunpack.c.h.b16 %v629
      %v2712 = vunpack.c.l.b16 %v630
      %v2713 = vunpack.c.h.b16 %v630
      %v2714 = vunpack.c.l.b16 %v631
      %v2715 = vunpack.c.h.b16 %v631
      %v2716 = vunpack.c.l.b16 %v632
      %v2717 = vunpack.c.h.b16 %v632
      %v2718 = vunpack.c.l.b16 %v633
      %v2719 = vunpack.c.h.b16 %v633
      %v2720 = vunpack.c.l.b16 %v634
      %v2721 = vunpack.c.h.b16 %v634
      %v2722 = vunpack.c.l.b16 %v635
      %v2723 = vunpack.c.h.b16 %v635
      %v2724 = vunpack.c.l.b16 %v636
      %v2725 = vunpack.c.h.b16 %v636
      %v2726 = vunpack.c.l.b16 %v637
      %v2727 = vunpack.c.h.b16 %v637
      %v2728 = vunpack.c.l.b16 %v638
      %v2729 = vunpack.c.h.b16 %v638
      %v2730 = vunpack.c.l.b16 %v639
      %v2731 = vunpack.c.h.b16 %v639
      %v2732 = vunpack.c.l.b16 %v640
      %v2733 = vunpack.c.h.b16 %v640
      %v2734 = vunpack.c.l.b16 %v641
      %v2735 = vunpack.c.h.b16 %v641
      %v2736 = vunpack.c.l.b16 %v642
      %v2737 = vunpack.c.h.b16 %v642
      %v2738 = vunpack.c.l.b16 %v643
      %v2739 = vunpack.c.h.b16 %v643
      %v2740 = vunpack.c.l.b16 %v644
      %v2741 = vunpack.c.h.b16 %v644
      %v2742 = vunpack.c.l.b16 %v645
      %v2743 = vunpack.c.h.b16 %v645
      %v2744 = vunpack.c.l.b16 %v646
      %v2745 = vunpack.c.h.b16 %v646
      %v2746 = vunpack.c.l.b16 %v647
      %v2747 = vunpack.c.h.b16 %v647
      %v2748 = vunpack.c.l.b16 %v648
      %v2749 = vunpack.c.h.b16 %v648
      %v2750 = vunpack.c.l.b16 %v649
      %v2751 = vunpack.c.h.b16 %v649
      %v2752 = vunpack.c.l.b16 %v650
      %v2753 = vunpack.c.h.b16 %v650
      %v2754 = vunpack.c.l.b16 %v651
      %v2755 = vunpack.c.h.b16 %v651
      %v2756 = vunpack.c.l.b16 %v652
      %v2757 = vunpack.c.h.b16 %v652
      %v2758 = vunpack.c.l.b16 %v653
      %v2759 = vunpack.c.h.b16 %v653
      %v2760 = vunpack.c.l.b16 %v654
      %v2761 = vunpack.c.h.b16 %v654
      %v2762 = vunpack.c.l.b16 %v655
      %v2763 = vunpack.c.h.b16 %v655
      %v2764 = vunpack.c.l.b16 %v656
      %v2765 = vunpack.c.h.b16 %v656
      %v2766 = vunpack.c.l.b16 %v657
      %v2767 = vunpack.c.h.b16 %v657
      %v2768 = vunpack.c.l.b16 %v658
      %v2769 = vunpack.c.h.b16 %v658
      %v2770 = vunpack.c.l.b16 %v659
      %v2771 = vunpack.c.h.b16 %v659
      %v2772 = vunpack.c.l.b16 %v660
      %v2773 = vunpack.c.h.b16 %v660
      %v2774 = vunpack.c.l.b16 %v661
      %v2775 = vunpack.c.h.b16 %v661
      %v2776 = vunpack.c.l.b16 %v662
      %v2777 = vunpack.c.h.b16 %v662
      %v2778 = vunpack.c.l.b16 %v663
      %v2779 = vunpack.c.h.b16 %v663
      %v2780 = vunpack.c.l.b16 %v664
      %v2781 = vunpack.c.h.b16 %v664
      %v2782 = vunpack.c.l.b16 %v665
      %v2783 = vunpack.c.h.b16 %v665
      %v2784 = vunpack.c.l.b16 %v666
      %v2785 = vunpack.c.h.b16 %v666
      %v2786 = vunpack.c.l.b16 %v667
      %v2787 = vunpack.c.h.b16 %v667
      %v2788 = vunpack.c.l.b16 %v668
      %v2789 = vunpack.c.h.b16 %v668
      %v2790 = vunpack.c.l.b16 %v669
      %v2791 = vunpack.c.h.b16 %v669
      %v2792 = vunpack.c.l.b16 %v670
      %v2793 = vunpack.c.h.b16 %v670
      %v2794 = vunpack.c.l.b16 %v671
      %v2795 = vunpack.c.h.b16 %v671
      %v2796 = vunpack.c.l.b16 %v672
      %v2797 = vunpack.c.h.b16 %v672
      %v2798 = vunpack.c.l.b16 %v673
      %v2799 = vunpack.c.h.b16 %v673
      %v2800 = vunpack.c.l.b16 %v674
      %v2801 = vunpack.c.h.b16 %v674
      %v2802 = vunpack.c.l.b16 %v675
      %v2803 = vunpack.c.h.b16 %v675
      %v2804 = vunpack.c.l.b16 %v676
      %v2805 = vunpack.c.h.b16 %v676
      %v2806 = vunpack.c.l.b16 %v677
      %v2807 = vunpack.c.h.b16 %v677
      %v2808 = vunpack.c.l.b16 %v678
      %v2809 = vunpack.c.h.b16 %v678
      %v2810 = vunpack.c.l.b16 %v679
      %v2811 = vunpack.c.h.b16 %v679
      %v2812 = vunpack.c.l.b16 %v680
      %v2813 = vunpack.c.h.b16 %v680
      %v2814 = vunpack.c.l.b16 %v681
      %v2815 = vunpack.c.h.b16 %v681
      %v2816 = vunpack.c.l.b16 %v682
      %v2817 = vunpack.c.h.b16 %v682
      %v2818 = vunpack.c.l.b16 %v683
      %v2819 = vunpack.c.h.b16 %v683
      %v2820 = vunpack.c.l.b16 %v684
      %v2821 = vunpack.c.h.b16 %v684
      %v2822 = vunpack.c.l.b16 %v685
      %v2823 = vunpack.c.h.b16 %v685
      %v2824 = vunpack.c.l.b16 %v686
      %v2825 = vunpack.c.h.b16 %v686
      %v2826 = vunpack.c.l.b16 %v687
      %v2827 = vunpack.c.h.b16 %v687
      %v2828 = vunpack.c.l.b16 %v688
      %v2829 = vunpack.c.h.b16 %v688
      %v2830 = vunpack.c.l.b16 %v689
      %v2831 = vunpack.c.h.b16 %v689
      %v2832 = vunpack.c.l.b16 %v690
      %v2833 = vunpack.c.h.b16 %v690
      %v2834 = vunpack.c.l.b16 %v691
      %v2835 = vunpack.c.h.b16 %v691
      %v2836 = vunpack.c.l.b16 %v692
      %v2837 = vunpack.c.h.b16 %v692
      %v2838 = vunpack.c.l.b16 %v693
      %v2839 = vunpack.c.h.b16 %v693
      %v2840 = vunpack.c.l.b16 %v694
      %v2841 = vunpack.c.h.b16 %v694
      %v2842 = vunpack.c.l.b16 %v695
      %v2843 = vunpack.c.h.b16 %v695
      %v2844 = vunpack.c.l.b16 %v696
      %v2845 = vunpack.c.h.b16 %v696
      %v2846 = vunpack.c.l.b16 %v697
      %v2847 = vunpack.c.h.b16 %v697
      %v2848 = vunpack.c.l.b16 %v698
      %v2849 = vunpack.c.h.b16 %v698
      %v2850 = vunpack.c.l.b16 %v699
      %v2851 = vunpack.c.h.b16 %v699
      %v2852 = vunpack.c.l.b16 %v700
      %v2853 = vunpack.c.h.b16 %v700
      %v2854 = vunpack.c.l.b16 %v701
      %v2855 = vunpack.c.h.b16 %v701
      %v2856 = vunpack.c.l.b16 %v702
      %v2857 = vunpack.c.h.b16 %v702
      %v2858 = vunpack.c.l.b16 %v703
      %v2859 = vunpack.c.h.b16 %v703
      %v2860 = vunpack.c.l.b16 %v704
      %v2861 = vunpack.c.h.b16 %v704
      %v2862 = vunpack.c.l.b16 %v705
      %v2863 = vunpack.c.h.b16 %v705
      %v2864 = vunpack.c.l.b16 %v706
      %v2865 = vunpack.c.h.b16 %v706
      %v2866 = vunpack.c.l.b16 %v707
      %v2867 = vunpack.c.h.b16 %v707
      %v2868 = vunpack.c.l.b16 %v708
      %v2869 = vunpack.c.h.b16 %v708
      %v2870 = vunpack.c.l.b16 %v709
      %v2871 = vunpack.c.h.b16 %v709
      %v2872 = vunpack.c.l.b16 %v710
      %v2873 = vunpack.c.h.b16 %v710
      %v2874 = vunpack.c.l.b16 %v711
      %v2875 = vunpack.c.h.b16 %v711
      %v2876 = vunpack.c.l.b16 %v712
      %v2877 = vunpack.c.h.b16 %v712
      %v2878 = vunpack.c.l.b16 %v713
      %v2879 = vunpack.c.h.b16 %v713
      %v2880 = vunpack.c.l.b16 %v714
      %v2881 = vunpack.c.h.b16 %v714
      %v2882 = vunpack.c.l.b16 %v715
      %v2883 = vunpack.c.h.b16 %v715
      %v2884 = vunpack.c.l.b16 %v716
      %v2885 = vunpack.c.h.b16 %v716
      %v2886 = vunpack.c.l.b16 %v717
      %v2887 = vunpack.c.h.b16 %v717
      %v2888 = vunpack.c.l.b16 %v718
      %v2889 = vunpack.c.h.b16 %v718
      %v2890 = vunpack.c.l.b16 %v719
      %v2891 = vunpack.c.h.b16 %v719
      %v2892 = vunpack.c.l.b16 %v720
      %v2893 = vunpack.c.h.b16 %v720
      %v2894 = vunpack.c.l.b16 %v721
      %v2895 = vunpack.c.h.b16 %v721
      %v2896 = vunpack.c.l.b16 %v722
      %v2897 = vunpack.c.h.b16 %v722
      %v2898 = vunpack.c.l.b16 %v723
      %v2899 = vunpack.c.h.b16 %v723
      %v2900 = vunpack.c.l.b16 %v724
      %v2901 = vunpack.c.h.b16 %v724
      %v2902 = vunpack.c.l.b16 %v725
      %v2903 = vunpack.c.h.b16 %v725
      %v2904 = vunpack.c.l.b16 %v726
      %v2905 = vunpack.c.h.b16 %v726
      %v2906 = vunpack.c.l.b16 %v727
      %v2907 = vunpack.c.h.b16 %v727
      %v2908 = vunpack.c.l.b16 %v728
      %v2909 = vunpack.c.h.b16 %v728
      %v2910 = vunpack.c.l.b16 %v729
      %v2911 = vunpack.c.h.b16 %v729
      %v2912 = vunpack.c.l.b16 %v730
      %v2913 = vunpack.c.h.b16 %v730
      %v2914 = vunpack.c.l.b16 %v731
      %v2915 = vunpack.c.h.b16 %v731
      %v2916 = vunpack.c.l.b16 %v732
      %v2917 = vunpack.c.h.b16 %v732
      %v2918 = vunpack.c.l.b16 %v733
      %v2919 = vunpack.c.h.b16 %v733
      %v2920 = vunpack.c.l.b16 %v734
      %v2921 = vunpack.c.h.b16 %v734
      %v2922 = vunpack.c.l.b16 %v735
      %v2923 = vunpack.c.h.b16 %v735
      %v2924 = vunpack.c.l.b16 %v736
      %v2925 = vunpack.c.h.b16 %v736
      %v2926 = vunpack.c.l.b16 %v737
      %v2927 = vunpack.c.h.b16 %v737
      %v2928 = vunpack.c.l.b16 %v738
      %v2929 = vunpack.c.h.b16 %v738
      %v2930 = vunpack.c.l.b16 %v739
      %v2931 = vunpack.c.h.b16 %v739
      %v2932 = vunpack.c.l.b16 %v740
      %v2933 = vunpack.c.h.b16 %v740
      %v2934 = vunpack.c.l.b16 %v741
      %v2935 = vunpack.c.h.b16 %v741
      %v2936 = vunpack.c.l.b16 %v742
      %v2937 = vunpack.c.h.b16 %v742
      %v2938 = vunpack.c.l.b16 %v743
      %v2939 = vunpack.c.h.b16 %v743
      %v2940 = vunpack.c.l.b16 %v744
      %v2941 = vunpack.c.h.b16 %v744
      %v2942 = vunpack.c.l.b16 %v745
      %v2943 = vunpack.c.h.b16 %v745
      %v2944 = vunpack.c.l.b16 %v746
      %v2945 = vunpack.c.h.b16 %v746
      %v2946 = vunpack.c.l.b16 %v747
      %v2947 = vunpack.c.h.b16 %v747
      %v2948 = vunpack.c.l.b16 %v748
      %v2949 = vunpack.c.h.b16 %v748
      %v2950 = vunpack.c.l.b16 %v749
      %v2951 = vunpack.c.h.b16 %v749
      %v2952 = vunpack.c.l.b16 %v750
      %v2953 = vunpack.c.h.b16 %v750
      %v2954 = vunpack.c.l.b16 %v751
      %v2955 = vunpack.c.h.b16 %v751
      %v2956 = vunpack.c.l.b16 %v752
      %v2957 = vunpack.c.h.b16 %v752
      %v2958 = vunpack.c.l.b16 %v753
      %v2959 = vunpack.c.h.b16 %v753
      %v2960 = vunpack.c.l.b16 %v754
      %v2961 = vunpack.c.h.b16 %v754
      %v2962 = vunpack.c.l.b16 %v755
      %v2963 = vunpack.c.h.b16 %v755
      %v2964 = vunpack.c.l.b16 %v756
      %v2965 = vunpack.c.h.b16 %v756
      %v2966 = vunpack.c.l.b16 %v757
      %v2967 = vunpack.c.h.b16 %v757
      %v2968 = vunpack.c.l.b16 %v758
      %v2969 = vunpack.c.h.b16 %v758
      %v2970 = vunpack.c.l.b16 %v759
      %v2971 = vunpack.c.h.b16 %v759
      %v2972 = vunpack.c.l.b16 %v760
      %v2973 = vunpack.c.h.b16 %v760
      %v2974 = vunpack.c.l.b16 %v761
      %v2975 = vunpack.c.h.b16 %v761
      %v2976 = vunpack.c.l.b16 %v762
      %v2977 = vunpack.c.h.b16 %v762
      %v2978 = vunpack.c.l.b16 %v763
      %v2979 = vunpack.c.h.b16 %v763
      %v2980 = vunpack.c.l.b16 %v764
      %v2981 = vunpack.c.h.b16 %v764
      %v2982 = vunpack.c.l.b16 %v765
      %v2983 = vunpack.c.h.b16 %v765
      %v2984 = vunpack.c.l.b16 %v766
      %v2985 = vunpack.c.h.b16 %v766
      %v2986 = vunpack.c.l.b16 %v767
      %v2987 = vunpack.c.h.b16 %v767
      %v2988 = vunpack.c.l.b16 %v768
      %v2989 = vunpack.c.h.b16 %v768
      %v2990 = vunpack.c.l.b16 %v769
      %v2991 = vunpack.c.h.b16 %v769
      %v2992 = vunpack.c.l.b16 %v770
      %v2993 = vunpack.c.h.b16 %v770
      %v2994 = vunpack.c.l.b16 %v771
      %v2995 = vunpack.c.h.b16 %v771
      %v2996 = vunpack.c.l.b16 %v772
      %v2997 = vunpack.c.h.b16 %v772
      %v2998 = vunpack.c.l.b16 %v773
      %v2999 = vunpack.c.h.b16 %v773
      %v3000 = vunpack.c.l.b16 %v774
      %v3001 = vunpack.c.h.b16 %v774
      %v3002 = vunpack.c.l.b16 %v775
      %v3003 = vunpack.c.h.b16 %v775
      %v3004 = vunpack.c.l.b16 %v776
      %v3005 = vunpack.c.h.b16 %v776
      %v3006 = vunpack.c.l.b16 %v777
      %v3007 = vunpack.c.h.b16 %v777
      %v3008 = vunpack.c.l.b16 %v778
      %v3009 = vunpack.c.h.b16 %v778
      %v3010 = vunpack.c.l.b16 %v779
      %v3011 = vunpack.c.h.b16 %v779
      %v3012 = vunpack.c.l.b16 %v780
      %v3013 = vunpack.c.h.b16 %v780
      %v3014 = vunpack.c.l.b16 %v781
      %v3015 = vunpack.c.h.b16 %v781
      %v3016 = vunpack.c.l.b16 %v782
      %v3017 = vunpack.c.h.b16 %v782
      %v3018 = vunpack.c.l.b16 %v783
      %v3019 = vunpack.c.h.b16 %v783
      %v3020 = vunpack.c.l.b16 %v784
      %v3021 = vunpack.c.h.b16 %v784
      %v3022 = vunpack.c.l.b16 %v785
      %v3023 = vunpack.c.h.b16 %v785
      %v3024 = vunpack.c.l.b16 %v786
      %v3025 = vunpack.c.h.b16 %v786
      %v3026 = vunpack.c.l.b16 %v787
      %v3027 = vunpack.c.h.b16 %v787
      %v3028 = vunpack.c.l.b16 %v788
      %v3029 = vunpack.c.h.b16 %v788
      %v3030 = vunpack.c.l.b16 %v789
      %v3031 = vunpack.c.h.b16 %v789
      %v3032 = vunpack.c.l.b16 %v790
      %v3033 = vunpack.c.h.b16 %v790
      %v3034 = vunpack.c.l.b16 %v791
      %v3035 = vunpack.c.h.b16 %v791
      %v3036 = vunpack.c.l.b16 %v792
      %v3037 = vunpack.c.h.b16 %v792
      %v3038 = vunpack.c.l.b16 %v793
      %v3039 = vunpack.c.h.b16 %v793
      %v3040 = vunpack.c.l.b16 %v794
      %v3041 = vunpack.c.h.b16 %v794
      %v3042 = vunpack.c.l.b16 %v795
      %v3043 = vunpack.c.h.b16 %v795
      %v3044 = vunpack.c.l.b16 %v796
      %v3045 = vunpack.c.h.b16 %v796
      %v3046 = vunpack.c.l.b16 %v797
      %v3047 = vunpack.c.h.b16 %v797
      %v3048 = vunpack.c.l.b16 %v798
      %v3049 = vunpack.c.h.b16 %v798
      %v3050 = vunpack.c.l.b16 %v799
      %v3051 = vunpack.c.h.b16 %v799
      %v3052 = vunpack.c.l.b16 %v800
      %v3053 = vunpack.c.h.b16 %v800
      %v3054 = vunpack.c.l.b16 %v801
      %v3055 = vunpack.c.h.b16 %v801
      %v3056 = vunpack.c.l.b16 %v802
      %v3057 = vunpack.c.h.b16 %v802
      %v3058 = vunpack.c.l.b16 %v803
      %v3059 = vunpack.c.h.b16 %v803
      %v3060 = vunpack.c.l.b16 %v804
      %v3061 = vunpack.c.h.b16 %v804
      %v3062 = vunpack.c.l.b16 %v805
      %v3063 = vunpack.c.h.b16 %v805
      %v3064 = vunpack.c.l.b16 %v806
      %v3065 = vunpack.c.h.b16 %v806
      %v3066 = vunpack.c.l.b16 %v807
      %v3067 = vunpack.c.h.b16 %v807
      %v3068 = vunpack.c.l.b16 %v808
      %v3069 = vunpack.c.h.b16 %v808
      %v3070 = vunpack.c.l.b16 %v809
      %v3071 = vunpack.c.h.b16 %v809
      %v3072 = vunpack.c.l.b16 %v810
      %v3073 = vunpack.c.h.b16 %v810
      %v3074 = vunpack.c.l.b16 %v811
      %v3075 = vunpack.c.h.b16 %v811
      %v3076 = vunpack.c.l.b16 %v812
      %v3077 = vunpack.c.h.b16 %v812
      %v3078 = vunpack.c.l.b16 %v813
      %v3079 = vunpack.c.h.b16 %v813
      %v3080 = vunpack.c.l.b16 %v814
      %v3081 = vunpack.c.h.b16 %v814
      %v3082 = vunpack.c.l.b16 %v815
      %v3083 = vunpack.c.h.b16 %v815
      %v3084 = vunpack.c.l.b16 %v816
      %v3085 = vunpack.c.h.b16 %v816
      %v3086 = vunpack.c.l.b16 %v817
      %v3087 = vunpack.c.h.b16 %v817
      %v3088 = vunpack.c.l.b16 %v818
      %v3089 = vunpack.c.h.b16 %v818
      %v3090 = vunpack.c.l.b16 %v819
      %v3091 = vunpack.c.h.b16 %v819
      %v3092 = vunpack.c.l.b16 %v820
      %v3093 = vunpack.c.h.b16 %v820
      %v3094 = vunpack.c.l.b16 %v821
      %v3095 = vunpack.c.h.b16 %v821
      %v3096 = vunpack.c.l.b16 %v822
      %v3097 = vunpack.c.h.b16 %v822
      %v3098 = vunpack.c.l.b16 %v823
      %v3099 = vunpack.c.h.b16 %v823
      %v3100 = vunpack.c.l.b16 %v824
      %v3101 = vunpack.c.h.b16 %v824
      %v3102 = vunpack.c.l.b16 %v825
      %v3103 = vunpack.c.h.b16 %v825
      %v3104 = vunpack.c.l.b16 %v826
      %v3105 = vunpack.c.h.b16 %v826
      %v3106 = vunpack.c.l.b16 %v827
      %v3107 = vunpack.c.h.b16 %v827
      %v3108 = vunpack.c.l.b16 %v828
      %v3109 = vunpack.c.h.b16 %v828
      %v3110 = vunpack.c.l.b16 %v829
      %v3111 = vunpack.c.h.b16 %v829
      %v3112 = vunpack.c.l.b16 %v830
      %v3113 = vunpack.c.h.b16 %v830
      %v3114 = vunpack.c.l.b16 %v831
      %v3115 = vunpack.c.h.b16 %v831
      %v3116 = vunpack.c.l.b16 %v832
      %v3117 = vunpack.c.h.b16 %v832
      %v3118 = vunpack.c.l.b16 %v833
      %v3119 = vunpack.c.h.b16 %v833
      %v3120 = vunpack.c.l.b16 %v834
      %v3121 = vunpack.c.h.b16 %v834
      %v3122 = vunpack.c.l.b16 %v835
      %v3123 = vunpack.c.h.b16 %v835
      %v3124 = vunpack.c.l.b16 %v836
      %v3125 = vunpack.c.h.b16 %v836
      %v3126 = vunpack.c.l.b16 %v837
      %v3127 = vunpack.c.h.b16 %v837
      %v3128 = vunpack.c.l.b16 %v838
      %v3129 = vunpack.c.h.b16 %v838
      %v3130 = vunpack.c.l.b16 %v839
      %v3131 = vunpack.c.h.b16 %v839
      %v3132 = vunpack.c.l.b16 %v840
      %v3133 = vunpack.c.h.b16 %v840
      %v3134 = vunpack.c.l.b16 %v841
      %v3135 = vunpack.c.h.b16 %v841
      %v3136 = vunpack.c.l.b16 %v842
      %v3137 = vunpack.c.h.b16 %v842
      %v3138 = vunpack.c.l.b16 %v843
      %v3139 = vunpack.c.h.b16 %v843
      %v3140 = vunpack.c.l.b16 %v844
      %v3141 = vunpack.c.h.b16 %v844
      %v3142 = vunpack.c.l.b16 %v845
      %v3143 = vunpack.c.h.b16 %v845
      %v3144 = vunpack.c.l.b16 %v846
      %v3145 = vunpack.c.h.b16 %v846
      %v3146 = vunpack.c.l.b16 %v847
      %v3147 = vunpack.c.h.b16 %v847
      %v3148 = vunpack.c.l.b16 %v848
      %v3149 = vunpack.c.h.b16 %v848
      %v3150 = vunpack.c.l.b16 %v849
      %v3151 = vunpack.c.h.b16 %v849
      %v3152 = vunpack.c.l.b16 %v850
      %v3153 = vunpack.c.h.b16 %v850
      %v3154 = vunpack.c.l.b16 %v851
      %v3155 = vunpack.c.h.b16 %v851
      %v3156 = vunpack.c.l.b16 %v852
      %v3157 = vunpack.c.h.b16 %v852
      %v3158 = vunpack.c.l.b16 %v853
      %v3159 = vunpack.c.h.b16 %v853
      %v3160 = vunpack.c.l.b16 %v854
      %v3161 = vunpack.c.h.b16 %v854
      %v3162 = vunpack.c.l.b16 %v855
      %v3163 = vunpack.c.h.b16 %v855
      %v3164 = vunpack.c.l.b16 %v856
      %v3165 = vunpack.c.h.b16 %v856
      %v3166 = vunpack.c.l.b16 %v857
      %v3167 = vunpack.c.h.b16 %v857
      %v3168 = vunpack.c.l.b16 %v858
      %v3169 = vunpack.c.h.b16 %v858
      %v3170 = vunpack.c.l.b16 %v859
      %v3171 = vunpack.c.h.b16 %v859
      %v3172 = vunpack.c.l.b16 %v860
      %v3173 = vunpack.c.h.b16 %v860
      %v3174 = vunpack.c.l.b16 %v861
      %v3175 = vunpack.c.h.b16 %v861
      %v3176 = vunpack.c.l.b16 %v862
      %v3177 = vunpack.c.h.b16 %v862
      %v3178 = vunpack.c.l.b16 %v863
      %v3179 = vunpack.c.h.b16 %v863
      %v3180 = vunpack.c.l.b16 %v864
      %v3181 = vunpack.c.h.b16 %v864
      %v3182 = vunpack.c.l.b16 %v865
      %v3183 = vunpack.c.h.b16 %v865
      %v3184 = vunpack.c.l.b16 %v866
      %v3185 = vunpack.c.h.b16 %v866
      %v3186 = vunpack.c.l.b16 %v867
      %v3187 = vunpack.c.h.b16 %v867
      %v3188 = vunpack.c.l.b16 %v868
      %v3189 = vunpack.c.h.b16 %v868
      %v3190 = vunpack.c.l.b16 %v869
      %v3191 = vunpack.c.h.b16 %v869
      %v3192 = vunpack.c.l.b16 %v870
      %v3193 = vunpack.c.h.b16 %v870
      %v3194 = vunpack.c.l.b16 %v871
      %v3195 = vunpack.c.h.b16 %v871
      %v3196 = vunpack.c.l.b16 %v872
      %v3197 = vunpack.c.h.b16 %v872
      %v3198 = vunpack.c.l.b16 %v873
      %v3199 = vunpack.c.h.b16 %v873
      %v3200 = vunpack.c.l.b16 %v874
      %v3201 = vunpack.c.h.b16 %v874
      %v3202 = vunpack.c.l.b16 %v875
      %v3203 = vunpack.c.h.b16 %v875
      %v3204 = vunpack.c.l.b16 %v876
      %v3205 = vunpack.c.h.b16 %v876
      %v3206 = vunpack.c.l.b16 %v877
      %v3207 = vunpack.c.h.b16 %v877
      %v3208 = vunpack.c.l.b16 %v878
      %v3209 = vunpack.c.h.b16 %v878
      %v3210 = vunpack.c.l.b16 %v879
      %v3211 = vunpack.c.h.b16 %v879
      %v3212 = vunpack.c.l.b16 %v880
      %v3213 = vunpack.c.h.b16 %v880
      %v3214 = vunpack.c.l.b16 %v881
      %v3215 = vunpack.c.h.b16 %v881
      %v3216 = vunpack.c.l.b16 %v882
      %v3217 = vunpack.c.h.b16 %v882
      %v3218 = vunpack.c.l.b16 %v883
      %v3219 = vunpack.c.h.b16 %v883
      %v3220 = vunpack.c.l.b16 %v884
      %v3221 = vunpack.c.h.b16 %v884
      %v3222 = vunpack.c.l.b16 %v885
      %v3223 = vunpack.c.h.b16 %v885
      %v3224 = vunpack.c.l.b16 %v886
      %v3225 = vunpack.c.h.b16 %v886
      %v3226 = vunpack.c.l.b16 %v887
      %v3227 = vunpack.c.h.b16 %v887
      %v3228 = vunpack.c.l.b16 %v888
      %v3229 = vunpack.c.h.b16 %v888
      %v3230 = vunpack.c.l.b16 %v889
      %v3231 = vunpack.c.h.b16 %v889
      %v3232 = vunpack.c.l.b16 %v890
      %v3233 = vunpack.c.h.b16 %v890
      %v3234 = vunpack.c.l.b16 %v891
      %v3235 = vunpack.c.h.b16 %v891
      %v3236 = vunpack.c.l.b16 %v892
      %v3237 = vunpack.c.h.b16 %v892
      %v3238 = vunpack.c.l.b16 %v893
      %v3239 = vunpack.c.h.b16 %v893
      %v3240 = vunpack.c.l.b16 %v894
      %v3241 = vunpack.c.h.b16 %v894
      %v3242 = vunpack.c.l.b16 %v895
      %v3243 = vunpack.c.h.b16 %v895
      %v3244 = vunpack.c.l.b16 %v896
      %v3245 = vunpack.c.h.b16 %v896
      %v3246 = vunpack.c.l.b16 %v897
      %v3247 = vunpack.c.h.b16 %v897
      %v3248 = vunpack.c.l.b16 %v898
      %v3249 = vunpack.c.h.b16 %v898
      %v3250 = vunpack.c.l.b16 %v899
      %v3251 = vunpack.c.h.b16 %v899
      %v3252 = vunpack.c.l.b16 %v900
      %v3253 = vunpack.c.h.b16 %v900
      %v3254 = vunpack.c.l.b16 %v901
      %v3255 = vunpack.c.h.b16 %v901
      %v3256 = vunpack.c.l.b16 %v902
      %v3257 = vunpack.c.h.b16 %v902
      %v3258 = vunpack.c.l.b16 %v903
      %v3259 = vunpack.c.h.b16 %v903
      %v3260 = vunpack.c.l.b16 %v904
      %v3261 = vunpack.c.h.b16 %v904
      %v3262 = vunpack.c.l.b16 %v905
      %v3263 = vunpack.c.h.b16 %v905
      %v3264 = vunpack.c.l.b16 %v906
      %v3265 = vunpack.c.h.b16 %v906
      %v3266 = vunpack.c.l.b16 %v907
      %v3267 = vunpack.c.h.b16 %v907
      %v3268 = vunpack.c.l.b16 %v908
      %v3269 = vunpack.c.h.b16 %v908
      %v3270 = vunpack.c.l.b16 %v909
      %v3271 = vunpack.c.h.b16 %v909
      %v3272 = vunpack.c.l.b16 %v910
      %v3273 = vunpack.c.h.b16 %v910
      %v3274 = vunpack.c.l.b16 %v911
      %v3275 = vunpack.c.h.b16 %v911
      %v3276 = vunpack.c.l.b16 %v912
      %v3277 = vunpack.c.h.b16 %v912
      %v3278 = vunpack.c.l.b16 %v913
      %v3279 = vunpack.c.h.b16 %v913
      %v3280 = vunpack.c.l.b16 %v914
      %v3281 = vunpack.c.h.b16 %v914
      %v3282 = vunpack.c.l.b16 %v915
      %v3283 = vunpack.c.h.b16 %v915
      %v3284 = vunpack.c.l.b16 %v916
      %v3285 = vunpack.c.h.b16 %v916
      %v3286 = vunpack.c.l.b16 %v917
      %v3287 = vunpack.c.h.b16 %v917
      %v3288 = vunpack.c.l.b16 %v918
      %v3289 = vunpack.c.h.b16 %v918
      %v3290 = vunpack.c.l.b16 %v919
      %v3291 = vunpack.c.h.b16 %v919
      %v3292 = vunpack.c.l.b16 %v920
      %v3293 = vunpack.c.h.b16 %v920
      %v3294 = vunpack.c.l.b16 %v921
      %v3295 = vunpack.c.h.b16 %v921
      %v3296 = vunpack.c.l.b16 %v922
      %v3297 = vunpack.c.h.b16 %v922
      %v3298 = vunpack.c.l.b16 %v923
      %v3299 = vunpack.c.h.b16 %v923
      %v3300 = vunpack.c.l.b16 %v924
      %v3301 = vunpack.c.h.b16 %v924
      %v3302 = vunpack.c.l.b16 %v925
      %v3303 = vunpack.c.h.b16 %v925
      %v3304 = vunpack.c.l.b16 %v926
      %v3305 = vunpack.c.h.b16 %v926
      %v3306 = vunpack.c.l.b16 %v927
      %v3307 = vunpack.c.h.b16 %v927
      %v3308 = vunpack.c.l.b16 %v928
      %v3309 = vunpack.c.h.b16 %v928
      %v3310 = vunpack.c.l.b16 %v929
      %v3311 = vunpack.c.h.b16 %v929
      %v3312 = vunpack.c.l.b16 %v930
      %v3313 = vunpack.c.h.b16 %v930
      %v3314 = vunpack.c.l.b16 %v931
      %v3315 = vunpack.c.h.b16 %v931
      %v3316 = vunpack.c.l.b16 %v932
      %v3317 = vunpack.c.h.b16 %v932
      %v3318 = vunpack.c.l.b16 %v933
      %v3319 = vunpack.c.h.b16 %v933
      %v3320 = vunpack.c.l.b16 %v934
      %v3321 = vunpack.c.h.b16 %v934
      %v3322 = vunpack.c.l.b16 %v935
      %v3323 = vunpack.c.h.b16 %v935
      %v3324 = vunpack.c.l.b16 %v936
      %v3325 = vunpack.c.h.b16 %v936
      %v3326 = vunpack.c.l.b16 %v937
      %v3327 = vunpack.c.h.b16 %v937
      %v3328 = vunpack.c.l.b16 %v938
      %v3329 = vunpack.c.h.b16 %v938
      %v3330 = vunpack.c.l.b16 %v939
      %v3331 = vunpack.c.h.b16 %v939
      %v3332 = vunpack.c.l.b16 %v940
      %v3333 = vunpack.c.h.b16 %v940
      %v3334 = vunpack.c.l.b16 %v941
      %v3335 = vunpack.c.h.b16 %v941
      %v3336 = vunpack.c.l.b16 %v942
      %v3337 = vunpack.c.h.b16 %v942
      %v3338 = vunpack.c.l.b16 %v943
      %v3339 = vunpack.c.h.b16 %v943
      %v3340 = vunpack.c.l.b16 %v944
      %v3341 = vunpack.c.h.b16 %v944
      %v3342 = vunpack.c.l.b16 %v945
      %v3343 = vunpack.c.h.b16 %v945
      %v3344 = vunpack.c.l.b16 %v946
      %v3345 = vunpack.c.h.b16 %v946
      %v3346 = vunpack.c.l.b16 %v947
      %v3347 = vunpack.c.h.b16 %v947
      %v3348 = vunpack.c.l.b16 %v948
      %v3349 = vunpack.c.h.b16 %v948
      %v3350 = vunpack.c.l.b16 %v949
      %v3351 = vunpack.c.h.b16 %v949
      %v3352 = vunpack.c.l.b16 %v950
      %v3353 = vunpack.c.h.b16 %v950
      %v3354 = vunpack.c.l.b16 %v951
      %v3355 = vunpack.c.h.b16 %v951
      %v3356 = vunpack.c.l.b16 %v952
      %v3357 = vunpack.c.h.b16 %v952
      %v3358 = vunpack.c.l.b16 %v953
      %v3359 = vunpack.c.h.b16 %v953
      %v3360 = vunpack.c.l.b16 %v954
      %v3361 = vunpack.c.h.b16 %v954
      %v3362 = vunpack.c.l.b16 %v955
      %v3363 = vunpack.c.h.b16 %v955
      %v3364 = vunpack.c.l.b16 %v956
      %v3365 = vunpack.c.h.b16 %v956
      %v3366 = vunpack.c.l.b16 %v957
      %v3367 = vunpack.c.h.b16 %v957
      %v3368 = vunpack.c.l.b16 %v958
      %v3369 = vunpack.c.h.b16 %v958
      %v3370 = vunpack.c.l.b16 %v959
      %v3371 = vunpack.c.h.b16 %v959
      %v3372 = vunpack.c.l.b16 %v960
      %v3373 = vunpack.c.h.b16 %v960
      %v3374 = vunpack.c.l.b16 %v961
      %v3375 = vunpack.c.h.b16 %v961
      %v3376 = vunpack.c.l.b16 %v962
      %v3377 = vunpack.c.h.b16 %v962
      %v3378 = vunpack.c.l.b16 %v963
      %v3379 = vunpack.c.h.b16 %v963
      %v3380 = vunpack.c.l.b16 %v964
      %v3381 = vunpack.c.h.b16 %v964
      %v3382 = vunpack.c.l.b16 %v965
      %v3383 = vunpack.c.h.b16 %v965
      %v3384 = vunpack.c.l.b16 %v966
      %v3385 = vunpack.c.h.b16 %v966
      %v3386 = vunpack.c.l.b16 %v967
      %v3387 = vunpack.c.h.b16 %v967
      %v3388 = vunpack.c.l.b16 %v968
      %v3389 = vunpack.c.h.b16 %v968
      %v3390 = vunpack.c.l.b16 %v969
      %v3391 = vunpack.c.h.b16 %v969
      %v3392 = vunpack.c.l.b16 %v970
      %v3393 = vunpack.c.h.b16 %v970
      %v3394 = vunpack.c.l.b16 %v971
      %v3395 = vunpack.c.h.b16 %v971
      %v3396 = vunpack.c.l.b16 %v972
      %v3397 = vunpack.c.h.b16 %v972
      %v3398 = vunpack.c.l.b16 %v973
      %v3399 = vunpack.c.h.b16 %v973
      %v3400 = vunpack.c.l.b16 %v974
      %v3401 = vunpack.c.h.b16 %v974
      %v3402 = vunpack.c.l.b16 %v975
      %v3403 = vunpack.c.h.b16 %v975
      %v3404 = vunpack.c.l.b16 %v976
      %v3405 = vunpack.c.h.b16 %v976
      %v3406 = vunpack.c.l.b16 %v977
      %v3407 = vunpack.c.h.b16 %v977
      %v3408 = vunpack.c.l.b16 %v978
      %v3409 = vunpack.c.h.b16 %v978
      %v3410 = vunpack.c.l.b16 %v979
      %v3411 = vunpack.c.h.b16 %v979
      %v3412 = vunpack.c.l.b16 %v980
      %v3413 = vunpack.c.h.b16 %v980
      %v3414 = vunpack.c.l.b16 %v981
      %v3415 = vunpack.c.h.b16 %v981
      %v3416 = vunpack.c.l.b16 %v982
      %v3417 = vunpack.c.h.b16 %v982
      %v3418 = vunpack.c.l.b16 %v983
      %v3419 = vunpack.c.h.b16 %v983
      %v3420 = vunpack.c.l.b16 %v984
      %v3421 = vunpack.c.h.b16 %v984
      %v3422 = vunpack.c.l.b16 %v985
      %v3423 = vunpack.c.h.b16 %v985
      %v3424 = vunpack.c.l.b16 %v986
      %v3425 = vunpack.c.h.b16 %v986
      %v3426 = vunpack.c.l.b16 %v987
      %v3427 = vunpack.c.h.b16 %v987
      %v3428 = vunpack.c.l.b16 %v988
      %v3429 = vunpack.c.h.b16 %v988
      %v3430 = vunpack.c.l.b16 %v989
      %v3431 = vunpack.c.h.b16 %v989
      %v3432 = vunpack.c.l.b16 %v990
      %v3433 = vunpack.c.h.b16 %v990
      %v3434 = vunpack.c.l.b16 %v991
      %v3435 = vunpack.c.h.b16 %v991
      %v3436 = vunpack.c.l.b16 %v992
      %v3437 = vunpack.c.h.b16 %v992
      %v3438 = vunpack.c.l.b16 %v993
      %v3439 = vunpack.c.h.b16 %v993
      %v3440 = vunpack.c.l.b16 %v994
      %v3441 = vunpack.c.h.b16 %v994
      %v3442 = vunpack.c.l.b16 %v995
      %v3443 = vunpack.c.h.b16 %v995
      %v3444 = vunpack.c.l.b16 %v996
      %v3445 = vunpack.c.h.b16 %v996
      %v3446 = vunpack.c.l.b16 %v997
      %v3447 = vunpack.c.h.b16 %v997
      %v3448 = vunpack.c.l.b16 %v998
      %v3449 = vunpack.c.h.b16 %v998
      %v3450 = vunpack.c.l.b16 %v999
      %v3451 = vunpack.c.h.b16 %v999
      %v3452 = vunpack.c.l.b16 %v1000
      %v3453 = vunpack.c.h.b16 %v1000
      %v3454 = vunpack.c.l.b16 %v1001
      %v3455 = vunpack.c.h.b16 %v1001
      %v3456 = vunpack.c.l.b16 %v1002
      %v3457 = vunpack.c.h.b16 %v1002
      %v3458 = vunpack.c.l.b16 %v1003
      %v3459 = vunpack.c.h.b16 %v1003
      %v3460 = vunpack.c.l.b16 %v1004
      %v3461 = vunpack.c.h.b16 %v1004
      %v3462 = vunpack.c.l.b16 %v1005
      %v3463 = vunpack.c.h.b16 %v1005
      %v3464 = vunpack.c.l.b16 %v1006
      %v3465 = vunpack.c.h.b16 %v1006
      %v3466 = vunpack.c.l.b16 %v1007
      %v3467 = vunpack.c.h.b16 %v1007
      %v3468 = vunpack.c.l.b16 %v1008
      %v3469 = vunpack.c.h.b16 %v1008
      %v3470 = vunpack.c.l.b16 %v1009
      %v3471 = vunpack.c.h.b16 %v1009
      %v3472 = vunpack.c.l.b16 %v1010
      %v3473 = vunpack.c.h.b16 %v1010
      %v3474 = vunpack.c.l.b16 %v1011
      %v3475 = vunpack.c.h.b16 %v1011
      %v3476 = vunpack.c.l.b16 %v1012
      %v3477 = vunpack.c.h.b16 %v1012
      %v3478 = vunpack.c.l.b16 %v1013
      %v3479 = vunpack.c.h.b16 %v1013
      %v3480 = vunpack.c.l.b16 %v1014
      %v3481 = vunpack.c.h.b16 %v1014
      %v3482 = vunpack.c.l.b16 %v1015
      %v3483 = vunpack.c.h.b16 %v1015
      %v3484 = vunpack.c.l.b16 %v1016
      %v3485 = vunpack.c.h.b16 %v1016
      %v3486 = vunpack.c.l.b16 %v1017
      %v3487 = vunpack.c.h.b16 %v1017
      %v3488 = vunpack.c.l.b16 %v1018
      %v3489 = vunpack.c.h.b16 %v1018
      %v3490 = vunpack.c.l.b16 %v1019
      %v3491 = vunpack.c.h.b16 %v1019
      %v3492 = vunpack.c.l.b16 %v1020
      %v3493 = vunpack.c.h.b16 %v1020
      %v3494 = vunpack.c.l.b16 %v1021
      %v3495 = vunpack.c.h.b16 %v1021
      %v3496 = vunpack.c.l.b16 %v1022
      %v3497 = vunpack.c.h.b16 %v1022
      %v3498 = vunpack.c.l.b16 %v1023
      %v3499 = vunpack.c.h.b16 %v1023
      %v3500 = vunpack.c.l.b16 %v1024
      %v3501 = vunpack.c.h.b16 %v1024
      %v3502 = vunpack.c.l.b16 %v1025
      %v3503 = vunpack.c.h.b16 %v1025
      %v3504 = vunpack.c.l.b16 %v1026
      %v3505 = vunpack.c.h.b16 %v1026
      %v3506 = vunpack.c.l.b16 %v1027
      %v3507 = vunpack.c.h.b16 %v1027
      %v3508 = vunpack.c.l.b16 %v1028
      %v3509 = vunpack.c.h.b16 %v1028
      %v3510 = vunpack.c.l.b16 %v1029
      %v3511 = vunpack.c.h.b16 %v1029
      %v3512 = vunpack.c.l.b16 %v1030
      %v3513 = vunpack.c.h.b16 %v1030
      %v3514 = vunpack.c.l.b16 %v1031
      %v3515 = vunpack.c.h.b16 %v1031
      %v3516 = vunpack.c.l.b16 %v1032
      %v3517 = vunpack.c.h.b16 %v1032
      %v3518 = vunpack.c.l.b16 %v1033
      %v3519 = vunpack.c.h.b16 %v1033
      %v3520 = vunpack.c.l.b16 %v1034
      %v3521 = vunpack.c.h.b16 %v1034
      %v3522 = vunpack.c.l.b16 %v1035
      %v3523 = vunpack.c.h.b16 %v1035
      %v3524 = vunpack.c.l.b16 %v1036
      %v3525 = vunpack.c.h.b16 %v1036
      %v3526 = vunpack.c.l.b16 %v1037
      %v3527 = vunpack.c.h.b16 %v1037
      %v3528 = vunpack.c.l.b16 %v1038
      %v3529 = vunpack.c.h.b16 %v1038
      %v3530 = vunpack.c.l.b16 %v1039
      %v3531 = vunpack.c.h.b16 %v1039
      %v3532 = vunpack.c.l.b16 %v1040
      %v3533 = vunpack.c.h.b16 %v1040
      %v3534 = vunpack.c.l.b16 %v1041
      %v3535 = vunpack.c.h.b16 %v1041
      %v3536 = vunpack.c.l.b16 %v1042
      %v3537 = vunpack.c.h.b16 %v1042
      %v3538 = vunpack.c.l.b16 %v1043
      %v3539 = vunpack.c.h.b16 %v1043
      %v3540 = vunpack.c.l.b16 %v1044
      %v3541 = vunpack.c.h.b16 %v1044
      %v3542 = vunpack.c.l.b16 %v1045
      %v3543 = vunpack.c.h.b16 %v1045
      %v3544 = vunpack.c.l.b16 %v1046
      %v3545 = vunpack.c.h.b16 %v1046
      %v3546 = vunpack.c.l.b16 %v1047
      %v3547 = vunpack.c.h.b16 %v1047
      %v3548 = vunpack.c.l.b16 %v1048
      %v3549 = vunpack.c.h.b16 %v1048
      %v3550 = vunpack.c.l.b16 %v1049
      %v3551 = vunpack.c.h.b16 %v1049
      %v3552 = vunpack.c.l.b16 %v1050
      %v3553 = vunpack.c.h.b16 %v1050
      %v3554 = vunpack.c.l.b16 %v1051
      %v3555 = vunpack.c.h.b16 %v1051
      %v3556 = vunpack.c.l.b16 %v1052
      %v3557 = vunpack.c.h.b16 %v1052
      %v3558 = vunpack.c.l.b16 %v1053
      %v3559 = vunpack.c.h.b16 %v1053
      %v3560 = vunpack.c.l.b16 %v1054
      %v3561 = vunpack.c.h.b16 %v1054
      %v3562 = vunpack.c.l.b16 %v1055
      %v3563 = vunpack.c.h.b16 %v1055
      %v3564 = vunpack.c.l.b16 %v1056
      %v3565 = vunpack.c.h.b16 %v1056
      %v3566 = vunpack.c.l.b16 %v1057
      %v3567 = vunpack.c.h.b16 %v1057
      %v3568 = vunpack.c.l.b16 %v1058
      %v3569 = vunpack.c.h.b16 %v1058
      %v3570 = vunpack.c.l.b16 %v1059
      %v3571 = vunpack.c.h.b16 %v1059
      %v3572 = vunpack.c.l.b16 %v1060
      %v3573 = vunpack.c.h.b16 %v1060
      %v3574 = vunpack.c.l.b16 %v1061
      %v3575 = vunpack.c.h.b16 %v1061
      %v3576 = vunpack.c.l.b16 %v1062
      %v3577 = vunpack.c.h.b16 %v1062
      %v3578 = vunpack.c.l.b16 %v1063
      %v3579 = vunpack.c.h.b16 %v1063
      %v3580 = vunpack.c.l.b16 %v1064
      %v3581 = vunpack.c.h.b16 %v1064
      %v3582 = vunpack.c.l.b16 %v1065
      %v3583 = vunpack.c.h.b16 %v1065
      %v3584 = vunpack.c.l.b16 %v1066
      %v3585 = vunpack.c.h.b16 %v1066
      %v3586 = vunpack.c.l.b16 %v1067
      %v3587 = vunpack.c.h.b16 %v1067
      %v3588 = vunpack.c.l.b16 %v1068
      %v3589 = vunpack.c.h.b16 %v1068
      %v3590 = vunpack.c.l.b16 %v1069
      %v3591 = vunpack.c.h.b16 %v1069
      %v3592 = vunpack.c.l.b16 %v1070
      %v3593 = vunpack.c.h.b16 %v1070
      %v3594 = vunpack.c.l.b16 %v1071
      %v3595 = vunpack.c.h.b16 %v1071
      %v3596 = vunpack.c.l.b16 %v1072
      %v3597 = vunpack.c.h.b16 %v1072
      %v3598 = vunpack.c.l.b16 %v1073
      %v3599 = vunpack.c.h.b16 %v1073
      %v3600 = vunpack.c.l.b16 %v1074
      %v3601 = vunpack.c.h.b16 %v1074
      %v3602 = vunpack.c.l.b16 %v1075
      %v3603 = vunpack.c.h.b16 %v1075
      %v3604 = vunpack.c.l.b16 %v1076
      %v3605 = vunpack.c.h.b16 %v1076
      %v3606 = vunpack.c.l.b16 %v1077
      %v3607 = vunpack.c.h.b16 %v1077
      %v3608 = vunpack.c.l.b16 %v1078
      %v3609 = vunpack.c.h.b16 %v1078
      %v3610 = vunpack.c.l.b16 %v1079
      %v3611 = vunpack.c.h.b16 %v1079
      %v3612 = vunpack.c.l.b16 %v1080
      %v3613 = vunpack.c.h.b16 %v1080
      %v3614 = vunpack.c.l.b16 %v1081
      %v3615 = vunpack.c.h.b16 %v1081
      %v3616 = vunpack.c.l.b16 %v1082
      %v3617 = vunpack.c.h.b16 %v1082
      %v3618 = vunpack.c.l.b16 %v1083
      %v3619 = vunpack.c.h.b16 %v1083
      %v3620 = vunpack.c.l.b16 %v1084
      %v3621 = vunpack.c.h.b16 %v1084
      %v3622 = vunpack.c.l.b16 %v1085
      %v3623 = vunpack.c.h.b16 %v1085
      %v3624 = vunpack.c.l.b16 %v1086
      %v3625 = vunpack.c.h.b16 %v1086
      %v3626 = vunpack.c.l.b16 %v1087
      %v3627 = vunpack.c.h.b16 %v1087
      %v3628 = vunpack.c.l.b16 %v1088
      %v3629 = vunpack.c.h.b16 %v1088
      %v3630 = vunpack.c.l.b16 %v1089
      %v3631 = vunpack.c.h.b16 %v1089
      %v3632 = vunpack.c.l.b16 %v1090
      %v3633 = vunpack.c.h.b16 %v1090
      %v3634 = vunpack.c.l.b16 %v1091
      %v3635 = vunpack.c.h.b16 %v1091
      %v3636 = vunpack.c.l.b16 %v1092
      %v3637 = vunpack.c.h.b16 %v1092
      %v3638 = vunpack.c.l.b16 %v1093
      %v3639 = vunpack.c.h.b16 %v1093
      %v3640 = vunpack.c.l.b16 %v1094
      %v3641 = vunpack.c.h.b16 %v1094
      %v3642 = vunpack.c.l.b16 %v1095
      %v3643 = vunpack.c.h.b16 %v1095
      %v3644 = vunpack.c.l.b16 %v1096
      %v3645 = vunpack.c.h.b16 %v1096
      %v3646 = vunpack.c.l.b16 %v1097
      %v3647 = vunpack.c.h.b16 %v1097
      %v3648 = vunpack.c.l.b16 %v1098
      %v3649 = vunpack.c.h.b16 %v1098
      %v3650 = vunpack.c.l.b16 %v1099
      %v3651 = vunpack.c.h.b16 %v1099
      %v3652 = vunpack.c.l.b16 %v1100
      %v3653 = vunpack.c.h.b16 %v1100
      %v3654 = vunpack.c.l.b16 %v1101
      %v3655 = vunpack.c.h.b16 %v1101
      %v3656 = vunpack.c.l.b16 %v1102
      %v3657 = vunpack.c.h.b16 %v1102
      %v3658 = vunpack.c.l.b16 %v1103
      %v3659 = vunpack.c.h.b16 %v1103
      %v3660 = vunpack.c.l.b16 %v1104
      %v3661 = vunpack.c.h.b16 %v1104
      %v3662 = vunpack.c.l.b16 %v1105
      %v3663 = vunpack.c.h.b16 %v1105
      %v3664 = vunpack.c.l.b16 %v1106
      %v3665 = vunpack.c.h.b16 %v1106
      %v3666 = vunpack.c.l.b16 %v1107
      %v3667 = vunpack.c.h.b16 %v1107
      %v3668 = vunpack.c.l.b16 %v1108
      %v3669 = vunpack.c.h.b16 %v1108
      %v3670 = vunpack.c.l.b16 %v1109
      %v3671 = vunpack.c.h.b16 %v1109
      %v3672 = vunpack.c.l.b16 %v1110
      %v3673 = vunpack.c.h.b16 %v1110
      %v3674 = vpack.c.b16 %v2110, %v2106
      %v3675 = vpack.c.b16 %v2111, %v2107
      %v3676 = vpack.c.b16 %v2112, %v2108
      %v3677 = vpack.c.b16 %v2113, %v2109
      %v3678 = vpack.c.b16 %v2118, %v2114
      %v3679 = vpack.c.b16 %v2119, %v2115
      %v3680 = vpack.c.b16 %v2120, %v2116
      %v3681 = vpack.c.b16 %v2121, %v2117
      %v3682 = vpack.c.b16 %v2126, %v2122
      %v3683 = vpack.c.b16 %v2127, %v2123
      %v3684 = vpack.c.b16 %v2128, %v2124
      %v3685 = vpack.c.b16 %v2129, %v2125
      %v3686 = vpack.c.b16 %v2134, %v2130
      %v3687 = vpack.c.b16 %v2135, %v2131
      %v3688 = vpack.c.b16 %v2136, %v2132
      %v3689 = vpack.c.b16 %v2137, %v2133
      %v3690 = vpack.c.b16 %v2142, %v2138
      %v3691 = vpack.c.b16 %v2143, %v2139
      %v3692 = vpack.c.b16 %v2144, %v2140
      %v3693 = vpack.c.b16 %v2145, %v2141
      %v3694 = vpack.c.b16 %v2150, %v2146
      %v3695 = vpack.c.b16 %v2151, %v2147
      %v3696 = vpack.c.b16 %v2152, %v2148
      %v3697 = vpack.c.b16 %v2153, %v2149
      %v3698 = vpack.c.b16 %v2158, %v2154
      %v3699 = vpack.c.b16 %v2159, %v2155
      %v3700 = vpack.c.b16 %v2160, %v2156
      %v3701 = vpack.c.b16 %v2161, %v2157
      %v3702 = vpack.c.b16 %v2166, %v2162
      %v3703 = vpack.c.b16 %v2167, %v2163
      %v3704 = vpack.c.b16 %v2168, %v2164
      %v3705 = vpack.c.b16 %v2169, %v2165
      %v3706 = vpack.c.b16 %v2174, %v2170
      %v3707 = vpack.c.b16 %v2175, %v2171
      %v3708 = vpack.c.b16 %v2176, %v2172
      %v3709 = vpack.c.b16 %v2177, %v2173
      %v3710 = vpack.c.b16 %v2182, %v2178
      %v3711 = vpack.c.b16 %v2183, %v2179
      %v3712 = vpack.c.b16 %v2184, %v2180
      %v3713 = vpack.c.b16 %v2185, %v2181
      %v3714 = vpack.c.b16 %v2190, %v2186
      %v3715 = vpack.c.b16 %v2191, %v2187
      %v3716 = vpack.c.b16 %v2192, %v2188
      %v3717 = vpack.c.b16 %v2193, %v2189
      %v3718 = vpack.c.b16 %v2198, %v2194
      %v3719 = vpack.c.b16 %v2199, %v2195
      %v3720 = vpack.c.b16 %v2200, %v2196
      %v3721 = vpack.c.b16 %v2201, %v2197
      %v3722 = vpack.c.b16 %v2206, %v2202
      %v3723 = vpack.c.b16 %v2207, %v2203
      %v3724 = vpack.c.b16 %v2208, %v2204
      %v3725 = vpack.c.b16 %v2209, %v2205
      %v3726 = vpack.c.b16 %v2214, %v2210
      %v3727 = vpack.c.b16 %v2215, %v2211
      %v3728 = vpack.c.b16 %v2216, %v2212
      %v3729 = vpack.c.b16 %v2217, %v2213
      %v3730 = vpack.c.b16 %v2222, %v2218
      %v3731 = vpack.c.b16 %v2223, %v2219
      %v3732 = vpack.c.b16 %v2224, %v2220
      %v3733 = vpack.c.b16 %v2225, %v2221
      %v3734 = vpack.c.b16 %v2230, %v2226
      %v3735 = vpack.c.b16 %v2231, %v2227
      %v3736 = vpack.c.b16 %v2232, %v2228
      %v3737 = vpack.c.b16 %v2233, %v2229
      %v3738 = vpack.c.b16 %v2238, %v2234
      %v3739 = vpack.c.b16 %v2239, %v2235
      %v3740 = vpack.c.b16 %v2240, %v2236
      %v3741 = vpack.c.b16 %v2241, %v2237
      %v3742 = vpack.c.b16 %v2246, %v2242
      %v3743 = vpack.c.b16 %v2247, %v2243
      %v3744 = vpack.c.b16 %v2248, %v2244
      %v3745 = vpack.c.b16 %v2249, %v2245
      %v3746 = vpack.c.b16 %v2254, %v2250
      %v3747 = vpack.c.b16 %v2255, %v2251
      %v3748 = vpack.c.b16 %v2256, %v2252
      %v3749 = vpack.c.b16 %v2257, %v2253
      %v3750 = vpack.c.b16 %v2262, %v2258
      %v3751 = vpack.c.b16 %v2263, %v2259
      %v3752 = vpack.c.b16 %v2264, %v2260
      %v3753 = vpack.c.b16 %v2265, %v2261
      %v3754 = vpack.c.b16 %v2270, %v2266
      %v3755 = vpack.c.b16 %v2271, %v2267
      %v3756 = vpack.c.b16 %v2272, %v2268
      %v3757 = vpack.c.b16 %v2273, %v2269
      %v3758 = vpack.c.b16 %v2278, %v2274
      %v3759 = vpack.c.b16 %v2279, %v2275
      %v3760 = vpack.c.b16 %v2280, %v2276
      %v3761 = vpack.c.b16 %v2281, %v2277
      %v3762 = vpack.c.b16 %v2286, %v2282
      %v3763 = vpack.c.b16 %v2287, %v2283
      %v3764 = vpack.c.b16 %v2288, %v2284
      %v3765 = vpack.c.b16 %v2289, %v2285
      %v3766 = vpack.c.b16 %v2294, %v2290
      %v3767 = vpack.c.b16 %v2295, %v2291
      %v3768 = vpack.c.b16 %v2296, %v2292
      %v3769 = vpack.c.b16 %v2297, %v2293
      %v3770 = vpack.c.b16 %v2302, %v2298
      %v3771 = vpack.c.b16 %v2303, %v2299
      %v3772 = vpack.c.b16 %v2304, %v2300
      %v3773 = vpack.c.b16 %v2305, %v2301
      %v3774 = vpack.c.b16 %v2310, %v2306
      %v3775 = vpack.c.b16 %v2311, %v2307
      %v3776 = vpack.c.b16 %v2312, %v2308
      %v3777 = vpack.c.b16 %v2313, %v2309
      %v3778 = vpack.c.b16 %v2318, %v2314
      %v3779 = vpack.c.b16 %v2319, %v2315
      %v3780 = vpack.c.b16 %v2320, %v2316
      %v3781 = vpack.c.b16 %v2321, %v2317
      %v3782 = vpack.c.b16 %v2326, %v2322
      %v3783 = vpack.c.b16 %v2327, %v2323
      %v3784 = vpack.c.b16 %v2328, %v2324
      %v3785 = vpack.c.b16 %v2329, %v2325
      %v3786 = vpack.c.b16 %v2334, %v2330
      %v3787 = vpack.c.b16 %v2335, %v2331
      %v3788 = vpack.c.b16 %v2336, %v2332
      %v3789 = vpack.c.b16 %v2337, %v2333
      %v3790 = vpack.c.b16 %v2342, %v2338
      %v3791 = vpack.c.b16 %v2343, %v2339
      %v3792 = vpack.c.b16 %v2344, %v2340
      %v3793 = vpack.c.b16 %v2345, %v2341
      %v3794 = vpack.c.b16 %v2350, %v2346
      %v3795 = vpack.c.b16 %v2351, %v2347
      %v3796 = vpack.c.b16 %v2352, %v2348
      %v3797 = vpack.c.b16 %v2353, %v2349
      %v3798 = vpack.c.b16 %v2358, %v2354
      %v3799 = vpack.c.b16 %v2359, %v2355
      %v3800 = vpack.c.b16 %v2360, %v2356
      %v3801 = vpack.c.b16 %v2361, %v2357
      %v3802 = vpack.c.b16 %v2366, %v2362
      %v3803 = vpack.c.b16 %v2367, %v2363
      %v3804 = vpack.c.b16 %v2368, %v2364
      %v3805 = vpack.c.b16 %v2369, %v2365
      %v3806 = vpack.c.b16 %v2374, %v2370
      %v3807 = vpack.c.b16 %v2375, %v2371
      %v3808 = vpack.c.b16 %v2376, %v2372
      %v3809 = vpack.c.b16 %v2377, %v2373
      %v3810 = vpack.c.b16 %v2382, %v2378
      %v3811 = vpack.c.b16 %v2383, %v2379
      %v3812 = vpack.c.b16 %v2384, %v2380
      %v3813 = vpack.c.b16 %v2385, %v2381
      %v3814 = vpack.c.b16 %v2390, %v2386
      %v3815 = vpack.c.b16 %v2391, %v2387
      %v3816 = vpack.c.b16 %v2392, %v2388
      %v3817 = vpack.c.b16 %v2393, %v2389
      %v3818 = vpack.c.b16 %v2398, %v2394
      %v3819 = vpack.c.b16 %v2399, %v2395
      %v3820 = vpack.c.b16 %v2400, %v2396
      %v3821 = vpack.c.b16 %v2401, %v2397
      %v3822 = vpack.c.b16 %v2406, %v2402
      %v3823 = vpack.c.b16 %v2407, %v2403
      %v3824 = vpack.c.b16 %v2408, %v2404
      %v3825 = vpack.c.b16 %v2409, %v2405
      %v3826 = vpack.c.b16 %v2414, %v2410
      %v3827 = vpack.c.b16 %v2415, %v2411
      %v3828 = vpack.c.b16 %v2416, %v2412
      %v3829 = vpack.c.b16 %v2417, %v2413
      %v3830 = vpack.c.b16 %v2422, %v2418
      %v3831 = vpack.c.b16 %v2423, %v2419
      %v3832 = vpack.c.b16 %v2424, %v2420
      %v3833 = vpack.c.b16 %v2425, %v2421
      %v3834 = vpack.c.b16 %v2430, %v2426
      %v3835 = vpack.c.b16 %v2431, %v2427
      %v3836 = vpack.c.b16 %v2432, %v2428
      %v3837 = vpack.c.b16 %v2433, %v2429
      %v3838 = vpack.c.b16 %v2438, %v2434
      %v3839 = vpack.c.b16 %v2439, %v2435
      %v3840 = vpack.c.b16 %v2440, %v2436
      %v3841 = vpack.c.b16 %v2441, %v2437
      %v3842 = vpack.c.b16 %v2446, %v2442
      %v3843 = vpack.c.b16 %v2447, %v2443
      %v3844 = vpack.c.b16 %v2448, %v2444
      %v3845 = vpack.c.b16 %v2449, %v2445
      %v3846 = vpack.c.b16 %v2454, %v2450
      %v3847 = vpack.c.b16 %v2455, %v2451
      %v3848 = vpack.c.b16 %v2456, %v2452
      %v3849 = vpack.c.b16 %v2457, %v2453
      %v3850 = vpack.c.b16 %v2462, %v2458
      %v3851 = vpack.c.b16 %v2463, %v2459
      %v3852 = vpack.c.b16 %v2464, %v2460
      %v3853 = vpack.c.b16 %v2465, %v2461
      %v3854 = vpack.c.b16 %v2470, %v2466
      %v3855 = vpack.c.b16 %v2471, %v2467
      %v3856 = vpack.c.b16 %v2472, %v2468
      %v3857 = vpack.c.b16 %v2473, %v2469
      %v3858 = vpack.c.b16 %v2478, %v2474
      %v3859 = vpack.c.b16 %v2479, %v2475
      %v3860 = vpack.c.b16 %v2480, %v2476
      %v3861 = vpack.c.b16 %v2481, %v2477
      %v3862 = vpack.c.b16 %v2486, %v2482
      %v3863 = vpack.c.b16 %v2487, %v2483
      %v3864 = vpack.c.b16 %v2488, %v2484
      %v3865 = vpack.c.b16 %v2489, %v2485
      %v3866 = vpack.c.b16 %v2494, %v2490
      %v3867 = vpack.c.b16 %v2495, %v2491
      %v3868 = vpack.c.b16 %v2496, %v2492
      %v3869 = vpack.c.b16 %v2497, %v2493
      %v3870 = vpack.c.b16 %v2502, %v2498
      %v3871 = vpack.c.b16 %v2503, %v2499
      %v3872 = vpack.c.b16 %v2504, %v2500
      %v3873 = vpack.c.b16 %v2505, %v2501
      %v3874 = vpack.c.b16 %v2510, %v2506
      %v3875 = vpack.c.b16 %v2511, %v2507
      %v3876 = vpack.c.b16 %v2512, %v2508
      %v3877 = vpack.c.b16 %v2513, %v2509
      %v3878 = vpack.c.b16 %v2518, %v2514
      %v3879 = vpack.c.b16 %v2519, %v2515
      %v3880 = vpack.c.b16 %v2520, %v2516
      %v3881 = vpack.c.b16 %v2521, %v2517
      %v3882 = vpack.c.b16 %v2526, %v2522
      %v3883 = vpack.c.b16 %v2527, %v2523
      %v3884 = vpack.c.b16 %v2528, %v2524
      %v3885 = vpack.c.b16 %v2529, %v2525
      %v3886 = vpack.c.b16 %v2534, %v2530
      %v3887 = vpack.c.b16 %v2535, %v2531
      %v3888 = vpack.c.b16 %v2536, %v2532
      %v3889 = vpack.c.b16 %v2537, %v2533
      %v3890 = vpack.c.b16 %v2542, %v2538
      %v3891 = vpack.c.b16 %v2543, %v2539
      %v3892 = vpack.c.b16 %v2544, %v2540
      %v3893 = vpack.c.b16 %v2545, %v2541
      %v3894 = vpack.c.b16 %v2550, %v2546
      %v3895 = vpack.c.b16 %v2551, %v2547
      %v3896 = vpack.c.b16 %v2552, %v2548
      %v3897 = vpack.c.b16 %v2553, %v2549
      %v3898 = vpack.c.b16 %v2558, %v2554
      %v3899 = vpack.c.b16 %v2559, %v2555
      %v3900 = vpack.c.b16 %v2560, %v2556
      %v3901 = vpack.c.b16 %v2561, %v2557
      %v3902 = vpack.c.b16 %v2566, %v2562
      %v3903 = vpack.c.b16 %v2567, %v2563
      %v3904 = vpack.c.b16 %v2568, %v2564
      %v3905 = vpack.c.b16 %v2569, %v2565
      %v3906 = vpack.c.b16 %v2574, %v2570
      %v3907 = vpack.c.b16 %v2575, %v2571
      %v3908 = vpack.c.b16 %v2576, %v2572
      %v3909 = vpack.c.b16 %v2577, %v2573
      %v3910 = vpack.c.b16 %v2582, %v2578
      %v3911 = vpack.c.b16 %v2583, %v2579
      %v3912 = vpack.c.b16 %v2584, %v2580
      %v3913 = vpack.c.b16 %v2585, %v2581
      %v3914 = vpack.c.b16 %v2590, %v2586
      %v3915 = vpack.c.b16 %v2591, %v2587
      %v3916 = vpack.c.b16 %v2592, %v2588
      %v3917 = vpack.c.b16 %v2593, %v2589
      %v3918 = vpack.c.b16 %v2598, %v2594
      %v3919 = vpack.c.b16 %v2599, %v2595
      %v3920 = vpack.c.b16 %v2600, %v2596
      %v3921 = vpack.c.b16 %v2601, %v2597
      %v3922 = vpack.c.b16 %v2606, %v2602
      %v3923 = vpack.c.b16 %v2607, %v2603
      %v3924 = vpack.c.b16 %v2608, %v2604
      %v3925 = vpack.c.b16 %v2609, %v2605
      %v3926 = vpack.c.b16 %v2614, %v2610
      %v3927 = vpack.c.b16 %v2615, %v2611
      %v3928 = vpack.c.b16 %v2616, %v2612
      %v3929 = vpack.c.b16 %v2617, %v2613
      %v3930 = vpack.c.b16 %v2622, %v2618
      %v3931 = vpack.c.b16 %v2623, %v2619
      %v3932 = vpack.c.b16 %v2624, %v2620
      %v3933 = vpack.c.b16 %v2625, %v2621
      %v3934 = vpack.c.b16 %v2630, %v2626
      %v3935 = vpack.c.b16 %v2631, %v2627
      %v3936 = vpack.c.b16 %v2632, %v2628
      %v3937 = vpack.c.b16 %v2633, %v2629
      %v3938 = vpack.c.b16 %v2638, %v2634
      %v3939 = vpack.c.b16 %v2639, %v2635
      %v3940 = vpack.c.b16 %v2640, %v2636
      %v3941 = vpack.c.b16 %v2641, %v2637
      %v3942 = vpack.c.b16 %v2646, %v2642
      %v3943 = vpack.c.b16 %v2647, %v2643
      %v3944 = vpack.c.b16 %v2648, %v2644
      %v3945 = vpack.c.b16 %v2649, %v2645
      %v3946 = vpack.c.b16 %v2654, %v2650
      %v3947 = vpack.c.b16 %v2655, %v2651
      %v3948 = vpack.c.b16 %v2656, %v2652
      %v3949 = vpack.c.b16 %v2657, %v2653
      %v3950 = vpack.c.b16 %v2662, %v2658
      %v3951 = vpack.c.b16 %v2663, %v2659
      %v3952 = vpack.c.b16 %v2664, %v2660
      %v3953 = vpack.c.b16 %v2665, %v2661
      %v3954 = vpack.c.b16 %v2670, %v2666
      %v3955 = vpack.c.b16 %v2671, %v2667
      %v3956 = vpack.c.b16 %v2672, %v2668
      %v3957 = vpack.c.b16 %v2673, %v2669
      %v3958 = vpack.c.b16 %v2678, %v2674
      %v3959 = vpack.c.b16 %v2679, %v2675
      %v3960 = vpack.c.b16 %v2680, %v2676
      %v3961 = vpack.c.b16 %v2681, %v2677
      %v3962 = vpack.c.b16 %v2686, %v2682
      %v3963 = vpack.c.b16 %v2687, %v2683
      %v3964 = vpack.c.b16 %v2688, %v2684
      %v3965 = vpack.c.b16 %v2689, %v2685
      %v3966 = vpack.c.b16 %v2694, %v2690
      %v3967 = vpack.c.b16 %v2695, %v2691
      %v3968 = vpack.c.b16 %v2696, %v2692
      %v3969 = vpack.c.b16 %v2697, %v2693
      %v3970 = vpack.c.b16 %v2702, %v2698
      %v3971 = vpack.c.b16 %v2703, %v2699
      %v3972 = vpack.c.b16 %v2704, %v2700
      %v3973 = vpack.c.b16 %v2705, %v2701
      %v3974 = vpack.c.b16 %v2710, %v2706
      %v3975 = vpack.c.b16 %v2711, %v2707
      %v3976 = vpack.c.b16 %v2712, %v2708
      %v3977 = vpack.c.b16 %v2713, %v2709
      %v3978 = vpack.c.b16 %v2718, %v2714
      %v3979 = vpack.c.b16 %v2719, %v2715
      %v3980 = vpack.c.b16 %v2720, %v2716
      %v3981 = vpack.c.b16 %v2721, %v2717
      %v3982 = vpack.c.b16 %v2726, %v2722
      %v3983 = vpack.c.b16 %v2727, %v2723
      %v3984 = vpack.c.b16 %v2728, %v2724
      %v3985 = vpack.c.b16 %v2729, %v2725
      %v3986 = vpack.c.b16 %v2734, %v2730
      %v3987 = vpack.c.b16 %v2735, %v2731
      %v3988 = vpack.c.b16 %v2736, %v2732
      %v3989 = vpack.c.b16 %v2737, %v2733
      %v3990 = vpack.c.b16 %v2742, %v2738
      %v3991 = vpack.c.b16 %v2743, %v2739
      %v3992 = vpack.c.b16 %v2744, %v2740
      %v3993 = vpack.c.b16 %v2745, %v2741
      %v3994 = vpack.c.b16 %v2750, %v2746
      %v3995 = vpack.c.b16 %v2751, %v2747
      %v3996 = vpack.c.b16 %v2752, %v2748
      %v3997 = vpack.c.b16 %v2753, %v2749
      %v3998 = vpack.c.b16 %v2758, %v2754
      %v3999 = vpack.c.b16 %v2759, %v2755
      %v4000 = vpack.c.b16 %v2760, %v2756
      %v4001 = vpack.c.b16 %v2761, %v2757
      %v4002 = vpack.c.b16 %v2766, %v2762
      %v4003 = vpack.c.b16 %v2767, %v2763
      %v4004 = vpack.c.b16 %v2768, %v2764
      %v4005 = vpack.c.b16 %v2769, %v2765
      %v4006 = vpack.c.b16 %v2774, %v2770
      %v4007 = vpack.c.b16 %v2775, %v2771
      %v4008 = vpack.c.b16 %v2776, %v2772
      %v4009 = vpack.c.b16 %v2777, %v2773
      %v4010 = vpack.c.b16 %v2782, %v2778
      %v4011 = vpack.c.b16 %v2783, %v2779
      %v4012 = vpack.c.b16 %v2784, %v2780
      %v4013 = vpack.c.b16 %v2785, %v2781
      %v4014 = vpack.c.b16 %v2790, %v2786
      %v4015 = vpack.c.b16 %v2791, %v2787
      %v4016 = vpack.c.b16 %v2792, %v2788
      %v4017 = vpack.c.b16 %v2793, %v2789
      %v4018 = vpack.c.b16 %v2798, %v2794
      %v4019 = vpack.c.b16 %v2799, %v2795
      %v4020 = vpack.c.b16 %v2800, %v2796
      %v4021 = vpack.c.b16 %v2801, %v2797
      %v4022 = vpack.c.b16 %v2806, %v2802
      %v4023 = vpack.c.b16 %v2807, %v2803
      %v4024 = vpack.c.b16 %v2808, %v2804
      %v4025 = vpack.c.b16 %v2809, %v2805
      %v4026 = vpack.c.b16 %v2814, %v2810
      %v4027 = vpack.c.b16 %v2815, %v2811
      %v4028 = vpack.c.b16 %v2816, %v2812
      %v4029 = vpack.c.b16 %v2817, %v2813
      %v4030 = vpack.c.b16 %v2822, %v2818
      %v4031 = vpack.c.b16 %v2823, %v2819
      %v4032 = vpack.c.b16 %v2824, %v2820
      %v4033 = vpack.c.b16 %v2825, %v2821
      %v4034 = vpack.c.b16 %v2830, %v2826
      %v4035 = vpack.c.b16 %v2831, %v2827
      %v4036 = vpack.c.b16 %v2832, %v2828
      %v4037 = vpack.c.b16 %v2833, %v2829
      %v4038 = vpack.c.b16 %v2838, %v2834
      %v4039 = vpack.c.b16 %v2839, %v2835
      %v4040 = vpack.c.b16 %v2840, %v2836
      %v4041 = vpack.c.b16 %v2841, %v2837
      %v4042 = vpack.c.b16 %v2846, %v2842
      %v4043 = vpack.c.b16 %v2847, %v2843
      %v4044 = vpack.c.b16 %v2848, %v2844
      %v4045 = vpack.c.b16 %v2849, %v2845
      %v4046 = vpack.c.b16 %v2854, %v2850
      %v4047 = vpack.c.b16 %v2855, %v2851
      %v4048 = vpack.c.b16 %v2856, %v2852
      %v4049 = vpack.c.b16 %v2857, %v2853
      %v4050 = vpack.c.b16 %v2862, %v2858
      %v4051 = vpack.c.b16 %v2863, %v2859
      %v4052 = vpack.c.b16 %v2864, %v2860
      %v4053 = vpack.c.b16 %v2865, %v2861
      %v4054 = vpack.c.b16 %v2870, %v2866
      %v4055 = vpack.c.b16 %v2871, %v2867
      %v4056 = vpack.c.b16 %v2872, %v2868
      %v4057 = vpack.c.b16 %v2873, %v2869
      %v4058 = vpack.c.b16 %v2878, %v2874
      %v4059 = vpack.c.b16 %v2879, %v2875
      %v4060 = vpack.c.b16 %v2880, %v2876
      %v4061 = vpack.c.b16 %v2881, %v2877
      %v4062 = vpack.c.b16 %v2886, %v2882
      %v4063 = vpack.c.b16 %v2887, %v2883
      %v4064 = vpack.c.b16 %v2888, %v2884
      %v4065 = vpack.c.b16 %v2889, %v2885
      %v4066 = vpack.c.b16 %v2894, %v2890
      %v4067 = vpack.c.b16 %v2895, %v2891
      %v4068 = vpack.c.b16 %v2896, %v2892
      %v4069 = vpack.c.b16 %v2897, %v2893
      %v4070 = vpack.c.b16 %v2902, %v2898
      %v4071 = vpack.c.b16 %v2903, %v2899
      %v4072 = vpack.c.b16 %v2904, %v2900
      %v4073 = vpack.c.b16 %v2905, %v2901
      %v4074 = vpack.c.b16 %v2910, %v2906
      %v4075 = vpack.c.b16 %v2911, %v2907
      %v4076 = vpack.c.b16 %v2912, %v2908
      %v4077 = vpack.c.b16 %v2913, %v2909
      %v4078 = vpack.c.b16 %v2918, %v2914
      %v4079 = vpack.c.b16 %v2919, %v2915
      %v4080 = vpack.c.b16 %v2920, %v2916
      %v4081 = vpack.c.b16 %v2921, %v2917
      %v4082 = vpack.c.b16 %v2926, %v2922
      %v4083 = vpack.c.b16 %v2927, %v2923
      %v4084 = vpack.c.b16 %v2928, %v2924
      %v4085 = vpack.c.b16 %v2929, %v2925
      %v4086 = vpack.c.b16 %v2934, %v2930
      %v4087 = vpack.c.b16 %v2935, %v2931
      %v4088 = vpack.c.b16 %v2936, %v2932
      %v4089 = vpack.c.b16 %v2937, %v2933
      %v4090 = vpack.c.b16 %v2942, %v2938
      %v4091 = vpack.c.b16 %v2943, %v2939
      %v4092 = vpack.c.b16 %v2944, %v2940
      %v4093 = vpack.c.b16 %v2945, %v2941
      %v4094 = vpack.c.b16 %v2950, %v2946
      %v4095 = vpack.c.b16 %v2951, %v2947
      %v4096 = vpack.c.b16 %v2952, %v2948
      %v4097 = vpack.c.b16 %v2953, %v2949
      %v4098 = vpack.c.b16 %v2958, %v2954
      %v4099 = vpack.c.b16 %v2959, %v2955
      %v4100 = vpack.c.b16 %v2960, %v2956
      %v4101 = vpack.c.b16 %v2961, %v2957
      %v4102 = vpack.c.b16 %v2966, %v2962
      %v4103 = vpack.c.b16 %v2967, %v2963
      %v4104 = vpack.c.b16 %v2968, %v2964
      %v4105 = vpack.c.b16 %v2969, %v2965
      %v4106 = vpack.c.b16 %v2974, %v2970
      %v4107 = vpack.c.b16 %v2975, %v2971
      %v4108 = vpack.c.b16 %v2976, %v2972
      %v4109 = vpack.c.b16 %v2977, %v2973
      %v4110 = vpack.c.b16 %v2982, %v2978
      %v4111 = vpack.c.b16 %v2983, %v2979
      %v4112 = vpack.c.b16 %v2984, %v2980
      %v4113 = vpack.c.b16 %v2985, %v2981
      %v4114 = vpack.c.b16 %v2990, %v2986
      %v4115 = vpack.c.b16 %v2991, %v2987
      %v4116 = vpack.c.b16 %v2992, %v2988
      %v4117 = vpack.c.b16 %v2993, %v2989
      %v4118 = vpack.c.b16 %v2998, %v2994
      %v4119 = vpack.c.b16 %v2999, %v2995
      %v4120 = vpack.c.b16 %v3000, %v2996
      %v4121 = vpack.c.b16 %v3001, %v2997
      %v4122 = vpack.c.b16 %v3006, %v3002
      %v4123 = vpack.c.b16 %v3007, %v3003
      %v4124 = vpack.c.b16 %v3008, %v3004
      %v4125 = vpack.c.b16 %v3009, %v3005
      %v4126 = vpack.c.b16 %v3014, %v3010
      %v4127 = vpack.c.b16 %v3015, %v3011
      %v4128 = vpack.c.b16 %v3016, %v3012
      %v4129 = vpack.c.b16 %v3017, %v3013
      %v4130 = vpack.c.b16 %v3022, %v3018
      %v4131 = vpack.c.b16 %v3023, %v3019
      %v4132 = vpack.c.b16 %v3024, %v3020
      %v4133 = vpack.c.b16 %v3025, %v3021
      %v4134 = vpack.c.b16 %v3030, %v3026
      %v4135 = vpack.c.b16 %v3031, %v3027
      %v4136 = vpack.c.b16 %v3032, %v3028
      %v4137 = vpack.c.b16 %v3033, %v3029
      %v4138 = vpack.c.b16 %v3038, %v3034
      %v4139 = vpack.c.b16 %v3039, %v3035
      %v4140 = vpack.c.b16 %v3040, %v3036
      %v4141 = vpack.c.b16 %v3041, %v3037
      %v4142 = vpack.c.b16 %v3046, %v3042
      %v4143 = vpack.c.b16 %v3047, %v3043
      %v4144 = vpack.c.b16 %v3048, %v3044
      %v4145 = vpack.c.b16 %v3049, %v3045
      %v4146 = vpack.c.b16 %v3054, %v3050
      %v4147 = vpack.c.b16 %v3055, %v3051
      %v4148 = vpack.c.b16 %v3056, %v3052
      %v4149 = vpack.c.b16 %v3057, %v3053
      %v4150 = vpack.c.b16 %v3062, %v3058
      %v4151 = vpack.c.b16 %v3063, %v3059
      %v4152 = vpack.c.b16 %v3064, %v3060
      %v4153 = vpack.c.b16 %v3065, %v3061
      %v4154 = vpack.c.b16 %v3070, %v3066
      %v4155 = vpack.c.b16 %v3071, %v3067
      %v4156 = vpack.c.b16 %v3072, %v3068
      %v4157 = vpack.c.b16 %v3073, %v3069
      %v4158 = vpack.c.b16 %v3078, %v3074
      %v4159 = vpack.c.b16 %v3079, %v3075
      %v4160 = vpack.c.b16 %v3080, %v3076
      %v4161 = vpack.c.b16 %v3081, %v3077
      %v4162 = vpack.c.b16 %v3086, %v3082
      %v4163 = vpack.c.b16 %v3087, %v3083
      %v4164 = vpack.c.b16 %v3088, %v3084
      %v4165 = vpack.c.b16 %v3089, %v3085
      %v4166 = vpack.c.b16 %v3094, %v3090
      %v4167 = vpack.c.b16 %v3095, %v3091
      %v4168 = vpack.c.b16 %v3096, %v3092
      %v4169 = vpack.c.b16 %v3097, %v3093
      %v4170 = vpack.c.b16 %v3102, %v3098
      %v4171 = vpack.c.b16 %v3103, %v3099
      %v4172 = vpack.c.b16 %v3104, %v3100
      %v4173 = vpack.c.b16 %v3105, %v3101
      %v4174 = vpack.c.b16 %v3110, %v3106
      %v4175 = vpack.c.b16 %v3111, %v3107
      %v4176 = vpack.c.b16 %v3112, %v3108
      %v4177 = vpack.c.b16 %v3113, %v3109
      %v4178 = vpack.c.b16 %v3118, %v3114
      %v4179 = vpack.c.b16 %v3119, %v3115
      %v4180 = vpack.c.b16 %v3120, %v3116
      %v4181 = vpack.c.b16 %v3121, %v3117
      %v4182 = vpack.c.b16 %v3126, %v3122
      %v4183 = vpack.c.b16 %v3127, %v3123
      %v4184 = vpack.c.b16 %v3128, %v3124
      %v4185 = vpack.c.b16 %v3129, %v3125
      %v4186 = vpack.c.b16 %v3134, %v3130
      %v4187 = vpack.c.b16 %v3135, %v3131
      %v4188 = vpack.c.b16 %v3136, %v3132
      %v4189 = vpack.c.b16 %v3137, %v3133
      %v4190 = vpack.c.b16 %v3142, %v3138
      %v4191 = vpack.c.b16 %v3143, %v3139
      %v4192 = vpack.c.b16 %v3144, %v3140
      %v4193 = vpack.c.b16 %v3145, %v3141
      %v4194 = vpack.c.b16 %v3150, %v3146
      %v4195 = vpack.c.b16 %v3151, %v3147
      %v4196 = vpack.c.b16 %v3152, %v3148
      %v4197 = vpack.c.b16 %v3153, %v3149
      %v4198 = vpack.c.b16 %v3158, %v3154
      %v4199 = vpack.c.b16 %v3159, %v3155
      %v4200 = vpack.c.b16 %v3160, %v3156
      %v4201 = vpack.c.b16 %v3161, %v3157
      %v4202 = vpack.c.b16 %v3166, %v3162
      %v4203 = vpack.c.b16 %v3167, %v3163
      %v4204 = vpack.c.b16 %v3168, %v3164
      %v4205 = vpack.c.b16 %v3169, %v3165
      %v4206 = vpack.c.b16 %v3174, %v3170
      %v4207 = vpack.c.b16 %v3175, %v3171
      %v4208 = vpack.c.b16 %v3176, %v3172
      %v4209 = vpack.c.b16 %v3177, %v3173
      %v4210 = vpack.c.b16 %v3182, %v3178
      %v4211 = vpack.c.b16 %v3183, %v3179
      %v4212 = vpack.c.b16 %v3184, %v3180
      %v4213 = vpack.c.b16 %v3185, %v3181
      %v4214 = vpack.c.b16 %v3190, %v3186
      %v4215 = vpack.c.b16 %v3191, %v3187
      %v4216 = vpack.c.b16 %v3192, %v3188
      %v4217 = vpack.c.b16 %v3193, %v3189
      %v4218 = vpack.c.b16 %v3198, %v3194
      %v4219 = vpack.c.b16 %v3199, %v3195
      %v4220 = vpack.c.b16 %v3200, %v3196
      %v4221 = vpack.c.b16 %v3201, %v3197
      %v4222 = vpack.c.b16 %v3206, %v3202
      %v4223 = vpack.c.b16 %v3207, %v3203
      %v4224 = vpack.c.b16 %v3208, %v3204
      %v4225 = vpack.c.b16 %v3209, %v3205
      %v4226 = vpack.c.b16 %v3214, %v3210
      %v4227 = vpack.c.b16 %v3215, %v3211
      %v4228 = vpack.c.b16 %v3216, %v3212
      %v4229 = vpack.c.b16 %v3217, %v3213
      %v4230 = vpack.c.b16 %v3222, %v3218
      %v4231 = vpack.c.b16 %v3223, %v3219
      %v4232 = vpack.c.b16 %v3224, %v3220
      %v4233 = vpack.c.b16 %v3225, %v3221
      %v4234 = vpack.c.b16 %v3230, %v3226
      %v4235 = vpack.c.b16 %v3231, %v3227
      %v4236 = vpack.c.b16 %v3232, %v3228
      %v4237 = vpack.c.b16 %v3233, %v3229
      %v4238 = vpack.c.b16 %v3238, %v3234
      %v4239 = vpack.c.b16 %v3239, %v3235
      %v4240 = vpack.c.b16 %v3240, %v3236
      %v4241 = vpack.c.b16 %v3241, %v3237
      %v4242 = vpack.c.b16 %v3246, %v3242
      %v4243 = vpack.c.b16 %v3247, %v3243
      %v4244 = vpack.c.b16 %v3248, %v3244
      %v4245 = vpack.c.b16 %v3249, %v3245
      %v4246 = vpack.c.b16 %v3254, %v3250
      %v4247 = vpack.c.b16 %v3255, %v3251
      %v4248 = vpack.c.b16 %v3256, %v3252
      %v4249 = vpack.c.b16 %v3257, %v3253
      %v4250 = vpack.c.b16 %v3262, %v3258
      %v4251 = vpack.c.b16 %v3263, %v3259
      %v4252 = vpack.c.b16 %v3264, %v3260
      %v4253 = vpack.c.b16 %v3265, %v3261
      %v4254 = vpack.c.b16 %v3270, %v3266
      %v4255 = vpack.c.b16 %v3271, %v3267
      %v4256 = vpack.c.b16 %v3272, %v3268
      %v4257 = vpack.c.b16 %v3273, %v3269
      %v4258 = vpack.c.b16 %v3278, %v3274
      %v4259 = vpack.c.b16 %v3279, %v3275
      %v4260 = vpack.c.b16 %v3280, %v3276
      %v4261 = vpack.c.b16 %v3281, %v3277
      %v4262 = vpack.c.b16 %v3286, %v3282
      %v4263 = vpack.c.b16 %v3287, %v3283
      %v4264 = vpack.c.b16 %v3288, %v3284
      %v4265 = vpack.c.b16 %v3289, %v3285
      %v4266 = vpack.c.b16 %v3294, %v3290
      %v4267 = vpack.c.b16 %v3295, %v3291
      %v4268 = vpack.c.b16 %v3296, %v3292
      %v4269 = vpack.c.b16 %v3297, %v3293
      %v4270 = vpack.c.b16 %v3302, %v3298
      %v4271 = vpack.c.b16 %v3303, %v3299
      %v4272 = vpack.c.b16 %v3304, %v3300
      %v4273 = vpack.c.b16 %v3305, %v3301
      %v4274 = vpack.c.b16 %v3310, %v3306
      %v4275 = vpack.c.b16 %v3311, %v3307
      %v4276 = vpack.c.b16 %v3312, %v3308
      %v4277 = vpack.c.b16 %v3313, %v3309
      %v4278 = vpack.c.b16 %v3318, %v3314
      %v4279 = vpack.c.b16 %v3319, %v3315
      %v4280 = vpack.c.b16 %v3320, %v3316
      %v4281 = vpack.c.b16 %v3321, %v3317
      %v4282 = vpack.c.b16 %v3326, %v3322
      %v4283 = vpack.c.b16 %v3327, %v3323
      %v4284 = vpack.c.b16 %v3328, %v3324
      %v4285 = vpack.c.b16 %v3329, %v3325
      %v4286 = vpack.c.b16 %v3334, %v3330
      %v4287 = vpack.c.b16 %v3335, %v3331
      %v4288 = vpack.c.b16 %v3336, %v3332
      %v4289 = vpack.c.b16 %v3337, %v3333
      %v4290 = vpack.c.b16 %v3342, %v3338
      %v4291 = vpack.c.b16 %v3343, %v3339
      %v4292 = vpack.c.b16 %v3344, %v3340
      %v4293 = vpack.c.b16 %v3345, %v3341
      %v4294 = vpack.c.b16 %v3350, %v3346
      %v4295 = vpack.c.b16 %v3351, %v3347
      %v4296 = vpack.c.b16 %v3352, %v3348
      %v4297 = vpack.c.b16 %v3353, %v3349
      %v4298 = vpack.c.b16 %v3358, %v3354
      %v4299 = vpack.c.b16 %v3359, %v3355
      %v4300 = vpack.c.b16 %v3360, %v3356
      %v4301 = vpack.c.b16 %v3361, %v3357
      %v4302 = vpack.c.b16 %v3366, %v3362
      %v4303 = vpack.c.b16 %v3367, %v3363
      %v4304 = vpack.c.b16 %v3368, %v3364
      %v4305 = vpack.c.b16 %v3369, %v3365
      %v4306 = vpack.c.b16 %v3374, %v3370
      %v4307 = vpack.c.b16 %v3375, %v3371
      %v4308 = vpack.c.b16 %v3376, %v3372
      %v4309 = vpack.c.b16 %v3377, %v3373
      %v4310 = vpack.c.b16 %v3382, %v3378
      %v4311 = vpack.c.b16 %v3383, %v3379
      %v4312 = vpack.c.b16 %v3384, %v3380
      %v4313 = vpack.c.b16 %v3385, %v3381
      %v4314 = vpack.c.b16 %v3390, %v3386
      %v4315 = vpack.c.b16 %v3391, %v3387
      %v4316 = vpack.c.b16 %v3392, %v3388
      %v4317 = vpack.c.b16 %v3393, %v3389
      %v4318 = vpack.c.b16 %v3398, %v3394
      %v4319 = vpack.c.b16 %v3399, %v3395
      %v4320 = vpack.c.b16 %v3400, %v3396
      %v4321 = vpack.c.b16 %v3401, %v3397
      %v4322 = vpack.c.b16 %v3406, %v3402
      %v4323 = vpack.c.b16 %v3407, %v3403
      %v4324 = vpack.c.b16 %v3408, %v3404
      %v4325 = vpack.c.b16 %v3409, %v3405
      %v4326 = vpack.c.b16 %v3414, %v3410
      %v4327 = vpack.c.b16 %v3415, %v3411
      %v4328 = vpack.c.b16 %v3416, %v3412
      %v4329 = vpack.c.b16 %v3417, %v3413
      %v4330 = vpack.c.b16 %v3422, %v3418
      %v4331 = vpack.c.b16 %v3423, %v3419
      %v4332 = vpack.c.b16 %v3424, %v3420
      %v4333 = vpack.c.b16 %v3425, %v3421
      %v4334 = vpack.c.b16 %v3430, %v3426
      %v4335 = vpack.c.b16 %v3431, %v3427
      %v4336 = vpack.c.b16 %v3432, %v3428
      %v4337 = vpack.c.b16 %v3433, %v3429
      %v4338 = vpack.c.b16 %v3438, %v3434
      %v4339 = vpack.c.b16 %v3439, %v3435
      %v4340 = vpack.c.b16 %v3440, %v3436
      %v4341 = vpack.c.b16 %v3441, %v3437
      %v4342 = vpack.c.b16 %v3446, %v3442
      %v4343 = vpack.c.b16 %v3447, %v3443
      %v4344 = vpack.c.b16 %v3448, %v3444
      %v4345 = vpack.c.b16 %v3449, %v3445
      %v4346 = vpack.c.b16 %v3454, %v3450
      %v4347 = vpack.c.b16 %v3455, %v3451
      %v4348 = vpack.c.b16 %v3456, %v3452
      %v4349 = vpack.c.b16 %v3457, %v3453
      %v4350 = vpack.c.b16 %v3462, %v3458
      %v4351 = vpack.c.b16 %v3463, %v3459
      %v4352 = vpack.c.b16 %v3464, %v3460
      %v4353 = vpack.c.b16 %v3465, %v3461
      %v4354 = vpack.c.b16 %v3470, %v3466
      %v4355 = vpack.c.b16 %v3471, %v3467
      %v4356 = vpack.c.b16 %v3472, %v3468
      %v4357 = vpack.c.b16 %v3473, %v3469
      %v4358 = vpack.c.b16 %v3478, %v3474
      %v4359 = vpack.c.b16 %v3479, %v3475
      %v4360 = vpack.c.b16 %v3480, %v3476
      %v4361 = vpack.c.b16 %v3481, %v3477
      %v4362 = vpack.c.b16 %v3486, %v3482
      %v4363 = vpack.c.b16 %v3487, %v3483
      %v4364 = vpack.c.b16 %v3488, %v3484
      %v4365 = vpack.c.b16 %v3489, %v3485
      %v4366 = vpack.c.b16 %v3494, %v3490
      %v4367 = vpack.c.b16 %v3495, %v3491
      %v4368 = vpack.c.b16 %v3496, %v3492
      %v4369 = vpack.c.b16 %v3497, %v3493
      %v4370 = vpack.c.b16 %v3502, %v3498
      %v4371 = vpack.c.b16 %v3503, %v3499
      %v4372 = vpack.c.b16 %v3504, %v3500
      %v4373 = vpack.c.b16 %v3505, %v3501
      %v4374 = vpack.c.b16 %v3510, %v3506
      %v4375 = vpack.c.b16 %v3511, %v3507
      %v4376 = vpack.c.b16 %v3512, %v3508
      %v4377 = vpack.c.b16 %v3513, %v3509
      %v4378 = vpack.c.b16 %v3518, %v3514
      %v4379 = vpack.c.b16 %v3519, %v3515
      %v4380 = vpack.c.b16 %v3520, %v3516
      %v4381 = vpack.c.b16 %v3521, %v3517
      %v4382 = vpack.c.b16 %v3526, %v3522
      %v4383 = vpack.c.b16 %v3527, %v3523
      %v4384 = vpack.c.b16 %v3528, %v3524
      %v4385 = vpack.c.b16 %v3529, %v3525
      %v4386 = vpack.c.b16 %v3534, %v3530
      %v4387 = vpack.c.b16 %v3535, %v3531
      %v4388 = vpack.c.b16 %v3536, %v3532
      %v4389 = vpack.c.b16 %v3537, %v3533
      %v4390 = vpack.c.b16 %v3542, %v3538
      %v4391 = vpack.c.b16 %v3543, %v3539
      %v4392 = vpack.c.b16 %v3544, %v3540
      %v4393 = vpack.c.b16 %v3545, %v3541
      %v4394 = vpack.c.b16 %v3550, %v3546
      %v4395 = vpack.c.b16 %v3551, %v3547
      %v4396 = vpack.c.b16 %v3552, %v3548
      %v4397 = vpack.c.b16 %v3553, %v3549
      %v4398 = vpack.c.b16 %v3558, %v3554
      %v4399 = vpack.c.b16 %v3559, %v3555
      %v4400 = vpack.c.b16 %v3560, %v3556
      %v4401 = vpack.c.b16 %v3561, %v3557
      %v4402 = vpack.c.b16 %v3566, %v3562
      %v4403 = vpack.c.b16 %v3567, %v3563
      %v4404 = vpack.c.b16 %v3568, %v3564
      %v4405 = vpack.c.b16 %v3569, %v3565
      %v4406 = vpack.c.b16 %v3574, %v3570
      %v4407 = vpack.c.b16 %v3575, %v3571
      %v4408 = vpack.c.b16 %v3576, %v3572
      %v4409 = vpack.c.b16 %v3577, %v3573
      %v4410 = vpack.c.b16 %v3582, %v3578
      %v4411 = vpack.c.b16 %v3583, %v3579
      %v4412 = vpack.c.b16 %v3584, %v3580
      %v4413 = vpack.c.b16 %v3585, %v3581
      %v4414 = vpack.c.b16 %v3590, %v3586
      %v4415 = vpack.c.b16 %v3591, %v3587
      %v4416 = vpack.c.b16 %v3592, %v3588
      %v4417 = vpack.c.b16 %v3593, %v3589
      %v4418 = vpack.c.b16 %v3598, %v3594
      %v4419 = vpack.c.b16 %v3599, %v3595
      %v4420 = vpack.c.b16 %v3600, %v3596
      %v4421 = vpack.c.b16 %v3601, %v3597
      %v4422 = vpack.c.b16 %v3606, %v3602
      %v4423 = vpack.c.b16 %v3607, %v3603
      %v4424 = vpack.c.b16 %v3608, %v3604
      %v4425 = vpack.c.b16 %v3609, %v3605
      %v4426 = vpack.c.b16 %v3614, %v3610
      %v4427 = vpack.c.b16 %v3615, %v3611
      %v4428 = vpack.c.b16 %v3616, %v3612
      %v4429 = vpack.c.b16 %v3617, %v3613
      %v4430 = vpack.c.b16 %v3622, %v3618
      %v4431 = vpack.c.b16 %v3623, %v3619
      %v4432 = vpack.c.b16 %v3624, %v3620
      %v4433 = vpack.c.b16 %v3625, %v3621
      %v4434 = vpack.c.b16 %v3630, %v3626
      %v4435 = vpack.c.b16 %v3631, %v3627
      %v4436 = vpack.c.b16 %v3632, %v3628
      %v4437 = vpack.c.b16 %v3633, %v3629
      %v4438 = vpack.c.b16 %v3638, %v3634
      %v4439 = vpack.c.b16 %v3639, %v3635
      %v4440 = vpack.c.b16 %v3640, %v3636
      %v4441 = vpack.c.b16 %v3641, %v3637
      %v4442 = vpack.c.b16 %v3646, %v3642
      %v4443 = vpack.c.b16 %v3647, %v3643
      %v4444 = vpack.c.b16 %v3648, %v3644
      %v4445 = vpack.c.b16 %v3649, %v3645
      %v4446 = vpack.c.b16 %v3654, %v3650
      %v4447 = vpack.c.b16 %v3655, %v3651
      %v4448 = vpack.c.b16 %v3656, %v3652
      %v4449 = vpack.c.b16 %v3657, %v3653
      %v4450 = vpack.c.b16 %v3662, %v3658
      %v4451 = vpack.c.b16 %v3663, %v3659
      %v4452 = vpack.c.b16 %v3664, %v3660
      %v4453 = vpack.c.b16 %v3665, %v3661
      %v4454 = vpack.c.b16 %v3670, %v3666
      %v4455 = vpack.c.b16 %v3671, %v3667
      %v4456 = vpack.c.b16 %v3672, %v3668
      %v4457 = vpack.c.b16 %v3673, %v3669
      %vm5242 = vcmask 523264
      %v5244 = vsel %vm5242, %v1297, 0
      %5246 = vmatprep.subr.bf16.mxu0 %v3675
      %5247 = vmatpush1.bf16.msra.mxu0 %v3674
      %5248 = vmatprep.subr.bf16.mxu0 %v3679
      %5249 = vmatpush1.bf16.msra.mxu0 %v3678
      %5250 = vmatprep.subr.bf16.mxu0 %v3683
      %5251 = vmatpush1.bf16.msra.mxu0 %v3682
      %5252 = vmatprep.subr.bf16.mxu0 %v3687
      %5253 = vmatpush1.bf16.msra.mxu0 %v3686
      %5254 = vmatprep.subr.bf16.mxu0 %v3691
      %5255 = vmatpush1.bf16.msra.mxu0 %v3690
      %5256 = vmatprep.subr.bf16.mxu0 %v3695
      %5257 = vmatpush1.bf16.msra.mxu0 %v3694
      %5258 = vmatprep.subr.bf16.mxu0 %v3699
      %5259 = vmatpush1.bf16.msra.mxu0 %v3698
      %5260 = vmatprep.subr.bf16.mxu0 %v3703
      %5261 = vmatpush1.bf16.msra.mxu0 %v3702
      %5262 = vmatprep.subr.bf16.mxu0 %v3707
      %5263 = vmatpush1.bf16.msra.mxu0 %v3706
      %5264 = vmatprep.subr.bf16.mxu0 %v3711
      %5265 = vmatpush1.bf16.msra.mxu0 %v3710
      %5266 = vmatprep.subr.bf16.mxu0 %v3715
      %5267 = vmatpush1.bf16.msra.mxu0 %v3714
      %5268 = vmatprep.subr.bf16.mxu0 %v3719
      %5269 = vmatpush1.bf16.msra.mxu0 %v3718
      %5270 = vmatprep.subr.bf16.mxu0 %v3723
      %5271 = vmatpush1.bf16.msra.mxu0 %v3722
      %5272 = vmatprep.subr.bf16.mxu0 %v3727
      %5273 = vmatpush1.bf16.msra.mxu0 %v3726
      %5274 = vmatprep.subr.bf16.mxu0 %v3731
      %5275 = vmatpush1.bf16.msra.mxu0 %v3730
      %5276 = vmatprep.subr.bf16.mxu0 %v3735
      %5277 = vmatpush1.bf16.msra.mxu0 %v3734
      %5278 = vmatprep.mubr.bf16.mxu0 %v1174
      %5279 = vmatmul.mubr.bf16.gmra.mrb[0].mxu0 %v1160
      %v5280 = vpop.f32.mrb[0].mxu0
      %v5281 = vadd.f32 %v1116, %v5280
      %v5282 = vpop.f32.mrb[0].mxu0
      %v5283 = vadd.f32 %v1120, %v5282
      %v5284 = vpop.f32.mrb[0].mxu0
      %v5285 = vpop.f32.mrb[0].mxu0
      %5286 = vdwg.mxu0
      %5287 = vmatprep.subr.bf16.mxu0 %v3739
      %5288 = vmatpush1.bf16.msra.mxu0 %v3738
      %5289 = vmatprep.subr.bf16.mxu0 %v3743
      %5290 = vmatpush1.bf16.msra.mxu0 %v3742
      %5291 = vmatprep.subr.bf16.mxu0 %v3747
      %5292 = vmatpush1.bf16.msra.mxu0 %v3746
      %5293 = vmatprep.subr.bf16.mxu0 %v3751
      %5294 = vmatpush1.bf16.msra.mxu0 %v3750
      %5295 = vmatprep.subr.bf16.mxu0 %v3755
      %5296 = vmatpush1.bf16.msra.mxu0 %v3754
      %5297 = vmatprep.subr.bf16.mxu0 %v3759
      %5298 = vmatpush1.bf16.msra.mxu0 %v3758
      %5299 = vmatprep.subr.bf16.mxu0 %v3763
      %5300 = vmatpush1.bf16.msra.mxu0 %v3762
      %5301 = vmatprep.subr.bf16.mxu0 %v3767
      %5302 = vmatpush1.bf16.msra.mxu0 %v3766
      %5303 = vmatprep.subr.bf16.mxu0 %v3771
      %5304 = vmatpush1.bf16.msra.mxu0 %v3770
      %5305 = vmatprep.subr.bf16.mxu0 %v3775
      %5306 = vmatpush1.bf16.msra.mxu0 %v3774
      %5307 = vmatprep.subr.bf16.mxu0 %v3779
      %5308 = vmatpush1.bf16.msra.mxu0 %v3778
      %5309 = vmatprep.subr.bf16.mxu0 %v3783
      %5310 = vmatpush1.bf16.msra.mxu0 %v3782
      %5311 = vmatprep.subr.bf16.mxu0 %v3787
      %5312 = vmatpush1.bf16.msra.mxu0 %v3786
      %5313 = vmatprep.subr.bf16.mxu0 %v3791
      %5314 = vmatpush1.bf16.msra.mxu0 %v3790
      %5315 = vmatprep.subr.bf16.mxu0 %v3795
      %5316 = vmatpush1.bf16.msra.mxu0 %v3794
      %5317 = vmatprep.subr.bf16.mxu0 %v3799
      %5318 = vmatpush1.bf16.msra.mxu0 %v3798
      %5319 = vmatprep.mubr.bf16.mxu0 %v1184
      %5320 = vmatmul.mubr.bf16.gmra.mrb[0].mxu0 %v1182
      %v5321 = vpop.f32.mrb[0].mxu0
      %v5322 = vadd.f32 %v5281, %v5321
      %v5323 = vpop.f32.mrb[0].mxu0
      %v5324 = vadd.f32 %v5283, %v5323
      %v5325 = vpop.f32.mrb[0].mxu0
      %v5326 = vpop.f32.mrb[0].mxu0
      %5327 = vdwg.mxu0
      %5328 = vmatprep.subr.bf16.mxu0 %v3803
      %5329 = vmatpush1.bf16.msra.mxu0 %v3802
      %5330 = vmatprep.subr.bf16.mxu0 %v3807
      %5331 = vmatpush1.bf16.msra.mxu0 %v3806
      %5332 = vmatprep.subr.bf16.mxu0 %v3811
      %5333 = vmatpush1.bf16.msra.mxu0 %v3810
      %5334 = vmatprep.subr.bf16.mxu0 %v3815
      %5335 = vmatpush1.bf16.msra.mxu0 %v3814
      %5336 = vmatprep.subr.bf16.mxu0 %v3819
      %5337 = vmatpush1.bf16.msra.mxu0 %v3818
      %5338 = vmatprep.subr.bf16.mxu0 %v3823
      %5339 = vmatpush1.bf16.msra.mxu0 %v3822
      %5340 = vmatprep.subr.bf16.mxu0 %v3827
      %5341 = vmatpush1.bf16.msra.mxu0 %v3826
      %5342 = vmatprep.subr.bf16.mxu0 %v3831
      %5343 = vmatpush1.bf16.msra.mxu0 %v3830
      %5344 = vmatprep.subr.bf16.mxu0 %v3835
      %5345 = vmatpush1.bf16.msra.mxu0 %v3834
      %5346 = vmatprep.subr.bf16.mxu0 %v3839
      %5347 = vmatpush1.bf16.msra.mxu0 %v3838
      %5348 = vmatprep.subr.bf16.mxu0 %v3843
      %5349 = vmatpush1.bf16.msra.mxu0 %v3842
      %5350 = vmatprep.subr.bf16.mxu0 %v3847
      %5351 = vmatpush1.bf16.msra.mxu0 %v3846
      %5352 = vmatprep.subr.bf16.mxu0 %v3851
      %5353 = vmatpush1.bf16.msra.mxu0 %v3850
      %5354 = vmatprep.subr.bf16.mxu0 %v3855
      %5355 = vmatpush1.bf16.msra.mxu0 %v3854
      %5356 = vmatprep.subr.bf16.mxu0 %v3859
      %5357 = vmatpush1.bf16.msra.mxu0 %v3858
      %5358 = vmatprep.subr.bf16.mxu0 %v3863
      %5359 = vmatpush1.bf16.msra.mxu0 %v3862
      %5360 = vmatprep.mubr.bf16.mxu0 %v1181
      %5361 = vmatmul.mubr.bf16.gmra.mrb[0].mxu0 %v1167
      %v5362 = vpop.f32.mrb[0].mxu0
      %v5363 = vadd.f32 %v5322, %v5362
      %v5364 = vpop.f32.mrb[0].mxu0
      %v5365 = vadd.f32 %v5324, %v5364
      %v5366 = vpop.f32.mrb[0].mxu0
      %v5367 = vpop.f32.mrb[0].mxu0
      %5368 = vdwg.mxu0
      %5369 = vmatprep.subr.bf16.mxu0 %v3867
      %5370 = vmatpush1.bf16.msra.mxu0 %v3866
      %5371 = vmatprep.subr.bf16.mxu0 %v3871
      %5372 = vmatpush1.bf16.msra.mxu0 %v3870
      %5373 = vmatprep.subr.bf16.mxu0 %v3875
      %5374 = vmatpush1.bf16.msra.mxu0 %v3874
      %5375 = vmatprep.subr.bf16.mxu0 %v3879
      %5376 = vmatpush1.bf16.msra.mxu0 %v3878
      %5377 = vmatprep.subr.bf16.mxu0 %v3883
      %5378 = vmatpush1.bf16.msra.mxu0 %v3882
      %5379 = vmatprep.subr.bf16.mxu0 %v3887
      %5380 = vmatpush1.bf16.msra.mxu0 %v3886
      %5381 = vmatprep.subr.bf16.mxu0 %v3891
      %5382 = vmatpush1.bf16.msra.mxu0 %v3890
      %5383 = vmatprep.subr.bf16.mxu0 %v3895
      %5384 = vmatpush1.bf16.msra.mxu0 %v3894
      %5385 = vmatprep.subr.bf16.mxu0 %v3899
      %5386 = vmatpush1.bf16.msra.mxu0 %v3898
      %5387 = vmatprep.subr.bf16.mxu0 %v3903
      %5388 = vmatpush1.bf16.msra.mxu0 %v3902
      %5389 = vmatprep.subr.bf16.mxu0 %v3907
      %5390 = vmatpush1.bf16.msra.mxu0 %v3906
      %5391 = vmatprep.subr.bf16.mxu0 %v3911
      %5392 = vmatpush1.bf16.msra.mxu0 %v3910
      %5393 = vmatprep.subr.bf16.mxu0 %v3915
      %5394 = vmatpush1.bf16.msra.mxu0 %v3914
      %5395 = vmatprep.subr.bf16.mxu0 %v3919
      %5396 = vmatpush1.bf16.msra.mxu0 %v3918
      %5397 = vmatprep.subr.bf16.mxu0 %v3923
      %5398 = vmatpush1.bf16.msra.mxu0 %v3922
      %5399 = vmatprep.subr.bf16.mxu0 %v3927
      %5400 = vmatpush1.bf16.msra.mxu0 %v3926
      %5401 = vmatprep.mubr.bf16.mxu0 %v1185
      %5402 = vmatmul.mubr.bf16.gmra.mrb[0].mxu0 %v1183
      %v5403 = vpop.f32.mrb[0].mxu0
      %v5404 = vadd.f32 %v5363, %v5403
      %v5405 = vpop.f32.mrb[0].mxu0
      %v5406 = vadd.f32 %v5365, %v5405
      %v5407 = vpop.f32.mrb[0].mxu0
      %v5408 = vpop.f32.mrb[0].mxu0
      %5409 = vdwg.mxu0
      %5410 = vmatprep.subr.bf16.mxu0 %v3931
      %5411 = vmatpush1.bf16.msra.mxu0 %v3930
      %5412 = vmatprep.subr.bf16.mxu0 %v3935
      %5413 = vmatpush1.bf16.msra.mxu0 %v3934
      %5414 = vmatprep.subr.bf16.mxu0 %v3939
      %5415 = vmatpush1.bf16.msra.mxu0 %v3938
      %5416 = vmatprep.subr.bf16.mxu0 %v3943
      %5417 = vmatpush1.bf16.msra.mxu0 %v3942
      %5418 = vmatprep.subr.bf16.mxu0 %v3947
      %5419 = vmatpush1.bf16.msra.mxu0 %v3946
      %5420 = vmatprep.subr.bf16.mxu0 %v3951
      %5421 = vmatpush1.bf16.msra.mxu0 %v3950
      %5422 = vmatprep.subr.bf16.mxu0 %v3955
      %5423 = vmatpush1.bf16.msra.mxu0 %v3954
      %5424 = vmatprep.subr.bf16.mxu0 %v3959
      %5425 = vmatpush1.bf16.msra.mxu0 %v3958
      %5426 = vmatprep.subr.bf16.mxu0 %v3963
      %5427 = vmatpush1.bf16.msra.mxu0 %v3962
      %5428 = vmatprep.subr.bf16.mxu0 %v3967
      %5429 = vmatpush1.bf16.msra.mxu0 %v3966
      %5430 = vmatprep.subr.bf16.mxu0 %v3971
      %5431 = vmatpush1.bf16.msra.mxu0 %v3970
      %5432 = vmatprep.subr.bf16.mxu0 %v3975
      %5433 = vmatpush1.bf16.msra.mxu0 %v3974
      %5434 = vmatprep.subr.bf16.mxu0 %v3979
      %5435 = vmatpush1.bf16.msra.mxu0 %v3978
      %5436 = vmatprep.subr.bf16.mxu0 %v3983
      %5437 = vmatpush1.bf16.msra.mxu0 %v3982
      %5438 = vmatprep.subr.bf16.mxu0 %v3987
      %5439 = vmatpush1.bf16.msra.mxu0 %v3986
      %5440 = vmatprep.subr.bf16.mxu0 %v3991
      %5441 = vmatpush1.bf16.msra.mxu0 %v3990
      %5442 = vmatprep.mubr.bf16.mxu0 %v1223
      %5443 = vmatmul.mubr.bf16.gmra.mrb[0].mxu0 %v1209
      %v5444 = vpop.f32.mrb[0].mxu0
      %v5445 = vadd.f32 %v5404, %v5444
      %v5446 = vpop.f32.mrb[0].mxu0
      %v5447 = vadd.f32 %v5406, %v5446
      %v5448 = vpop.f32.mrb[0].mxu0
      %v5449 = vpop.f32.mrb[0].mxu0
      %5450 = vdwg.mxu0
      %5451 = vmatprep.subr.bf16.mxu0 %v3995
      %5452 = vmatpush1.bf16.msra.mxu0 %v3994
      %5453 = vmatprep.subr.bf16.mxu0 %v3999
      %5454 = vmatpush1.bf16.msra.mxu0 %v3998
      %5455 = vmatprep.subr.bf16.mxu0 %v4003
      %5456 = vmatpush1.bf16.msra.mxu0 %v4002
      %5457 = vmatprep.subr.bf16.mxu0 %v4007
      %5458 = vmatpush1.bf16.msra.mxu0 %v4006
      %5459 = vmatprep.subr.bf16.mxu0 %v4011
      %5460 = vmatpush1.bf16.msra.mxu0 %v4010
      %5461 = vmatprep.subr.bf16.mxu0 %v4015
      %5462 = vmatpush1.bf16.msra.mxu0 %v4014
      %5463 = vmatprep.subr.bf16.mxu0 %v4019
      %5464 = vmatpush1.bf16.msra.mxu0 %v4018
      %5465 = vmatprep.subr.bf16.mxu0 %v4023
      %5466 = vmatpush1.bf16.msra.mxu0 %v4022
      %5467 = vmatprep.subr.bf16.mxu0 %v4027
      %5468 = vmatpush1.bf16.msra.mxu0 %v4026
      %5469 = vmatprep.subr.bf16.mxu0 %v4031
      %5470 = vmatpush1.bf16.msra.mxu0 %v4030
      %5471 = vmatprep.subr.bf16.mxu0 %v4035
      %5472 = vmatpush1.bf16.msra.mxu0 %v4034
      %5473 = vmatprep.subr.bf16.mxu0 %v4039
      %5474 = vmatpush1.bf16.msra.mxu0 %v4038
      %5475 = vmatprep.subr.bf16.mxu0 %v4043
      %5476 = vmatpush1.bf16.msra.mxu0 %v4042
      %5477 = vmatprep.subr.bf16.mxu0 %v4047
      %5478 = vmatpush1.bf16.msra.mxu0 %v4046
      %5479 = vmatprep.subr.bf16.mxu0 %v4051
      %5480 = vmatpush1.bf16.msra.mxu0 %v4050
      %5481 = vmatprep.subr.bf16.mxu0 %v4055
      %5482 = vmatpush1.bf16.msra.mxu0 %v4054
      %5483 = vmatprep.mubr.bf16.mxu0 %v1233
      %5484 = vmatmul.mubr.bf16.gmra.mrb[0].mxu0 %v1231
      %v5485 = vpop.f32.mrb[0].mxu0
      %v5486 = vadd.f32 %v5445, %v5485
      %v5487 = vpop.f32.mrb[0].mxu0
      %v5488 = vadd.f32 %v5447, %v5487
      %v5489 = vpop.f32.mrb[0].mxu0
      %v5490 = vpop.f32.mrb[0].mxu0
      %5491 = vdwg.mxu0
      %5492 = vmatprep.subr.bf16.mxu0 %v4059
      %5493 = vmatpush1.bf16.msra.mxu0 %v4058
      %5494 = vmatprep.subr.bf16.mxu0 %v4063
      %5495 = vmatpush1.bf16.msra.mxu0 %v4062
      %5496 = vmatprep.subr.bf16.mxu0 %v4067
      %5497 = vmatpush1.bf16.msra.mxu0 %v4066
      %5498 = vmatprep.subr.bf16.mxu0 %v4071
      %5499 = vmatpush1.bf16.msra.mxu0 %v4070
      %5500 = vmatprep.subr.bf16.mxu0 %v4075
      %5501 = vmatpush1.bf16.msra.mxu0 %v4074
      %5502 = vmatprep.subr.bf16.mxu0 %v4079
      %5503 = vmatpush1.bf16.msra.mxu0 %v4078
      %5504 = vmatprep.subr.bf16.mxu0 %v4083
      %5505 = vmatpush1.bf16.msra.mxu0 %v4082
      %5506 = vmatprep.subr.bf16.mxu0 %v4087
      %5507 = vmatpush1.bf16.msra.mxu0 %v4086
      %5508 = vmatprep.subr.bf16.mxu0 %v4091
      %5509 = vmatpush1.bf16.msra.mxu0 %v4090
      %5510 = vmatprep.subr.bf16.mxu0 %v4095
      %5511 = vmatpush1.bf16.msra.mxu0 %v4094
      %5512 = vmatprep.subr.bf16.mxu0 %v4099
      %5513 = vmatpush1.bf16.msra.mxu0 %v4098
      %5514 = vmatprep.subr.bf16.mxu0 %v4103
      %5515 = vmatpush1.bf16.msra.mxu0 %v4102
      %5516 = vmatprep.subr.bf16.mxu0 %v4107
      %5517 = vmatpush1.bf16.msra.mxu0 %v4106
      %5518 = vmatprep.subr.bf16.mxu0 %v4111
      %5519 = vmatpush1.bf16.msra.mxu0 %v4110
      %5520 = vmatprep.subr.bf16.mxu0 %v4115
      %5521 = vmatpush1.bf16.msra.mxu0 %v4114
      %5522 = vmatprep.subr.bf16.mxu0 %v4119
      %5523 = vmatpush1.bf16.msra.mxu0 %v4118
      %5524 = vmatprep.mubr.bf16.mxu0 %v1230
      %5525 = vmatmul.mubr.bf16.gmra.mrb[0].mxu0 %v1216
      %v5526 = vpop.f32.mrb[0].mxu0
      %v5527 = vadd.f32 %v5486, %v5526
      %v5528 = vpop.f32.mrb[0].mxu0
      %v5529 = vadd.f32 %v5488, %v5528
      %v5530 = vpop.f32.mrb[0].mxu0
      %v5531 = vpop.f32.mrb[0].mxu0
      %5532 = vdwg.mxu0
      %5533 = vmatprep.subr.bf16.mxu0 %v4123
      %5534 = vmatpush1.bf16.msra.mxu0 %v4122
      %5535 = vmatprep.subr.bf16.mxu0 %v4127
      %5536 = vmatpush1.bf16.msra.mxu0 %v4126
      %5537 = vmatprep.subr.bf16.mxu0 %v4131
      %5538 = vmatpush1.bf16.msra.mxu0 %v4130
      %5539 = vmatprep.subr.bf16.mxu0 %v4135
      %5540 = vmatpush1.bf16.msra.mxu0 %v4134
      %5541 = vmatprep.subr.bf16.mxu0 %v4139
      %5542 = vmatpush1.bf16.msra.mxu0 %v4138
      %5543 = vmatprep.subr.bf16.mxu0 %v4143
      %5544 = vmatpush1.bf16.msra.mxu0 %v4142
      %5545 = vmatprep.subr.bf16.mxu0 %v4147
      %5546 = vmatpush1.bf16.msra.mxu0 %v4146
      %5547 = vmatprep.subr.bf16.mxu0 %v4151
      %5548 = vmatpush1.bf16.msra.mxu0 %v4150
      %5549 = vmatprep.subr.bf16.mxu0 %v4155
      %5550 = vmatpush1.bf16.msra.mxu0 %v4154
      %5551 = vmatprep.subr.bf16.mxu0 %v4159
      %5552 = vmatpush1.bf16.msra.mxu0 %v4158
      %5553 = vmatprep.subr.bf16.mxu0 %v4163
      %5554 = vmatpush1.bf16.msra.mxu0 %v4162
      %5555 = vmatprep.subr.bf16.mxu0 %v4167
      %5556 = vmatpush1.bf16.msra.mxu0 %v4166
      %5557 = vmatprep.subr.bf16.mxu0 %v4171
      %5558 = vmatpush1.bf16.msra.mxu0 %v4170
      %5559 = vmatprep.subr.bf16.mxu0 %v4175
      %5560 = vmatpush1.bf16.msra.mxu0 %v4174
      %5561 = vmatprep.subr.bf16.mxu0 %v4179
      %5562 = vmatpush1.bf16.msra.mxu0 %v4178
      %5563 = vmatprep.subr.bf16.mxu0 %v4183
      %5564 = vmatpush1.bf16.msra.mxu0 %v4182
      %5565 = vmatprep.mubr.bf16.mxu0 %v1234
      %5566 = vmatmul.mubr.bf16.gmra.mrb[0].mxu0 %v1232
      %v5567 = vpop.f32.mrb[0].mxu0
      %v5568 = vadd.f32 %v5527, %v5567
      %v5569 = vpop.f32.mrb[0].mxu0
      %v5570 = vadd.f32 %v5529, %v5569
      %v5571 = vpop.f32.mrb[0].mxu0
      %v5572 = vpop.f32.mrb[0].mxu0
      %5573 = vdwg.mxu0
      %5574 = vmatprep.subr.bf16.mxu0 %v4187
      %5575 = vmatpush1.bf16.msra.mxu0 %v4186
      %5576 = vmatprep.subr.bf16.mxu0 %v4191
      %5577 = vmatpush1.bf16.msra.mxu0 %v4190
      %5578 = vmatprep.subr.bf16.mxu0 %v4195
      %5579 = vmatpush1.bf16.msra.mxu0 %v4194
      %5580 = vmatprep.subr.bf16.mxu0 %v4199
      %5581 = vmatpush1.bf16.msra.mxu0 %v4198
      %5582 = vmatprep.subr.bf16.mxu0 %v4203
      %5583 = vmatpush1.bf16.msra.mxu0 %v4202
      %5584 = vmatprep.subr.bf16.mxu0 %v4207
      %5585 = vmatpush1.bf16.msra.mxu0 %v4206
      %5586 = vmatprep.subr.bf16.mxu0 %v4211
      %5587 = vmatpush1.bf16.msra.mxu0 %v4210
      %5588 = vmatprep.subr.bf16.mxu0 %v4215
      %5589 = vmatpush1.bf16.msra.mxu0 %v4214
      %5590 = vmatprep.subr.bf16.mxu0 %v4219
      %5591 = vmatpush1.bf16.msra.mxu0 %v4218
      %5592 = vmatprep.subr.bf16.mxu0 %v4223
      %5593 = vmatpush1.bf16.msra.mxu0 %v4222
      %5594 = vmatprep.subr.bf16.mxu0 %v4227
      %5595 = vmatpush1.bf16.msra.mxu0 %v4226
      %5596 = vmatprep.subr.bf16.mxu0 %v4231
      %5597 = vmatpush1.bf16.msra.mxu0 %v4230
      %5598 = vmatprep.subr.bf16.mxu0 %v4235
      %5599 = vmatpush1.bf16.msra.mxu0 %v4234
      %5600 = vmatprep.subr.bf16.mxu0 %v4239
      %5601 = vmatpush1.bf16.msra.mxu0 %v4238
      %5602 = vmatprep.subr.bf16.mxu0 %v4243
      %5603 = vmatpush1.bf16.msra.mxu0 %v4242
      %5604 = vmatprep.subr.bf16.mxu0 %v4247
      %5605 = vmatpush1.bf16.msra.mxu0 %v4246
      %5606 = vmatprep.mubr.bf16.mxu0 %v1272
      %5607 = vmatmul.mubr.bf16.gmra.mrb[0].mxu0 %v1258
      %v5608 = vpop.f32.mrb[0].mxu0
      %v5609 = vadd.f32 %v5568, %v5608
      %v5610 = vpop.f32.mrb[0].mxu0
      %v5611 = vadd.f32 %v5570, %v5610
      %v5612 = vpop.f32.mrb[0].mxu0
      %v5613 = vpop.f32.mrb[0].mxu0
      %5614 = vdwg.mxu0
      %5615 = vmatprep.subr.bf16.mxu0 %v4251
      %5616 = vmatpush1.bf16.msra.mxu0 %v4250
      %5617 = vmatprep.subr.bf16.mxu0 %v4255
      %5618 = vmatpush1.bf16.msra.mxu0 %v4254
      %5619 = vmatprep.subr.bf16.mxu0 %v4259
      %5620 = vmatpush1.bf16.msra.mxu0 %v4258
      %5621 = vmatprep.subr.bf16.mxu0 %v4263
      %5622 = vmatpush1.bf16.msra.mxu0 %v4262
      %5623 = vmatprep.subr.bf16.mxu0 %v4267
      %5624 = vmatpush1.bf16.msra.mxu0 %v4266
      %5625 = vmatprep.subr.bf16.mxu0 %v4271
      %5626 = vmatpush1.bf16.msra.mxu0 %v4270
      %5627 = vmatprep.subr.bf16.mxu0 %v4275
      %5628 = vmatpush1.bf16.msra.mxu0 %v4274
      %5629 = vmatprep.subr.bf16.mxu0 %v4279
      %5630 = vmatpush1.bf16.msra.mxu0 %v4278
      %5631 = vmatprep.subr.bf16.mxu0 %v4283
      %5632 = vmatpush1.bf16.msra.mxu0 %v4282
      %5633 = vmatprep.subr.bf16.mxu0 %v4287
      %5634 = vmatpush1.bf16.msra.mxu0 %v4286
      %5635 = vmatprep.subr.bf16.mxu0 %v4291
      %5636 = vmatpush1.bf16.msra.mxu0 %v4290
      %5637 = vmatprep.subr.bf16.mxu0 %v4295
      %5638 = vmatpush1.bf16.msra.mxu0 %v4294
      %5639 = vmatprep.subr.bf16.mxu0 %v4299
      %5640 = vmatpush1.bf16.msra.mxu0 %v4298
      %5641 = vmatprep.subr.bf16.mxu0 %v4303
      %5642 = vmatpush1.bf16.msra.mxu0 %v4302
      %5643 = vmatprep.subr.bf16.mxu0 %v4307
      %5644 = vmatpush1.bf16.msra.mxu0 %v4306
      %5645 = vmatprep.subr.bf16.mxu0 %v4311
      %5646 = vmatpush1.bf16.msra.mxu0 %v4310
      %5647 = vmatprep.mubr.bf16.mxu0 %v1282
      %5648 = vmatmul.mubr.bf16.gmra.mrb[0].mxu0 %v1280
      %v5649 = vpop.f32.mrb[0].mxu0
      %v5650 = vadd.f32 %v5609, %v5649
      %v5651 = vpop.f32.mrb[0].mxu0
      %v5652 = vadd.f32 %v5611, %v5651
      %v5653 = vpop.f32.mrb[0].mxu0
      %v5654 = vpop.f32.mrb[0].mxu0
      %5655 = vdwg.mxu0
      %5656 = vmatprep.subr.bf16.mxu0 %v4315
      %5657 = vmatpush1.bf16.msra.mxu0 %v4314
      %5658 = vmatprep.subr.bf16.mxu0 %v4319
      %5659 = vmatpush1.bf16.msra.mxu0 %v4318
      %5660 = vmatprep.subr.bf16.mxu0 %v4323
      %5661 = vmatpush1.bf16.msra.mxu0 %v4322
      %5662 = vmatprep.subr.bf16.mxu0 %v4327
      %5663 = vmatpush1.bf16.msra.mxu0 %v4326
      %5664 = vmatprep.subr.bf16.mxu0 %v4331
      %5665 = vmatpush1.bf16.msra.mxu0 %v4330
      %5666 = vmatprep.subr.bf16.mxu0 %v4335
      %5667 = vmatpush1.bf16.msra.mxu0 %v4334
      %5668 = vmatprep.subr.bf16.mxu0 %v4339
      %5669 = vmatpush1.bf16.msra.mxu0 %v4338
      %5670 = vmatprep.subr.bf16.mxu0 %v4343
      %5671 = vmatpush1.bf16.msra.mxu0 %v4342
      %5672 = vmatprep.subr.bf16.mxu0 %v4347
      %5673 = vmatpush1.bf16.msra.mxu0 %v4346
      %5674 = vmatprep.subr.bf16.mxu0 %v4351
      %5675 = vmatpush1.bf16.msra.mxu0 %v4350
      %5676 = vmatprep.subr.bf16.mxu0 %v4355
      %5677 = vmatpush1.bf16.msra.mxu0 %v4354
      %5678 = vmatprep.subr.bf16.mxu0 %v4359
      %5679 = vmatpush1.bf16.msra.mxu0 %v4358
      %5680 = vmatprep.subr.bf16.mxu0 %v4363
      %5681 = vmatpush1.bf16.msra.mxu0 %v4362
      %5682 = vmatprep.subr.bf16.mxu0 %v4367
      %5683 = vmatpush1.bf16.msra.mxu0 %v4366
      %5684 = vmatprep.subr.bf16.mxu0 %v4371
      %5685 = vmatpush1.bf16.msra.mxu0 %v4370
      %5686 = vmatprep.subr.bf16.mxu0 %v4375
      %5687 = vmatpush1.bf16.msra.mxu0 %v4374
      %5688 = vmatprep.mubr.bf16.mxu0 %v1279
      %5689 = vmatmul.mubr.bf16.gmra.mrb[0].mxu0 %v1265
      %v5690 = vpop.f32.mrb[0].mxu0
      %v5691 = vadd.f32 %v5650, %v5690
      %v5692 = vpop.f32.mrb[0].mxu0
      %v5693 = vadd.f32 %v5652, %v5692
      %v5694 = vpop.f32.mrb[0].mxu0
      %v5695 = vpop.f32.mrb[0].mxu0
      %5696 = vdwg.mxu0
      %5697 = vmatprep.subr.bf16.mxu0 %v4379
      %5698 = vmatpush1.bf16.msra.mxu0 %v4378
      %5699 = vmatprep.subr.bf16.mxu0 %v4383
      %5700 = vmatpush1.bf16.msra.mxu0 %v4382
      %5701 = vmatprep.subr.bf16.mxu0 %v4387
      %5702 = vmatpush1.bf16.msra.mxu0 %v4386
      %5703 = vmatprep.subr.bf16.mxu0 %v4391
      %5704 = vmatpush1.bf16.msra.mxu0 %v4390
      %5705 = vmatprep.subr.bf16.mxu0 %v4395
      %5706 = vmatpush1.bf16.msra.mxu0 %v4394
      %5707 = vmatprep.subr.bf16.mxu0 %v4399
      %5708 = vmatpush1.bf16.msra.mxu0 %v4398
      %5709 = vmatprep.subr.bf16.mxu0 %v4403
      %5710 = vmatpush1.bf16.msra.mxu0 %v4402
      %5711 = vmatprep.subr.bf16.mxu0 %v4407
      %5712 = vmatpush1.bf16.msra.mxu0 %v4406
      %5713 = vmatprep.subr.bf16.mxu0 %v4411
      %5714 = vmatpush1.bf16.msra.mxu0 %v4410
      %5715 = vmatprep.subr.bf16.mxu0 %v4415
      %5716 = vmatpush1.bf16.msra.mxu0 %v4414
      %5717 = vmatprep.subr.bf16.mxu0 %v4419
      %5718 = vmatpush1.bf16.msra.mxu0 %v4418
      %5719 = vmatprep.subr.bf16.mxu0 %v4423
      %5720 = vmatpush1.bf16.msra.mxu0 %v4422
      %5721 = vmatprep.subr.bf16.mxu0 %v4427
      %5722 = vmatpush1.bf16.msra.mxu0 %v4426
      %5723 = vmatprep.subr.bf16.mxu0 %v4431
      %5724 = vmatpush1.bf16.msra.mxu0 %v4430
      %5725 = vmatprep.subr.bf16.mxu0 %v4435
      %5726 = vmatpush1.bf16.msra.mxu0 %v4434
      %5727 = vmatprep.subr.bf16.mxu0 %v4439
      %5728 = vmatpush1.bf16.msra.mxu0 %v4438
      %5729 = vmatprep.mubr.bf16.mxu0 %v1283
      %5730 = vmatmul.mubr.bf16.gmra.mrb[0].mxu0 %v1281
      %v5731 = vpop.f32.mrb[0].mxu0
      %v5732 = vadd.f32 %v5691, %v5731
      %v5733 = vpop.f32.mrb[0].mxu0
      %v5734 = vadd.f32 %v5693, %v5733
      %v5735 = vpop.f32.mrb[0].mxu0
      %v5736 = vpop.f32.mrb[0].mxu0
      %5737 = vdwg.mxu0
      %5738 = vmatprep.subr.bf16.mxu0 %v4443
      %5739 = vmatpush1.bf16.msra.mxu0 %v4442
      %5740 = vmatprep.subr.bf16.mxu0 %v4447
      %5741 = vmatpush1.bf16.msra.mxu0 %v4446
      %5742 = vmatprep.subr.bf16.mxu0 %v4451
      %5743 = vmatpush1.bf16.msra.mxu0 %v4450
      %5744 = vmatprep.subr.bf16.mxu0 %v4455
      %5745 = vmatpush1.bf16.msra.mxu0 %v4454
      %5746 = vmatprep.subr.bf16.mxu0 0
      %5747 = vmatpush1.bf16.msra.mxu0 0
      %5748 = vmatprep.subr.bf16.mxu0 0
      %5749 = vmatpush1.bf16.msra.mxu0 0
      %5750 = vmatprep.subr.bf16.mxu0 0
      %5751 = vmatpush1.bf16.msra.mxu0 0
      %5752 = vmatprep.subr.bf16.mxu0 0
      %5753 = vmatpush1.bf16.msra.mxu0 0
      %5754 = vmatprep.subr.bf16.mxu0 0
      %5755 = vmatpush1.bf16.msra.mxu0 0
      %5756 = vmatprep.subr.bf16.mxu0 0
      %5757 = vmatpush1.bf16.msra.mxu0 0
      %5758 = vmatprep.subr.bf16.mxu0 0
      %5759 = vmatpush1.bf16.msra.mxu0 0
      %5760 = vmatprep.subr.bf16.mxu0 0
      %5761 = vmatpush1.bf16.msra.mxu0 0
      %5762 = vmatprep.subr.bf16.mxu0 0
      %5763 = vmatpush1.bf16.msra.mxu0 0
      %5764 = vmatprep.subr.bf16.mxu0 0
      %5765 = vmatpush1.bf16.msra.mxu0 0
      %5766 = vmatprep.subr.bf16.mxu0 0
      %5767 = vmatpush1.bf16.msra.mxu0 0
      %5768 = vmatprep.subr.bf16.mxu0 0
      %5769 = vmatpush1.bf16.msra.mxu0 0
      %5770 = vmatprep.mubr.bf16.mxu0 0
      %5771 = vmatmul.mubr.bf16.gmra.mrb[0].mxu0 %v5244
      %v5772 = vpop.f32.mrb[0].mxu0
      %v5773 = vadd.f32 %v5732, %v5772
      %v5774 = vpop.f32.mrb[0].mxu0
      %v5775 = vadd.f32 %v5734, %v5774
      %v5776 = vpop.f32.mrb[0].mxu0
      %v5777 = vpop.f32.mrb[0].mxu0
      %5778 = vdwg.mxu0
      %5779 = vmatprep.subr.bf16.mxu0 %v3677
      %5780 = vmatpush1.bf16.msra.mxu0 %v3676
      %5781 = vmatprep.subr.bf16.mxu0 %v3681
      %5782 = vmatpush1.bf16.msra.mxu0 %v3680
      %5783 = vmatprep.subr.bf16.mxu0 %v3685
      %5784 = vmatpush1.bf16.msra.mxu0 %v3684
      %5785 = vmatprep.subr.bf16.mxu0 %v3689
      %5786 = vmatpush1.bf16.msra.mxu0 %v3688
      %5787 = vmatprep.subr.bf16.mxu0 %v3693
      %5788 = vmatpush1.bf16.msra.mxu0 %v3692
      %5789 = vmatprep.subr.bf16.mxu0 %v3697
      %5790 = vmatpush1.bf16.msra.mxu0 %v3696
      %5791 = vmatprep.subr.bf16.mxu0 %v3701
      %5792 = vmatpush1.bf16.msra.mxu0 %v3700
      %5793 = vmatprep.subr.bf16.mxu0 %v3705
      %5794 = vmatpush1.bf16.msra.mxu0 %v3704
      %5795 = vmatprep.subr.bf16.mxu0 %v3709
      %5796 = vmatpush1.bf16.msra.mxu0 %v3708
      %5797 = vmatprep.subr.bf16.mxu0 %v3713
      %5798 = vmatpush1.bf16.msra.mxu0 %v3712
      %5799 = vmatprep.subr.bf16.mxu0 %v3717
      %5800 = vmatpush1.bf16.msra.mxu0 %v3716
      %5801 = vmatprep.subr.bf16.mxu0 %v3721
      %5802 = vmatpush1.bf16.msra.mxu0 %v3720
      %5803 = vmatprep.subr.bf16.mxu0 %v3725
      %5804 = vmatpush1.bf16.msra.mxu0 %v3724
      %5805 = vmatprep.subr.bf16.mxu0 %v3729
      %5806 = vmatpush1.bf16.msra.mxu0 %v3728
      %5807 = vmatprep.subr.bf16.mxu0 %v3733
      %5808 = vmatpush1.bf16.msra.mxu0 %v3732
      %5809 = vmatprep.subr.bf16.mxu0 %v3737
      %5810 = vmatpush1.bf16.msra.mxu0 %v3736
      %5811 = vmatprep.mubr.bf16.mxu0 %v1174
      %5812 = vmatmul.mubr.bf16.gmra.mrb[0].mxu0 %v1160
      %v5813 = vpop.f32.mrb[0].mxu0
      %v5814 = vadd.f32 %v1124, %v5813
      %v5815 = vpop.f32.mrb[0].mxu0
      %v5816 = vadd.f32 %v1128, %v5815
      %v5817 = vpop.f32.mrb[0].mxu0
      %v5818 = vpop.f32.mrb[0].mxu0
      %5819 = vdwg.mxu0
      %5820 = vmatprep.subr.bf16.mxu0 %v3741
      %5821 = vmatpush1.bf16.msra.mxu0 %v3740
      %5822 = vmatprep.subr.bf16.mxu0 %v3745
      %5823 = vmatpush1.bf16.msra.mxu0 %v3744
      %5824 = vmatprep.subr.bf16.mxu0 %v3749
      %5825 = vmatpush1.bf16.msra.mxu0 %v3748
      %5826 = vmatprep.subr.bf16.mxu0 %v3753
      %5827 = vmatpush1.bf16.msra.mxu0 %v3752
      %5828 = vmatprep.subr.bf16.mxu0 %v3757
      %5829 = vmatpush1.bf16.msra.mxu0 %v3756
      %5830 = vmatprep.subr.bf16.mxu0 %v3761
      %5831 = vmatpush1.bf16.msra.mxu0 %v3760
      %5832 = vmatprep.subr.bf16.mxu0 %v3765
      %5833 = vmatpush1.bf16.msra.mxu0 %v3764
      %5834 = vmatprep.subr.bf16.mxu0 %v3769
      %5835 = vmatpush1.bf16.msra.mxu0 %v3768
      %5836 = vmatprep.subr.bf16.mxu0 %v3773
      %5837 = vmatpush1.bf16.msra.mxu0 %v3772
      %5838 = vmatprep.subr.bf16.mxu0 %v3777
      %5839 = vmatpush1.bf16.msra.mxu0 %v3776
      %5840 = vmatprep.subr.bf16.mxu0 %v3781
      %5841 = vmatpush1.bf16.msra.mxu0 %v3780
      %5842 = vmatprep.subr.bf16.mxu0 %v3785
      %5843 = vmatpush1.bf16.msra.mxu0 %v3784
      %5844 = vmatprep.subr.bf16.mxu0 %v3789
      %5845 = vmatpush1.bf16.msra.mxu0 %v3788
      %5846 = vmatprep.subr.bf16.mxu0 %v3793
      %5847 = vmatpush1.bf16.msra.mxu0 %v3792
      %5848 = vmatprep.subr.bf16.mxu0 %v3797
      %5849 = vmatpush1.bf16.msra.mxu0 %v3796
      %5850 = vmatprep.subr.bf16.mxu0 %v3801
      %5851 = vmatpush1.bf16.msra.mxu0 %v3800
      %5852 = vmatprep.mubr.bf16.mxu0 %v1184
      %5853 = vmatmul.mubr.bf16.gmra.mrb[0].mxu0 %v1182
      %v5854 = vpop.f32.mrb[0].mxu0
      %v5855 = vadd.f32 %v5814, %v5854
      %v5856 = vpop.f32.mrb[0].mxu0
      %v5857 = vadd.f32 %v5816, %v5856
      %v5858 = vpop.f32.mrb[0].mxu0
      %v5859 = vpop.f32.mrb[0].mxu0
      %5860 = vdwg.mxu0
      %5861 = vmatprep.subr.bf16.mxu0 %v3805
      %5862 = vmatpush1.bf16.msra.mxu0 %v3804
      %5863 = vmatprep.subr.bf16.mxu0 %v3809
      %5864 = vmatpush1.bf16.msra.mxu0 %v3808
      %5865 = vmatprep.subr.bf16.mxu0 %v3813
      %5866 = vmatpush1.bf16.msra.mxu0 %v3812
      %5867 = vmatprep.subr.bf16.mxu0 %v3817
      %5868 = vmatpush1.bf16.msra.mxu0 %v3816
      %5869 = vmatprep.subr.bf16.mxu0 %v3821
      %5870 = vmatpush1.bf16.msra.mxu0 %v3820
      %5871 = vmatprep.subr.bf16.mxu0 %v3825
      %5872 = vmatpush1.bf16.msra.mxu0 %v3824
      %5873 = vmatprep.subr.bf16.mxu0 %v3829
      %5874 = vmatpush1.bf16.msra.mxu0 %v3828
      %5875 = vmatprep.subr.bf16.mxu0 %v3833
      %5876 = vmatpush1.bf16.msra.mxu0 %v3832
      %5877 = vmatprep.subr.bf16.mxu0 %v3837
      %5878 = vmatpush1.bf16.msra.mxu0 %v3836
      %5879 = vmatprep.subr.bf16.mxu0 %v3841
      %5880 = vmatpush1.bf16.msra.mxu0 %v3840
      %5881 = vmatprep.subr.bf16.mxu0 %v3845
      %5882 = vmatpush1.bf16.msra.mxu0 %v3844
      %5883 = vmatprep.subr.bf16.mxu0 %v3849
      %5884 = vmatpush1.bf16.msra.mxu0 %v3848
      %5885 = vmatprep.subr.bf16.mxu0 %v3853
      %5886 = vmatpush1.bf16.msra.mxu0 %v3852
      %5887 = vmatprep.subr.bf16.mxu0 %v3857
      %5888 = vmatpush1.bf16.msra.mxu0 %v3856
      %5889 = vmatprep.subr.bf16.mxu0 %v3861
      %5890 = vmatpush1.bf16.msra.mxu0 %v3860
      %5891 = vmatprep.subr.bf16.mxu0 %v3865
      %5892 = vmatpush1.bf16.msra.mxu0 %v3864
      %5893 = vmatprep.mubr.bf16.mxu0 %v1181
      %5894 = vmatmul.mubr.bf16.gmra.mrb[0].mxu0 %v1167
      %v5895 = vpop.f32.mrb[0].mxu0
      %v5896 = vadd.f32 %v5855, %v5895
      %v5897 = vpop.f32.mrb[0].mxu0
      %v5898 = vadd.f32 %v5857, %v5897
      %v5899 = vpop.f32.mrb[0].mxu0
      %v5900 = vpop.f32.mrb[0].mxu0
      %5901 = vdwg.mxu0
      %5902 = vmatprep.subr.bf16.mxu0 %v3869
      %5903 = vmatpush1.bf16.msra.mxu0 %v3868
      %5904 = vmatprep.subr.bf16.mxu0 %v3873
      %5905 = vmatpush1.bf16.msra.mxu0 %v3872
      %5906 = vmatprep.subr.bf16.mxu0 %v3877
      %5907 = vmatpush1.bf16.msra.mxu0 %v3876
      %5908 = vmatprep.subr.bf16.mxu0 %v3881
      %5909 = vmatpush1.bf16.msra.mxu0 %v3880
      %5910 = vmatprep.subr.bf16.mxu0 %v3885
      %5911 = vmatpush1.bf16.msra.mxu0 %v3884
      %5912 = vmatprep.subr.bf16.mxu0 %v3889
      %5913 = vmatpush1.bf16.msra.mxu0 %v3888
      %5914 = vmatprep.subr.bf16.mxu0 %v3893
      %5915 = vmatpush1.bf16.msra.mxu0 %v3892
      %5916 = vmatprep.subr.bf16.mxu0 %v3897
      %5917 = vmatpush1.bf16.msra.mxu0 %v3896
      %5918 = vmatprep.subr.bf16.mxu0 %v3901
      %5919 = vmatpush1.bf16.msra.mxu0 %v3900
      %5920 = vmatprep.subr.bf16.mxu0 %v3905
      %5921 = vmatpush1.bf16.msra.mxu0 %v3904
      %5922 = vmatprep.subr.bf16.mxu0 %v3909
      %5923 = vmatpush1.bf16.msra.mxu0 %v3908
      %5924 = vmatprep.subr.bf16.mxu0 %v3913
      %5925 = vmatpush1.bf16.msra.mxu0 %v3912
      %5926 = vmatprep.subr.bf16.mxu0 %v3917
      %5927 = vmatpush1.bf16.msra.mxu0 %v3916
      %5928 = vmatprep.subr.bf16.mxu0 %v3921
      %5929 = vmatpush1.bf16.msra.mxu0 %v3920
      %5930 = vmatprep.subr.bf16.mxu0 %v3925
      %5931 = vmatpush1.bf16.msra.mxu0 %v3924
      %5932 = vmatprep.subr.bf16.mxu0 %v3929
      %5933 = vmatpush1.bf16.msra.mxu0 %v3928
      %5934 = vmatprep.mubr.bf16.mxu0 %v1185
      %5935 = vmatmul.mubr.bf16.gmra.mrb[0].mxu0 %v1183
      %v5936 = vpop.f32.mrb[0].mxu0
      %v5937 = vadd.f32 %v5896, %v5936
      %v5938 = vpop.f32.mrb[0].mxu0
      %v5939 = vadd.f32 %v5898, %v5938
      %v5940 = vpop.f32.mrb[0].mxu0
      %v5941 = vpop.f32.mrb[0].mxu0
      %5942 = vdwg.mxu0
      %5943 = vmatprep.subr.bf16.mxu0 %v3933
      %5944 = vmatpush1.bf16.msra.mxu0 %v3932
      %5945 = vmatprep.subr.bf16.mxu0 %v3937
      %5946 = vmatpush1.bf16.msra.mxu0 %v3936
      %5947 = vmatprep.subr.bf16.mxu0 %v3941
      %5948 = vmatpush1.bf16.msra.mxu0 %v3940
      %5949 = vmatprep.subr.bf16.mxu0 %v3945
      %5950 = vmatpush1.bf16.msra.mxu0 %v3944
      %5951 = vmatprep.subr.bf16.mxu0 %v3949
      %5952 = vmatpush1.bf16.msra.mxu0 %v3948
      %5953 = vmatprep.subr.bf16.mxu0 %v3953
      %5954 = vmatpush1.bf16.msra.mxu0 %v3952
      %5955 = vmatprep.subr.bf16.mxu0 %v3957
      %5956 = vmatpush1.bf16.msra.mxu0 %v3956
      %5957 = vmatprep.subr.bf16.mxu0 %v3961
      %5958 = vmatpush1.bf16.msra.mxu0 %v3960
      %5959 = vmatprep.subr.bf16.mxu0 %v3965
      %5960 = vmatpush1.bf16.msra.mxu0 %v3964
      %5961 = vmatprep.subr.bf16.mxu0 %v3969
      %5962 = vmatpush1.bf16.msra.mxu0 %v3968
      %5963 = vmatprep.subr.bf16.mxu0 %v3973
      %5964 = vmatpush1.bf16.msra.mxu0 %v3972
      %5965 = vmatprep.subr.bf16.mxu0 %v3977
      %5966 = vmatpush1.bf16.msra.mxu0 %v3976
      %5967 = vmatprep.subr.bf16.mxu0 %v3981
      %5968 = vmatpush1.bf16.msra.mxu0 %v3980
      %5969 = vmatprep.subr.bf16.mxu0 %v3985
      %5970 = vmatpush1.bf16.msra.mxu0 %v3984
      %5971 = vmatprep.subr.bf16.mxu0 %v3989
      %5972 = vmatpush1.bf16.msra.mxu0 %v3988
      %5973 = vmatprep.subr.bf16.mxu0 %v3993
      %5974 = vmatpush1.bf16.msra.mxu0 %v3992
      %5975 = vmatprep.mubr.bf16.mxu0 %v1223
      %5976 = vmatmul.mubr.bf16.gmra.mrb[0].mxu0 %v1209
      %v5977 = vpop.f32.mrb[0].mxu0
      %v5978 = vadd.f32 %v5937, %v5977
      %v5979 = vpop.f32.mrb[0].mxu0
      %v5980 = vadd.f32 %v5939, %v5979
      %v5981 = vpop.f32.mrb[0].mxu0
      %v5982 = vpop.f32.mrb[0].mxu0
      %5983 = vdwg.mxu0
      %5984 = vmatprep.subr.bf16.mxu0 %v3997
      %5985 = vmatpush1.bf16.msra.mxu0 %v3996
      %5986 = vmatprep.subr.bf16.mxu0 %v4001
      %5987 = vmatpush1.bf16.msra.mxu0 %v4000
      %5988 = vmatprep.subr.bf16.mxu0 %v4005
      %5989 = vmatpush1.bf16.msra.mxu0 %v4004
      %5990 = vmatprep.subr.bf16.mxu0 %v4009
      %5991 = vmatpush1.bf16.msra.mxu0 %v4008
      %5992 = vmatprep.subr.bf16.mxu0 %v4013
      %5993 = vmatpush1.bf16.msra.mxu0 %v4012
      %5994 = vmatprep.subr.bf16.mxu0 %v4017
      %5995 = vmatpush1.bf16.msra.mxu0 %v4016
      %5996 = vmatprep.subr.bf16.mxu0 %v4021
      %5997 = vmatpush1.bf16.msra.mxu0 %v4020
      %5998 = vmatprep.subr.bf16.mxu0 %v4025
      %5999 = vmatpush1.bf16.msra.mxu0 %v4024
      %6000 = vmatprep.subr.bf16.mxu0 %v4029
      %6001 = vmatpush1.bf16.msra.mxu0 %v4028
      %6002 = vmatprep.subr.bf16.mxu0 %v4033
      %6003 = vmatpush1.bf16.msra.mxu0 %v4032
      %6004 = vmatprep.subr.bf16.mxu0 %v4037
      %6005 = vmatpush1.bf16.msra.mxu0 %v4036
      %6006 = vmatprep.subr.bf16.mxu0 %v4041
      %6007 = vmatpush1.bf16.msra.mxu0 %v4040
      %6008 = vmatprep.subr.bf16.mxu0 %v4045
      %6009 = vmatpush1.bf16.msra.mxu0 %v4044
      %6010 = vmatprep.subr.bf16.mxu0 %v4049
      %6011 = vmatpush1.bf16.msra.mxu0 %v4048
      %6012 = vmatprep.subr.bf16.mxu0 %v4053
      %6013 = vmatpush1.bf16.msra.mxu0 %v4052
      %6014 = vmatprep.subr.bf16.mxu0 %v4057
      %6015 = vmatpush1.bf16.msra.mxu0 %v4056
      %6016 = vmatprep.mubr.bf16.mxu0 %v1233
      %6017 = vmatmul.mubr.bf16.gmra.mrb[0].mxu0 %v1231
      %v6018 = vpop.f32.mrb[0].mxu0
      %v6019 = vadd.f32 %v5978, %v6018
      %v6020 = vpop.f32.mrb[0].mxu0
      %v6021 = vadd.f32 %v5980, %v6020
      %v6022 = vpop.f32.mrb[0].mxu0
      %v6023 = vpop.f32.mrb[0].mxu0
      %6024 = vdwg.mxu0
      %6025 = vmatprep.subr.bf16.mxu0 %v4061
      %6026 = vmatpush1.bf16.msra.mxu0 %v4060
      %6027 = vmatprep.subr.bf16.mxu0 %v4065
      %6028 = vmatpush1.bf16.msra.mxu0 %v4064
      %6029 = vmatprep.subr.bf16.mxu0 %v4069
      %6030 = vmatpush1.bf16.msra.mxu0 %v4068
      %6031 = vmatprep.subr.bf16.mxu0 %v4073
      %6032 = vmatpush1.bf16.msra.mxu0 %v4072
      %6033 = vmatprep.subr.bf16.mxu0 %v4077
      %6034 = vmatpush1.bf16.msra.mxu0 %v4076
      %6035 = vmatprep.subr.bf16.mxu0 %v4081
      %6036 = vmatpush1.bf16.msra.mxu0 %v4080
      %6037 = vmatprep.subr.bf16.mxu0 %v4085
      %6038 = vmatpush1.bf16.msra.mxu0 %v4084
      %6039 = vmatprep.subr.bf16.mxu0 %v4089
      %6040 = vmatpush1.bf16.msra.mxu0 %v4088
      %6041 = vmatprep.subr.bf16.mxu0 %v4093
      %6042 = vmatpush1.bf16.msra.mxu0 %v4092
      %6043 = vmatprep.subr.bf16.mxu0 %v4097
      %6044 = vmatpush1.bf16.msra.mxu0 %v4096
      %6045 = vmatprep.subr.bf16.mxu0 %v4101
      %6046 = vmatpush1.bf16.msra.mxu0 %v4100
      %6047 = vmatprep.subr.bf16.mxu0 %v4105
      %6048 = vmatpush1.bf16.msra.mxu0 %v4104
      %6049 = vmatprep.subr.bf16.mxu0 %v4109
      %6050 = vmatpush1.bf16.msra.mxu0 %v4108
      %6051 = vmatprep.subr.bf16.mxu0 %v4113
      %6052 = vmatpush1.bf16.msra.mxu0 %v4112
      %6053 = vmatprep.subr.bf16.mxu0 %v4117
      %6054 = vmatpush1.bf16.msra.mxu0 %v4116
      %6055 = vmatprep.subr.bf16.mxu0 %v4121
      %6056 = vmatpush1.bf16.msra.mxu0 %v4120
      %6057 = vmatprep.mubr.bf16.mxu0 %v1230
      %6058 = vmatmul.mubr.bf16.gmra.mrb[0].mxu0 %v1216
      %v6059 = vpop.f32.mrb[0].mxu0
      %v6060 = vadd.f32 %v6019, %v6059
      %v6061 = vpop.f32.mrb[0].mxu0
      %v6062 = vadd.f32 %v6021, %v6061
      %v6063 = vpop.f32.mrb[0].mxu0
      %v6064 = vpop.f32.mrb[0].mxu0
      %6065 = vdwg.mxu0
      %6066 = vmatprep.subr.bf16.mxu0 %v4125
      %6067 = vmatpush1.bf16.msra.mxu0 %v4124
      %6068 = vmatprep.subr.bf16.mxu0 %v4129
      %6069 = vmatpush1.bf16.msra.mxu0 %v4128
      %6070 = vmatprep.subr.bf16.mxu0 %v4133
      %6071 = vmatpush1.bf16.msra.mxu0 %v4132
      %6072 = vmatprep.subr.bf16.mxu0 %v4137
      %6073 = vmatpush1.bf16.msra.mxu0 %v4136
      %6074 = vmatprep.subr.bf16.mxu0 %v4141
      %6075 = vmatpush1.bf16.msra.mxu0 %v4140
      %6076 = vmatprep.subr.bf16.mxu0 %v4145
      %6077 = vmatpush1.bf16.msra.mxu0 %v4144
      %6078 = vmatprep.subr.bf16.mxu0 %v4149
      %6079 = vmatpush1.bf16.msra.mxu0 %v4148
      %6080 = vmatprep.subr.bf16.mxu0 %v4153
      %6081 = vmatpush1.bf16.msra.mxu0 %v4152
      %6082 = vmatprep.subr.bf16.mxu0 %v4157
      %6083 = vmatpush1.bf16.msra.mxu0 %v4156
      %6084 = vmatprep.subr.bf16.mxu0 %v4161
      %6085 = vmatpush1.bf16.msra.mxu0 %v4160
      %6086 = vmatprep.subr.bf16.mxu0 %v4165
      %6087 = vmatpush1.bf16.msra.mxu0 %v4164
      %6088 = vmatprep.subr.bf16.mxu0 %v4169
      %6089 = vmatpush1.bf16.msra.mxu0 %v4168
      %6090 = vmatprep.subr.bf16.mxu0 %v4173
      %6091 = vmatpush1.bf16.msra.mxu0 %v4172
      %6092 = vmatprep.subr.bf16.mxu0 %v4177
      %6093 = vmatpush1.bf16.msra.mxu0 %v4176
      %6094 = vmatprep.subr.bf16.mxu0 %v4181
      %6095 = vmatpush1.bf16.msra.mxu0 %v4180
      %6096 = vmatprep.subr.bf16.mxu0 %v4185
      %6097 = vmatpush1.bf16.msra.mxu0 %v4184
      %6098 = vmatprep.mubr.bf16.mxu0 %v1234
      %6099 = vmatmul.mubr.bf16.gmra.mrb[0].mxu0 %v1232
      %v6100 = vpop.f32.mrb[0].mxu0
      %v6101 = vadd.f32 %v6060, %v6100
      %v6102 = vpop.f32.mrb[0].mxu0
      %v6103 = vadd.f32 %v6062, %v6102
      %v6104 = vpop.f32.mrb[0].mxu0
      %v6105 = vpop.f32.mrb[0].mxu0
      %6106 = vdwg.mxu0
      %6107 = vmatprep.subr.bf16.mxu0 %v4189
      %6108 = vmatpush1.bf16.msra.mxu0 %v4188
      %6109 = vmatprep.subr.bf16.mxu0 %v4193
      %6110 = vmatpush1.bf16.msra.mxu0 %v4192
      %6111 = vmatprep.subr.bf16.mxu0 %v4197
      %6112 = vmatpush1.bf16.msra.mxu0 %v4196
      %6113 = vmatprep.subr.bf16.mxu0 %v4201
      %6114 = vmatpush1.bf16.msra.mxu0 %v4200
      %6115 = vmatprep.subr.bf16.mxu0 %v4205
      %6116 = vmatpush1.bf16.msra.mxu0 %v4204
      %6117 = vmatprep.subr.bf16.mxu0 %v4209
      %6118 = vmatpush1.bf16.msra.mxu0 %v4208
      %6119 = vmatprep.subr.bf16.mxu0 %v4213
      %6120 = vmatpush1.bf16.msra.mxu0 %v4212
      %6121 = vmatprep.subr.bf16.mxu0 %v4217
      %6122 = vmatpush1.bf16.msra.mxu0 %v4216
      %6123 = vmatprep.subr.bf16.mxu0 %v4221
      %6124 = vmatpush1.bf16.msra.mxu0 %v4220
      %6125 = vmatprep.subr.bf16.mxu0 %v4225
      %6126 = vmatpush1.bf16.msra.mxu0 %v4224
      %6127 = vmatprep.subr.bf16.mxu0 %v4229
      %6128 = vmatpush1.bf16.msra.mxu0 %v4228
      %6129 = vmatprep.subr.bf16.mxu0 %v4233
      %6130 = vmatpush1.bf16.msra.mxu0 %v4232
      %6131 = vmatprep.subr.bf16.mxu0 %v4237
      %6132 = vmatpush1.bf16.msra.mxu0 %v4236
      %6133 = vmatprep.subr.bf16.mxu0 %v4241
      %6134 = vmatpush1.bf16.msra.mxu0 %v4240
      %6135 = vmatprep.subr.bf16.mxu0 %v4245
      %6136 = vmatpush1.bf16.msra.mxu0 %v4244
      %6137 = vmatprep.subr.bf16.mxu0 %v4249
      %6138 = vmatpush1.bf16.msra.mxu0 %v4248
      %6139 = vmatprep.mubr.bf16.mxu0 %v1272
      %6140 = vmatmul.mubr.bf16.gmra.mrb[0].mxu0 %v1258
      %v6141 = vpop.f32.mrb[0].mxu0
      %v6142 = vadd.f32 %v6101, %v6141
      %v6143 = vpop.f32.mrb[0].mxu0
      %v6144 = vadd.f32 %v6103, %v6143
      %v6145 = vpop.f32.mrb[0].mxu0
      %v6146 = vpop.f32.mrb[0].mxu0
      %6147 = vdwg.mxu0
      %6148 = vmatprep.subr.bf16.mxu0 %v4253
      %6149 = vmatpush1.bf16.msra.mxu0 %v4252
      %6150 = vmatprep.subr.bf16.mxu0 %v4257
      %6151 = vmatpush1.bf16.msra.mxu0 %v4256
      %6152 = vmatprep.subr.bf16.mxu0 %v4261
      %6153 = vmatpush1.bf16.msra.mxu0 %v4260
      %6154 = vmatprep.subr.bf16.mxu0 %v4265
      %6155 = vmatpush1.bf16.msra.mxu0 %v4264
      %6156 = vmatprep.subr.bf16.mxu0 %v4269
      %6157 = vmatpush1.bf16.msra.mxu0 %v4268
      %6158 = vmatprep.subr.bf16.mxu0 %v4273
      %6159 = vmatpush1.bf16.msra.mxu0 %v4272
      %6160 = vmatprep.subr.bf16.mxu0 %v4277
      %6161 = vmatpush1.bf16.msra.mxu0 %v4276
      %6162 = vmatprep.subr.bf16.mxu0 %v4281
      %6163 = vmatpush1.bf16.msra.mxu0 %v4280
      %6164 = vmatprep.subr.bf16.mxu0 %v4285
      %6165 = vmatpush1.bf16.msra.mxu0 %v4284
      %6166 = vmatprep.subr.bf16.mxu0 %v4289
      %6167 = vmatpush1.bf16.msra.mxu0 %v4288
      %6168 = vmatprep.subr.bf16.mxu0 %v4293
      %6169 = vmatpush1.bf16.msra.mxu0 %v4292
      %6170 = vmatprep.subr.bf16.mxu0 %v4297
      %6171 = vmatpush1.bf16.msra.mxu0 %v4296
      %6172 = vmatprep.subr.bf16.mxu0 %v4301
      %6173 = vmatpush1.bf16.msra.mxu0 %v4300
      %6174 = vmatprep.subr.bf16.mxu0 %v4305
      %6175 = vmatpush1.bf16.msra.mxu0 %v4304
      %6176 = vmatprep.subr.bf16.mxu0 %v4309
      %6177 = vmatpush1.bf16.msra.mxu0 %v4308
      %6178 = vmatprep.subr.bf16.mxu0 %v4313
      %6179 = vmatpush1.bf16.msra.mxu0 %v4312
      %6180 = vmatprep.mubr.bf16.mxu0 %v1282
      %6181 = vmatmul.mubr.bf16.gmra.mrb[0].mxu0 %v1280
      %v6182 = vpop.f32.mrb[0].mxu0
      %v6183 = vadd.f32 %v6142, %v6182
      %v6184 = vpop.f32.mrb[0].mxu0
      %v6185 = vadd.f32 %v6144, %v6184
      %v6186 = vpop.f32.mrb[0].mxu0
      %v6187 = vpop.f32.mrb[0].mxu0
      %6188 = vdwg.mxu0
      %6189 = vmatprep.subr.bf16.mxu0 %v4317
      %6190 = vmatpush1.bf16.msra.mxu0 %v4316
      %6191 = vmatprep.subr.bf16.mxu0 %v4321
      %6192 = vmatpush1.bf16.msra.mxu0 %v4320
      %6193 = vmatprep.subr.bf16.mxu0 %v4325
      %6194 = vmatpush1.bf16.msra.mxu0 %v4324
      %6195 = vmatprep.subr.bf16.mxu0 %v4329
      %6196 = vmatpush1.bf16.msra.mxu0 %v4328
      %6197 = vmatprep.subr.bf16.mxu0 %v4333
      %6198 = vmatpush1.bf16.msra.mxu0 %v4332
      %6199 = vmatprep.subr.bf16.mxu0 %v4337
      %6200 = vmatpush1.bf16.msra.mxu0 %v4336
      %6201 = vmatprep.subr.bf16.mxu0 %v4341
      %6202 = vmatpush1.bf16.msra.mxu0 %v4340
      %6203 = vmatprep.subr.bf16.mxu0 %v4345
      %6204 = vmatpush1.bf16.msra.mxu0 %v4344
      %6205 = vmatprep.subr.bf16.mxu0 %v4349
      %6206 = vmatpush1.bf16.msra.mxu0 %v4348
      %6207 = vmatprep.subr.bf16.mxu0 %v4353
      %6208 = vmatpush1.bf16.msra.mxu0 %v4352
      %6209 = vmatprep.subr.bf16.mxu0 %v4357
      %6210 = vmatpush1.bf16.msra.mxu0 %v4356
      %6211 = vmatprep.subr.bf16.mxu0 %v4361
      %6212 = vmatpush1.bf16.msra.mxu0 %v4360
      %6213 = vmatprep.subr.bf16.mxu0 %v4365
      %6214 = vmatpush1.bf16.msra.mxu0 %v4364
      %6215 = vmatprep.subr.bf16.mxu0 %v4369
      %6216 = vmatpush1.bf16.msra.mxu0 %v4368
      %6217 = vmatprep.subr.bf16.mxu0 %v4373
      %6218 = vmatpush1.bf16.msra.mxu0 %v4372
      %6219 = vmatprep.subr.bf16.mxu0 %v4377
      %6220 = vmatpush1.bf16.msra.mxu0 %v4376
      %6221 = vmatprep.mubr.bf16.mxu0 %v1279
      %6222 = vmatmul.mubr.bf16.gmra.mrb[0].mxu0 %v1265
      %v6223 = vpop.f32.mrb[0].mxu0
      %v6224 = vadd.f32 %v6183, %v6223
      %v6225 = vpop.f32.mrb[0].mxu0
      %v6226 = vadd.f32 %v6185, %v6225
      %v6227 = vpop.f32.mrb[0].mxu0
      %v6228 = vpop.f32.mrb[0].mxu0
      %6229 = vdwg.mxu0
      %6230 = vmatprep.subr.bf16.mxu0 %v4381
      %6231 = vmatpush1.bf16.msra.mxu0 %v4380
      %6232 = vmatprep.subr.bf16.mxu0 %v4385
      %6233 = vmatpush1.bf16.msra.mxu0 %v4384
      %6234 = vmatprep.subr.bf16.mxu0 %v4389
      %6235 = vmatpush1.bf16.msra.mxu0 %v4388
      %6236 = vmatprep.subr.bf16.mxu0 %v4393
      %6237 = vmatpush1.bf16.msra.mxu0 %v4392
      %6238 = vmatprep.subr.bf16.mxu0 %v4397
      %6239 = vmatpush1.bf16.msra.mxu0 %v4396
      %6240 = vmatprep.subr.bf16.mxu0 %v4401
      %6241 = vmatpush1.bf16.msra.mxu0 %v4400
      %6242 = vmatprep.subr.bf16.mxu0 %v4405
      %6243 = vmatpush1.bf16.msra.mxu0 %v4404
      %6244 = vmatprep.subr.bf16.mxu0 %v4409
      %6245 = vmatpush1.bf16.msra.mxu0 %v4408
      %6246 = vmatprep.subr.bf16.mxu0 %v4413
      %6247 = vmatpush1.bf16.msra.mxu0 %v4412
      %6248 = vmatprep.subr.bf16.mxu0 %v4417
      %6249 = vmatpush1.bf16.msra.mxu0 %v4416
      %6250 = vmatprep.subr.bf16.mxu0 %v4421
      %6251 = vmatpush1.bf16.msra.mxu0 %v4420
      %6252 = vmatprep.subr.bf16.mxu0 %v4425
      %6253 = vmatpush1.bf16.msra.mxu0 %v4424
      %6254 = vmatprep.subr.bf16.mxu0 %v4429
      %6255 = vmatpush1.bf16.msra.mxu0 %v4428
      %6256 = vmatprep.subr.bf16.mxu0 %v4433
      %6257 = vmatpush1.bf16.msra.mxu0 %v4432
      %6258 = vmatprep.subr.bf16.mxu0 %v4437
      %6259 = vmatpush1.bf16.msra.mxu0 %v4436
      %6260 = vmatprep.subr.bf16.mxu0 %v4441
      %6261 = vmatpush1.bf16.msra.mxu0 %v4440
      %6262 = vmatprep.mubr.bf16.mxu0 %v1283
      %6263 = vmatmul.mubr.bf16.gmra.mrb[0].mxu0 %v1281
      %v6264 = vpop.f32.mrb[0].mxu0
      %v6265 = vadd.f32 %v6224, %v6264
      %v6266 = vpop.f32.mrb[0].mxu0
      %v6267 = vadd.f32 %v6226, %v6266
      %v6268 = vpop.f32.mrb[0].mxu0
      %v6269 = vpop.f32.mrb[0].mxu0
      %6270 = vdwg.mxu0
      %6271 = vmatprep.subr.bf16.mxu0 %v4445
      %6272 = vmatpush1.bf16.msra.mxu0 %v4444
      %6273 = vmatprep.subr.bf16.mxu0 %v4449
      %6274 = vmatpush1.bf16.msra.mxu0 %v4448
      %6275 = vmatprep.subr.bf16.mxu0 %v4453
      %6276 = vmatpush1.bf16.msra.mxu0 %v4452
      %6277 = vmatprep.subr.bf16.mxu0 %v4457
      %6278 = vmatpush1.bf16.msra.mxu0 %v4456
      %6279 = vmatprep.subr.bf16.mxu0 0
      %6280 = vmatpush1.bf16.msra.mxu0 0
      %6281 = vmatprep.subr.bf16.mxu0 0
      %6282 = vmatpush1.bf16.msra.mxu0 0
      %6283 = vmatprep.subr.bf16.mxu0 0
      %6284 = vmatpush1.bf16.msra.mxu0 0
      %6285 = vmatprep.subr.bf16.mxu0 0
      %6286 = vmatpush1.bf16.msra.mxu0 0
      %6287 = vmatprep.subr.bf16.mxu0 0
      %6288 = vmatpush1.bf16.msra.mxu0 0
      %6289 = vmatprep.subr.bf16.mxu0 0
      %6290 = vmatpush1.bf16.msra.mxu0 0
      %6291 = vmatprep.subr.bf16.mxu0 0
      %6292 = vmatpush1.bf16.msra.mxu0 0
      %6293 = vmatprep.subr.bf16.mxu0 0
      %6294 = vmatpush1.bf16.msra.mxu0 0
      %6295 = vmatprep.subr.bf16.mxu0 0
      %6296 = vmatpush1.bf16.msra.mxu0 0
      %6297 = vmatprep.subr.bf16.mxu0 0
      %6298 = vmatpush1.bf16.msra.mxu0 0
      %6299 = vmatprep.subr.bf16.mxu0 0
      %6300 = vmatpush1.bf16.msra.mxu0 0
      %6301 = vmatprep.subr.bf16.mxu0 0
      %6302 = vmatpush1.bf16.msra.mxu0 0
      %6303 = vmatprep.mubr.bf16.mxu0 0
      %6304 = vmatmul.mubr.bf16.gmra.mrb[0].mxu0 %v5244
      %v6305 = vpop.f32.mrb[0].mxu0
      %v6306 = vadd.f32 %v6265, %v6305
      %v6307 = vpop.f32.mrb[0].mxu0
      %v6308 = vadd.f32 %v6267, %v6307
      %v6309 = vpop.f32.mrb[0].mxu0
      %v6310 = vpop.f32.mrb[0].mxu0
      %6311 = vdwg.mxu0
      %v6312 = vmax.f32 %v5773, 0.0
      %v6313 = vmax.f32 %v5775, 0.0
      %v6314 = vmax.f32 %v6306, 0.0
      %v6315 = vmax.f32 %v6308, 0.0
      %v6316 = vld [vmem:[%s311] sm:$0xf]
      %v6317 = vunpack.c.l.bf16 %v6316
      %v6319 = vlaneseq
      %v6320 = vshrl.u32 %v6319, 7
      %v6321 = vsub.s32 0, %v6320
      %v6322 = vrot.slane %v6317, %v6321
      %v6323 = vlaneseq
      %v6324 = vshrl.u32 %v6323, 7
      %v6325 = vsub.s32 2, %v6324
      %v6326 = vrot.slane %v6317, %v6325
      %v6327 = vlaneseq
      %v6328 = vshrl.u32 %v6327, 7
      %v6329 = vsub.s32 4, %v6328
      %v6330 = vrot.slane %v6317, %v6329
      %v6331 = vlaneseq
      %v6332 = vshrl.u32 %v6331, 7
      %v6333 = vsub.s32 6, %v6332
      %v6334 = vrot.slane %v6317, %v6333
      %v6339 = vlaneseq
      %v6340 = vshrl.u32 %v6339, 7
      %v6341 = vsub.s32 0, %v6340
      %v6342 = vrot.slane %v6322, %v6341
      %v6343 = vlaneseq
      %v6344 = vshrl.u32 %v6343, 7
      %v6345 = vsub.s32 0, %v6344
      %v6346 = vrot.slane %v6326, %v6345
      %v6347 = vlaneseq
      %v6348 = vshrl.u32 %v6347, 7
      %v6349 = vsub.s32 0, %v6348
      %v6350 = vrot.slane %v6330, %v6349
      %v6351 = vlaneseq
      %v6352 = vshrl.u32 %v6351, 7
      %v6353 = vsub.s32 0, %v6352
      %v6354 = vrot.slane %v6334, %v6353
      %v6355 = vmul.f32 %v6312, %v6342
      %v6356 = vmul.f32 %v6313, %v6346
      %v6357 = vmul.f32 %v6314, %v6350
      %v6358 = vmul.f32 %v6315, %v6354
      %vm6359 = vcmask 1041408
      %v6360 = vsel %vm6359, %v6355, 0.0
      %v6361 = vsel %vm6359, %v6356, 0.0
      %v6362 = vadd.f32 %v6360, %v6361
      %v6363 = vsel %vm6359, %v6357, 0.0
      %v6364 = vadd.f32 %v6362, %v6363
      %v6365 = vsel %vm6359, %v6358, 0.0
      %v6366 = vadd.f32 %v6364, %v6365
      %6367 = vadd.xlane.f32.xlu0 %v6366
      %v6368 = vpop.xlane.xlu0 %6367
      %v6369 = vld [vmem:[%s314] sm:$0x1]
      %v6371 = vlaneseq
      %v6372 = vshrl.u32 %v6371, 7
      %v6373 = vsub.s32 0, %v6372
      %v6374 = vrot.slane %v6369, %v6373
      %v6376 = vadd.f32 %v6368, %v6374
      %vm6377 = vcmask 1024
      %6378 = vst.msk [vmem:[%s321] sm:$0x3] %vm6377, %v6376
      %p6379 = scmp.lt.s32.totalorder %s20, 1
      %s6380 = scalar_select %p6379, %s20, 1
      %p6381 = scmp.lt.s32.totalorder %s21, 0
      %s6382 = scalar_select %p6381, %s21, 0
      %s6383 = sadd.s32 %s6382, %s6380
      %s6384 = smul.addr %s6383, 2
      %s6385 = scalar_lea.vmem %s5, %s6384
      // Predicated region
      $region41: #{legged_qnetwork_forward.7} parent=39 // pred_check
        %p6386 = pneg %p180
      $region42: #{legged_qnetwork_forward.7} parent=39 // pred_check_branch
        %6388 = sbr.rel (%p6386) target = $region44
      $region43: #{legged_qnetwork_forward.7} parent=39 // pred_region
        _
      $region44: #{legged_qnetwork_forward.7} parent=39 // pred_fallthru
        _
    $region40: #{legged_qnetwork_forward.7} parent=5 // pred_fallthru
      _
    %p6389 = scmp.le.s32.totalorder 2, %s11
    // Predicated region
    $region45: #{legged_qnetwork_forward.7} parent=5 // pred_check
      %p6390 = pneg %p6389
    $region46: #{legged_qnetwork_forward.7} parent=5 // pred_check_branch
      %6392 = sbr.rel (%p6390) target = $region48
    $region47: #{legged_qnetwork_forward.7} parent=5 // pred_region
      %s6393 = ssub.s32 %s11, 2
      // Predicated region
      $region49: #{legged_qnetwork_forward.7} parent=47 // pred_check
        %p6394 = pneg %p186
      $region50: #{legged_qnetwork_forward.7} parent=47 // pred_check_branch
        %6396 = sbr.rel (%p6394) target = $region52
      $region51: #{legged_qnetwork_forward.7} parent=47 // pred_region
        %p6397 = scmp.lt.s32.totalorder %s22, 1
        %s6398 = scalar_select %p6397, %s22, 1
        %p6399 = scmp.lt.s32.totalorder %s23, 0
        %s6400 = scalar_select %p6399, %s23, 0
        %s6401 = sadd.s32 %s6400, %s6398
        %s6402 = smul.addr %s6401, 2
        %s6403 = scalar_lea.vmem %s5, %s6402
      $region52: #{legged_qnetwork_forward.7} parent=47 // pred_fallthru
        _
    $region48: #{legged_qnetwork_forward.7} parent=5 // pred_fallthru
      _
  $region6: #{legged_qnetwork_forward.7} parent=0 // loop_footer
    %s15 = sadd.s32 1, %s11
  $region7: #{legged_qnetwork_forward.7} parent=0 // loop_footer_branch
    %10 = sbr.rel target = $region3
  $region8: #{legged_qnetwork_forward.7} parent=0 // loop_exit
    _

</llo_original>
